<compile_context>
chip_gen: v6e
topology: v6e:2x2x1
jax: 0.10.0
libtpu: 0.0.40
codegen_flags: <defaults>
</compile_context>

<pallas_src>
import functools

import numpy as np

import jax
import jax.numpy as jnp
from jax.experimental import pallas as pl
from jax.experimental.pallas import tpu as pltpu

GAME_COLS = 4 * 2    # 8
GAME_ROWS = 4 * 5    # 20


# ---------------------------------------------------------------------------
# The single fused kernel: NB samples per grid step
# ---------------------------------------------------------------------------
def _dqn_fused_kernel(x_ref,        # (22*NB, 16)   bf16  h-padded planar input, row = h*NB + b
                      b1_ref,       # (3, 16, 256)  bf16  conv1 taps (even||odd output cols)
                      bias1_ref,    # (1, 256)      f32
                      a2_ref,       # (3, 128, 256) bf16  conv2 taps (even||odd output cols)
                      bias2_ref,    # (1, 256)      f32
                      w3_ref,       # (5, 128, 256) f32   fc1, split by pooled row h3
                      b3_ref,       # (1, 256)      f32
                      w4_ref,       # (256, 128)    f32   fc2, lane-padded 4 -> 128
                      b4_ref,       # (1, 128)      f32
                      o_ref,        # (NB, 128)     f32   output (lanes 0..3 real)
                      p1pad_ref,    # scratch (12*NB, 128) bf16  h-padded pool1 output
                      fc_acc_ref,   # scratch (NB, 256)    f32   fc1 accumulator
                      *, nb):
    f32 = jnp.float32

    # Zero ONLY the two padding h-rows of the pool1 buffer (h2 = 0 and 11).
    zrow = jnp.zeros((nb, 128), p1pad_ref.dtype)
    p1pad_ref[0:nb, :] = zrow
    p1pad_ref[11 * nb:12 * nb, :] = zrow

    # ---- conv1 (2->32, 3x3 pad 1) + tanh + 2x2 maxpool ---------------------
    # One output-row pair (h = 2j, 2j+1) across the whole NB-batch per chunk.
    for j in range(10):
        acc = jnp.zeros((2 * nb, 256), f32)
        for kh in range(3):
            s = x_ref[(2 * j + kh) * nb:(2 * j + kh + 2) * nb, :]     # (2NB, 16) bf16
            acc = acc + jnp.dot(s, b1_ref[kh], preferred_element_type=f32)
        y = jnp.tanh(acc + bias1_ref[...])                            # (2NB, 256)
        m = jnp.maximum(y[:, :128], y[:, 128:])                       # column-pair max
        pooled = jnp.maximum(m[:nb, :], m[nb:, :])                    # row-pair max -> (NB,128)
        p1pad_ref[(j + 1) * nb:(j + 2) * nb, :] = pooled.astype(p1pad_ref.dtype)

    # ---- conv2 (32->64, 3x3 pad 1) + tanh + 2x2 maxpool, fused with fc1 ----
    fc_acc_ref[...] = jnp.zeros_like(fc_acc_ref)
    for j in range(5):
        acc = jnp.zeros((2 * nb, 256), f32)
        for kh in range(3):
            s = p1pad_ref[(2 * j + kh) * nb:(2 * j + kh + 2) * nb, :]  # (2NB, 128) bf16
            acc = acc + jnp.dot(s, a2_ref[kh], preferred_element_type=f32)
        y = jnp.tanh(acc + bias2_ref[...])
        m = jnp.maximum(y[:, :128], y[:, 128:])
        pooled = jnp.maximum(m[:nb, :], m[nb:, :])                     # (NB, 128) f32
        # fc1 partial sum for flatten-rows belonging to pooled row h3 = j.
        fc_acc_ref[...] += jnp.dot(pooled, w3_ref[j], preferred_element_type=f32)

    # ---- fc1 tanh + fc2 (lane-padded to 128 for an unmasked dense store) ---
    z1 = jnp.tanh(fc_acc_ref[...] + b3_ref[...])                       # (NB, 256)
    o_ref[...] = jnp.dot(z1, w4_ref[...], preferred_element_type=f32) + b4_ref[...]


# ---------------------------------------------------------------------------
# One-time parameter re-layout (hoisted out of the forward pass)
# ---------------------------------------------------------------------------
def prepare_params(params):
    w1 = np.asarray(params["w1"], np.float32)   # (32, 2, 3, 3)  OIHW
    b1 = np.asarray(params["b1"], np.float32)
    w2 = np.asarray(params["w2"], np.float32)   # (64, 32, 3, 3)
    b2 = np.asarray(params["b2"], np.float32)
    w3 = np.asarray(params["w3"], np.float32)   # (640, 256), rows in NCHW-flatten order
    b3 = np.asarray(params["b3"], np.float32)
    w4 = np.asarray(params["w4"], np.float32)   # (256, 4)
    b4 = np.asarray(params["b4"], np.float32)

    # conv1: per kernel row kh a (16 -> 256) matrix.
    #   input lane  = c*8 + w_in                         (channel folded into lanes)
    #   output lane = parity*128 + wo*32 + co  for output column w_out = 2*wo + parity
    B1 = np.zeros((3, 16, 256), np.float32)
    for kh in range(3):
        for c in range(2):
            for w_in in range(8):
                for parity in range(2):
                    for wo in range(4):
                        kw = w_in - (2 * wo + parity) + 1
                        if 0 <= kw < 3:
                            B1[kh, c * 8 + w_in,
                               parity * 128 + wo * 32:parity * 128 + (wo + 1) * 32] = \
                                w1[:, c, kh, kw]

    # conv2: per kh a (128 -> 256) matrix; input lane = w_in*32 + c,
    # output lane = parity*128 + wo*64 + co for output column w_out = 2*wo + parity.
    A2 = np.zeros((3, 128, 256), np.float32)
    for kh in range(3):
        for w_in in range(4):
            for parity in range(2):
                for wo in range(2):
                    kw = w_in - (2 * wo + parity) + 1
                    if 0 <= kw < 3:
                        A2[kh, w_in * 32:(w_in + 1) * 32,
                           parity * 128 + wo * 64:parity * 128 + (wo + 1) * 64] = \
                            w2[:, :, kh, kw].T

    # fc1: split into 5 (128, 256) blocks keyed by pooled row h3; input lane = w3_col*64 + c;
    # PyTorch's NCHW flatten index is c*10 + h3*2 + w3_col.
    W3 = np.zeros((5, 128, 256), np.float32)
    for h3 in range(5):
        for wc in range(2):
            for c in range(64):
                W3[h3, wc * 64 + c, :] = w3[c * 10 + h3 * 2 + wc, :]

    # fc2: lane-pad 4 -> 128 outputs for a lane-dense, unmasked store.
    W4p = np.zeros((256, 128), np.float32)
    W4p[:, :4] = w4
    b4p = np.zeros((128,), np.float32)
    b4p[:4] = b4

    return {
        "B1": jnp.asarray(B1, jnp.bfloat16),                       # bf16: single-pass MXU
        "b1t": jnp.asarray(np.tile(b1, 8).reshape(1, 256)),
        "A2": jnp.asarray(A2, jnp.bfloat16),
        "b2t": jnp.asarray(np.tile(b2, 4).reshape(1, 256)),
        "W3": jnp.asarray(W3),                                      # f32: K=640 accumulation
        "b3r": jnp.asarray(b3.reshape(1, 256)),
        "W4p": jnp.asarray(W4p),
        "b4p": jnp.asarray(b4p.reshape(1, 128)),
    }


# ---------------------------------------------------------------------------
# Forward pass: a single pallas_call, NB samples per grid step
# ---------------------------------------------------------------------------
def dqn_forward(x_nchw, prep, nb=32):
    n = x_nchw.shape[0]
    g = -(-n // nb)                   # number of grid steps (keep >= 2 for v7x megacore)
    n_pad = g * nb
    if n_pad != n:
        x_nchw = jnp.pad(x_nchw, ((0, n_pad - n), (0, 0), (0, 0), (0, 0)))

    # NCHW -> h-major planar slab, once in XLA (contiguous DMA per block):
    #   (N,2,20,8) -> (N,20,16)[lane = c*8+w] -> h-pad -> (G, 22*NB, 16)[row = h*NB + b]
    hp = GAME_ROWS + 2                # 22 padded rows
    xs = jnp.transpose(x_nchw, (0, 2, 1, 3)).reshape(n_pad, GAME_ROWS, 16)
    xs = jnp.pad(xs, ((0, 0), (1, 1), (0, 0)))
    xs = xs.reshape(g, nb, hp, 16).transpose(0, 2, 1, 3).reshape(g, hp * nb, 16)
    xs = xs.astype(jnp.bfloat16)

    # Advisory cost estimate (~2 MFLOP / sample).
    flops = 2 * (92160 + 737280 + 163840 + 1024) * n_pad
    transcendentals = (5120 + 2560 + 256) * n_pad
    weight_bytes = sum(int(np.prod(v.shape)) * v.dtype.itemsize for v in prep.values())
    bytes_accessed = weight_bytes * g + g * hp * nb * 16 * 2 + n_pad * 128 * 4

    wconst3 = lambda i: (0, 0, 0)
    wconst2 = lambda i: (0, 0)

    out = pl.pallas_call(
        functools.partial(_dqn_fused_kernel, nb=nb),
        out_shape=jax.ShapeDtypeStruct((g, nb, 128), jnp.float32),
        grid=(g,),
        in_specs=[
            pl.BlockSpec((None, hp * nb, 16), lambda i: (i, 0, 0)),   # input slab
            pl.BlockSpec((3, 16, 256), wconst3),                      # B1
            pl.BlockSpec((1, 256), wconst2),                          # bias1
            pl.BlockSpec((3, 128, 256), wconst3),                     # A2
            pl.BlockSpec((1, 256), wconst2),                          # bias2
            pl.BlockSpec((5, 128, 256), wconst3),                     # W3
            pl.BlockSpec((1, 256), wconst2),                          # b3
            pl.BlockSpec((256, 128), wconst2),                        # W4p
            pl.BlockSpec((1, 128), wconst2),                          # b4p
        ],
        out_specs=pl.BlockSpec((None, nb, 128), lambda i: (i, 0, 0)),
        scratch_shapes=[pltpu.VMEM((12 * nb, 128), jnp.bfloat16),     # padded pool1 output
                        pltpu.VMEM((nb, 256), jnp.float32)],          # fc1 accumulator
        compiler_params=pltpu.CompilerParams(
            dimension_semantics=("parallel",)),
        cost_estimate=pl.CostEstimate(flops=flops,
                                      transcendentals=transcendentals,
                                      bytes_accessed=bytes_accessed),
    )(xs, prep["B1"], prep["b1t"], prep["A2"], prep["b2t"],
      prep["W3"], prep["b3r"], prep["W4p"], prep["b4p"])
    return out.reshape(n_pad, 128)[:n, :4]


# ---------------------------------------------------------------------------
# Parameters (PyTorch layout) + float64 numpy reference for validation
# ---------------------------------------------------------------------------
def init_params(key):
    ks = jax.random.split(key, 8)
    s = 0.1
    flat_dim = 64 * (GAME_ROWS // 4) * (GAME_COLS // 4)                # 640
    return {
        "w1": s * jax.random.normal(ks[0], (32, 2, 3, 3), jnp.float32),
        "b1": s * jax.random.normal(ks[1], (32,), jnp.float32),
        "w2": s * jax.random.normal(ks[2], (64, 32, 3, 3), jnp.float32),
        "b2": s * jax.random.normal(ks[3], (64,), jnp.float32),
        "w3": s * jax.random.normal(ks[4], (flat_dim, 256), jnp.float32),
        "b3": s * jax.random.normal(ks[5], (256,), jnp.float32),
        "w4": s * jax.random.normal(ks[6], (256, 4), jnp.float32),
        "b4": s * jax.random.normal(ks[7], (4,), jnp.float32),
    }


def _reference_forward_np(x, params):
    w1 = np.asarray(params["w1"], np.float64); b1 = np.asarray(params["b1"], np.float64)
    w2 = np.asarray(params["w2"], np.float64); b2 = np.asarray(params["b2"], np.float64)
    w3 = np.asarray(params["w3"], np.float64); b3 = np.asarray(params["b3"], np.float64)
    w4 = np.asarray(params["w4"], np.float64); b4 = np.asarray(params["b4"], np.float64)

    def conv3x3(h, w, b):
        n, c, H, W = h.shape
        hp = np.pad(h, ((0, 0), (0, 0), (1, 1), (1, 1)))
        out = np.zeros((n, w.shape[0], H, W), np.float64)
        for kh in range(3):
            for kw in range(3):
                out += np.einsum("nchw,oc->nohw",
                                 hp[:, :, kh:kh + H, kw:kw + W], w[:, :, kh, kw])
        return out + b[None, :, None, None]

    def pool2x2(h):
        n, c, H, W = h.shape
        return h.reshape(n, c, H // 2, 2, W // 2, 2).max(axis=(3, 5))

    h = pool2x2(np.tanh(conv3x3(x, w1, b1)))
    h = pool2x2(np.tanh(conv3x3(h, w2, b2)))
    h = h.reshape(h.shape[0], -1)          # NCHW flatten, matches nn.Flatten
    h = np.tanh(h @ w3 + b3)
    return h @ w4 + b4


if __name__ == "__main__":
    key = jax.random.PRNGKey(0)
    k_x, k_p = jax.random.split(key)

    # batch 64 -> 2 grid steps of NB=32 (keeps both v7x TensorCores busy).
    n = 64
    x = jax.random.normal(k_x, (n, 2, GAME_ROWS, GAME_COLS), jnp.float32)
    params = init_params(k_p)
    prep = prepare_params(params)          # one-time weight re-layout (hoisted)

    fwd = jax.jit(dqn_forward)
    out = jax.block_until_ready(fwd(x, prep))

    assert out.shape == (n, 4)
    assert bool(jnp.all(jnp.isfinite(out)))

    ref = _reference_forward_np(np.asarray(x, np.float64), params)
    np.testing.assert_allclose(np.asarray(out, np.float64), ref, atol=2e-2, rtol=0)

    print("KERNEL_OK")
</pallas_src>

<mosaic_0001>
module attributes {stable_mosaic.version = 11 : i64} {
  func.func @_dqn_fused_kernel(%arg0: i32, %arg1: memref<1x704x16xbf16, #tpu.memory_space<vmem>>, %arg2: memref<3x16x256xbf16, #tpu.memory_space<vmem>>, %arg3: memref<1x256xf32, #tpu.memory_space<vmem>>, %arg4: memref<3x128x256xbf16, #tpu.memory_space<vmem>>, %arg5: memref<1x256xf32, #tpu.memory_space<vmem>>, %arg6: memref<5x128x256xf32, #tpu.memory_space<vmem>>, %arg7: memref<1x256xf32, #tpu.memory_space<vmem>>, %arg8: memref<256x128xf32, #tpu.memory_space<vmem>>, %arg9: memref<1x128xf32, #tpu.memory_space<vmem>>, %arg10: memref<1x32x128xf32, #tpu.memory_space<vmem>>, %arg11: memref<384x128xbf16, #tpu.memory_space<vmem>>, %arg12: memref<32x256xf32, #tpu.memory_space<vmem>>) attributes {dimension_semantics = [#tpu.dimension_semantics<parallel>], iteration_bounds = array<i64: 2>, scalar_prefetch = 0 : i64, scratch_operands = 2 : i64, tpu.core_type = #tpu.core_type<tc>, window_params = [{transform_indices = @transform_0, window_bounds = array<i64: 1, 704, 16>}, {pipeline_mode = #tpu.pipeline_mode<synchronous>, transform_indices = @transform_1, window_bounds = array<i64: 3, 16, 256>}, {pipeline_mode = #tpu.pipeline_mode<synchronous>, transform_indices = @transform_2, window_bounds = array<i64: 1, 256>}, {pipeline_mode = #tpu.pipeline_mode<synchronous>, transform_indices = @transform_3, window_bounds = array<i64: 3, 128, 256>}, {pipeline_mode = #tpu.pipeline_mode<synchronous>, transform_indices = @transform_4, window_bounds = array<i64: 1, 256>}, {pipeline_mode = #tpu.pipeline_mode<synchronous>, transform_indices = @transform_5, window_bounds = array<i64: 5, 128, 256>}, {pipeline_mode = #tpu.pipeline_mode<synchronous>, transform_indices = @transform_6, window_bounds = array<i64: 1, 256>}, {pipeline_mode = #tpu.pipeline_mode<synchronous>, transform_indices = @transform_7, window_bounds = array<i64: 256, 128>}, {pipeline_mode = #tpu.pipeline_mode<synchronous>, transform_indices = @transform_8, window_bounds = array<i64: 1, 128>}, {transform_indices = @transform_9, window_bounds = array<i64: 1, 32, 128>}]} {
    %cst = arith.constant 0.000000e+00 : bf16
    %0 = vector.broadcast %cst : bf16 to vector<32x128xbf16>
    %c0 = arith.constant 0 : index
    %c0_0 = arith.constant 0 : index
    %1 = vector.load %arg11[%c0, %c0_0] : memref<384x128xbf16, #tpu.memory_space<vmem>>, vector<32x128xbf16>
    tpu.vector_store %arg11[%c0, %c0_0], %0 {strides = array<i32>} : memref<384x128xbf16, #tpu.memory_space<vmem>>, vector<32x128xbf16>,
    %c352 = arith.constant 352 : index
    %c0_1 = arith.constant 0 : index
    %2 = vector.load %arg11[%c352, %c0_1] : memref<384x128xbf16, #tpu.memory_space<vmem>>, vector<32x128xbf16>
    tpu.vector_store %arg11[%c352, %c0_1], %0 {strides = array<i32>} : memref<384x128xbf16, #tpu.memory_space<vmem>>, vector<32x128xbf16>,
    %cst_2 = arith.constant 0.000000e+00 : f32
    %3 = vector.broadcast %cst_2 : f32 to vector<64x256xf32>
    %c0_3 = arith.constant 0 : index
    %c0_4 = arith.constant 0 : index
    %c0_5 = arith.constant 0 : index
    %4 = vector.load %arg1[%c0_3, %c0_4, %c0_5] : memref<1x704x16xbf16, #tpu.memory_space<vmem>>, vector<1x64x16xbf16>
    %5 = vector.shape_cast %4 : vector<1x64x16xbf16> to vector<64x16xbf16>
    %c0_6 = arith.constant 0 : index
    %c0_7 = arith.constant 0 : index
    %c0_8 = arith.constant 0 : index
    %6 = vector.load %arg2[%c0_6, %c0_7, %c0_8] : memref<3x16x256xbf16, #tpu.memory_space<vmem>>, vector<1x16x256xbf16>
    %7 = vector.shape_cast %6 : vector<1x16x256xbf16> to vector<16x256xbf16>
    %cst_9 = arith.constant dense<0.000000e+00> : vector<64x256xf32>
    %8 = tpu.matmul %5, %7, %cst_9 {dimension_numbers = #tpu.dot_dimension_numbers<[1], [0], [0], [1], [0, 0, 1, 1], [], []>} : vector<64x16xbf16>, vector<16x256xbf16>, vector<64x256xf32> -> vector<64x256xf32>
    %9 = arith.addf %3, %8 : vector<64x256xf32>
    %c0_10 = arith.constant 0 : index
    %c32 = arith.constant 32 : index
    %c0_11 = arith.constant 0 : index
    %10 = vector.load %arg1[%c0_10, %c32, %c0_11] : memref<1x704x16xbf16, #tpu.memory_space<vmem>>, vector<1x64x16xbf16>
    %11 = vector.shape_cast %10 : vector<1x64x16xbf16> to vector<64x16xbf16>
    %c1 = arith.constant 1 : index
    %c0_12 = arith.constant 0 : index
    %c0_13 = arith.constant 0 : index
    %12 = vector.load %arg2[%c1, %c0_12, %c0_13] : memref<3x16x256xbf16, #tpu.memory_space<vmem>>, vector<1x16x256xbf16>
    %13 = vector.shape_cast %12 : vector<1x16x256xbf16> to vector<16x256xbf16>
    %cst_14 = arith.constant dense<0.000000e+00> : vector<64x256xf32>
    %14 = tpu.matmul %11, %13, %cst_14 {dimension_numbers = #tpu.dot_dimension_numbers<[1], [0], [0], [1], [0, 0, 1, 1], [], []>} : vector<64x16xbf16>, vector<16x256xbf16>, vector<64x256xf32> -> vector<64x256xf32>
    %15 = arith.addf %9, %14 : vector<64x256xf32>
    %c0_15 = arith.constant 0 : index
    %c64 = arith.constant 64 : index
    %c0_16 = arith.constant 0 : index
    %16 = vector.load %arg1[%c0_15, %c64, %c0_16] : memref<1x704x16xbf16, #tpu.memory_space<vmem>>, vector<1x64x16xbf16>
    %17 = vector.shape_cast %16 : vector<1x64x16xbf16> to vector<64x16xbf16>
    %c2 = arith.constant 2 : index
    %c0_17 = arith.constant 0 : index
    %c0_18 = arith.constant 0 : index
    %18 = vector.load %arg2[%c2, %c0_17, %c0_18] : memref<3x16x256xbf16, #tpu.memory_space<vmem>>, vector<1x16x256xbf16>
    %19 = vector.shape_cast %18 : vector<1x16x256xbf16> to vector<16x256xbf16>
    %cst_19 = arith.constant dense<0.000000e+00> : vector<64x256xf32>
    %20 = tpu.matmul %17, %19, %cst_19 {dimension_numbers = #tpu.dot_dimension_numbers<[1], [0], [0], [1], [0, 0, 1, 1], [], []>} : vector<64x16xbf16>, vector<16x256xbf16>, vector<64x256xf32> -> vector<64x256xf32>
    %21 = arith.addf %15, %20 : vector<64x256xf32>
    %c0_20 = arith.constant 0 : index
    %c0_21 = arith.constant 0 : index
    %22 = vector.load %arg3[%c0_20, %c0_21] : memref<1x256xf32, #tpu.memory_space<vmem>>, vector<1x256xf32>
    %23 = vector.broadcast %22 : vector<1x256xf32> to vector<64x256xf32>
    %24 = arith.addf %21, %23 : vector<64x256xf32>
    %25 = math.tanh %24 : vector<64x256xf32>
    %26 = vector.extract_strided_slice %25 {offsets = [0, 0], sizes = [64, 128], strides = [1, 1]} : vector<64x256xf32> to vector<64x128xf32>
    %27 = vector.extract_strided_slice %25 {offsets = [0, 128], sizes = [64, 128], strides = [1, 1]} : vector<64x256xf32> to vector<64x128xf32>
    %28 = arith.maximumf %26, %27 : vector<64x128xf32>
    %29 = vector.extract_strided_slice %28 {offsets = [0, 0], sizes = [32, 128], strides = [1, 1]} : vector<64x128xf32> to vector<32x128xf32>
    %30 = vector.extract_strided_slice %28 {offsets = [32, 0], sizes = [32, 128], strides = [1, 1]} : vector<64x128xf32> to vector<32x128xf32>
    %31 = arith.maximumf %29, %30 : vector<32x128xf32>
    %32 = arith.truncf %31 : vector<32x128xf32> to vector<32x128xbf16>
    %c32_22 = arith.constant 32 : index
    %c0_23 = arith.constant 0 : index
    %33 = vector.load %arg11[%c32_22, %c0_23] : memref<384x128xbf16, #tpu.memory_space<vmem>>, vector<32x128xbf16>
    tpu.vector_store %arg11[%c32_22, %c0_23], %32 {strides = array<i32>} : memref<384x128xbf16, #tpu.memory_space<vmem>>, vector<32x128xbf16>,
    %cst_24 = arith.constant 0.000000e+00 : f32
    %34 = vector.broadcast %cst_24 : f32 to vector<64x256xf32>
    %c0_25 = arith.constant 0 : index
    %c64_26 = arith.constant 64 : index
    %c0_27 = arith.constant 0 : index
    %35 = vector.load %arg1[%c0_25, %c64_26, %c0_27] : memref<1x704x16xbf16, #tpu.memory_space<vmem>>, vector<1x64x16xbf16>
    %36 = vector.shape_cast %35 : vector<1x64x16xbf16> to vector<64x16xbf16>
    %c0_28 = arith.constant 0 : index
    %c0_29 = arith.constant 0 : index
    %c0_30 = arith.constant 0 : index
    %37 = vector.load %arg2[%c0_28, %c0_29, %c0_30] : memref<3x16x256xbf16, #tpu.memory_space<vmem>>, vector<1x16x256xbf16>
    %38 = vector.shape_cast %37 : vector<1x16x256xbf16> to vector<16x256xbf16>
    %cst_31 = arith.constant dense<0.000000e+00> : vector<64x256xf32>
    %39 = tpu.matmul %36, %38, %cst_31 {dimension_numbers = #tpu.dot_dimension_numbers<[1], [0], [0], [1], [0, 0, 1, 1], [], []>} : vector<64x16xbf16>, vector<16x256xbf16>, vector<64x256xf32> -> vector<64x256xf32>
    %40 = arith.addf %34, %39 : vector<64x256xf32>
    %c0_32 = arith.constant 0 : index
    %c96 = arith.constant 96 : index
    %c0_33 = arith.constant 0 : index
    %41 = vector.load %arg1[%c0_32, %c96, %c0_33] : memref<1x704x16xbf16, #tpu.memory_space<vmem>>, vector<1x64x16xbf16>
    %42 = vector.shape_cast %41 : vector<1x64x16xbf16> to vector<64x16xbf16>
    %c1_34 = arith.constant 1 : index
    %c0_35 = arith.constant 0 : index
    %c0_36 = arith.constant 0 : index
    %43 = vector.load %arg2[%c1_34, %c0_35, %c0_36] : memref<3x16x256xbf16, #tpu.memory_space<vmem>>, vector<1x16x256xbf16>
    %44 = vector.shape_cast %43 : vector<1x16x256xbf16> to vector<16x256xbf16>
    %cst_37 = arith.constant dense<0.000000e+00> : vector<64x256xf32>
    %45 = tpu.matmul %42, %44, %cst_37 {dimension_numbers = #tpu.dot_dimension_numbers<[1], [0], [0], [1], [0, 0, 1, 1], [], []>} : vector<64x16xbf16>, vector<16x256xbf16>, vector<64x256xf32> -> vector<64x256xf32>
    %46 = arith.addf %40, %45 : vector<64x256xf32>
    %c0_38 = arith.constant 0 : index
    %c128 = arith.constant 128 : index
    %c0_39 = arith.constant 0 : index
    %47 = vector.load %arg1[%c0_38, %c128, %c0_39] : memref<1x704x16xbf16, #tpu.memory_space<vmem>>, vector<1x64x16xbf16>
    %48 = vector.shape_cast %47 : vector<1x64x16xbf16> to vector<64x16xbf16>
    %c2_40 = arith.constant 2 : index
    %c0_41 = arith.constant 0 : index
    %c0_42 = arith.constant 0 : index
    %49 = vector.load %arg2[%c2_40, %c0_41, %c0_42] : memref<3x16x256xbf16, #tpu.memory_space<vmem>>, vector<1x16x256xbf16>
    %50 = vector.shape_cast %49 : vector<1x16x256xbf16> to vector<16x256xbf16>
    %cst_43 = arith.constant dense<0.000000e+00> : vector<64x256xf32>
    %51 = tpu.matmul %48, %50, %cst_43 {dimension_numbers = #tpu.dot_dimension_numbers<[1], [0], [0], [1], [0, 0, 1, 1], [], []>} : vector<64x16xbf16>, vector<16x256xbf16>, vector<64x256xf32> -> vector<64x256xf32>
    %52 = arith.addf %46, %51 : vector<64x256xf32>
    %c0_44 = arith.constant 0 : index
    %c0_45 = arith.constant 0 : index
    %53 = vector.load %arg3[%c0_44, %c0_45] : memref<1x256xf32, #tpu.memory_space<vmem>>, vector<1x256xf32>
    %54 = vector.broadcast %53 : vector<1x256xf32> to vector<64x256xf32>
    %55 = arith.addf %52, %54 : vector<64x256xf32>
    %56 = math.tanh %55 : vector<64x256xf32>
    %57 = vector.extract_strided_slice %56 {offsets = [0, 0], sizes = [64, 128], strides = [1, 1]} : vector<64x256xf32> to vector<64x128xf32>
    %58 = vector.extract_strided_slice %56 {offsets = [0, 128], sizes = [64, 128], strides = [1, 1]} : vector<64x256xf32> to vector<64x128xf32>
    %59 = arith.maximumf %57, %58 : vector<64x128xf32>
    %60 = vector.extract_strided_slice %59 {offsets = [0, 0], sizes = [32, 128], strides = [1, 1]} : vector<64x128xf32> to vector<32x128xf32>
    %61 = vector.extract_strided_slice %59 {offsets = [32, 0], sizes = [32, 128], strides = [1, 1]} : vector<64x128xf32> to vector<32x128xf32>
    %62 = arith.maximumf %60, %61 : vector<32x128xf32>
    %63 = arith.truncf %62 : vector<32x128xf32> to vector<32x128xbf16>
    %c64_46 = arith.constant 64 : index
    %c0_47 = arith.constant 0 : index
    %64 = vector.load %arg11[%c64_46, %c0_47] : memref<384x128xbf16, #tpu.memory_space<vmem>>, vector<32x128xbf16>
    tpu.vector_store %arg11[%c64_46, %c0_47], %63 {strides = array<i32>} : memref<384x128xbf16, #tpu.memory_space<vmem>>, vector<32x128xbf16>,
    %cst_48 = arith.constant 0.000000e+00 : f32
    %65 = vector.broadcast %cst_48 : f32 to vector<64x256xf32>
    %c0_49 = arith.constant 0 : index
    %c128_50 = arith.constant 128 : index
    %c0_51 = arith.constant 0 : index
    %66 = vector.load %arg1[%c0_49, %c128_50, %c0_51] : memref<1x704x16xbf16, #tpu.memory_space<vmem>>, vector<1x64x16xbf16>
    %67 = vector.shape_cast %66 : vector<1x64x16xbf16> to vector<64x16xbf16>
    %c0_52 = arith.constant 0 : index
    %c0_53 = arith.constant 0 : index
    %c0_54 = arith.constant 0 : index
    %68 = vector.load %arg2[%c0_52, %c0_53, %c0_54] : memref<3x16x256xbf16, #tpu.memory_space<vmem>>, vector<1x16x256xbf16>
    %69 = vector.shape_cast %68 : vector<1x16x256xbf16> to vector<16x256xbf16>
    %cst_55 = arith.constant dense<0.000000e+00> : vector<64x256xf32>
    %70 = tpu.matmul %67, %69, %cst_55 {dimension_numbers = #tpu.dot_dimension_numbers<[1], [0], [0], [1], [0, 0, 1, 1], [], []>} : vector<64x16xbf16>, vector<16x256xbf16>, vector<64x256xf32> -> vector<64x256xf32>
    %71 = arith.addf %65, %70 : vector<64x256xf32>
    %c0_56 = arith.constant 0 : index
    %c160 = arith.constant 160 : index
    %c0_57 = arith.constant 0 : index
    %72 = vector.load %arg1[%c0_56, %c160, %c0_57] : memref<1x704x16xbf16, #tpu.memory_space<vmem>>, vector<1x64x16xbf16>
    %73 = vector.shape_cast %72 : vector<1x64x16xbf16> to vector<64x16xbf16>
    %c1_58 = arith.constant 1 : index
    %c0_59 = arith.constant 0 : index
    %c0_60 = arith.constant 0 : index
    %74 = vector.load %arg2[%c1_58, %c0_59, %c0_60] : memref<3x16x256xbf16, #tpu.memory_space<vmem>>, vector<1x16x256xbf16>
    %75 = vector.shape_cast %74 : vector<1x16x256xbf16> to vector<16x256xbf16>
    %cst_61 = arith.constant dense<0.000000e+00> : vector<64x256xf32>
    %76 = tpu.matmul %73, %75, %cst_61 {dimension_numbers = #tpu.dot_dimension_numbers<[1], [0], [0], [1], [0, 0, 1, 1], [], []>} : vector<64x16xbf16>, vector<16x256xbf16>, vector<64x256xf32> -> vector<64x256xf32>
    %77 = arith.addf %71, %76 : vector<64x256xf32>
    %c0_62 = arith.constant 0 : index
    %c192 = arith.constant 192 : index
    %c0_63 = arith.constant 0 : index
    %78 = vector.load %arg1[%c0_62, %c192, %c0_63] : memref<1x704x16xbf16, #tpu.memory_space<vmem>>, vector<1x64x16xbf16>
    %79 = vector.shape_cast %78 : vector<1x64x16xbf16> to vector<64x16xbf16>
    %c2_64 = arith.constant 2 : index
    %c0_65 = arith.constant 0 : index
    %c0_66 = arith.constant 0 : index
    %80 = vector.load %arg2[%c2_64, %c0_65, %c0_66] : memref<3x16x256xbf16, #tpu.memory_space<vmem>>, vector<1x16x256xbf16>
    %81 = vector.shape_cast %80 : vector<1x16x256xbf16> to vector<16x256xbf16>
    %cst_67 = arith.constant dense<0.000000e+00> : vector<64x256xf32>
    %82 = tpu.matmul %79, %81, %cst_67 {dimension_numbers = #tpu.dot_dimension_numbers<[1], [0], [0], [1], [0, 0, 1, 1], [], []>} : vector<64x16xbf16>, vector<16x256xbf16>, vector<64x256xf32> -> vector<64x256xf32>
    %83 = arith.addf %77, %82 : vector<64x256xf32>
    %c0_68 = arith.constant 0 : index
    %c0_69 = arith.constant 0 : index
    %84 = vector.load %arg3[%c0_68, %c0_69] : memref<1x256xf32, #tpu.memory_space<vmem>>, vector<1x256xf32>
    %85 = vector.broadcast %84 : vector<1x256xf32> to vector<64x256xf32>
    %86 = arith.addf %83, %85 : vector<64x256xf32>
    %87 = math.tanh %86 : vector<64x256xf32>
    %88 = vector.extract_strided_slice %87 {offsets = [0, 0], sizes = [64, 128], strides = [1, 1]} : vector<64x256xf32> to vector<64x128xf32>
    %89 = vector.extract_strided_slice %87 {offsets = [0, 128], sizes = [64, 128], strides = [1, 1]} : vector<64x256xf32> to vector<64x128xf32>
    %90 = arith.maximumf %88, %89 : vector<64x128xf32>
    %91 = vector.extract_strided_slice %90 {offsets = [0, 0], sizes = [32, 128], strides = [1, 1]} : vector<64x128xf32> to vector<32x128xf32>
    %92 = vector.extract_strided_slice %90 {offsets = [32, 0], sizes = [32, 128], strides = [1, 1]} : vector<64x128xf32> to vector<32x128xf32>
    %93 = arith.maximumf %91, %92 : vector<32x128xf32>
    %94 = arith.truncf %93 : vector<32x128xf32> to vector<32x128xbf16>
    %c96_70 = arith.constant 96 : index
    %c0_71 = arith.constant 0 : index
    %95 = vector.load %arg11[%c96_70, %c0_71] : memref<384x128xbf16, #tpu.memory_space<vmem>>, vector<32x128xbf16>
    tpu.vector_store %arg11[%c96_70, %c0_71], %94 {strides = array<i32>} : memref<384x128xbf16, #tpu.memory_space<vmem>>, vector<32x128xbf16>,
    %cst_72 = arith.constant 0.000000e+00 : f32
    %96 = vector.broadcast %cst_72 : f32 to vector<64x256xf32>
    %c0_73 = arith.constant 0 : index
    %c192_74 = arith.constant 192 : index
    %c0_75 = arith.constant 0 : index
    %97 = vector.load %arg1[%c0_73, %c192_74, %c0_75] : memref<1x704x16xbf16, #tpu.memory_space<vmem>>, vector<1x64x16xbf16>
    %98 = vector.shape_cast %97 : vector<1x64x16xbf16> to vector<64x16xbf16>
    %c0_76 = arith.constant 0 : index
    %c0_77 = arith.constant 0 : index
    %c0_78 = arith.constant 0 : index
    %99 = vector.load %arg2[%c0_76, %c0_77, %c0_78] : memref<3x16x256xbf16, #tpu.memory_space<vmem>>, vector<1x16x256xbf16>
    %100 = vector.shape_cast %99 : vector<1x16x256xbf16> to vector<16x256xbf16>
    %cst_79 = arith.constant dense<0.000000e+00> : vector<64x256xf32>
    %101 = tpu.matmul %98, %100, %cst_79 {dimension_numbers = #tpu.dot_dimension_numbers<[1], [0], [0], [1], [0, 0, 1, 1], [], []>} : vector<64x16xbf16>, vector<16x256xbf16>, vector<64x256xf32> -> vector<64x256xf32>
    %102 = arith.addf %96, %101 : vector<64x256xf32>
    %c0_80 = arith.constant 0 : index
    %c224 = arith.constant 224 : index
    %c0_81 = arith.constant 0 : index
    %103 = vector.load %arg1[%c0_80, %c224, %c0_81] : memref<1x704x16xbf16, #tpu.memory_space<vmem>>, vector<1x64x16xbf16>
    %104 = vector.shape_cast %103 : vector<1x64x16xbf16> to vector<64x16xbf16>
    %c1_82 = arith.constant 1 : index
    %c0_83 = arith.constant 0 : index
    %c0_84 = arith.constant 0 : index
    %105 = vector.load %arg2[%c1_82, %c0_83, %c0_84] : memref<3x16x256xbf16, #tpu.memory_space<vmem>>, vector<1x16x256xbf16>
    %106 = vector.shape_cast %105 : vector<1x16x256xbf16> to vector<16x256xbf16>
    %cst_85 = arith.constant dense<0.000000e+00> : vector<64x256xf32>
    %107 = tpu.matmul %104, %106, %cst_85 {dimension_numbers = #tpu.dot_dimension_numbers<[1], [0], [0], [1], [0, 0, 1, 1], [], []>} : vector<64x16xbf16>, vector<16x256xbf16>, vector<64x256xf32> -> vector<64x256xf32>
    %108 = arith.addf %102, %107 : vector<64x256xf32>
    %c0_86 = arith.constant 0 : index
    %c256 = arith.constant 256 : index
    %c0_87 = arith.constant 0 : index
    %109 = vector.load %arg1[%c0_86, %c256, %c0_87] : memref<1x704x16xbf16, #tpu.memory_space<vmem>>, vector<1x64x16xbf16>
    %110 = vector.shape_cast %109 : vector<1x64x16xbf16> to vector<64x16xbf16>
    %c2_88 = arith.constant 2 : index
    %c0_89 = arith.constant 0 : index
    %c0_90 = arith.constant 0 : index
    %111 = vector.load %arg2[%c2_88, %c0_89, %c0_90] : memref<3x16x256xbf16, #tpu.memory_space<vmem>>, vector<1x16x256xbf16>
    %112 = vector.shape_cast %111 : vector<1x16x256xbf16> to vector<16x256xbf16>
    %cst_91 = arith.constant dense<0.000000e+00> : vector<64x256xf32>
    %113 = tpu.matmul %110, %112, %cst_91 {dimension_numbers = #tpu.dot_dimension_numbers<[1], [0], [0], [1], [0, 0, 1, 1], [], []>} : vector<64x16xbf16>, vector<16x256xbf16>, vector<64x256xf32> -> vector<64x256xf32>
    %114 = arith.addf %108, %113 : vector<64x256xf32>
    %c0_92 = arith.constant 0 : index
    %c0_93 = arith.constant 0 : index
    %115 = vector.load %arg3[%c0_92, %c0_93] : memref<1x256xf32, #tpu.memory_space<vmem>>, vector<1x256xf32>
    %116 = vector.broadcast %115 : vector<1x256xf32> to vector<64x256xf32>
    %117 = arith.addf %114, %116 : vector<64x256xf32>
    %118 = math.tanh %117 : vector<64x256xf32>
    %119 = vector.extract_strided_slice %118 {offsets = [0, 0], sizes = [64, 128], strides = [1, 1]} : vector<64x256xf32> to vector<64x128xf32>
    %120 = vector.extract_strided_slice %118 {offsets = [0, 128], sizes = [64, 128], strides = [1, 1]} : vector<64x256xf32> to vector<64x128xf32>
    %121 = arith.maximumf %119, %120 : vector<64x128xf32>
    %122 = vector.extract_strided_slice %121 {offsets = [0, 0], sizes = [32, 128], strides = [1, 1]} : vector<64x128xf32> to vector<32x128xf32>
    %123 = vector.extract_strided_slice %121 {offsets = [32, 0], sizes = [32, 128], strides = [1, 1]} : vector<64x128xf32> to vector<32x128xf32>
    %124 = arith.maximumf %122, %123 : vector<32x128xf32>
    %125 = arith.truncf %124 : vector<32x128xf32> to vector<32x128xbf16>
    %c128_94 = arith.constant 128 : index
    %c0_95 = arith.constant 0 : index
    %126 = vector.load %arg11[%c128_94, %c0_95] : memref<384x128xbf16, #tpu.memory_space<vmem>>, vector<32x128xbf16>
    tpu.vector_store %arg11[%c128_94, %c0_95], %125 {strides = array<i32>} : memref<384x128xbf16, #tpu.memory_space<vmem>>, vector<32x128xbf16>,
    %cst_96 = arith.constant 0.000000e+00 : f32
    %127 = vector.broadcast %cst_96 : f32 to vector<64x256xf32>
    %c0_97 = arith.constant 0 : index
    %c256_98 = arith.constant 256 : index
    %c0_99 = arith.constant 0 : index
    %128 = vector.load %arg1[%c0_97, %c256_98, %c0_99] : memref<1x704x16xbf16, #tpu.memory_space<vmem>>, vector<1x64x16xbf16>
    %129 = vector.shape_cast %128 : vector<1x64x16xbf16> to vector<64x16xbf16>
    %c0_100 = arith.constant 0 : index
    %c0_101 = arith.constant 0 : index
    %c0_102 = arith.constant 0 : index
    %130 = vector.load %arg2[%c0_100, %c0_101, %c0_102] : memref<3x16x256xbf16, #tpu.memory_space<vmem>>, vector<1x16x256xbf16>
    %131 = vector.shape_cast %130 : vector<1x16x256xbf16> to vector<16x256xbf16>
    %cst_103 = arith.constant dense<0.000000e+00> : vector<64x256xf32>
    %132 = tpu.matmul %129, %131, %cst_103 {dimension_numbers = #tpu.dot_dimension_numbers<[1], [0], [0], [1], [0, 0, 1, 1], [], []>} : vector<64x16xbf16>, vector<16x256xbf16>, vector<64x256xf32> -> vector<64x256xf32>
    %133 = arith.addf %127, %132 : vector<64x256xf32>
    %c0_104 = arith.constant 0 : index
    %c288 = arith.constant 288 : index
    %c0_105 = arith.constant 0 : index
    %134 = vector.load %arg1[%c0_104, %c288, %c0_105] : memref<1x704x16xbf16, #tpu.memory_space<vmem>>, vector<1x64x16xbf16>
    %135 = vector.shape_cast %134 : vector<1x64x16xbf16> to vector<64x16xbf16>
    %c1_106 = arith.constant 1 : index
    %c0_107 = arith.constant 0 : index
    %c0_108 = arith.constant 0 : index
    %136 = vector.load %arg2[%c1_106, %c0_107, %c0_108] : memref<3x16x256xbf16, #tpu.memory_space<vmem>>, vector<1x16x256xbf16>
    %137 = vector.shape_cast %136 : vector<1x16x256xbf16> to vector<16x256xbf16>
    %cst_109 = arith.constant dense<0.000000e+00> : vector<64x256xf32>
    %138 = tpu.matmul %135, %137, %cst_109 {dimension_numbers = #tpu.dot_dimension_numbers<[1], [0], [0], [1], [0, 0, 1, 1], [], []>} : vector<64x16xbf16>, vector<16x256xbf16>, vector<64x256xf32> -> vector<64x256xf32>
    %139 = arith.addf %133, %138 : vector<64x256xf32>
    %c0_110 = arith.constant 0 : index
    %c320 = arith.constant 320 : index
    %c0_111 = arith.constant 0 : index
    %140 = vector.load %arg1[%c0_110, %c320, %c0_111] : memref<1x704x16xbf16, #tpu.memory_space<vmem>>, vector<1x64x16xbf16>
    %141 = vector.shape_cast %140 : vector<1x64x16xbf16> to vector<64x16xbf16>
    %c2_112 = arith.constant 2 : index
    %c0_113 = arith.constant 0 : index
    %c0_114 = arith.constant 0 : index
    %142 = vector.load %arg2[%c2_112, %c0_113, %c0_114] : memref<3x16x256xbf16, #tpu.memory_space<vmem>>, vector<1x16x256xbf16>
    %143 = vector.shape_cast %142 : vector<1x16x256xbf16> to vector<16x256xbf16>
    %cst_115 = arith.constant dense<0.000000e+00> : vector<64x256xf32>
    %144 = tpu.matmul %141, %143, %cst_115 {dimension_numbers = #tpu.dot_dimension_numbers<[1], [0], [0], [1], [0, 0, 1, 1], [], []>} : vector<64x16xbf16>, vector<16x256xbf16>, vector<64x256xf32> -> vector<64x256xf32>
    %145 = arith.addf %139, %144 : vector<64x256xf32>
    %c0_116 = arith.constant 0 : index
    %c0_117 = arith.constant 0 : index
    %146 = vector.load %arg3[%c0_116, %c0_117] : memref<1x256xf32, #tpu.memory_space<vmem>>, vector<1x256xf32>
    %147 = vector.broadcast %146 : vector<1x256xf32> to vector<64x256xf32>
    %148 = arith.addf %145, %147 : vector<64x256xf32>
    %149 = math.tanh %148 : vector<64x256xf32>
    %150 = vector.extract_strided_slice %149 {offsets = [0, 0], sizes = [64, 128], strides = [1, 1]} : vector<64x256xf32> to vector<64x128xf32>
    %151 = vector.extract_strided_slice %149 {offsets = [0, 128], sizes = [64, 128], strides = [1, 1]} : vector<64x256xf32> to vector<64x128xf32>
    %152 = arith.maximumf %150, %151 : vector<64x128xf32>
    %153 = vector.extract_strided_slice %152 {offsets = [0, 0], sizes = [32, 128], strides = [1, 1]} : vector<64x128xf32> to vector<32x128xf32>
    %154 = vector.extract_strided_slice %152 {offsets = [32, 0], sizes = [32, 128], strides = [1, 1]} : vector<64x128xf32> to vector<32x128xf32>
    %155 = arith.maximumf %153, %154 : vector<32x128xf32>
    %156 = arith.truncf %155 : vector<32x128xf32> to vector<32x128xbf16>
    %c160_118 = arith.constant 160 : index
    %c0_119 = arith.constant 0 : index
    %157 = vector.load %arg11[%c160_118, %c0_119] : memref<384x128xbf16, #tpu.memory_space<vmem>>, vector<32x128xbf16>
    tpu.vector_store %arg11[%c160_118, %c0_119], %156 {strides = array<i32>} : memref<384x128xbf16, #tpu.memory_space<vmem>>, vector<32x128xbf16>,
    %cst_120 = arith.constant 0.000000e+00 : f32
    %158 = vector.broadcast %cst_120 : f32 to vector<64x256xf32>
    %c0_121 = arith.constant 0 : index
    %c320_122 = arith.constant 320 : index
    %c0_123 = arith.constant 0 : index
    %159 = vector.load %arg1[%c0_121, %c320_122, %c0_123] : memref<1x704x16xbf16, #tpu.memory_space<vmem>>, vector<1x64x16xbf16>
    %160 = vector.shape_cast %159 : vector<1x64x16xbf16> to vector<64x16xbf16>
    %c0_124 = arith.constant 0 : index
    %c0_125 = arith.constant 0 : index
    %c0_126 = arith.constant 0 : index
    %161 = vector.load %arg2[%c0_124, %c0_125, %c0_126] : memref<3x16x256xbf16, #tpu.memory_space<vmem>>, vector<1x16x256xbf16>
    %162 = vector.shape_cast %161 : vector<1x16x256xbf16> to vector<16x256xbf16>
    %cst_127 = arith.constant dense<0.000000e+00> : vector<64x256xf32>
    %163 = tpu.matmul %160, %162, %cst_127 {dimension_numbers = #tpu.dot_dimension_numbers<[1], [0], [0], [1], [0, 0, 1, 1], [], []>} : vector<64x16xbf16>, vector<16x256xbf16>, vector<64x256xf32> -> vector<64x256xf32>
    %164 = arith.addf %158, %163 : vector<64x256xf32>
    %c0_128 = arith.constant 0 : index
    %c352_129 = arith.constant 352 : index
    %c0_130 = arith.constant 0 : index
    %165 = vector.load %arg1[%c0_128, %c352_129, %c0_130] : memref<1x704x16xbf16, #tpu.memory_space<vmem>>, vector<1x64x16xbf16>
    %166 = vector.shape_cast %165 : vector<1x64x16xbf16> to vector<64x16xbf16>
    %c1_131 = arith.constant 1 : index
    %c0_132 = arith.constant 0 : index
    %c0_133 = arith.constant 0 : index
    %167 = vector.load %arg2[%c1_131, %c0_132, %c0_133] : memref<3x16x256xbf16, #tpu.memory_space<vmem>>, vector<1x16x256xbf16>
    %168 = vector.shape_cast %167 : vector<1x16x256xbf16> to vector<16x256xbf16>
    %cst_134 = arith.constant dense<0.000000e+00> : vector<64x256xf32>
    %169 = tpu.matmul %166, %168, %cst_134 {dimension_numbers = #tpu.dot_dimension_numbers<[1], [0], [0], [1], [0, 0, 1, 1], [], []>} : vector<64x16xbf16>, vector<16x256xbf16>, vector<64x256xf32> -> vector<64x256xf32>
    %170 = arith.addf %164, %169 : vector<64x256xf32>
    %c0_135 = arith.constant 0 : index
    %c384 = arith.constant 384 : index
    %c0_136 = arith.constant 0 : index
    %171 = vector.load %arg1[%c0_135, %c384, %c0_136] : memref<1x704x16xbf16, #tpu.memory_space<vmem>>, vector<1x64x16xbf16>
    %172 = vector.shape_cast %171 : vector<1x64x16xbf16> to vector<64x16xbf16>
    %c2_137 = arith.constant 2 : index
    %c0_138 = arith.constant 0 : index
    %c0_139 = arith.constant 0 : index
    %173 = vector.load %arg2[%c2_137, %c0_138, %c0_139] : memref<3x16x256xbf16, #tpu.memory_space<vmem>>, vector<1x16x256xbf16>
    %174 = vector.shape_cast %173 : vector<1x16x256xbf16> to vector<16x256xbf16>
    %cst_140 = arith.constant dense<0.000000e+00> : vector<64x256xf32>
    %175 = tpu.matmul %172, %174, %cst_140 {dimension_numbers = #tpu.dot_dimension_numbers<[1], [0], [0], [1], [0, 0, 1, 1], [], []>} : vector<64x16xbf16>, vector<16x256xbf16>, vector<64x256xf32> -> vector<64x256xf32>
    %176 = arith.addf %170, %175 : vector<64x256xf32>
    %c0_141 = arith.constant 0 : index
    %c0_142 = arith.constant 0 : index
    %177 = vector.load %arg3[%c0_141, %c0_142] : memref<1x256xf32, #tpu.memory_space<vmem>>, vector<1x256xf32>
    %178 = vector.broadcast %177 : vector<1x256xf32> to vector<64x256xf32>
    %179 = arith.addf %176, %178 : vector<64x256xf32>
    %180 = math.tanh %179 : vector<64x256xf32>
    %181 = vector.extract_strided_slice %180 {offsets = [0, 0], sizes = [64, 128], strides = [1, 1]} : vector<64x256xf32> to vector<64x128xf32>
    %182 = vector.extract_strided_slice %180 {offsets = [0, 128], sizes = [64, 128], strides = [1, 1]} : vector<64x256xf32> to vector<64x128xf32>
    %183 = arith.maximumf %181, %182 : vector<64x128xf32>
    %184 = vector.extract_strided_slice %183 {offsets = [0, 0], sizes = [32, 128], strides = [1, 1]} : vector<64x128xf32> to vector<32x128xf32>
    %185 = vector.extract_strided_slice %183 {offsets = [32, 0], sizes = [32, 128], strides = [1, 1]} : vector<64x128xf32> to vector<32x128xf32>
    %186 = arith.maximumf %184, %185 : vector<32x128xf32>
    %187 = arith.truncf %186 : vector<32x128xf32> to vector<32x128xbf16>
    %c192_143 = arith.constant 192 : index
    %c0_144 = arith.constant 0 : index
    %188 = vector.load %arg11[%c192_143, %c0_144] : memref<384x128xbf16, #tpu.memory_space<vmem>>, vector<32x128xbf16>
    tpu.vector_store %arg11[%c192_143, %c0_144], %187 {strides = array<i32>} : memref<384x128xbf16, #tpu.memory_space<vmem>>, vector<32x128xbf16>,
    %cst_145 = arith.constant 0.000000e+00 : f32
    %189 = vector.broadcast %cst_145 : f32 to vector<64x256xf32>
    %c0_146 = arith.constant 0 : index
    %c384_147 = arith.constant 384 : index
    %c0_148 = arith.constant 0 : index
    %190 = vector.load %arg1[%c0_146, %c384_147, %c0_148] : memref<1x704x16xbf16, #tpu.memory_space<vmem>>, vector<1x64x16xbf16>
    %191 = vector.shape_cast %190 : vector<1x64x16xbf16> to vector<64x16xbf16>
    %c0_149 = arith.constant 0 : index
    %c0_150 = arith.constant 0 : index
    %c0_151 = arith.constant 0 : index
    %192 = vector.load %arg2[%c0_149, %c0_150, %c0_151] : memref<3x16x256xbf16, #tpu.memory_space<vmem>>, vector<1x16x256xbf16>
    %193 = vector.shape_cast %192 : vector<1x16x256xbf16> to vector<16x256xbf16>
    %cst_152 = arith.constant dense<0.000000e+00> : vector<64x256xf32>
    %194 = tpu.matmul %191, %193, %cst_152 {dimension_numbers = #tpu.dot_dimension_numbers<[1], [0], [0], [1], [0, 0, 1, 1], [], []>} : vector<64x16xbf16>, vector<16x256xbf16>, vector<64x256xf32> -> vector<64x256xf32>
    %195 = arith.addf %189, %194 : vector<64x256xf32>
    %c0_153 = arith.constant 0 : index
    %c416 = arith.constant 416 : index
    %c0_154 = arith.constant 0 : index
    %196 = vector.load %arg1[%c0_153, %c416, %c0_154] : memref<1x704x16xbf16, #tpu.memory_space<vmem>>, vector<1x64x16xbf16>
    %197 = vector.shape_cast %196 : vector<1x64x16xbf16> to vector<64x16xbf16>
    %c1_155 = arith.constant 1 : index
    %c0_156 = arith.constant 0 : index
    %c0_157 = arith.constant 0 : index
    %198 = vector.load %arg2[%c1_155, %c0_156, %c0_157] : memref<3x16x256xbf16, #tpu.memory_space<vmem>>, vector<1x16x256xbf16>
    %199 = vector.shape_cast %198 : vector<1x16x256xbf16> to vector<16x256xbf16>
    %cst_158 = arith.constant dense<0.000000e+00> : vector<64x256xf32>
    %200 = tpu.matmul %197, %199, %cst_158 {dimension_numbers = #tpu.dot_dimension_numbers<[1], [0], [0], [1], [0, 0, 1, 1], [], []>} : vector<64x16xbf16>, vector<16x256xbf16>, vector<64x256xf32> -> vector<64x256xf32>
    %201 = arith.addf %195, %200 : vector<64x256xf32>
    %c0_159 = arith.constant 0 : index
    %c448 = arith.constant 448 : index
    %c0_160 = arith.constant 0 : index
    %202 = vector.load %arg1[%c0_159, %c448, %c0_160] : memref<1x704x16xbf16, #tpu.memory_space<vmem>>, vector<1x64x16xbf16>
    %203 = vector.shape_cast %202 : vector<1x64x16xbf16> to vector<64x16xbf16>
    %c2_161 = arith.constant 2 : index
    %c0_162 = arith.constant 0 : index
    %c0_163 = arith.constant 0 : index
    %204 = vector.load %arg2[%c2_161, %c0_162, %c0_163] : memref<3x16x256xbf16, #tpu.memory_space<vmem>>, vector<1x16x256xbf16>
    %205 = vector.shape_cast %204 : vector<1x16x256xbf16> to vector<16x256xbf16>
    %cst_164 = arith.constant dense<0.000000e+00> : vector<64x256xf32>
    %206 = tpu.matmul %203, %205, %cst_164 {dimension_numbers = #tpu.dot_dimension_numbers<[1], [0], [0], [1], [0, 0, 1, 1], [], []>} : vector<64x16xbf16>, vector<16x256xbf16>, vector<64x256xf32> -> vector<64x256xf32>
    %207 = arith.addf %201, %206 : vector<64x256xf32>
    %c0_165 = arith.constant 0 : index
    %c0_166 = arith.constant 0 : index
    %208 = vector.load %arg3[%c0_165, %c0_166] : memref<1x256xf32, #tpu.memory_space<vmem>>, vector<1x256xf32>
    %209 = vector.broadcast %208 : vector<1x256xf32> to vector<64x256xf32>
    %210 = arith.addf %207, %209 : vector<64x256xf32>
    %211 = math.tanh %210 : vector<64x256xf32>
    %212 = vector.extract_strided_slice %211 {offsets = [0, 0], sizes = [64, 128], strides = [1, 1]} : vector<64x256xf32> to vector<64x128xf32>
    %213 = vector.extract_strided_slice %211 {offsets = [0, 128], sizes = [64, 128], strides = [1, 1]} : vector<64x256xf32> to vector<64x128xf32>
    %214 = arith.maximumf %212, %213 : vector<64x128xf32>
    %215 = vector.extract_strided_slice %214 {offsets = [0, 0], sizes = [32, 128], strides = [1, 1]} : vector<64x128xf32> to vector<32x128xf32>
    %216 = vector.extract_strided_slice %214 {offsets = [32, 0], sizes = [32, 128], strides = [1, 1]} : vector<64x128xf32> to vector<32x128xf32>
    %217 = arith.maximumf %215, %216 : vector<32x128xf32>
    %218 = arith.truncf %217 : vector<32x128xf32> to vector<32x128xbf16>
    %c224_167 = arith.constant 224 : index
    %c0_168 = arith.constant 0 : index
    %219 = vector.load %arg11[%c224_167, %c0_168] : memref<384x128xbf16, #tpu.memory_space<vmem>>, vector<32x128xbf16>
    tpu.vector_store %arg11[%c224_167, %c0_168], %218 {strides = array<i32>} : memref<384x128xbf16, #tpu.memory_space<vmem>>, vector<32x128xbf16>,
    %cst_169 = arith.constant 0.000000e+00 : f32
    %220 = vector.broadcast %cst_169 : f32 to vector<64x256xf32>
    %c0_170 = arith.constant 0 : index
    %c448_171 = arith.constant 448 : index
    %c0_172 = arith.constant 0 : index
    %221 = vector.load %arg1[%c0_170, %c448_171, %c0_172] : memref<1x704x16xbf16, #tpu.memory_space<vmem>>, vector<1x64x16xbf16>
    %222 = vector.shape_cast %221 : vector<1x64x16xbf16> to vector<64x16xbf16>
    %c0_173 = arith.constant 0 : index
    %c0_174 = arith.constant 0 : index
    %c0_175 = arith.constant 0 : index
    %223 = vector.load %arg2[%c0_173, %c0_174, %c0_175] : memref<3x16x256xbf16, #tpu.memory_space<vmem>>, vector<1x16x256xbf16>
    %224 = vector.shape_cast %223 : vector<1x16x256xbf16> to vector<16x256xbf16>
    %cst_176 = arith.constant dense<0.000000e+00> : vector<64x256xf32>
    %225 = tpu.matmul %222, %224, %cst_176 {dimension_numbers = #tpu.dot_dimension_numbers<[1], [0], [0], [1], [0, 0, 1, 1], [], []>} : vector<64x16xbf16>, vector<16x256xbf16>, vector<64x256xf32> -> vector<64x256xf32>
    %226 = arith.addf %220, %225 : vector<64x256xf32>
    %c0_177 = arith.constant 0 : index
    %c480 = arith.constant 480 : index
    %c0_178 = arith.constant 0 : index
    %227 = vector.load %arg1[%c0_177, %c480, %c0_178] : memref<1x704x16xbf16, #tpu.memory_space<vmem>>, vector<1x64x16xbf16>
    %228 = vector.shape_cast %227 : vector<1x64x16xbf16> to vector<64x16xbf16>
    %c1_179 = arith.constant 1 : index
    %c0_180 = arith.constant 0 : index
    %c0_181 = arith.constant 0 : index
    %229 = vector.load %arg2[%c1_179, %c0_180, %c0_181] : memref<3x16x256xbf16, #tpu.memory_space<vmem>>, vector<1x16x256xbf16>
    %230 = vector.shape_cast %229 : vector<1x16x256xbf16> to vector<16x256xbf16>
    %cst_182 = arith.constant dense<0.000000e+00> : vector<64x256xf32>
    %231 = tpu.matmul %228, %230, %cst_182 {dimension_numbers = #tpu.dot_dimension_numbers<[1], [0], [0], [1], [0, 0, 1, 1], [], []>} : vector<64x16xbf16>, vector<16x256xbf16>, vector<64x256xf32> -> vector<64x256xf32>
    %232 = arith.addf %226, %231 : vector<64x256xf32>
    %c0_183 = arith.constant 0 : index
    %c512 = arith.constant 512 : index
    %c0_184 = arith.constant 0 : index
    %233 = vector.load %arg1[%c0_183, %c512, %c0_184] : memref<1x704x16xbf16, #tpu.memory_space<vmem>>, vector<1x64x16xbf16>
    %234 = vector.shape_cast %233 : vector<1x64x16xbf16> to vector<64x16xbf16>
    %c2_185 = arith.constant 2 : index
    %c0_186 = arith.constant 0 : index
    %c0_187 = arith.constant 0 : index
    %235 = vector.load %arg2[%c2_185, %c0_186, %c0_187] : memref<3x16x256xbf16, #tpu.memory_space<vmem>>, vector<1x16x256xbf16>
    %236 = vector.shape_cast %235 : vector<1x16x256xbf16> to vector<16x256xbf16>
    %cst_188 = arith.constant dense<0.000000e+00> : vector<64x256xf32>
    %237 = tpu.matmul %234, %236, %cst_188 {dimension_numbers = #tpu.dot_dimension_numbers<[1], [0], [0], [1], [0, 0, 1, 1], [], []>} : vector<64x16xbf16>, vector<16x256xbf16>, vector<64x256xf32> -> vector<64x256xf32>
    %238 = arith.addf %232, %237 : vector<64x256xf32>
    %c0_189 = arith.constant 0 : index
    %c0_190 = arith.constant 0 : index
    %239 = vector.load %arg3[%c0_189, %c0_190] : memref<1x256xf32, #tpu.memory_space<vmem>>, vector<1x256xf32>
    %240 = vector.broadcast %239 : vector<1x256xf32> to vector<64x256xf32>
    %241 = arith.addf %238, %240 : vector<64x256xf32>
    %242 = math.tanh %241 : vector<64x256xf32>
    %243 = vector.extract_strided_slice %242 {offsets = [0, 0], sizes = [64, 128], strides = [1, 1]} : vector<64x256xf32> to vector<64x128xf32>
    %244 = vector.extract_strided_slice %242 {offsets = [0, 128], sizes = [64, 128], strides = [1, 1]} : vector<64x256xf32> to vector<64x128xf32>
    %245 = arith.maximumf %243, %244 : vector<64x128xf32>
    %246 = vector.extract_strided_slice %245 {offsets = [0, 0], sizes = [32, 128], strides = [1, 1]} : vector<64x128xf32> to vector<32x128xf32>
    %247 = vector.extract_strided_slice %245 {offsets = [32, 0], sizes = [32, 128], strides = [1, 1]} : vector<64x128xf32> to vector<32x128xf32>
    %248 = arith.maximumf %246, %247 : vector<32x128xf32>
    %249 = arith.truncf %248 : vector<32x128xf32> to vector<32x128xbf16>
    %c256_191 = arith.constant 256 : index
    %c0_192 = arith.constant 0 : index
    %250 = vector.load %arg11[%c256_191, %c0_192] : memref<384x128xbf16, #tpu.memory_space<vmem>>, vector<32x128xbf16>
    tpu.vector_store %arg11[%c256_191, %c0_192], %249 {strides = array<i32>} : memref<384x128xbf16, #tpu.memory_space<vmem>>, vector<32x128xbf16>,
    %cst_193 = arith.constant 0.000000e+00 : f32
    %251 = vector.broadcast %cst_193 : f32 to vector<64x256xf32>
    %c0_194 = arith.constant 0 : index
    %c512_195 = arith.constant 512 : index
    %c0_196 = arith.constant 0 : index
    %252 = vector.load %arg1[%c0_194, %c512_195, %c0_196] : memref<1x704x16xbf16, #tpu.memory_space<vmem>>, vector<1x64x16xbf16>
    %253 = vector.shape_cast %252 : vector<1x64x16xbf16> to vector<64x16xbf16>
    %c0_197 = arith.constant 0 : index
    %c0_198 = arith.constant 0 : index
    %c0_199 = arith.constant 0 : index
    %254 = vector.load %arg2[%c0_197, %c0_198, %c0_199] : memref<3x16x256xbf16, #tpu.memory_space<vmem>>, vector<1x16x256xbf16>
    %255 = vector.shape_cast %254 : vector<1x16x256xbf16> to vector<16x256xbf16>
    %cst_200 = arith.constant dense<0.000000e+00> : vector<64x256xf32>
    %256 = tpu.matmul %253, %255, %cst_200 {dimension_numbers = #tpu.dot_dimension_numbers<[1], [0], [0], [1], [0, 0, 1, 1], [], []>} : vector<64x16xbf16>, vector<16x256xbf16>, vector<64x256xf32> -> vector<64x256xf32>
    %257 = arith.addf %251, %256 : vector<64x256xf32>
    %c0_201 = arith.constant 0 : index
    %c544 = arith.constant 544 : index
    %c0_202 = arith.constant 0 : index
    %258 = vector.load %arg1[%c0_201, %c544, %c0_202] : memref<1x704x16xbf16, #tpu.memory_space<vmem>>, vector<1x64x16xbf16>
    %259 = vector.shape_cast %258 : vector<1x64x16xbf16> to vector<64x16xbf16>
    %c1_203 = arith.constant 1 : index
    %c0_204 = arith.constant 0 : index
    %c0_205 = arith.constant 0 : index
    %260 = vector.load %arg2[%c1_203, %c0_204, %c0_205] : memref<3x16x256xbf16, #tpu.memory_space<vmem>>, vector<1x16x256xbf16>
    %261 = vector.shape_cast %260 : vector<1x16x256xbf16> to vector<16x256xbf16>
    %cst_206 = arith.constant dense<0.000000e+00> : vector<64x256xf32>
    %262 = tpu.matmul %259, %261, %cst_206 {dimension_numbers = #tpu.dot_dimension_numbers<[1], [0], [0], [1], [0, 0, 1, 1], [], []>} : vector<64x16xbf16>, vector<16x256xbf16>, vector<64x256xf32> -> vector<64x256xf32>
    %263 = arith.addf %257, %262 : vector<64x256xf32>
    %c0_207 = arith.constant 0 : index
    %c576 = arith.constant 576 : index
    %c0_208 = arith.constant 0 : index
    %264 = vector.load %arg1[%c0_207, %c576, %c0_208] : memref<1x704x16xbf16, #tpu.memory_space<vmem>>, vector<1x64x16xbf16>
    %265 = vector.shape_cast %264 : vector<1x64x16xbf16> to vector<64x16xbf16>
    %c2_209 = arith.constant 2 : index
    %c0_210 = arith.constant 0 : index
    %c0_211 = arith.constant 0 : index
    %266 = vector.load %arg2[%c2_209, %c0_210, %c0_211] : memref<3x16x256xbf16, #tpu.memory_space<vmem>>, vector<1x16x256xbf16>
    %267 = vector.shape_cast %266 : vector<1x16x256xbf16> to vector<16x256xbf16>
    %cst_212 = arith.constant dense<0.000000e+00> : vector<64x256xf32>
    %268 = tpu.matmul %265, %267, %cst_212 {dimension_numbers = #tpu.dot_dimension_numbers<[1], [0], [0], [1], [0, 0, 1, 1], [], []>} : vector<64x16xbf16>, vector<16x256xbf16>, vector<64x256xf32> -> vector<64x256xf32>
    %269 = arith.addf %263, %268 : vector<64x256xf32>
    %c0_213 = arith.constant 0 : index
    %c0_214 = arith.constant 0 : index
    %270 = vector.load %arg3[%c0_213, %c0_214] : memref<1x256xf32, #tpu.memory_space<vmem>>, vector<1x256xf32>
    %271 = vector.broadcast %270 : vector<1x256xf32> to vector<64x256xf32>
    %272 = arith.addf %269, %271 : vector<64x256xf32>
    %273 = math.tanh %272 : vector<64x256xf32>
    %274 = vector.extract_strided_slice %273 {offsets = [0, 0], sizes = [64, 128], strides = [1, 1]} : vector<64x256xf32> to vector<64x128xf32>
    %275 = vector.extract_strided_slice %273 {offsets = [0, 128], sizes = [64, 128], strides = [1, 1]} : vector<64x256xf32> to vector<64x128xf32>
    %276 = arith.maximumf %274, %275 : vector<64x128xf32>
    %277 = vector.extract_strided_slice %276 {offsets = [0, 0], sizes = [32, 128], strides = [1, 1]} : vector<64x128xf32> to vector<32x128xf32>
    %278 = vector.extract_strided_slice %276 {offsets = [32, 0], sizes = [32, 128], strides = [1, 1]} : vector<64x128xf32> to vector<32x128xf32>
    %279 = arith.maximumf %277, %278 : vector<32x128xf32>
    %280 = arith.truncf %279 : vector<32x128xf32> to vector<32x128xbf16>
    %c288_215 = arith.constant 288 : index
    %c0_216 = arith.constant 0 : index
    %281 = vector.load %arg11[%c288_215, %c0_216] : memref<384x128xbf16, #tpu.memory_space<vmem>>, vector<32x128xbf16>
    tpu.vector_store %arg11[%c288_215, %c0_216], %280 {strides = array<i32>} : memref<384x128xbf16, #tpu.memory_space<vmem>>, vector<32x128xbf16>,
    %cst_217 = arith.constant 0.000000e+00 : f32
    %282 = vector.broadcast %cst_217 : f32 to vector<64x256xf32>
    %c0_218 = arith.constant 0 : index
    %c576_219 = arith.constant 576 : index
    %c0_220 = arith.constant 0 : index
    %283 = vector.load %arg1[%c0_218, %c576_219, %c0_220] : memref<1x704x16xbf16, #tpu.memory_space<vmem>>, vector<1x64x16xbf16>
    %284 = vector.shape_cast %283 : vector<1x64x16xbf16> to vector<64x16xbf16>
    %c0_221 = arith.constant 0 : index
    %c0_222 = arith.constant 0 : index
    %c0_223 = arith.constant 0 : index
    %285 = vector.load %arg2[%c0_221, %c0_222, %c0_223] : memref<3x16x256xbf16, #tpu.memory_space<vmem>>, vector<1x16x256xbf16>
    %286 = vector.shape_cast %285 : vector<1x16x256xbf16> to vector<16x256xbf16>
    %cst_224 = arith.constant dense<0.000000e+00> : vector<64x256xf32>
    %287 = tpu.matmul %284, %286, %cst_224 {dimension_numbers = #tpu.dot_dimension_numbers<[1], [0], [0], [1], [0, 0, 1, 1], [], []>} : vector<64x16xbf16>, vector<16x256xbf16>, vector<64x256xf32> -> vector<64x256xf32>
    %288 = arith.addf %282, %287 : vector<64x256xf32>
    %c0_225 = arith.constant 0 : index
    %c608 = arith.constant 608 : index
    %c0_226 = arith.constant 0 : index
    %289 = vector.load %arg1[%c0_225, %c608, %c0_226] : memref<1x704x16xbf16, #tpu.memory_space<vmem>>, vector<1x64x16xbf16>
    %290 = vector.shape_cast %289 : vector<1x64x16xbf16> to vector<64x16xbf16>
    %c1_227 = arith.constant 1 : index
    %c0_228 = arith.constant 0 : index
    %c0_229 = arith.constant 0 : index
    %291 = vector.load %arg2[%c1_227, %c0_228, %c0_229] : memref<3x16x256xbf16, #tpu.memory_space<vmem>>, vector<1x16x256xbf16>
    %292 = vector.shape_cast %291 : vector<1x16x256xbf16> to vector<16x256xbf16>
    %cst_230 = arith.constant dense<0.000000e+00> : vector<64x256xf32>
    %293 = tpu.matmul %290, %292, %cst_230 {dimension_numbers = #tpu.dot_dimension_numbers<[1], [0], [0], [1], [0, 0, 1, 1], [], []>} : vector<64x16xbf16>, vector<16x256xbf16>, vector<64x256xf32> -> vector<64x256xf32>
    %294 = arith.addf %288, %293 : vector<64x256xf32>
    %c0_231 = arith.constant 0 : index
    %c640 = arith.constant 640 : index
    %c0_232 = arith.constant 0 : index
    %295 = vector.load %arg1[%c0_231, %c640, %c0_232] : memref<1x704x16xbf16, #tpu.memory_space<vmem>>, vector<1x64x16xbf16>
    %296 = vector.shape_cast %295 : vector<1x64x16xbf16> to vector<64x16xbf16>
    %c2_233 = arith.constant 2 : index
    %c0_234 = arith.constant 0 : index
    %c0_235 = arith.constant 0 : index
    %297 = vector.load %arg2[%c2_233, %c0_234, %c0_235] : memref<3x16x256xbf16, #tpu.memory_space<vmem>>, vector<1x16x256xbf16>
    %298 = vector.shape_cast %297 : vector<1x16x256xbf16> to vector<16x256xbf16>
    %cst_236 = arith.constant dense<0.000000e+00> : vector<64x256xf32>
    %299 = tpu.matmul %296, %298, %cst_236 {dimension_numbers = #tpu.dot_dimension_numbers<[1], [0], [0], [1], [0, 0, 1, 1], [], []>} : vector<64x16xbf16>, vector<16x256xbf16>, vector<64x256xf32> -> vector<64x256xf32>
    %300 = arith.addf %294, %299 : vector<64x256xf32>
    %c0_237 = arith.constant 0 : index
    %c0_238 = arith.constant 0 : index
    %301 = vector.load %arg3[%c0_237, %c0_238] : memref<1x256xf32, #tpu.memory_space<vmem>>, vector<1x256xf32>
    %302 = vector.broadcast %301 : vector<1x256xf32> to vector<64x256xf32>
    %303 = arith.addf %300, %302 : vector<64x256xf32>
    %304 = math.tanh %303 : vector<64x256xf32>
    %305 = vector.extract_strided_slice %304 {offsets = [0, 0], sizes = [64, 128], strides = [1, 1]} : vector<64x256xf32> to vector<64x128xf32>
    %306 = vector.extract_strided_slice %304 {offsets = [0, 128], sizes = [64, 128], strides = [1, 1]} : vector<64x256xf32> to vector<64x128xf32>
    %307 = arith.maximumf %305, %306 : vector<64x128xf32>
    %308 = vector.extract_strided_slice %307 {offsets = [0, 0], sizes = [32, 128], strides = [1, 1]} : vector<64x128xf32> to vector<32x128xf32>
    %309 = vector.extract_strided_slice %307 {offsets = [32, 0], sizes = [32, 128], strides = [1, 1]} : vector<64x128xf32> to vector<32x128xf32>
    %310 = arith.maximumf %308, %309 : vector<32x128xf32>
    %311 = arith.truncf %310 : vector<32x128xf32> to vector<32x128xbf16>
    %c320_239 = arith.constant 320 : index
    %c0_240 = arith.constant 0 : index
    %312 = vector.load %arg11[%c320_239, %c0_240] : memref<384x128xbf16, #tpu.memory_space<vmem>>, vector<32x128xbf16>
    tpu.vector_store %arg11[%c320_239, %c0_240], %311 {strides = array<i32>} : memref<384x128xbf16, #tpu.memory_space<vmem>>, vector<32x128xbf16>,
    %cst_241 = arith.constant 0.000000e+00 : f32
    %313 = vector.broadcast %cst_241 : f32 to vector<32x256xf32>
    %c0_242 = arith.constant 0 : index
    %c0_243 = arith.constant 0 : index
    %314 = vector.load %arg12[%c0_242, %c0_243] : memref<32x256xf32, #tpu.memory_space<vmem>>, vector<32x256xf32>
    tpu.vector_store %arg12[%c0_242, %c0_243], %313 {strides = array<i32>} : memref<32x256xf32, #tpu.memory_space<vmem>>, vector<32x256xf32>,
    %cst_244 = arith.constant 0.000000e+00 : f32
    %315 = vector.broadcast %cst_244 : f32 to vector<64x256xf32>
    %c0_245 = arith.constant 0 : index
    %c0_246 = arith.constant 0 : index
    %316 = vector.load %arg11[%c0_245, %c0_246] : memref<384x128xbf16, #tpu.memory_space<vmem>>, vector<64x128xbf16>
    %c0_247 = arith.constant 0 : index
    %c0_248 = arith.constant 0 : index
    %c0_249 = arith.constant 0 : index
    %317 = vector.load %arg4[%c0_247, %c0_248, %c0_249] : memref<3x128x256xbf16, #tpu.memory_space<vmem>>, vector<1x128x256xbf16>
    %318 = vector.shape_cast %317 : vector<1x128x256xbf16> to vector<128x256xbf16>
    %cst_250 = arith.constant dense<0.000000e+00> : vector<64x256xf32>
    %319 = tpu.matmul %316, %318, %cst_250 {dimension_numbers = #tpu.dot_dimension_numbers<[1], [0], [0], [1], [0, 0, 1, 1], [], []>} : vector<64x128xbf16>, vector<128x256xbf16>, vector<64x256xf32> -> vector<64x256xf32>
    %320 = arith.addf %315, %319 : vector<64x256xf32>
    %c32_251 = arith.constant 32 : index
    %c0_252 = arith.constant 0 : index
    %321 = vector.load %arg11[%c32_251, %c0_252] : memref<384x128xbf16, #tpu.memory_space<vmem>>, vector<64x128xbf16>
    %c1_253 = arith.constant 1 : index
    %c0_254 = arith.constant 0 : index
    %c0_255 = arith.constant 0 : index
    %322 = vector.load %arg4[%c1_253, %c0_254, %c0_255] : memref<3x128x256xbf16, #tpu.memory_space<vmem>>, vector<1x128x256xbf16>
    %323 = vector.shape_cast %322 : vector<1x128x256xbf16> to vector<128x256xbf16>
    %cst_256 = arith.constant dense<0.000000e+00> : vector<64x256xf32>
    %324 = tpu.matmul %321, %323, %cst_256 {dimension_numbers = #tpu.dot_dimension_numbers<[1], [0], [0], [1], [0, 0, 1, 1], [], []>} : vector<64x128xbf16>, vector<128x256xbf16>, vector<64x256xf32> -> vector<64x256xf32>
    %325 = arith.addf %320, %324 : vector<64x256xf32>
    %c64_257 = arith.constant 64 : index
    %c0_258 = arith.constant 0 : index
    %326 = vector.load %arg11[%c64_257, %c0_258] : memref<384x128xbf16, #tpu.memory_space<vmem>>, vector<64x128xbf16>
    %c2_259 = arith.constant 2 : index
    %c0_260 = arith.constant 0 : index
    %c0_261 = arith.constant 0 : index
    %327 = vector.load %arg4[%c2_259, %c0_260, %c0_261] : memref<3x128x256xbf16, #tpu.memory_space<vmem>>, vector<1x128x256xbf16>
    %328 = vector.shape_cast %327 : vector<1x128x256xbf16> to vector<128x256xbf16>
    %cst_262 = arith.constant dense<0.000000e+00> : vector<64x256xf32>
    %329 = tpu.matmul %326, %328, %cst_262 {dimension_numbers = #tpu.dot_dimension_numbers<[1], [0], [0], [1], [0, 0, 1, 1], [], []>} : vector<64x128xbf16>, vector<128x256xbf16>, vector<64x256xf32> -> vector<64x256xf32>
    %330 = arith.addf %325, %329 : vector<64x256xf32>
    %c0_263 = arith.constant 0 : index
    %c0_264 = arith.constant 0 : index
    %331 = vector.load %arg5[%c0_263, %c0_264] : memref<1x256xf32, #tpu.memory_space<vmem>>, vector<1x256xf32>
    %332 = vector.broadcast %331 : vector<1x256xf32> to vector<64x256xf32>
    %333 = arith.addf %330, %332 : vector<64x256xf32>
    %334 = math.tanh %333 : vector<64x256xf32>
    %335 = vector.extract_strided_slice %334 {offsets = [0, 0], sizes = [64, 128], strides = [1, 1]} : vector<64x256xf32> to vector<64x128xf32>
    %336 = vector.extract_strided_slice %334 {offsets = [0, 128], sizes = [64, 128], strides = [1, 1]} : vector<64x256xf32> to vector<64x128xf32>
    %337 = arith.maximumf %335, %336 : vector<64x128xf32>
    %338 = vector.extract_strided_slice %337 {offsets = [0, 0], sizes = [32, 128], strides = [1, 1]} : vector<64x128xf32> to vector<32x128xf32>
    %339 = vector.extract_strided_slice %337 {offsets = [32, 0], sizes = [32, 128], strides = [1, 1]} : vector<64x128xf32> to vector<32x128xf32>
    %340 = arith.maximumf %338, %339 : vector<32x128xf32>
    %c0_265 = arith.constant 0 : index
    %c0_266 = arith.constant 0 : index
    %341 = vector.load %arg12[%c0_265, %c0_266] : memref<32x256xf32, #tpu.memory_space<vmem>>, vector<32x256xf32>
    %c0_267 = arith.constant 0 : index
    %c0_268 = arith.constant 0 : index
    %c0_269 = arith.constant 0 : index
    %342 = vector.load %arg6[%c0_267, %c0_268, %c0_269] : memref<5x128x256xf32, #tpu.memory_space<vmem>>, vector<1x128x256xf32>
    %343 = vector.shape_cast %342 : vector<1x128x256xf32> to vector<128x256xf32>
    %cst_270 = arith.constant dense<0.000000e+00> : vector<32x256xf32>
    %344 = tpu.matmul %340, %343, %cst_270 {dimension_numbers = #tpu.dot_dimension_numbers<[1], [0], [0], [1], [0, 0, 1, 1], [], []>} : vector<32x128xf32>, vector<128x256xf32>, vector<32x256xf32> -> vector<32x256xf32>
    %345 = arith.addf %341, %344 : vector<32x256xf32>
    %c0_271 = arith.constant 0 : index
    %c0_272 = arith.constant 0 : index
    %346 = vector.load %arg12[%c0_271, %c0_272] : memref<32x256xf32, #tpu.memory_space<vmem>>, vector<32x256xf32>
    tpu.vector_store %arg12[%c0_271, %c0_272], %345 {strides = array<i32>} : memref<32x256xf32, #tpu.memory_space<vmem>>, vector<32x256xf32>,
    %cst_273 = arith.constant 0.000000e+00 : f32
    %347 = vector.broadcast %cst_273 : f32 to vector<64x256xf32>
    %c64_274 = arith.constant 64 : index
    %c0_275 = arith.constant 0 : index
    %348 = vector.load %arg11[%c64_274, %c0_275] : memref<384x128xbf16, #tpu.memory_space<vmem>>, vector<64x128xbf16>
    %c0_276 = arith.constant 0 : index
    %c0_277 = arith.constant 0 : index
    %c0_278 = arith.constant 0 : index
    %349 = vector.load %arg4[%c0_276, %c0_277, %c0_278] : memref<3x128x256xbf16, #tpu.memory_space<vmem>>, vector<1x128x256xbf16>
    %350 = vector.shape_cast %349 : vector<1x128x256xbf16> to vector<128x256xbf16>
    %cst_279 = arith.constant dense<0.000000e+00> : vector<64x256xf32>
    %351 = tpu.matmul %348, %350, %cst_279 {dimension_numbers = #tpu.dot_dimension_numbers<[1], [0], [0], [1], [0, 0, 1, 1], [], []>} : vector<64x128xbf16>, vector<128x256xbf16>, vector<64x256xf32> -> vector<64x256xf32>
    %352 = arith.addf %347, %351 : vector<64x256xf32>
    %c96_280 = arith.constant 96 : index
    %c0_281 = arith.constant 0 : index
    %353 = vector.load %arg11[%c96_280, %c0_281] : memref<384x128xbf16, #tpu.memory_space<vmem>>, vector<64x128xbf16>
    %c1_282 = arith.constant 1 : index
    %c0_283 = arith.constant 0 : index
    %c0_284 = arith.constant 0 : index
    %354 = vector.load %arg4[%c1_282, %c0_283, %c0_284] : memref<3x128x256xbf16, #tpu.memory_space<vmem>>, vector<1x128x256xbf16>
    %355 = vector.shape_cast %354 : vector<1x128x256xbf16> to vector<128x256xbf16>
    %cst_285 = arith.constant dense<0.000000e+00> : vector<64x256xf32>
    %356 = tpu.matmul %353, %355, %cst_285 {dimension_numbers = #tpu.dot_dimension_numbers<[1], [0], [0], [1], [0, 0, 1, 1], [], []>} : vector<64x128xbf16>, vector<128x256xbf16>, vector<64x256xf32> -> vector<64x256xf32>
    %357 = arith.addf %352, %356 : vector<64x256xf32>
    %c128_286 = arith.constant 128 : index
    %c0_287 = arith.constant 0 : index
    %358 = vector.load %arg11[%c128_286, %c0_287] : memref<384x128xbf16, #tpu.memory_space<vmem>>, vector<64x128xbf16>
    %c2_288 = arith.constant 2 : index
    %c0_289 = arith.constant 0 : index
    %c0_290 = arith.constant 0 : index
    %359 = vector.load %arg4[%c2_288, %c0_289, %c0_290] : memref<3x128x256xbf16, #tpu.memory_space<vmem>>, vector<1x128x256xbf16>
    %360 = vector.shape_cast %359 : vector<1x128x256xbf16> to vector<128x256xbf16>
    %cst_291 = arith.constant dense<0.000000e+00> : vector<64x256xf32>
    %361 = tpu.matmul %358, %360, %cst_291 {dimension_numbers = #tpu.dot_dimension_numbers<[1], [0], [0], [1], [0, 0, 1, 1], [], []>} : vector<64x128xbf16>, vector<128x256xbf16>, vector<64x256xf32> -> vector<64x256xf32>
    %362 = arith.addf %357, %361 : vector<64x256xf32>
    %c0_292 = arith.constant 0 : index
    %c0_293 = arith.constant 0 : index
    %363 = vector.load %arg5[%c0_292, %c0_293] : memref<1x256xf32, #tpu.memory_space<vmem>>, vector<1x256xf32>
    %364 = vector.broadcast %363 : vector<1x256xf32> to vector<64x256xf32>
    %365 = arith.addf %362, %364 : vector<64x256xf32>
    %366 = math.tanh %365 : vector<64x256xf32>
    %367 = vector.extract_strided_slice %366 {offsets = [0, 0], sizes = [64, 128], strides = [1, 1]} : vector<64x256xf32> to vector<64x128xf32>
    %368 = vector.extract_strided_slice %366 {offsets = [0, 128], sizes = [64, 128], strides = [1, 1]} : vector<64x256xf32> to vector<64x128xf32>
    %369 = arith.maximumf %367, %368 : vector<64x128xf32>
    %370 = vector.extract_strided_slice %369 {offsets = [0, 0], sizes = [32, 128], strides = [1, 1]} : vector<64x128xf32> to vector<32x128xf32>
    %371 = vector.extract_strided_slice %369 {offsets = [32, 0], sizes = [32, 128], strides = [1, 1]} : vector<64x128xf32> to vector<32x128xf32>
    %372 = arith.maximumf %370, %371 : vector<32x128xf32>
    %c0_294 = arith.constant 0 : index
    %c0_295 = arith.constant 0 : index
    %373 = vector.load %arg12[%c0_294, %c0_295] : memref<32x256xf32, #tpu.memory_space<vmem>>, vector<32x256xf32>
    %c1_296 = arith.constant 1 : index
    %c0_297 = arith.constant 0 : index
    %c0_298 = arith.constant 0 : index
    %374 = vector.load %arg6[%c1_296, %c0_297, %c0_298] : memref<5x128x256xf32, #tpu.memory_space<vmem>>, vector<1x128x256xf32>
    %375 = vector.shape_cast %374 : vector<1x128x256xf32> to vector<128x256xf32>
    %cst_299 = arith.constant dense<0.000000e+00> : vector<32x256xf32>
    %376 = tpu.matmul %372, %375, %cst_299 {dimension_numbers = #tpu.dot_dimension_numbers<[1], [0], [0], [1], [0, 0, 1, 1], [], []>} : vector<32x128xf32>, vector<128x256xf32>, vector<32x256xf32> -> vector<32x256xf32>
    %377 = arith.addf %373, %376 : vector<32x256xf32>
    %c0_300 = arith.constant 0 : index
    %c0_301 = arith.constant 0 : index
    %378 = vector.load %arg12[%c0_300, %c0_301] : memref<32x256xf32, #tpu.memory_space<vmem>>, vector<32x256xf32>
    tpu.vector_store %arg12[%c0_300, %c0_301], %377 {strides = array<i32>} : memref<32x256xf32, #tpu.memory_space<vmem>>, vector<32x256xf32>,
    %cst_302 = arith.constant 0.000000e+00 : f32
    %379 = vector.broadcast %cst_302 : f32 to vector<64x256xf32>
    %c128_303 = arith.constant 128 : index
    %c0_304 = arith.constant 0 : index
    %380 = vector.load %arg11[%c128_303, %c0_304] : memref<384x128xbf16, #tpu.memory_space<vmem>>, vector<64x128xbf16>
    %c0_305 = arith.constant 0 : index
    %c0_306 = arith.constant 0 : index
    %c0_307 = arith.constant 0 : index
    %381 = vector.load %arg4[%c0_305, %c0_306, %c0_307] : memref<3x128x256xbf16, #tpu.memory_space<vmem>>, vector<1x128x256xbf16>
    %382 = vector.shape_cast %381 : vector<1x128x256xbf16> to vector<128x256xbf16>
    %cst_308 = arith.constant dense<0.000000e+00> : vector<64x256xf32>
    %383 = tpu.matmul %380, %382, %cst_308 {dimension_numbers = #tpu.dot_dimension_numbers<[1], [0], [0], [1], [0, 0, 1, 1], [], []>} : vector<64x128xbf16>, vector<128x256xbf16>, vector<64x256xf32> -> vector<64x256xf32>
    %384 = arith.addf %379, %383 : vector<64x256xf32>
    %c160_309 = arith.constant 160 : index
    %c0_310 = arith.constant 0 : index
    %385 = vector.load %arg11[%c160_309, %c0_310] : memref<384x128xbf16, #tpu.memory_space<vmem>>, vector<64x128xbf16>
    %c1_311 = arith.constant 1 : index
    %c0_312 = arith.constant 0 : index
    %c0_313 = arith.constant 0 : index
    %386 = vector.load %arg4[%c1_311, %c0_312, %c0_313] : memref<3x128x256xbf16, #tpu.memory_space<vmem>>, vector<1x128x256xbf16>
    %387 = vector.shape_cast %386 : vector<1x128x256xbf16> to vector<128x256xbf16>
    %cst_314 = arith.constant dense<0.000000e+00> : vector<64x256xf32>
    %388 = tpu.matmul %385, %387, %cst_314 {dimension_numbers = #tpu.dot_dimension_numbers<[1], [0], [0], [1], [0, 0, 1, 1], [], []>} : vector<64x128xbf16>, vector<128x256xbf16>, vector<64x256xf32> -> vector<64x256xf32>
    %389 = arith.addf %384, %388 : vector<64x256xf32>
    %c192_315 = arith.constant 192 : index
    %c0_316 = arith.constant 0 : index
    %390 = vector.load %arg11[%c192_315, %c0_316] : memref<384x128xbf16, #tpu.memory_space<vmem>>, vector<64x128xbf16>
    %c2_317 = arith.constant 2 : index
    %c0_318 = arith.constant 0 : index
    %c0_319 = arith.constant 0 : index
    %391 = vector.load %arg4[%c2_317, %c0_318, %c0_319] : memref<3x128x256xbf16, #tpu.memory_space<vmem>>, vector<1x128x256xbf16>
    %392 = vector.shape_cast %391 : vector<1x128x256xbf16> to vector<128x256xbf16>
    %cst_320 = arith.constant dense<0.000000e+00> : vector<64x256xf32>
    %393 = tpu.matmul %390, %392, %cst_320 {dimension_numbers = #tpu.dot_dimension_numbers<[1], [0], [0], [1], [0, 0, 1, 1], [], []>} : vector<64x128xbf16>, vector<128x256xbf16>, vector<64x256xf32> -> vector<64x256xf32>
    %394 = arith.addf %389, %393 : vector<64x256xf32>
    %c0_321 = arith.constant 0 : index
    %c0_322 = arith.constant 0 : index
    %395 = vector.load %arg5[%c0_321, %c0_322] : memref<1x256xf32, #tpu.memory_space<vmem>>, vector<1x256xf32>
    %396 = vector.broadcast %395 : vector<1x256xf32> to vector<64x256xf32>
    %397 = arith.addf %394, %396 : vector<64x256xf32>
    %398 = math.tanh %397 : vector<64x256xf32>
    %399 = vector.extract_strided_slice %398 {offsets = [0, 0], sizes = [64, 128], strides = [1, 1]} : vector<64x256xf32> to vector<64x128xf32>
    %400 = vector.extract_strided_slice %398 {offsets = [0, 128], sizes = [64, 128], strides = [1, 1]} : vector<64x256xf32> to vector<64x128xf32>
    %401 = arith.maximumf %399, %400 : vector<64x128xf32>
    %402 = vector.extract_strided_slice %401 {offsets = [0, 0], sizes = [32, 128], strides = [1, 1]} : vector<64x128xf32> to vector<32x128xf32>
    %403 = vector.extract_strided_slice %401 {offsets = [32, 0], sizes = [32, 128], strides = [1, 1]} : vector<64x128xf32> to vector<32x128xf32>
    %404 = arith.maximumf %402, %403 : vector<32x128xf32>
    %c0_323 = arith.constant 0 : index
    %c0_324 = arith.constant 0 : index
    %405 = vector.load %arg12[%c0_323, %c0_324] : memref<32x256xf32, #tpu.memory_space<vmem>>, vector<32x256xf32>
    %c2_325 = arith.constant 2 : index
    %c0_326 = arith.constant 0 : index
    %c0_327 = arith.constant 0 : index
    %406 = vector.load %arg6[%c2_325, %c0_326, %c0_327] : memref<5x128x256xf32, #tpu.memory_space<vmem>>, vector<1x128x256xf32>
    %407 = vector.shape_cast %406 : vector<1x128x256xf32> to vector<128x256xf32>
    %cst_328 = arith.constant dense<0.000000e+00> : vector<32x256xf32>
    %408 = tpu.matmul %404, %407, %cst_328 {dimension_numbers = #tpu.dot_dimension_numbers<[1], [0], [0], [1], [0, 0, 1, 1], [], []>} : vector<32x128xf32>, vector<128x256xf32>, vector<32x256xf32> -> vector<32x256xf32>
    %409 = arith.addf %405, %408 : vector<32x256xf32>
    %c0_329 = arith.constant 0 : index
    %c0_330 = arith.constant 0 : index
    %410 = vector.load %arg12[%c0_329, %c0_330] : memref<32x256xf32, #tpu.memory_space<vmem>>, vector<32x256xf32>
    tpu.vector_store %arg12[%c0_329, %c0_330], %409 {strides = array<i32>} : memref<32x256xf32, #tpu.memory_space<vmem>>, vector<32x256xf32>,
    %cst_331 = arith.constant 0.000000e+00 : f32
    %411 = vector.broadcast %cst_331 : f32 to vector<64x256xf32>
    %c192_332 = arith.constant 192 : index
    %c0_333 = arith.constant 0 : index
    %412 = vector.load %arg11[%c192_332, %c0_333] : memref<384x128xbf16, #tpu.memory_space<vmem>>, vector<64x128xbf16>
    %c0_334 = arith.constant 0 : index
    %c0_335 = arith.constant 0 : index
    %c0_336 = arith.constant 0 : index
    %413 = vector.load %arg4[%c0_334, %c0_335, %c0_336] : memref<3x128x256xbf16, #tpu.memory_space<vmem>>, vector<1x128x256xbf16>
    %414 = vector.shape_cast %413 : vector<1x128x256xbf16> to vector<128x256xbf16>
    %cst_337 = arith.constant dense<0.000000e+00> : vector<64x256xf32>
    %415 = tpu.matmul %412, %414, %cst_337 {dimension_numbers = #tpu.dot_dimension_numbers<[1], [0], [0], [1], [0, 0, 1, 1], [], []>} : vector<64x128xbf16>, vector<128x256xbf16>, vector<64x256xf32> -> vector<64x256xf32>
    %416 = arith.addf %411, %415 : vector<64x256xf32>
    %c224_338 = arith.constant 224 : index
    %c0_339 = arith.constant 0 : index
    %417 = vector.load %arg11[%c224_338, %c0_339] : memref<384x128xbf16, #tpu.memory_space<vmem>>, vector<64x128xbf16>
    %c1_340 = arith.constant 1 : index
    %c0_341 = arith.constant 0 : index
    %c0_342 = arith.constant 0 : index
    %418 = vector.load %arg4[%c1_340, %c0_341, %c0_342] : memref<3x128x256xbf16, #tpu.memory_space<vmem>>, vector<1x128x256xbf16>
    %419 = vector.shape_cast %418 : vector<1x128x256xbf16> to vector<128x256xbf16>
    %cst_343 = arith.constant dense<0.000000e+00> : vector<64x256xf32>
    %420 = tpu.matmul %417, %419, %cst_343 {dimension_numbers = #tpu.dot_dimension_numbers<[1], [0], [0], [1], [0, 0, 1, 1], [], []>} : vector<64x128xbf16>, vector<128x256xbf16>, vector<64x256xf32> -> vector<64x256xf32>
    %421 = arith.addf %416, %420 : vector<64x256xf32>
    %c256_344 = arith.constant 256 : index
    %c0_345 = arith.constant 0 : index
    %422 = vector.load %arg11[%c256_344, %c0_345] : memref<384x128xbf16, #tpu.memory_space<vmem>>, vector<64x128xbf16>
    %c2_346 = arith.constant 2 : index
    %c0_347 = arith.constant 0 : index
    %c0_348 = arith.constant 0 : index
    %423 = vector.load %arg4[%c2_346, %c0_347, %c0_348] : memref<3x128x256xbf16, #tpu.memory_space<vmem>>, vector<1x128x256xbf16>
    %424 = vector.shape_cast %423 : vector<1x128x256xbf16> to vector<128x256xbf16>
    %cst_349 = arith.constant dense<0.000000e+00> : vector<64x256xf32>
    %425 = tpu.matmul %422, %424, %cst_349 {dimension_numbers = #tpu.dot_dimension_numbers<[1], [0], [0], [1], [0, 0, 1, 1], [], []>} : vector<64x128xbf16>, vector<128x256xbf16>, vector<64x256xf32> -> vector<64x256xf32>
    %426 = arith.addf %421, %425 : vector<64x256xf32>
    %c0_350 = arith.constant 0 : index
    %c0_351 = arith.constant 0 : index
    %427 = vector.load %arg5[%c0_350, %c0_351] : memref<1x256xf32, #tpu.memory_space<vmem>>, vector<1x256xf32>
    %428 = vector.broadcast %427 : vector<1x256xf32> to vector<64x256xf32>
    %429 = arith.addf %426, %428 : vector<64x256xf32>
    %430 = math.tanh %429 : vector<64x256xf32>
    %431 = vector.extract_strided_slice %430 {offsets = [0, 0], sizes = [64, 128], strides = [1, 1]} : vector<64x256xf32> to vector<64x128xf32>
    %432 = vector.extract_strided_slice %430 {offsets = [0, 128], sizes = [64, 128], strides = [1, 1]} : vector<64x256xf32> to vector<64x128xf32>
    %433 = arith.maximumf %431, %432 : vector<64x128xf32>
    %434 = vector.extract_strided_slice %433 {offsets = [0, 0], sizes = [32, 128], strides = [1, 1]} : vector<64x128xf32> to vector<32x128xf32>
    %435 = vector.extract_strided_slice %433 {offsets = [32, 0], sizes = [32, 128], strides = [1, 1]} : vector<64x128xf32> to vector<32x128xf32>
    %436 = arith.maximumf %434, %435 : vector<32x128xf32>
    %c0_352 = arith.constant 0 : index
    %c0_353 = arith.constant 0 : index
    %437 = vector.load %arg12[%c0_352, %c0_353] : memref<32x256xf32, #tpu.memory_space<vmem>>, vector<32x256xf32>
    %c3 = arith.constant 3 : index
    %c0_354 = arith.constant 0 : index
    %c0_355 = arith.constant 0 : index
    %438 = vector.load %arg6[%c3, %c0_354, %c0_355] : memref<5x128x256xf32, #tpu.memory_space<vmem>>, vector<1x128x256xf32>
    %439 = vector.shape_cast %438 : vector<1x128x256xf32> to vector<128x256xf32>
    %cst_356 = arith.constant dense<0.000000e+00> : vector<32x256xf32>
    %440 = tpu.matmul %436, %439, %cst_356 {dimension_numbers = #tpu.dot_dimension_numbers<[1], [0], [0], [1], [0, 0, 1, 1], [], []>} : vector<32x128xf32>, vector<128x256xf32>, vector<32x256xf32> -> vector<32x256xf32>
    %441 = arith.addf %437, %440 : vector<32x256xf32>
    %c0_357 = arith.constant 0 : index
    %c0_358 = arith.constant 0 : index
    %442 = vector.load %arg12[%c0_357, %c0_358] : memref<32x256xf32, #tpu.memory_space<vmem>>, vector<32x256xf32>
    tpu.vector_store %arg12[%c0_357, %c0_358], %441 {strides = array<i32>} : memref<32x256xf32, #tpu.memory_space<vmem>>, vector<32x256xf32>,
    %cst_359 = arith.constant 0.000000e+00 : f32
    %443 = vector.broadcast %cst_359 : f32 to vector<64x256xf32>
    %c256_360 = arith.constant 256 : index
    %c0_361 = arith.constant 0 : index
    %444 = vector.load %arg11[%c256_360, %c0_361] : memref<384x128xbf16, #tpu.memory_space<vmem>>, vector<64x128xbf16>
    %c0_362 = arith.constant 0 : index
    %c0_363 = arith.constant 0 : index
    %c0_364 = arith.constant 0 : index
    %445 = vector.load %arg4[%c0_362, %c0_363, %c0_364] : memref<3x128x256xbf16, #tpu.memory_space<vmem>>, vector<1x128x256xbf16>
    %446 = vector.shape_cast %445 : vector<1x128x256xbf16> to vector<128x256xbf16>
    %cst_365 = arith.constant dense<0.000000e+00> : vector<64x256xf32>
    %447 = tpu.matmul %444, %446, %cst_365 {dimension_numbers = #tpu.dot_dimension_numbers<[1], [0], [0], [1], [0, 0, 1, 1], [], []>} : vector<64x128xbf16>, vector<128x256xbf16>, vector<64x256xf32> -> vector<64x256xf32>
    %448 = arith.addf %443, %447 : vector<64x256xf32>
    %c288_366 = arith.constant 288 : index
    %c0_367 = arith.constant 0 : index
    %449 = vector.load %arg11[%c288_366, %c0_367] : memref<384x128xbf16, #tpu.memory_space<vmem>>, vector<64x128xbf16>
    %c1_368 = arith.constant 1 : index
    %c0_369 = arith.constant 0 : index
    %c0_370 = arith.constant 0 : index
    %450 = vector.load %arg4[%c1_368, %c0_369, %c0_370] : memref<3x128x256xbf16, #tpu.memory_space<vmem>>, vector<1x128x256xbf16>
    %451 = vector.shape_cast %450 : vector<1x128x256xbf16> to vector<128x256xbf16>
    %cst_371 = arith.constant dense<0.000000e+00> : vector<64x256xf32>
    %452 = tpu.matmul %449, %451, %cst_371 {dimension_numbers = #tpu.dot_dimension_numbers<[1], [0], [0], [1], [0, 0, 1, 1], [], []>} : vector<64x128xbf16>, vector<128x256xbf16>, vector<64x256xf32> -> vector<64x256xf32>
    %453 = arith.addf %448, %452 : vector<64x256xf32>
    %c320_372 = arith.constant 320 : index
    %c0_373 = arith.constant 0 : index
    %454 = vector.load %arg11[%c320_372, %c0_373] : memref<384x128xbf16, #tpu.memory_space<vmem>>, vector<64x128xbf16>
    %c2_374 = arith.constant 2 : index
    %c0_375 = arith.constant 0 : index
    %c0_376 = arith.constant 0 : index
    %455 = vector.load %arg4[%c2_374, %c0_375, %c0_376] : memref<3x128x256xbf16, #tpu.memory_space<vmem>>, vector<1x128x256xbf16>
    %456 = vector.shape_cast %455 : vector<1x128x256xbf16> to vector<128x256xbf16>
    %cst_377 = arith.constant dense<0.000000e+00> : vector<64x256xf32>
    %457 = tpu.matmul %454, %456, %cst_377 {dimension_numbers = #tpu.dot_dimension_numbers<[1], [0], [0], [1], [0, 0, 1, 1], [], []>} : vector<64x128xbf16>, vector<128x256xbf16>, vector<64x256xf32> -> vector<64x256xf32>
    %458 = arith.addf %453, %457 : vector<64x256xf32>
    %c0_378 = arith.constant 0 : index
    %c0_379 = arith.constant 0 : index
    %459 = vector.load %arg5[%c0_378, %c0_379] : memref<1x256xf32, #tpu.memory_space<vmem>>, vector<1x256xf32>
    %460 = vector.broadcast %459 : vector<1x256xf32> to vector<64x256xf32>
    %461 = arith.addf %458, %460 : vector<64x256xf32>
    %462 = math.tanh %461 : vector<64x256xf32>
    %463 = vector.extract_strided_slice %462 {offsets = [0, 0], sizes = [64, 128], strides = [1, 1]} : vector<64x256xf32> to vector<64x128xf32>
    %464 = vector.extract_strided_slice %462 {offsets = [0, 128], sizes = [64, 128], strides = [1, 1]} : vector<64x256xf32> to vector<64x128xf32>
    %465 = arith.maximumf %463, %464 : vector<64x128xf32>
    %466 = vector.extract_strided_slice %465 {offsets = [0, 0], sizes = [32, 128], strides = [1, 1]} : vector<64x128xf32> to vector<32x128xf32>
    %467 = vector.extract_strided_slice %465 {offsets = [32, 0], sizes = [32, 128], strides = [1, 1]} : vector<64x128xf32> to vector<32x128xf32>
    %468 = arith.maximumf %466, %467 : vector<32x128xf32>
    %c0_380 = arith.constant 0 : index
    %c0_381 = arith.constant 0 : index
    %469 = vector.load %arg12[%c0_380, %c0_381] : memref<32x256xf32, #tpu.memory_space<vmem>>, vector<32x256xf32>
    %c4 = arith.constant 4 : index
    %c0_382 = arith.constant 0 : index
    %c0_383 = arith.constant 0 : index
    %470 = vector.load %arg6[%c4, %c0_382, %c0_383] : memref<5x128x256xf32, #tpu.memory_space<vmem>>, vector<1x128x256xf32>
    %471 = vector.shape_cast %470 : vector<1x128x256xf32> to vector<128x256xf32>
    %cst_384 = arith.constant dense<0.000000e+00> : vector<32x256xf32>
    %472 = tpu.matmul %468, %471, %cst_384 {dimension_numbers = #tpu.dot_dimension_numbers<[1], [0], [0], [1], [0, 0, 1, 1], [], []>} : vector<32x128xf32>, vector<128x256xf32>, vector<32x256xf32> -> vector<32x256xf32>
    %473 = arith.addf %469, %472 : vector<32x256xf32>
    %c0_385 = arith.constant 0 : index
    %c0_386 = arith.constant 0 : index
    %474 = vector.load %arg12[%c0_385, %c0_386] : memref<32x256xf32, #tpu.memory_space<vmem>>, vector<32x256xf32>
    tpu.vector_store %arg12[%c0_385, %c0_386], %473 {strides = array<i32>} : memref<32x256xf32, #tpu.memory_space<vmem>>, vector<32x256xf32>,
    %c0_387 = arith.constant 0 : index
    %c0_388 = arith.constant 0 : index
    %475 = vector.load %arg12[%c0_387, %c0_388] : memref<32x256xf32, #tpu.memory_space<vmem>>, vector<32x256xf32>
    %c0_389 = arith.constant 0 : index
    %c0_390 = arith.constant 0 : index
    %476 = vector.load %arg7[%c0_389, %c0_390] : memref<1x256xf32, #tpu.memory_space<vmem>>, vector<1x256xf32>
    %477 = vector.broadcast %476 : vector<1x256xf32> to vector<32x256xf32>
    %478 = arith.addf %475, %477 : vector<32x256xf32>
    %479 = math.tanh %478 : vector<32x256xf32>
    %c0_391 = arith.constant 0 : index
    %c0_392 = arith.constant 0 : index
    %480 = vector.load %arg8[%c0_391, %c0_392] : memref<256x128xf32, #tpu.memory_space<vmem>>, vector<256x128xf32>
    %cst_393 = arith.constant dense<0.000000e+00> : vector<32x128xf32>
    %481 = tpu.matmul %479, %480, %cst_393 {dimension_numbers = #tpu.dot_dimension_numbers<[1], [0], [0], [1], [0, 0, 1, 1], [], []>} : vector<32x256xf32>, vector<256x128xf32>, vector<32x128xf32> -> vector<32x128xf32>
    %c0_394 = arith.constant 0 : index
    %c0_395 = arith.constant 0 : index
    %482 = vector.load %arg9[%c0_394, %c0_395] : memref<1x128xf32, #tpu.memory_space<vmem>>, vector<1x128xf32>
    %483 = vector.broadcast %482 : vector<1x128xf32> to vector<32x128xf32>
    %484 = arith.addf %481, %483 : vector<32x128xf32>
    %c0_396 = arith.constant 0 : index
    %c0_397 = arith.constant 0 : index
    %c0_398 = arith.constant 0 : index
    %485 = vector.load %arg10[%c0_396, %c0_397, %c0_398] : memref<1x32x128xf32, #tpu.memory_space<vmem>>, vector<1x32x128xf32>
    %486 = vector.shape_cast %485 : vector<1x32x128xf32> to vector<32x128xf32>
    %487 = vector.shape_cast %484 : vector<32x128xf32> to vector<1x32x128xf32>
    tpu.vector_store %arg10[%c0_396, %c0_397, %c0_398], %487 {strides = array<i32>} : memref<1x32x128xf32, #tpu.memory_space<vmem>>, vector<1x32x128xf32>,
    return
  }
  func.func @transform_0(%arg0: i32) -> (i32, i32, i32) {
    %c0_i32 = arith.constant 0 : i32
    %c0_i32_0 = arith.constant 0 : i32
    %c0_i32_1 = arith.constant 0 : i32
    return %arg0, %c0_i32, %c0_i32_0 : i32, i32, i32
  }
  func.func @transform_1(%arg0: i32) -> (i32, i32, i32) {
    %c0_i32 = arith.constant 0 : i32
    %c0_i32_0 = arith.constant 0 : i32
    %c0_i32_1 = arith.constant 0 : i32
    %c0_i32_2 = arith.constant 0 : i32
    return %c0_i32, %c0_i32_0, %c0_i32_1 : i32, i32, i32
  }
  func.func @transform_2(%arg0: i32) -> (i32, i32) {
    %c0_i32 = arith.constant 0 : i32
    %c0_i32_0 = arith.constant 0 : i32
    %c0_i32_1 = arith.constant 0 : i32
    return %c0_i32, %c0_i32_0 : i32, i32
  }
  func.func @transform_3(%arg0: i32) -> (i32, i32, i32) {
    %c0_i32 = arith.constant 0 : i32
    %c0_i32_0 = arith.constant 0 : i32
    %c0_i32_1 = arith.constant 0 : i32
    %c0_i32_2 = arith.constant 0 : i32
    return %c0_i32, %c0_i32_0, %c0_i32_1 : i32, i32, i32
  }
  func.func @transform_4(%arg0: i32) -> (i32, i32) {
    %c0_i32 = arith.constant 0 : i32
    %c0_i32_0 = arith.constant 0 : i32
    %c0_i32_1 = arith.constant 0 : i32
    return %c0_i32, %c0_i32_0 : i32, i32
  }
  func.func @transform_5(%arg0: i32) -> (i32, i32, i32) {
    %c0_i32 = arith.constant 0 : i32
    %c0_i32_0 = arith.constant 0 : i32
    %c0_i32_1 = arith.constant 0 : i32
    %c0_i32_2 = arith.constant 0 : i32
    return %c0_i32, %c0_i32_0, %c0_i32_1 : i32, i32, i32
  }
  func.func @transform_6(%arg0: i32) -> (i32, i32) {
    %c0_i32 = arith.constant 0 : i32
    %c0_i32_0 = arith.constant 0 : i32
    %c0_i32_1 = arith.constant 0 : i32
    return %c0_i32, %c0_i32_0 : i32, i32
  }
  func.func @transform_7(%arg0: i32) -> (i32, i32) {
    %c0_i32 = arith.constant 0 : i32
    %c0_i32_0 = arith.constant 0 : i32
    %c0_i32_1 = arith.constant 0 : i32
    return %c0_i32, %c0_i32_0 : i32, i32
  }
  func.func @transform_8(%arg0: i32) -> (i32, i32) {
    %c0_i32 = arith.constant 0 : i32
    %c0_i32_0 = arith.constant 0 : i32
    %c0_i32_1 = arith.constant 0 : i32
    return %c0_i32, %c0_i32_0 : i32, i32
  }
  func.func @transform_9(%arg0: i32) -> (i32, i32, i32) {
    %c0_i32 = arith.constant 0 : i32
    %c0_i32_0 = arith.constant 0 : i32
    %c0_i32_1 = arith.constant 0 : i32
    return %arg0, %c0_i32, %c0_i32_0 : i32, i32, i32
  }
}

</mosaic_0001>

<llo_original>
// kernel: dqn_forward.1
$region0: #{dqn_forward.1}
  #allocation0 [shape = 'u32[]', space=smem, size = 0x4, offset = 0x4, fixed_abs, tag = 'smem constant byte address 0x4 - core index']
  #allocation1 [shape = 'u32[144,128]{1,0:T(1,128)}', space=vmem, size = 0x12000, scoped, tag = 'internal scratch']
  #allocation2 [shape = 'bf16[384,128]{1,0:T(8,128)(2,1)}', space=vmem, size = 0x18000, scoped, tag = 'scratch operand']
  #allocation3 [shape = 'f32[32,256]{1,0:T(8,128)}', space=vmem, size = 0x8000, scoped, tag = 'scratch operand']
  %s0 = inlined_call_operand.vmem [shape: bf16[2,704,16], index: 0, kind: input, shape index: {}]
  %s1 = inlined_call_operand.vmem [shape: bf16[3,16,256], index: 1, kind: input, shape index: {}]
  %s2 = inlined_call_operand.vmem [shape: f32[1,256], index: 2, kind: input, shape index: {}]
  %s3 = inlined_call_operand.vmem [shape: bf16[3,128,256], index: 3, kind: input, shape index: {}]
  %s4 = inlined_call_operand.vmem [shape: f32[1,256], index: 4, kind: input, shape index: {}]
  %s5 = inlined_call_operand.vmem [shape: f32[5,128,256], index: 5, kind: input, shape index: {}]
  %s6 = inlined_call_operand.vmem [shape: f32[1,256], index: 6, kind: input, shape index: {}]
  %s7 = inlined_call_operand.vmem [shape: f32[256,128], index: 7, kind: input, shape index: {}]
  %s8 = inlined_call_operand.vmem [shape: f32[1,128], index: 8, kind: input, shape index: {}]
  %s9 = inlined_call_operand.vmem [shape: f32[2,32,128], index: 9, kind: output, shape index: {}]
  %s10 = sld [smem:[#allocation0]]
  $region69: #{dqn_forward.1} parent=0
    _
  %s12 = ssub.s32 1, %s10
  %s13 = scalar_select 0, %s12, %s10
  loop: start=0, step=1, limit=4
  $region2: #{dqn_forward.1} parent=0 // loop_pre_header
    _
  $region3: #{dqn_forward.1} parent=0 // loop_header
    %s15 = sphi 0, %s19
    %p16 = scmp.ge.s32.totalorder %s15, 4
    %s25 = sphi 0, %s27
    %s28 = sphi 0, %s25
    %s29 = sphi 0, %s28
    %s45 = sphi 0, %s29
    %s49 = sphi 0, %s49
    %s51 = sphi 0, %s49
    %s52 = sphi 0, %s51
    %s66 = sphi 0, %s52
    %s70 = sphi 0, %s70
    %s72 = sphi 0, %s70
    %s73 = sphi 0, %s72
    %s87 = sphi 0, %s73
    %s91 = sphi 0, %s91
    %s93 = sphi 0, %s91
    %s94 = sphi 0, %s93
    %s108 = sphi 0, %s94
    %s112 = sphi 0, %s112
    %s114 = sphi 0, %s112
    %s115 = sphi 0, %s114
    %s129 = sphi 0, %s115
    %s133 = sphi 0, %s133
    %s135 = sphi 0, %s133
    %s136 = sphi 0, %s135
    %s150 = sphi 0, %s136
    %s154 = sphi 0, %s154
    %s156 = sphi 0, %s154
    %s157 = sphi 0, %s156
    %s171 = sphi 0, %s157
    %s175 = sphi 0, %s175
    %s177 = sphi 0, %s175
    %s178 = sphi 0, %s177
    %s192 = sphi 0, %s178
    %s196 = sphi 0, %s196
    %s198 = sphi 0, %s196
    %s199 = sphi 0, %s198
    %s213 = sphi 0, %s199
    %s219 = sphi 0, %s221
    %s222 = sphi 0, %s219
    %s223 = sphi 0, %s222
    %s239 = sphi 0, %s223
  $region4: #{dqn_forward.1} parent=0 // loop_header_branch
    %18 = sbr.rel (%p16) target = $region8
  $region5: #{dqn_forward.1} parent=0 // loop_body
    %s20 = ssub.s32 %s15, 1
    %s21 = ssub.s32 %s15, 2
    %s22 = sadd.s32 %s15, 1
    %s23 = ssub.s32 %s15, %s22
    %p24 = scmp.eq.s32.totalorder %s23, 0
    %s26 = sadd.s32 %s25, 1
    %s27 = scalar_select %p24, %s25, %s26
    %p30 = pneg %p24
    %p31 = scmp.eq.s32.totalorder %s15, 1
    %p32 = por %p30, %p31
    %p33 = scmp.ne.s32.totalorder %s25, %s28
    %p34 = scmp.eq.s32.totalorder %s15, 0
    %p35 = por %p33, %p34
    %p36 = scmp.ne.s32.totalorder %s25, %s28
    %p37 = scmp.eq.s32.totalorder %s20, 1
    %p38 = por %p36, %p37
    %p39 = scmp.ne.s32.totalorder %s28, %s29
    %p40 = scmp.eq.s32.totalorder %s20, 0
    %p41 = por %p39, %p40
    %p42 = scmp.ne.s32.totalorder %s28, %s29
    %p43 = scmp.eq.s32.totalorder %s21, 1
    %p44 = por %p42, %p43
    %p46 = scmp.ne.s32.totalorder %s29, %s45
    %p47 = scmp.eq.s32.totalorder %s21, 0
    %p48 = por %p46, %p47
    %s50 = sadd.s32 %s49, 1
    %p53 = scmp.eq.s32.totalorder %s15, 1
    %p54 = scmp.ne.s32.totalorder %s49, %s51
    %p55 = scmp.eq.s32.totalorder %s15, 0
    %p56 = por %p54, %p55
    %p57 = scmp.ne.s32.totalorder %s49, %s51
    %p58 = scmp.eq.s32.totalorder %s20, 1
    %p59 = por %p57, %p58
    %p60 = scmp.ne.s32.totalorder %s51, %s52
    %p61 = scmp.eq.s32.totalorder %s20, 0
    %p62 = por %p60, %p61
    %p63 = scmp.ne.s32.totalorder %s51, %s52
    %p64 = scmp.eq.s32.totalorder %s21, 1
    %p65 = por %p63, %p64
    %p67 = scmp.ne.s32.totalorder %s52, %s66
    %p68 = scmp.eq.s32.totalorder %s21, 0
    %p69 = por %p67, %p68
    %s71 = sadd.s32 %s70, 1
    %p74 = scmp.eq.s32.totalorder %s15, 1
    %p75 = scmp.ne.s32.totalorder %s70, %s72
    %p76 = scmp.eq.s32.totalorder %s15, 0
    %p77 = por %p75, %p76
    %p78 = scmp.ne.s32.totalorder %s70, %s72
    %p79 = scmp.eq.s32.totalorder %s20, 1
    %p80 = por %p78, %p79
    %p81 = scmp.ne.s32.totalorder %s72, %s73
    %p82 = scmp.eq.s32.totalorder %s20, 0
    %p83 = por %p81, %p82
    %p84 = scmp.ne.s32.totalorder %s72, %s73
    %p85 = scmp.eq.s32.totalorder %s21, 1
    %p86 = por %p84, %p85
    %p88 = scmp.ne.s32.totalorder %s73, %s87
    %p89 = scmp.eq.s32.totalorder %s21, 0
    %p90 = por %p88, %p89
    %s92 = sadd.s32 %s91, 1
    %p95 = scmp.eq.s32.totalorder %s15, 1
    %p96 = scmp.ne.s32.totalorder %s91, %s93
    %p97 = scmp.eq.s32.totalorder %s15, 0
    %p98 = por %p96, %p97
    %p99 = scmp.ne.s32.totalorder %s91, %s93
    %p100 = scmp.eq.s32.totalorder %s20, 1
    %p101 = por %p99, %p100
    %p102 = scmp.ne.s32.totalorder %s93, %s94
    %p103 = scmp.eq.s32.totalorder %s20, 0
    %p104 = por %p102, %p103
    %p105 = scmp.ne.s32.totalorder %s93, %s94
    %p106 = scmp.eq.s32.totalorder %s21, 1
    %p107 = por %p105, %p106
    %p109 = scmp.ne.s32.totalorder %s94, %s108
    %p110 = scmp.eq.s32.totalorder %s21, 0
    %p111 = por %p109, %p110
    %s113 = sadd.s32 %s112, 1
    %p116 = scmp.eq.s32.totalorder %s15, 1
    %p117 = scmp.ne.s32.totalorder %s112, %s114
    %p118 = scmp.eq.s32.totalorder %s15, 0
    %p119 = por %p117, %p118
    %p120 = scmp.ne.s32.totalorder %s112, %s114
    %p121 = scmp.eq.s32.totalorder %s20, 1
    %p122 = por %p120, %p121
    %p123 = scmp.ne.s32.totalorder %s114, %s115
    %p124 = scmp.eq.s32.totalorder %s20, 0
    %p125 = por %p123, %p124
    %p126 = scmp.ne.s32.totalorder %s114, %s115
    %p127 = scmp.eq.s32.totalorder %s21, 1
    %p128 = por %p126, %p127
    %p130 = scmp.ne.s32.totalorder %s115, %s129
    %p131 = scmp.eq.s32.totalorder %s21, 0
    %p132 = por %p130, %p131
    %s134 = sadd.s32 %s133, 1
    %p137 = scmp.eq.s32.totalorder %s15, 1
    %p138 = scmp.ne.s32.totalorder %s133, %s135
    %p139 = scmp.eq.s32.totalorder %s15, 0
    %p140 = por %p138, %p139
    %p141 = scmp.ne.s32.totalorder %s133, %s135
    %p142 = scmp.eq.s32.totalorder %s20, 1
    %p143 = por %p141, %p142
    %p144 = scmp.ne.s32.totalorder %s135, %s136
    %p145 = scmp.eq.s32.totalorder %s20, 0
    %p146 = por %p144, %p145
    %p147 = scmp.ne.s32.totalorder %s135, %s136
    %p148 = scmp.eq.s32.totalorder %s21, 1
    %p149 = por %p147, %p148
    %p151 = scmp.ne.s32.totalorder %s136, %s150
    %p152 = scmp.eq.s32.totalorder %s21, 0
    %p153 = por %p151, %p152
    %s155 = sadd.s32 %s154, 1
    %p158 = scmp.eq.s32.totalorder %s15, 1
    %p159 = scmp.ne.s32.totalorder %s154, %s156
    %p160 = scmp.eq.s32.totalorder %s15, 0
    %p161 = por %p159, %p160
    %p162 = scmp.ne.s32.totalorder %s154, %s156
    %p163 = scmp.eq.s32.totalorder %s20, 1
    %p164 = por %p162, %p163
    %p165 = scmp.ne.s32.totalorder %s156, %s157
    %p166 = scmp.eq.s32.totalorder %s20, 0
    %p167 = por %p165, %p166
    %p168 = scmp.ne.s32.totalorder %s156, %s157
    %p169 = scmp.eq.s32.totalorder %s21, 1
    %p170 = por %p168, %p169
    %p172 = scmp.ne.s32.totalorder %s157, %s171
    %p173 = scmp.eq.s32.totalorder %s21, 0
    %p174 = por %p172, %p173
    %s176 = sadd.s32 %s175, 1
    %p179 = scmp.eq.s32.totalorder %s15, 1
    %p180 = scmp.ne.s32.totalorder %s175, %s177
    %p181 = scmp.eq.s32.totalorder %s15, 0
    %p182 = por %p180, %p181
    %p183 = scmp.ne.s32.totalorder %s175, %s177
    %p184 = scmp.eq.s32.totalorder %s20, 1
    %p185 = por %p183, %p184
    %p186 = scmp.ne.s32.totalorder %s177, %s178
    %p187 = scmp.eq.s32.totalorder %s20, 0
    %p188 = por %p186, %p187
    %p189 = scmp.ne.s32.totalorder %s177, %s178
    %p190 = scmp.eq.s32.totalorder %s21, 1
    %p191 = por %p189, %p190
    %p193 = scmp.ne.s32.totalorder %s178, %s192
    %p194 = scmp.eq.s32.totalorder %s21, 0
    %p195 = por %p193, %p194
    %s197 = sadd.s32 %s196, 1
    %p200 = scmp.eq.s32.totalorder %s15, 1
    %p201 = scmp.ne.s32.totalorder %s196, %s198
    %p202 = scmp.eq.s32.totalorder %s15, 0
    %p203 = por %p201, %p202
    %p204 = scmp.ne.s32.totalorder %s196, %s198
    %p205 = scmp.eq.s32.totalorder %s20, 1
    %p206 = por %p204, %p205
    %p207 = scmp.ne.s32.totalorder %s198, %s199
    %p208 = scmp.eq.s32.totalorder %s20, 0
    %p209 = por %p207, %p208
    %p210 = scmp.ne.s32.totalorder %s198, %s199
    %p211 = scmp.eq.s32.totalorder %s21, 1
    %p212 = por %p210, %p211
    %p214 = scmp.ne.s32.totalorder %s199, %s213
    %p215 = scmp.eq.s32.totalorder %s21, 0
    %p216 = por %p214, %p215
    %s217 = ssub.s32 %s15, %s22
    %p218 = scmp.eq.s32.totalorder %s217, 0
    %s220 = sadd.s32 %s219, 1
    %s221 = scalar_select %p218, %s219, %s220
    %p224 = pneg %p218
    %p225 = scmp.eq.s32.totalorder %s15, 1
    %p226 = por %p224, %p225
    %p227 = scmp.ne.s32.totalorder %s219, %s222
    %p228 = scmp.eq.s32.totalorder %s15, 0
    %p229 = por %p227, %p228
    %p230 = scmp.ne.s32.totalorder %s219, %s222
    %p231 = scmp.eq.s32.totalorder %s20, 1
    %p232 = por %p230, %p231
    %p233 = scmp.ne.s32.totalorder %s222, %s223
    %p234 = scmp.eq.s32.totalorder %s20, 0
    %p235 = por %p233, %p234
    %p236 = scmp.ne.s32.totalorder %s222, %s223
    %p237 = scmp.eq.s32.totalorder %s21, 1
    %p238 = por %p236, %p237
    %p240 = scmp.ne.s32.totalorder %s223, %s239
    %p241 = scmp.eq.s32.totalorder %s21, 0
    %p242 = por %p240, %p241
    %p243 = scmp.le.s32.totalorder 1, %s15
    %p244 = scmp.lt.s32.totalorder %s15, 3
    %p245 = pnand %p243, %p244
    %p246 = pneg %p245
    // Predicated region
    $region9: #{dqn_forward.1} parent=5 // pred_check
      _
    $region10: #{dqn_forward.1} parent=5 // pred_check_branch
      %248 = sbr.rel (%p245) target = $region12
    $region11: #{dqn_forward.1} parent=5 // pred_region
      %s249 = ssub.s32 %s15, 1
      // Predicated region
      $region13: #{dqn_forward.1} parent=11 // pred_check
        %p250 = pneg %p62
      $region14: #{dqn_forward.1} parent=11 // pred_check_branch
        %252 = sbr.rel (%p250) target = $region16
      $region15: #{dqn_forward.1} parent=11 // pred_region
        _
      $region16: #{dqn_forward.1} parent=11 // pred_fallthru
        _
      // Predicated region
      $region17: #{dqn_forward.1} parent=11 // pred_check
        %p253 = pneg %p83
      $region18: #{dqn_forward.1} parent=11 // pred_check_branch
        %255 = sbr.rel (%p253) target = $region20
      $region19: #{dqn_forward.1} parent=11 // pred_region
        _
      $region20: #{dqn_forward.1} parent=11 // pred_fallthru
        _
      // Predicated region
      $region21: #{dqn_forward.1} parent=11 // pred_check
        %p256 = pneg %p104
      $region22: #{dqn_forward.1} parent=11 // pred_check_branch
        %258 = sbr.rel (%p256) target = $region24
      $region23: #{dqn_forward.1} parent=11 // pred_region
        _
      $region24: #{dqn_forward.1} parent=11 // pred_fallthru
        _
      // Predicated region
      $region25: #{dqn_forward.1} parent=11 // pred_check
        %p259 = pneg %p125
      $region26: #{dqn_forward.1} parent=11 // pred_check_branch
        %261 = sbr.rel (%p259) target = $region28
      $region27: #{dqn_forward.1} parent=11 // pred_region
        _
      $region28: #{dqn_forward.1} parent=11 // pred_fallthru
        _
      // Predicated region
      $region29: #{dqn_forward.1} parent=11 // pred_check
        %p262 = pneg %p146
      $region30: #{dqn_forward.1} parent=11 // pred_check_branch
        %264 = sbr.rel (%p262) target = $region32
      $region31: #{dqn_forward.1} parent=11 // pred_region
        _
      $region32: #{dqn_forward.1} parent=11 // pred_fallthru
        _
      // Predicated region
      $region33: #{dqn_forward.1} parent=11 // pred_check
        %p265 = pneg %p167
      $region34: #{dqn_forward.1} parent=11 // pred_check_branch
        %267 = sbr.rel (%p265) target = $region36
      $region35: #{dqn_forward.1} parent=11 // pred_region
        _
      $region36: #{dqn_forward.1} parent=11 // pred_fallthru
        _
      // Predicated region
      $region37: #{dqn_forward.1} parent=11 // pred_check
        %p268 = pneg %p188
      $region38: #{dqn_forward.1} parent=11 // pred_check_branch
        %270 = sbr.rel (%p268) target = $region40
      $region39: #{dqn_forward.1} parent=11 // pred_region
        _
      $region40: #{dqn_forward.1} parent=11 // pred_fallthru
        _
      // Predicated region
      $region41: #{dqn_forward.1} parent=11 // pred_check
        %p271 = pneg %p209
      $region42: #{dqn_forward.1} parent=11 // pred_check_branch
        %273 = sbr.rel (%p271) target = $region44
      $region43: #{dqn_forward.1} parent=11 // pred_region
        _
      $region44: #{dqn_forward.1} parent=11 // pred_fallthru
        _
    $region12: #{dqn_forward.1} parent=5 // pred_fallthru
      _
    %p274 = scmp.lt.s32.totalorder %s15, 2
    // Predicated region
    $region45: #{dqn_forward.1} parent=5 // pred_check
      %p275 = pneg %p274
    $region46: #{dqn_forward.1} parent=5 // pred_check_branch
      %277 = sbr.rel (%p275) target = $region48
    $region47: #{dqn_forward.1} parent=5 // pred_region
      // Predicated region
      $region49: #{dqn_forward.1} parent=47 // pred_check
        %p278 = pneg %p35
      $region50: #{dqn_forward.1} parent=47 // pred_check_branch
        %280 = sbr.rel (%p278) target = $region52
      $region51: #{dqn_forward.1} parent=47 // pred_region
        %p281 = scmp.lt.s32.totalorder %s15, 1
        %s282 = scalar_select %p281, %s15, 1
        %s283 = smul.addr %s282, 88
        %s284 = smul.addr %s283, 4
        %s285 = scalar_lea.vmem %s0, %s284
      $region52: #{dqn_forward.1} parent=47 // pred_fallthru
        _
    $region48: #{dqn_forward.1} parent=5 // pred_fallthru
      _
    %p286 = scmp.le.s32.totalorder 1, %s15
    %p287 = scmp.lt.s32.totalorder %s15, 3
    %p288 = pnand %p286, %p287
    %p289 = pneg %p288
    // Predicated region
    $region53: #{dqn_forward.1} parent=5 // pred_check
      _
    $region54: #{dqn_forward.1} parent=5 // pred_check_branch
      %291 = sbr.rel (%p288) target = $region56
    $region55: #{dqn_forward.1} parent=5 // pred_region
      %s292 = ssub.s32 %s15, 1
      %p293 = scmp.lt.s32.totalorder %s20, 1
      %s294 = scalar_select %p293, %s20, 1
      %s295 = smul.addr %s294, 88
      %s296 = smul.addr %s295, 4
      %s297 = scalar_lea.vmem %s0, %s296
      %p298 = pneg %p41
      %p299 = pneg %p38
      %p300 = pneg %p62
      %p301 = pneg %p59
      %p302 = pneg %p83
      %p303 = pneg %p80
      %p304 = pneg %p104
      %p305 = pneg %p101
      %p306 = pneg %p125
      %p307 = pneg %p122
      %p308 = pneg %p146
      %p309 = pneg %p143
      %p310 = pneg %p167
      %p311 = pneg %p164
      %p312 = pneg %p188
      %p313 = pneg %p185
      %p314 = pneg %p209
      %p315 = pneg %p206
      %p316 = pneg %p235
      %p317 = pneg %p232
      %p318 = scmp.lt.s32.totalorder %s20, 1
      %s319 = scalar_select %p318, %s20, 1
      %s320 = smul.addr %s319, 4
      %s321 = smul.addr %s320, 8
      %s322 = scalar_lea.vmem %s9, %s321
      %p323 = scmp.lt.s32.totalorder %s20, 1
      %s324 = scalar_select %p323, %s20, 1
      %s325 = smul.addr %s324, 88
      %s326 = smul.addr %s325, 4
      %s327 = scalar_lea.vmem %s0, %s326
      %p328 = scmp.lt.s32.totalorder %s20, 1
      %s329 = scalar_select %p328, %s20, 1
      %s330 = smul.addr %s329, 4
      %s331 = smul.addr %s330, 8
      %s332 = scalar_lea.vmem %s9, %s331
      %334 = vst [vmem:[#allocation2] sm:$0xf] 0
      %335 = vst [vmem:[#allocation2 + $0x4] sm:$0xf] 0
      %336 = vst [vmem:[#allocation2 + $0x8] sm:$0xf] 0
      %337 = vst [vmem:[#allocation2 + $0xc] sm:$0xf] 0
      %338 = vst [vmem:[#allocation2 + $0xb0] sm:$0xf] 0
      %339 = vst [vmem:[#allocation2 + $0xb4] sm:$0xf] 0
      %340 = vst [vmem:[#allocation2 + $0xb8] sm:$0xf] 0
      %341 = vst [vmem:[#allocation2 + $0xbc] sm:$0xf] 0
      %v342 = vld [vmem:[%s327] sm:$0xf]
      %v343 = vld [vmem:[%s327 + $0x4] sm:$0xf]
      %v344 = vld [vmem:[%s327 + $0x8] sm:$0xf]
      %v345 = vld [vmem:[%s327 + $0xc] sm:$0xf]
      %v346 = vld [vmem:[%s327 + $0x10] sm:$0xf]
      %v347 = vld [vmem:[%s327 + $0x14] sm:$0xf]
      %v348 = vld [vmem:[%s327 + $0x18] sm:$0xf]
      %v349 = vld [vmem:[%s327 + $0x1c] sm:$0xf]
      %v350 = vld [vmem:[%s1] sm:$0xff]
      %v351 = vld [vmem:[%s1 + $0x8] sm:$0xff]
      %v352 = vld [vmem:[%s327 + $0x20] sm:$0xf]
      %v353 = vld [vmem:[%s327 + $0x24] sm:$0xf]
      %v354 = vld [vmem:[%s327 + $0x28] sm:$0xf]
      %v355 = vld [vmem:[%s327 + $0x2c] sm:$0xf]
      %s356 = scalar_lea.vmem %s1, 16
      %v357 = vld [vmem:[%s356] sm:$0xff]
      %v358 = vld [vmem:[%s356 + $0x8] sm:$0xff]
      %v367 = vunpack.c.l.b16 %v346
      %v368 = vunpack.c.l.b16 %v347
      %v369 = vunpack.c.l.b16 %v348
      %v370 = vunpack.c.l.b16 %v349
      %v371 = vunpack.c.l.b16 %v352
      %v372 = vunpack.c.l.b16 %v353
      %v373 = vunpack.c.l.b16 %v354
      %v374 = vunpack.c.l.b16 %v355
      %v375 = vpack.c.b16 %v368, %v367
      %v376 = vpack.c.b16 %v370, %v369
      %v377 = vpack.c.b16 %v372, %v371
      %v378 = vpack.c.b16 %v374, %v373
      %v381 = vunpack.c.l.b16 %v357
      %v382 = vunpack.c.h.b16 %v357
      %v383 = vunpack.c.l.b16 %v358
      %v384 = vunpack.c.h.b16 %v358
      %v385 = vpack.c.b16 %v383, %v381
      %v386 = vpack.c.b16 %v384, %v382
      %vm389 = vcmask 130048
      %v391 = vsel %vm389, %v375, 0
      %v394 = vsel %vm389, %v376, 0
      %v397 = vsel %vm389, %v377, 0
      %v400 = vsel %vm389, %v378, 0
      %402 = vmatprep.subr.bf16.mxu0 0
      %403 = vmatpush1.bf16.msra.mxu0 0
      %404 = vmatprep.subr.bf16.mxu0 0
      %405 = vmatpush1.bf16.msra.mxu0 0
      %406 = vmatprep.subr.bf16.mxu0 0
      %407 = vmatpush1.bf16.msra.mxu0 0
      %408 = vmatprep.subr.bf16.mxu0 0
      %409 = vmatpush1.bf16.msra.mxu0 0
      %410 = vmatprep.subr.bf16.mxu0 0
      %411 = vmatpush1.bf16.msra.mxu0 0
      %412 = vmatprep.subr.bf16.mxu0 0
      %413 = vmatpush1.bf16.msra.mxu0 0
      %414 = vmatprep.subr.bf16.mxu0 0
      %415 = vmatpush1.bf16.msra.mxu0 0
      %416 = vmatprep.subr.bf16.mxu0 %v386
      %417 = vmatpush1.bf16.msra.mxu0 %v385
      %418 = vmatprep.subr.bf16.mxu0 0
      %419 = vmatpush2.bf16.msra.mxu0 0
      %420 = vmatprep.subr.bf16.mxu0 0
      %421 = vmatpush2.bf16.msra.mxu0 0
      %422 = vmatprep.subr.bf16.mxu0 0
      %423 = vmatpush2.bf16.msra.mxu0 0
      %424 = vmatprep.subr.bf16.mxu0 0
      %425 = vmatpush2.bf16.msra.mxu0 0
      %426 = vmatprep.subr.bf16.mxu0 0
      %427 = vmatpush2.bf16.msra.mxu0 0
      %428 = vmatprep.subr.bf16.mxu0 0
      %429 = vmatpush2.bf16.msra.mxu0 0
      %430 = vmatprep.subr.bf16.mxu0 0
      %431 = vmatpush2.bf16.msra.mxu0 0
      %432 = vmatprep.subr.bf16.mxu0 0
      %433 = vmatpush2.bf16.msra.mxu0 0
      %434 = vmatprep.mubr.bf16.mxu0 0
      %435 = vmatmul.mubr.bf16.gmra.mxu0 %v391
      %v436 = vpop.f32.mrf.mxu0
      %v437 = vadd.f32 0.0, %v436
      %v438 = vpop.f32.mrf.mxu0
      %v439 = vadd.f32 0.0, %v438
      %v440 = vpop.f32.mrf.mxu0
      %v441 = vadd.f32 0.0, %v440
      %v442 = vpop.f32.mrf.mxu0
      %v443 = vadd.f32 0.0, %v442
      %444 = vmatprep.mubr.bf16.mxu0 0
      %445 = vmatmul.mubr.bf16.gmra.mxu0 %v394
      %v446 = vpop.f32.mrf.mxu0
      %v447 = vadd.f32 0.0, %v446
      %v448 = vpop.f32.mrf.mxu0
      %v449 = vadd.f32 0.0, %v448
      %v450 = vpop.f32.mrf.mxu0
      %v451 = vadd.f32 0.0, %v450
      %v452 = vpop.f32.mrf.mxu0
      %v453 = vadd.f32 0.0, %v452
      %454 = vmatprep.mubr.bf16.mxu0 0
      %455 = vmatmul.mubr.bf16.gmra.mxu0 %v397
      %v456 = vpop.f32.mrf.mxu0
      %v457 = vadd.f32 0.0, %v456
      %v458 = vpop.f32.mrf.mxu0
      %v459 = vadd.f32 0.0, %v458
      %v460 = vpop.f32.mrf.mxu0
      %v461 = vadd.f32 0.0, %v460
      %v462 = vpop.f32.mrf.mxu0
      %v463 = vadd.f32 0.0, %v462
      %464 = vmatprep.mubr.bf16.mxu0 0
      %465 = vmatmul.mubr.bf16.gmra.mxu0 %v400
      %v466 = vpop.f32.mrf.mxu0
      %v467 = vadd.f32 0.0, %v466
      %v468 = vpop.f32.mrf.mxu0
      %v469 = vadd.f32 0.0, %v468
      %v470 = vpop.f32.mrf.mxu0
      %v471 = vadd.f32 0.0, %v470
      %v472 = vpop.f32.mrf.mxu0
      %v473 = vadd.f32 0.0, %v472
      %474 = vdwg.mxu0
      %v479 = vunpack.c.l.b16 %v342
      %v480 = vunpack.c.l.b16 %v343
      %v481 = vunpack.c.l.b16 %v344
      %v482 = vunpack.c.l.b16 %v345
      %v483 = vpack.c.b16 %v480, %v479
      %v484 = vpack.c.b16 %v482, %v481
      %v487 = vunpack.c.l.b16 %v350
      %v488 = vunpack.c.h.b16 %v350
      %v489 = vunpack.c.l.b16 %v351
      %v490 = vunpack.c.h.b16 %v351
      %v491 = vpack.c.b16 %v489, %v487
      %v492 = vpack.c.b16 %v490, %v488
      %v496 = vsel %vm389, %v483, 0
      %v499 = vsel %vm389, %v484, 0
      %501 = vmatprep.subr.bf16.mxu0 0
      %502 = vmatpush1.bf16.msra.mxu0 0
      %503 = vmatprep.subr.bf16.mxu0 0
      %504 = vmatpush1.bf16.msra.mxu0 0
      %505 = vmatprep.subr.bf16.mxu0 0
      %506 = vmatpush1.bf16.msra.mxu0 0
      %507 = vmatprep.subr.bf16.mxu0 0
      %508 = vmatpush1.bf16.msra.mxu0 0
      %509 = vmatprep.subr.bf16.mxu0 0
      %510 = vmatpush1.bf16.msra.mxu0 0
      %511 = vmatprep.subr.bf16.mxu0 0
      %512 = vmatpush1.bf16.msra.mxu0 0
      %513 = vmatprep.subr.bf16.mxu0 0
      %514 = vmatpush1.bf16.msra.mxu0 0
      %515 = vmatprep.subr.bf16.mxu0 %v492
      %516 = vmatpush1.bf16.msra.mxu0 %v491
      %517 = vmatprep.subr.bf16.mxu0 0
      %518 = vmatpush2.bf16.msra.mxu0 0
      %519 = vmatprep.subr.bf16.mxu0 0
      %520 = vmatpush2.bf16.msra.mxu0 0
      %521 = vmatprep.subr.bf16.mxu0 0
      %522 = vmatpush2.bf16.msra.mxu0 0
      %523 = vmatprep.subr.bf16.mxu0 0
      %524 = vmatpush2.bf16.msra.mxu0 0
      %525 = vmatprep.subr.bf16.mxu0 0
      %526 = vmatpush2.bf16.msra.mxu0 0
      %527 = vmatprep.subr.bf16.mxu0 0
      %528 = vmatpush2.bf16.msra.mxu0 0
      %529 = vmatprep.subr.bf16.mxu0 0
      %530 = vmatpush2.bf16.msra.mxu0 0
      %531 = vmatprep.subr.bf16.mxu0 0
      %532 = vmatpush2.bf16.msra.mxu0 0
      %533 = vmatprep.mubr.bf16.mxu0 0
      %534 = vmatmul.mubr.bf16.gmra.mxu0 %v496
      %v535 = vpop.f32.mrf.mxu0
      %v536 = vadd.f32 %v437, %v535
      %v537 = vpop.f32.mrf.mxu0
      %v538 = vadd.f32 %v439, %v537
      %v539 = vpop.f32.mrf.mxu0
      %v540 = vadd.f32 %v441, %v539
      %v541 = vpop.f32.mrf.mxu0
      %v542 = vadd.f32 %v443, %v541
      %543 = vmatprep.mubr.bf16.mxu0 0
      %544 = vmatmul.mubr.bf16.gmra.mxu0 %v499
      %v545 = vpop.f32.mrf.mxu0
      %v546 = vadd.f32 %v447, %v545
      %v547 = vpop.f32.mrf.mxu0
      %v548 = vadd.f32 %v449, %v547
      %v549 = vpop.f32.mrf.mxu0
      %v550 = vadd.f32 %v451, %v549
      %v551 = vpop.f32.mrf.mxu0
      %v552 = vadd.f32 %v453, %v551
      %553 = vmatprep.mubr.bf16.mxu0 0
      %554 = vmatmul.mubr.bf16.gmra.mxu0 %v391
      %v555 = vpop.f32.mrf.mxu0
      %v556 = vadd.f32 %v457, %v555
      %v557 = vpop.f32.mrf.mxu0
      %v558 = vadd.f32 %v459, %v557
      %v559 = vpop.f32.mrf.mxu0
      %v560 = vadd.f32 %v461, %v559
      %v561 = vpop.f32.mrf.mxu0
      %v562 = vadd.f32 %v463, %v561
      %563 = vmatprep.mubr.bf16.mxu0 0
      %564 = vmatmul.mubr.bf16.gmra.mxu0 %v394
      %v565 = vpop.f32.mrf.mxu0
      %v566 = vadd.f32 %v467, %v565
      %v567 = vpop.f32.mrf.mxu0
      %v568 = vadd.f32 %v469, %v567
      %v569 = vpop.f32.mrf.mxu0
      %v570 = vadd.f32 %v471, %v569
      %v571 = vpop.f32.mrf.mxu0
      %v572 = vadd.f32 %v473, %v571
      %573 = vdwg.mxu0
      %v574 = vld [vmem:[%s327 + $0x20] sm:$0xf]
      %v575 = vld [vmem:[%s327 + $0x24] sm:$0xf]
      %v576 = vld [vmem:[%s327 + $0x28] sm:$0xf]
      %v577 = vld [vmem:[%s327 + $0x2c] sm:$0xf]
      %v578 = vld [vmem:[%s327 + $0x30] sm:$0xf]
      %v579 = vld [vmem:[%s327 + $0x34] sm:$0xf]
      %v580 = vld [vmem:[%s327 + $0x38] sm:$0xf]
      %v581 = vld [vmem:[%s327 + $0x3c] sm:$0xf]
      %s582 = scalar_lea.vmem %s1, 32
      %v583 = vld [vmem:[%s582] sm:$0xff]
      %v584 = vld [vmem:[%s582 + $0x8] sm:$0xff]
      %v593 = vunpack.c.l.b16 %v574
      %v594 = vunpack.c.l.b16 %v575
      %v595 = vunpack.c.l.b16 %v576
      %v596 = vunpack.c.l.b16 %v577
      %v597 = vunpack.c.l.b16 %v578
      %v598 = vunpack.c.l.b16 %v579
      %v599 = vunpack.c.l.b16 %v580
      %v600 = vunpack.c.l.b16 %v581
      %v601 = vpack.c.b16 %v594, %v593
      %v602 = vpack.c.b16 %v596, %v595
      %v603 = vpack.c.b16 %v598, %v597
      %v604 = vpack.c.b16 %v600, %v599
      %v607 = vunpack.c.l.b16 %v583
      %v608 = vunpack.c.h.b16 %v583
      %v609 = vunpack.c.l.b16 %v584
      %v610 = vunpack.c.h.b16 %v584
      %v611 = vpack.c.b16 %v609, %v607
      %v612 = vpack.c.b16 %v610, %v608
      %v616 = vsel %vm389, %v601, 0
      %v619 = vsel %vm389, %v602, 0
      %v622 = vsel %vm389, %v603, 0
      %v625 = vsel %vm389, %v604, 0
      %627 = vmatprep.subr.bf16.mxu0 0
      %628 = vmatpush1.bf16.msra.mxu0 0
      %629 = vmatprep.subr.bf16.mxu0 0
      %630 = vmatpush1.bf16.msra.mxu0 0
      %631 = vmatprep.subr.bf16.mxu0 0
      %632 = vmatpush1.bf16.msra.mxu0 0
      %633 = vmatprep.subr.bf16.mxu0 0
      %634 = vmatpush1.bf16.msra.mxu0 0
      %635 = vmatprep.subr.bf16.mxu0 0
      %636 = vmatpush1.bf16.msra.mxu0 0
      %637 = vmatprep.subr.bf16.mxu0 0
      %638 = vmatpush1.bf16.msra.mxu0 0
      %639 = vmatprep.subr.bf16.mxu0 0
      %640 = vmatpush1.bf16.msra.mxu0 0
      %641 = vmatprep.subr.bf16.mxu0 %v612
      %642 = vmatpush1.bf16.msra.mxu0 %v611
      %643 = vmatprep.subr.bf16.mxu0 0
      %644 = vmatpush2.bf16.msra.mxu0 0
      %645 = vmatprep.subr.bf16.mxu0 0
      %646 = vmatpush2.bf16.msra.mxu0 0
      %647 = vmatprep.subr.bf16.mxu0 0
      %648 = vmatpush2.bf16.msra.mxu0 0
      %649 = vmatprep.subr.bf16.mxu0 0
      %650 = vmatpush2.bf16.msra.mxu0 0
      %651 = vmatprep.subr.bf16.mxu0 0
      %652 = vmatpush2.bf16.msra.mxu0 0
      %653 = vmatprep.subr.bf16.mxu0 0
      %654 = vmatpush2.bf16.msra.mxu0 0
      %655 = vmatprep.subr.bf16.mxu0 0
      %656 = vmatpush2.bf16.msra.mxu0 0
      %657 = vmatprep.subr.bf16.mxu0 0
      %658 = vmatpush2.bf16.msra.mxu0 0
      %659 = vmatprep.mubr.bf16.mxu0 0
      %660 = vmatmul.mubr.bf16.gmra.mxu0 %v616
      %v661 = vpop.f32.mrf.mxu0
      %v662 = vadd.f32 0.0, %v661
      %v663 = vpop.f32.mrf.mxu0
      %v664 = vadd.f32 0.0, %v663
      %v665 = vpop.f32.mrf.mxu0
      %v666 = vadd.f32 0.0, %v665
      %v667 = vpop.f32.mrf.mxu0
      %v668 = vadd.f32 0.0, %v667
      %669 = vmatprep.mubr.bf16.mxu0 0
      %670 = vmatmul.mubr.bf16.gmra.mxu0 %v619
      %v671 = vpop.f32.mrf.mxu0
      %v672 = vadd.f32 0.0, %v671
      %v673 = vpop.f32.mrf.mxu0
      %v674 = vadd.f32 0.0, %v673
      %v675 = vpop.f32.mrf.mxu0
      %v676 = vadd.f32 0.0, %v675
      %v677 = vpop.f32.mrf.mxu0
      %v678 = vadd.f32 0.0, %v677
      %679 = vmatprep.mubr.bf16.mxu0 0
      %680 = vmatmul.mubr.bf16.gmra.mxu0 %v622
      %v681 = vpop.f32.mrf.mxu0
      %v682 = vadd.f32 0.0, %v681
      %v683 = vpop.f32.mrf.mxu0
      %v684 = vadd.f32 0.0, %v683
      %v685 = vpop.f32.mrf.mxu0
      %v686 = vadd.f32 0.0, %v685
      %v687 = vpop.f32.mrf.mxu0
      %v688 = vadd.f32 0.0, %v687
      %689 = vmatprep.mubr.bf16.mxu0 0
      %690 = vmatmul.mubr.bf16.gmra.mxu0 %v625
      %v691 = vpop.f32.mrf.mxu0
      %v692 = vadd.f32 0.0, %v691
      %v693 = vpop.f32.mrf.mxu0
      %v694 = vadd.f32 0.0, %v693
      %v695 = vpop.f32.mrf.mxu0
      %v696 = vadd.f32 0.0, %v695
      %v697 = vpop.f32.mrf.mxu0
      %v698 = vadd.f32 0.0, %v697
      %699 = vdwg.mxu0
      %v700 = vadd.f32 %v536, %v662
      %v701 = vadd.f32 %v538, %v664
      %v702 = vadd.f32 %v540, %v666
      %v703 = vadd.f32 %v542, %v668
      %v704 = vadd.f32 %v546, %v672
      %v705 = vadd.f32 %v548, %v674
      %v706 = vadd.f32 %v550, %v676
      %v707 = vadd.f32 %v552, %v678
      %v708 = vadd.f32 %v556, %v682
      %v709 = vadd.f32 %v558, %v684
      %v710 = vadd.f32 %v560, %v686
      %v711 = vadd.f32 %v562, %v688
      %v712 = vadd.f32 %v566, %v692
      %v713 = vadd.f32 %v568, %v694
      %v714 = vadd.f32 %v570, %v696
      %v715 = vadd.f32 %v572, %v698
      %v716 = vld [vmem:[%s2] sm:$0x3]
      %v718 = vlaneseq
      %v719 = vshrl.u32 %v718, 7
      %v720 = vsub.s32 0, %v719
      %v721 = vrot.slane %v716, %v720
      %v722 = vlaneseq
      %v723 = vshrl.u32 %v722, 7
      %v724 = vsub.s32 1, %v723
      %v725 = vrot.slane %v716, %v724
      %v728 = vadd.f32 %v700, %v721
      %v729 = vadd.f32 %v701, %v725
      %v730 = vadd.f32 %v702, %v721
      %v731 = vadd.f32 %v703, %v725
      %v732 = vadd.f32 %v704, %v721
      %v733 = vadd.f32 %v705, %v725
      %v734 = vadd.f32 %v706, %v721
      %v735 = vadd.f32 %v707, %v725
      %v736 = vadd.f32 %v708, %v721
      %v737 = vadd.f32 %v709, %v725
      %v738 = vadd.f32 %v710, %v721
      %v739 = vadd.f32 %v711, %v725
      %v740 = vadd.f32 %v712, %v721
      %v741 = vadd.f32 %v713, %v725
      %v742 = vadd.f32 %v714, %v721
      %v743 = vadd.f32 %v715, %v725
      %v744 = vtanh.pop %v728
      %v745 = vtanh.pop %v729
      %v746 = vtanh.pop %v730
      %v747 = vtanh.pop %v731
      %v748 = vtanh.pop %v732
      %v749 = vtanh.pop %v733
      %v750 = vtanh.pop %v734
      %v751 = vtanh.pop %v735
      %v752 = vtanh.pop %v736
      %v753 = vtanh.pop %v737
      %v754 = vtanh.pop %v738
      %v755 = vtanh.pop %v739
      %v756 = vtanh.pop %v740
      %v757 = vtanh.pop %v741
      %v758 = vtanh.pop %v742
      %v759 = vtanh.pop %v743
      %v760 = vmax.f32 %v744, %v745
      %v761 = vmax.f32 %v746, %v747
      %v762 = vmax.f32 %v748, %v749
      %v763 = vmax.f32 %v750, %v751
      %v764 = vmax.f32 %v752, %v753
      %v765 = vmax.f32 %v754, %v755
      %v766 = vmax.f32 %v756, %v757
      %v767 = vmax.f32 %v758, %v759
      %v768 = vmax.f32 %v760, %v764
      %v769 = vmax.f32 %v761, %v765
      %v770 = vmax.f32 %v762, %v766
      %v771 = vmax.f32 %v763, %v767
      %v772 = vpack.c.bf16 %v769, %v768
      %v773 = vpack.c.bf16 %v771, %v770
      %v776 = vunpack.c.l.b16 %v772
      %v777 = vunpack.c.h.b16 %v772
      %v778 = vunpack.c.l.b16 %v773
      %v779 = vunpack.c.h.b16 %v773
      %v780 = vpack.c.b16 %v776, %v776
      %v781 = vpack.c.b16 %v777, %v777
      %v782 = vpack.c.b16 %v778, %v778
      %v783 = vpack.c.b16 %v779, %v779
      %788 = vst [vmem:[#allocation2 + $0x10] sm:$0xf] %v780
      %789 = vst [vmem:[#allocation2 + $0x14] sm:$0xf] %v781
      %790 = vst [vmem:[#allocation2 + $0x18] sm:$0xf] %v782
      %791 = vst [vmem:[#allocation2 + $0x1c] sm:$0xf] %v783
      %v792 = vld [vmem:[%s327 + $0x20] sm:$0xf]
      %v793 = vld [vmem:[%s327 + $0x24] sm:$0xf]
      %v794 = vld [vmem:[%s327 + $0x28] sm:$0xf]
      %v795 = vld [vmem:[%s327 + $0x2c] sm:$0xf]
      %v796 = vld [vmem:[%s327 + $0x30] sm:$0xf]
      %v797 = vld [vmem:[%s327 + $0x34] sm:$0xf]
      %v798 = vld [vmem:[%s327 + $0x38] sm:$0xf]
      %v799 = vld [vmem:[%s327 + $0x3c] sm:$0xf]
      %v800 = vld [vmem:[%s1] sm:$0xff]
      %v801 = vld [vmem:[%s1 + $0x8] sm:$0xff]
      %v802 = vld [vmem:[%s327 + $0x40] sm:$0xf]
      %v803 = vld [vmem:[%s327 + $0x44] sm:$0xf]
      %v804 = vld [vmem:[%s327 + $0x48] sm:$0xf]
      %v805 = vld [vmem:[%s327 + $0x4c] sm:$0xf]
      %v806 = vld [vmem:[%s356] sm:$0xff]
      %v807 = vld [vmem:[%s356 + $0x8] sm:$0xff]
      %v816 = vunpack.c.l.b16 %v796
      %v817 = vunpack.c.l.b16 %v797
      %v818 = vunpack.c.l.b16 %v798
      %v819 = vunpack.c.l.b16 %v799
      %v820 = vunpack.c.l.b16 %v802
      %v821 = vunpack.c.l.b16 %v803
      %v822 = vunpack.c.l.b16 %v804
      %v823 = vunpack.c.l.b16 %v805
      %v824 = vpack.c.b16 %v817, %v816
      %v825 = vpack.c.b16 %v819, %v818
      %v826 = vpack.c.b16 %v821, %v820
      %v827 = vpack.c.b16 %v823, %v822
      %v830 = vunpack.c.l.b16 %v806
      %v831 = vunpack.c.h.b16 %v806
      %v832 = vunpack.c.l.b16 %v807
      %v833 = vunpack.c.h.b16 %v807
      %v834 = vpack.c.b16 %v832, %v830
      %v835 = vpack.c.b16 %v833, %v831
      %v839 = vsel %vm389, %v824, 0
      %v842 = vsel %vm389, %v825, 0
      %v845 = vsel %vm389, %v826, 0
      %v848 = vsel %vm389, %v827, 0
      %850 = vmatprep.subr.bf16.mxu0 0
      %851 = vmatpush1.bf16.msra.mxu0 0
      %852 = vmatprep.subr.bf16.mxu0 0
      %853 = vmatpush1.bf16.msra.mxu0 0
      %854 = vmatprep.subr.bf16.mxu0 0
      %855 = vmatpush1.bf16.msra.mxu0 0
      %856 = vmatprep.subr.bf16.mxu0 0
      %857 = vmatpush1.bf16.msra.mxu0 0
      %858 = vmatprep.subr.bf16.mxu0 0
      %859 = vmatpush1.bf16.msra.mxu0 0
      %860 = vmatprep.subr.bf16.mxu0 0
      %861 = vmatpush1.bf16.msra.mxu0 0
      %862 = vmatprep.subr.bf16.mxu0 0
      %863 = vmatpush1.bf16.msra.mxu0 0
      %864 = vmatprep.subr.bf16.mxu0 %v835
      %865 = vmatpush1.bf16.msra.mxu0 %v834
      %866 = vmatprep.subr.bf16.mxu0 0
      %867 = vmatpush2.bf16.msra.mxu0 0
      %868 = vmatprep.subr.bf16.mxu0 0
      %869 = vmatpush2.bf16.msra.mxu0 0
      %870 = vmatprep.subr.bf16.mxu0 0
      %871 = vmatpush2.bf16.msra.mxu0 0
      %872 = vmatprep.subr.bf16.mxu0 0
      %873 = vmatpush2.bf16.msra.mxu0 0
      %874 = vmatprep.subr.bf16.mxu0 0
      %875 = vmatpush2.bf16.msra.mxu0 0
      %876 = vmatprep.subr.bf16.mxu0 0
      %877 = vmatpush2.bf16.msra.mxu0 0
      %878 = vmatprep.subr.bf16.mxu0 0
      %879 = vmatpush2.bf16.msra.mxu0 0
      %880 = vmatprep.subr.bf16.mxu0 0
      %881 = vmatpush2.bf16.msra.mxu0 0
      %882 = vmatprep.mubr.bf16.mxu0 0
      %883 = vmatmul.mubr.bf16.gmra.mxu0 %v839
      %v884 = vpop.f32.mrf.mxu0
      %v885 = vadd.f32 0.0, %v884
      %v886 = vpop.f32.mrf.mxu0
      %v887 = vadd.f32 0.0, %v886
      %v888 = vpop.f32.mrf.mxu0
      %v889 = vadd.f32 0.0, %v888
      %v890 = vpop.f32.mrf.mxu0
      %v891 = vadd.f32 0.0, %v890
      %892 = vmatprep.mubr.bf16.mxu0 0
      %893 = vmatmul.mubr.bf16.gmra.mxu0 %v842
      %v894 = vpop.f32.mrf.mxu0
      %v895 = vadd.f32 0.0, %v894
      %v896 = vpop.f32.mrf.mxu0
      %v897 = vadd.f32 0.0, %v896
      %v898 = vpop.f32.mrf.mxu0
      %v899 = vadd.f32 0.0, %v898
      %v900 = vpop.f32.mrf.mxu0
      %v901 = vadd.f32 0.0, %v900
      %902 = vmatprep.mubr.bf16.mxu0 0
      %903 = vmatmul.mubr.bf16.gmra.mxu0 %v845
      %v904 = vpop.f32.mrf.mxu0
      %v905 = vadd.f32 0.0, %v904
      %v906 = vpop.f32.mrf.mxu0
      %v907 = vadd.f32 0.0, %v906
      %v908 = vpop.f32.mrf.mxu0
      %v909 = vadd.f32 0.0, %v908
      %v910 = vpop.f32.mrf.mxu0
      %v911 = vadd.f32 0.0, %v910
      %912 = vmatprep.mubr.bf16.mxu0 0
      %913 = vmatmul.mubr.bf16.gmra.mxu0 %v848
      %v914 = vpop.f32.mrf.mxu0
      %v915 = vadd.f32 0.0, %v914
      %v916 = vpop.f32.mrf.mxu0
      %v917 = vadd.f32 0.0, %v916
      %v918 = vpop.f32.mrf.mxu0
      %v919 = vadd.f32 0.0, %v918
      %v920 = vpop.f32.mrf.mxu0
      %v921 = vadd.f32 0.0, %v920
      %922 = vdwg.mxu0
      %v927 = vunpack.c.l.b16 %v792
      %v928 = vunpack.c.l.b16 %v793
      %v929 = vunpack.c.l.b16 %v794
      %v930 = vunpack.c.l.b16 %v795
      %v931 = vpack.c.b16 %v928, %v927
      %v932 = vpack.c.b16 %v930, %v929
      %v935 = vunpack.c.l.b16 %v800
      %v936 = vunpack.c.h.b16 %v800
      %v937 = vunpack.c.l.b16 %v801
      %v938 = vunpack.c.h.b16 %v801
      %v939 = vpack.c.b16 %v937, %v935
      %v940 = vpack.c.b16 %v938, %v936
      %v944 = vsel %vm389, %v931, 0
      %v947 = vsel %vm389, %v932, 0
      %949 = vmatprep.subr.bf16.mxu0 0
      %950 = vmatpush1.bf16.msra.mxu0 0
      %951 = vmatprep.subr.bf16.mxu0 0
      %952 = vmatpush1.bf16.msra.mxu0 0
      %953 = vmatprep.subr.bf16.mxu0 0
      %954 = vmatpush1.bf16.msra.mxu0 0
      %955 = vmatprep.subr.bf16.mxu0 0
      %956 = vmatpush1.bf16.msra.mxu0 0
      %957 = vmatprep.subr.bf16.mxu0 0
      %958 = vmatpush1.bf16.msra.mxu0 0
      %959 = vmatprep.subr.bf16.mxu0 0
      %960 = vmatpush1.bf16.msra.mxu0 0
      %961 = vmatprep.subr.bf16.mxu0 0
      %962 = vmatpush1.bf16.msra.mxu0 0
      %963 = vmatprep.subr.bf16.mxu0 %v940
      %964 = vmatpush1.bf16.msra.mxu0 %v939
      %965 = vmatprep.subr.bf16.mxu0 0
      %966 = vmatpush2.bf16.msra.mxu0 0
      %967 = vmatprep.subr.bf16.mxu0 0
      %968 = vmatpush2.bf16.msra.mxu0 0
      %969 = vmatprep.subr.bf16.mxu0 0
      %970 = vmatpush2.bf16.msra.mxu0 0
      %971 = vmatprep.subr.bf16.mxu0 0
      %972 = vmatpush2.bf16.msra.mxu0 0
      %973 = vmatprep.subr.bf16.mxu0 0
      %974 = vmatpush2.bf16.msra.mxu0 0
      %975 = vmatprep.subr.bf16.mxu0 0
      %976 = vmatpush2.bf16.msra.mxu0 0
      %977 = vmatprep.subr.bf16.mxu0 0
      %978 = vmatpush2.bf16.msra.mxu0 0
      %979 = vmatprep.subr.bf16.mxu0 0
      %980 = vmatpush2.bf16.msra.mxu0 0
      %981 = vmatprep.mubr.bf16.mxu0 0
      %982 = vmatmul.mubr.bf16.gmra.mxu0 %v944
      %v983 = vpop.f32.mrf.mxu0
      %v984 = vadd.f32 %v885, %v983
      %v985 = vpop.f32.mrf.mxu0
      %v986 = vadd.f32 %v887, %v985
      %v987 = vpop.f32.mrf.mxu0
      %v988 = vadd.f32 %v889, %v987
      %v989 = vpop.f32.mrf.mxu0
      %v990 = vadd.f32 %v891, %v989
      %991 = vmatprep.mubr.bf16.mxu0 0
      %992 = vmatmul.mubr.bf16.gmra.mxu0 %v947
      %v993 = vpop.f32.mrf.mxu0
      %v994 = vadd.f32 %v895, %v993
      %v995 = vpop.f32.mrf.mxu0
      %v996 = vadd.f32 %v897, %v995
      %v997 = vpop.f32.mrf.mxu0
      %v998 = vadd.f32 %v899, %v997
      %v999 = vpop.f32.mrf.mxu0
      %v1000 = vadd.f32 %v901, %v999
      %1001 = vmatprep.mubr.bf16.mxu0 0
      %1002 = vmatmul.mubr.bf16.gmra.mxu0 %v839
      %v1003 = vpop.f32.mrf.mxu0
      %v1004 = vadd.f32 %v905, %v1003
      %v1005 = vpop.f32.mrf.mxu0
      %v1006 = vadd.f32 %v907, %v1005
      %v1007 = vpop.f32.mrf.mxu0
      %v1008 = vadd.f32 %v909, %v1007
      %v1009 = vpop.f32.mrf.mxu0
      %v1010 = vadd.f32 %v911, %v1009
      %1011 = vmatprep.mubr.bf16.mxu0 0
      %1012 = vmatmul.mubr.bf16.gmra.mxu0 %v842
      %v1013 = vpop.f32.mrf.mxu0
      %v1014 = vadd.f32 %v915, %v1013
      %v1015 = vpop.f32.mrf.mxu0
      %v1016 = vadd.f32 %v917, %v1015
      %v1017 = vpop.f32.mrf.mxu0
      %v1018 = vadd.f32 %v919, %v1017
      %v1019 = vpop.f32.mrf.mxu0
      %v1020 = vadd.f32 %v921, %v1019
      %1021 = vdwg.mxu0
      %v1022 = vld [vmem:[%s327 + $0x40] sm:$0xf]
      %v1023 = vld [vmem:[%s327 + $0x44] sm:$0xf]
      %v1024 = vld [vmem:[%s327 + $0x48] sm:$0xf]
      %v1025 = vld [vmem:[%s327 + $0x4c] sm:$0xf]
      %v1026 = vld [vmem:[%s327 + $0x50] sm:$0xf]
      %v1027 = vld [vmem:[%s327 + $0x54] sm:$0xf]
      %v1028 = vld [vmem:[%s327 + $0x58] sm:$0xf]
      %v1029 = vld [vmem:[%s327 + $0x5c] sm:$0xf]
      %v1030 = vld [vmem:[%s582] sm:$0xff]
      %v1031 = vld [vmem:[%s582 + $0x8] sm:$0xff]
      %v1040 = vunpack.c.l.b16 %v1022
      %v1041 = vunpack.c.l.b16 %v1023
      %v1042 = vunpack.c.l.b16 %v1024
      %v1043 = vunpack.c.l.b16 %v1025
      %v1044 = vunpack.c.l.b16 %v1026
      %v1045 = vunpack.c.l.b16 %v1027
      %v1046 = vunpack.c.l.b16 %v1028
      %v1047 = vunpack.c.l.b16 %v1029
      %v1048 = vpack.c.b16 %v1041, %v1040
      %v1049 = vpack.c.b16 %v1043, %v1042
      %v1050 = vpack.c.b16 %v1045, %v1044
      %v1051 = vpack.c.b16 %v1047, %v1046
      %v1054 = vunpack.c.l.b16 %v1030
      %v1055 = vunpack.c.h.b16 %v1030
      %v1056 = vunpack.c.l.b16 %v1031
      %v1057 = vunpack.c.h.b16 %v1031
      %v1058 = vpack.c.b16 %v1056, %v1054
      %v1059 = vpack.c.b16 %v1057, %v1055
      %v1063 = vsel %vm389, %v1048, 0
      %v1066 = vsel %vm389, %v1049, 0
      %v1069 = vsel %vm389, %v1050, 0
      %v1072 = vsel %vm389, %v1051, 0
      %1074 = vmatprep.subr.bf16.mxu0 0
      %1075 = vmatpush1.bf16.msra.mxu0 0
      %1076 = vmatprep.subr.bf16.mxu0 0
      %1077 = vmatpush1.bf16.msra.mxu0 0
      %1078 = vmatprep.subr.bf16.mxu0 0
      %1079 = vmatpush1.bf16.msra.mxu0 0
      %1080 = vmatprep.subr.bf16.mxu0 0
      %1081 = vmatpush1.bf16.msra.mxu0 0
      %1082 = vmatprep.subr.bf16.mxu0 0
      %1083 = vmatpush1.bf16.msra.mxu0 0
      %1084 = vmatprep.subr.bf16.mxu0 0
      %1085 = vmatpush1.bf16.msra.mxu0 0
      %1086 = vmatprep.subr.bf16.mxu0 0
      %1087 = vmatpush1.bf16.msra.mxu0 0
      %1088 = vmatprep.subr.bf16.mxu0 %v1059
      %1089 = vmatpush1.bf16.msra.mxu0 %v1058
      %1090 = vmatprep.subr.bf16.mxu0 0
      %1091 = vmatpush2.bf16.msra.mxu0 0
      %1092 = vmatprep.subr.bf16.mxu0 0
      %1093 = vmatpush2.bf16.msra.mxu0 0
      %1094 = vmatprep.subr.bf16.mxu0 0
      %1095 = vmatpush2.bf16.msra.mxu0 0
      %1096 = vmatprep.subr.bf16.mxu0 0
      %1097 = vmatpush2.bf16.msra.mxu0 0
      %1098 = vmatprep.subr.bf16.mxu0 0
      %1099 = vmatpush2.bf16.msra.mxu0 0
      %1100 = vmatprep.subr.bf16.mxu0 0
      %1101 = vmatpush2.bf16.msra.mxu0 0
      %1102 = vmatprep.subr.bf16.mxu0 0
      %1103 = vmatpush2.bf16.msra.mxu0 0
      %1104 = vmatprep.subr.bf16.mxu0 0
      %1105 = vmatpush2.bf16.msra.mxu0 0
      %1106 = vmatprep.mubr.bf16.mxu0 0
      %1107 = vmatmul.mubr.bf16.gmra.mxu0 %v1063
      %v1108 = vpop.f32.mrf.mxu0
      %v1109 = vadd.f32 0.0, %v1108
      %v1110 = vpop.f32.mrf.mxu0
      %v1111 = vadd.f32 0.0, %v1110
      %v1112 = vpop.f32.mrf.mxu0
      %v1113 = vadd.f32 0.0, %v1112
      %v1114 = vpop.f32.mrf.mxu0
      %v1115 = vadd.f32 0.0, %v1114
      %1116 = vmatprep.mubr.bf16.mxu0 0
      %1117 = vmatmul.mubr.bf16.gmra.mxu0 %v1066
      %v1118 = vpop.f32.mrf.mxu0
      %v1119 = vadd.f32 0.0, %v1118
      %v1120 = vpop.f32.mrf.mxu0
      %v1121 = vadd.f32 0.0, %v1120
      %v1122 = vpop.f32.mrf.mxu0
      %v1123 = vadd.f32 0.0, %v1122
      %v1124 = vpop.f32.mrf.mxu0
      %v1125 = vadd.f32 0.0, %v1124
      %1126 = vmatprep.mubr.bf16.mxu0 0
      %1127 = vmatmul.mubr.bf16.gmra.mxu0 %v1069
      %v1128 = vpop.f32.mrf.mxu0
      %v1129 = vadd.f32 0.0, %v1128
      %v1130 = vpop.f32.mrf.mxu0
      %v1131 = vadd.f32 0.0, %v1130
      %v1132 = vpop.f32.mrf.mxu0
      %v1133 = vadd.f32 0.0, %v1132
      %v1134 = vpop.f32.mrf.mxu0
      %v1135 = vadd.f32 0.0, %v1134
      %1136 = vmatprep.mubr.bf16.mxu0 0
      %1137 = vmatmul.mubr.bf16.gmra.mxu0 %v1072
      %v1138 = vpop.f32.mrf.mxu0
      %v1139 = vadd.f32 0.0, %v1138
      %v1140 = vpop.f32.mrf.mxu0
      %v1141 = vadd.f32 0.0, %v1140
      %v1142 = vpop.f32.mrf.mxu0
      %v1143 = vadd.f32 0.0, %v1142
      %v1144 = vpop.f32.mrf.mxu0
      %v1145 = vadd.f32 0.0, %v1144
      %1146 = vdwg.mxu0
      %v1147 = vadd.f32 %v984, %v1109
      %v1148 = vadd.f32 %v986, %v1111
      %v1149 = vadd.f32 %v988, %v1113
      %v1150 = vadd.f32 %v990, %v1115
      %v1151 = vadd.f32 %v994, %v1119
      %v1152 = vadd.f32 %v996, %v1121
      %v1153 = vadd.f32 %v998, %v1123
      %v1154 = vadd.f32 %v1000, %v1125
      %v1155 = vadd.f32 %v1004, %v1129
      %v1156 = vadd.f32 %v1006, %v1131
      %v1157 = vadd.f32 %v1008, %v1133
      %v1158 = vadd.f32 %v1010, %v1135
      %v1159 = vadd.f32 %v1014, %v1139
      %v1160 = vadd.f32 %v1016, %v1141
      %v1161 = vadd.f32 %v1018, %v1143
      %v1162 = vadd.f32 %v1020, %v1145
      %v1163 = vld [vmem:[%s2] sm:$0x3]
      %v1165 = vlaneseq
      %v1166 = vshrl.u32 %v1165, 7
      %v1167 = vsub.s32 0, %v1166
      %v1168 = vrot.slane %v1163, %v1167
      %v1169 = vlaneseq
      %v1170 = vshrl.u32 %v1169, 7
      %v1171 = vsub.s32 1, %v1170
      %v1172 = vrot.slane %v1163, %v1171
      %v1175 = vadd.f32 %v1147, %v1168
      %v1176 = vadd.f32 %v1148, %v1172
      %v1177 = vadd.f32 %v1149, %v1168
      %v1178 = vadd.f32 %v1150, %v1172
      %v1179 = vadd.f32 %v1151, %v1168
      %v1180 = vadd.f32 %v1152, %v1172
      %v1181 = vadd.f32 %v1153, %v1168
      %v1182 = vadd.f32 %v1154, %v1172
      %v1183 = vadd.f32 %v1155, %v1168
      %v1184 = vadd.f32 %v1156, %v1172
      %v1185 = vadd.f32 %v1157, %v1168
      %v1186 = vadd.f32 %v1158, %v1172
      %v1187 = vadd.f32 %v1159, %v1168
      %v1188 = vadd.f32 %v1160, %v1172
      %v1189 = vadd.f32 %v1161, %v1168
      %v1190 = vadd.f32 %v1162, %v1172
      %v1191 = vtanh.pop %v1175
      %v1192 = vtanh.pop %v1176
      %v1193 = vtanh.pop %v1177
      %v1194 = vtanh.pop %v1178
      %v1195 = vtanh.pop %v1179
      %v1196 = vtanh.pop %v1180
      %v1197 = vtanh.pop %v1181
      %v1198 = vtanh.pop %v1182
      %v1199 = vtanh.pop %v1183
      %v1200 = vtanh.pop %v1184
      %v1201 = vtanh.pop %v1185
      %v1202 = vtanh.pop %v1186
      %v1203 = vtanh.pop %v1187
      %v1204 = vtanh.pop %v1188
      %v1205 = vtanh.pop %v1189
      %v1206 = vtanh.pop %v1190
      %v1207 = vmax.f32 %v1191, %v1192
      %v1208 = vmax.f32 %v1193, %v1194
      %v1209 = vmax.f32 %v1195, %v1196
      %v1210 = vmax.f32 %v1197, %v1198
      %v1211 = vmax.f32 %v1199, %v1200
      %v1212 = vmax.f32 %v1201, %v1202
      %v1213 = vmax.f32 %v1203, %v1204
      %v1214 = vmax.f32 %v1205, %v1206
      %v1215 = vmax.f32 %v1207, %v1211
      %v1216 = vmax.f32 %v1208, %v1212
      %v1217 = vmax.f32 %v1209, %v1213
      %v1218 = vmax.f32 %v1210, %v1214
      %v1219 = vpack.c.bf16 %v1216, %v1215
      %v1220 = vpack.c.bf16 %v1218, %v1217
      %v1223 = vunpack.c.l.b16 %v1219
      %v1224 = vunpack.c.h.b16 %v1219
      %v1225 = vunpack.c.l.b16 %v1220
      %v1226 = vunpack.c.h.b16 %v1220
      %v1227 = vpack.c.b16 %v1223, %v1223
      %v1228 = vpack.c.b16 %v1224, %v1224
      %v1229 = vpack.c.b16 %v1225, %v1225
      %v1230 = vpack.c.b16 %v1226, %v1226
      %1235 = vst [vmem:[#allocation2 + $0x20] sm:$0xf] %v1227
      %1236 = vst [vmem:[#allocation2 + $0x24] sm:$0xf] %v1228
      %1237 = vst [vmem:[#allocation2 + $0x28] sm:$0xf] %v1229
      %1238 = vst [vmem:[#allocation2 + $0x2c] sm:$0xf] %v1230
      %v1239 = vld [vmem:[%s327 + $0x40] sm:$0xf]
      %v1240 = vld [vmem:[%s327 + $0x44] sm:$0xf]
      %v1241 = vld [vmem:[%s327 + $0x48] sm:$0xf]
      %v1242 = vld [vmem:[%s327 + $0x4c] sm:$0xf]
      %v1243 = vld [vmem:[%s327 + $0x50] sm:$0xf]
      %v1244 = vld [vmem:[%s327 + $0x54] sm:$0xf]
      %v1245 = vld [vmem:[%s327 + $0x58] sm:$0xf]
      %v1246 = vld [vmem:[%s327 + $0x5c] sm:$0xf]
      %v1247 = vld [vmem:[%s1] sm:$0xff]
      %v1248 = vld [vmem:[%s1 + $0x8] sm:$0xff]
      %v1249 = vld [vmem:[%s327 + $0x60] sm:$0xf]
      %v1250 = vld [vmem:[%s327 + $0x64] sm:$0xf]
      %v1251 = vld [vmem:[%s327 + $0x68] sm:$0xf]
      %v1252 = vld [vmem:[%s327 + $0x6c] sm:$0xf]
      %v1253 = vld [vmem:[%s356] sm:$0xff]
      %v1254 = vld [vmem:[%s356 + $0x8] sm:$0xff]
      %v1263 = vunpack.c.l.b16 %v1243
      %v1264 = vunpack.c.l.b16 %v1244
      %v1265 = vunpack.c.l.b16 %v1245
      %v1266 = vunpack.c.l.b16 %v1246
      %v1267 = vunpack.c.l.b16 %v1249
      %v1268 = vunpack.c.l.b16 %v1250
      %v1269 = vunpack.c.l.b16 %v1251
      %v1270 = vunpack.c.l.b16 %v1252
      %v1271 = vpack.c.b16 %v1264, %v1263
      %v1272 = vpack.c.b16 %v1266, %v1265
      %v1273 = vpack.c.b16 %v1268, %v1267
      %v1274 = vpack.c.b16 %v1270, %v1269
      %v1277 = vunpack.c.l.b16 %v1253
      %v1278 = vunpack.c.h.b16 %v1253
      %v1279 = vunpack.c.l.b16 %v1254
      %v1280 = vunpack.c.h.b16 %v1254
      %v1281 = vpack.c.b16 %v1279, %v1277
      %v1282 = vpack.c.b16 %v1280, %v1278
      %v1286 = vsel %vm389, %v1271, 0
      %v1289 = vsel %vm389, %v1272, 0
      %v1292 = vsel %vm389, %v1273, 0
      %v1295 = vsel %vm389, %v1274, 0
      %1297 = vmatprep.subr.bf16.mxu0 0
      %1298 = vmatpush1.bf16.msra.mxu0 0
      %1299 = vmatprep.subr.bf16.mxu0 0
      %1300 = vmatpush1.bf16.msra.mxu0 0
      %1301 = vmatprep.subr.bf16.mxu0 0
      %1302 = vmatpush1.bf16.msra.mxu0 0
      %1303 = vmatprep.subr.bf16.mxu0 0
      %1304 = vmatpush1.bf16.msra.mxu0 0
      %1305 = vmatprep.subr.bf16.mxu0 0
      %1306 = vmatpush1.bf16.msra.mxu0 0
      %1307 = vmatprep.subr.bf16.mxu0 0
      %1308 = vmatpush1.bf16.msra.mxu0 0
      %1309 = vmatprep.subr.bf16.mxu0 0
      %1310 = vmatpush1.bf16.msra.mxu0 0
      %1311 = vmatprep.subr.bf16.mxu0 %v1282
      %1312 = vmatpush1.bf16.msra.mxu0 %v1281
      %1313 = vmatprep.subr.bf16.mxu0 0
      %1314 = vmatpush2.bf16.msra.mxu0 0
      %1315 = vmatprep.subr.bf16.mxu0 0
      %1316 = vmatpush2.bf16.msra.mxu0 0
      %1317 = vmatprep.subr.bf16.mxu0 0
      %1318 = vmatpush2.bf16.msra.mxu0 0
      %1319 = vmatprep.subr.bf16.mxu0 0
      %1320 = vmatpush2.bf16.msra.mxu0 0
      %1321 = vmatprep.subr.bf16.mxu0 0
      %1322 = vmatpush2.bf16.msra.mxu0 0
      %1323 = vmatprep.subr.bf16.mxu0 0
      %1324 = vmatpush2.bf16.msra.mxu0 0
      %1325 = vmatprep.subr.bf16.mxu0 0
      %1326 = vmatpush2.bf16.msra.mxu0 0
      %1327 = vmatprep.subr.bf16.mxu0 0
      %1328 = vmatpush2.bf16.msra.mxu0 0
      %1329 = vmatprep.mubr.bf16.mxu0 0
      %1330 = vmatmul.mubr.bf16.gmra.mxu0 %v1286
      %v1331 = vpop.f32.mrf.mxu0
      %v1332 = vadd.f32 0.0, %v1331
      %v1333 = vpop.f32.mrf.mxu0
      %v1334 = vadd.f32 0.0, %v1333
      %v1335 = vpop.f32.mrf.mxu0
      %v1336 = vadd.f32 0.0, %v1335
      %v1337 = vpop.f32.mrf.mxu0
      %v1338 = vadd.f32 0.0, %v1337
      %1339 = vmatprep.mubr.bf16.mxu0 0
      %1340 = vmatmul.mubr.bf16.gmra.mxu0 %v1289
      %v1341 = vpop.f32.mrf.mxu0
      %v1342 = vadd.f32 0.0, %v1341
      %v1343 = vpop.f32.mrf.mxu0
      %v1344 = vadd.f32 0.0, %v1343
      %v1345 = vpop.f32.mrf.mxu0
      %v1346 = vadd.f32 0.0, %v1345
      %v1347 = vpop.f32.mrf.mxu0
      %v1348 = vadd.f32 0.0, %v1347
      %1349 = vmatprep.mubr.bf16.mxu0 0
      %1350 = vmatmul.mubr.bf16.gmra.mxu0 %v1292
      %v1351 = vpop.f32.mrf.mxu0
      %v1352 = vadd.f32 0.0, %v1351
      %v1353 = vpop.f32.mrf.mxu0
      %v1354 = vadd.f32 0.0, %v1353
      %v1355 = vpop.f32.mrf.mxu0
      %v1356 = vadd.f32 0.0, %v1355
      %v1357 = vpop.f32.mrf.mxu0
      %v1358 = vadd.f32 0.0, %v1357
      %1359 = vmatprep.mubr.bf16.mxu0 0
      %1360 = vmatmul.mubr.bf16.gmra.mxu0 %v1295
      %v1361 = vpop.f32.mrf.mxu0
      %v1362 = vadd.f32 0.0, %v1361
      %v1363 = vpop.f32.mrf.mxu0
      %v1364 = vadd.f32 0.0, %v1363
      %v1365 = vpop.f32.mrf.mxu0
      %v1366 = vadd.f32 0.0, %v1365
      %v1367 = vpop.f32.mrf.mxu0
      %v1368 = vadd.f32 0.0, %v1367
      %1369 = vdwg.mxu0
      %v1374 = vunpack.c.l.b16 %v1239
      %v1375 = vunpack.c.l.b16 %v1240
      %v1376 = vunpack.c.l.b16 %v1241
      %v1377 = vunpack.c.l.b16 %v1242
      %v1378 = vpack.c.b16 %v1375, %v1374
      %v1379 = vpack.c.b16 %v1377, %v1376
      %v1382 = vunpack.c.l.b16 %v1247
      %v1383 = vunpack.c.h.b16 %v1247
      %v1384 = vunpack.c.l.b16 %v1248
      %v1385 = vunpack.c.h.b16 %v1248
      %v1386 = vpack.c.b16 %v1384, %v1382
      %v1387 = vpack.c.b16 %v1385, %v1383
      %v1391 = vsel %vm389, %v1378, 0
      %v1394 = vsel %vm389, %v1379, 0
      %1396 = vmatprep.subr.bf16.mxu0 0
      %1397 = vmatpush1.bf16.msra.mxu0 0
      %1398 = vmatprep.subr.bf16.mxu0 0
      %1399 = vmatpush1.bf16.msra.mxu0 0
      %1400 = vmatprep.subr.bf16.mxu0 0
      %1401 = vmatpush1.bf16.msra.mxu0 0
      %1402 = vmatprep.subr.bf16.mxu0 0
      %1403 = vmatpush1.bf16.msra.mxu0 0
      %1404 = vmatprep.subr.bf16.mxu0 0
      %1405 = vmatpush1.bf16.msra.mxu0 0
      %1406 = vmatprep.subr.bf16.mxu0 0
      %1407 = vmatpush1.bf16.msra.mxu0 0
      %1408 = vmatprep.subr.bf16.mxu0 0
      %1409 = vmatpush1.bf16.msra.mxu0 0
      %1410 = vmatprep.subr.bf16.mxu0 %v1387
      %1411 = vmatpush1.bf16.msra.mxu0 %v1386
      %1412 = vmatprep.subr.bf16.mxu0 0
      %1413 = vmatpush2.bf16.msra.mxu0 0
      %1414 = vmatprep.subr.bf16.mxu0 0
      %1415 = vmatpush2.bf16.msra.mxu0 0
      %1416 = vmatprep.subr.bf16.mxu0 0
      %1417 = vmatpush2.bf16.msra.mxu0 0
      %1418 = vmatprep.subr.bf16.mxu0 0
      %1419 = vmatpush2.bf16.msra.mxu0 0
      %1420 = vmatprep.subr.bf16.mxu0 0
      %1421 = vmatpush2.bf16.msra.mxu0 0
      %1422 = vmatprep.subr.bf16.mxu0 0
      %1423 = vmatpush2.bf16.msra.mxu0 0
      %1424 = vmatprep.subr.bf16.mxu0 0
      %1425 = vmatpush2.bf16.msra.mxu0 0
      %1426 = vmatprep.subr.bf16.mxu0 0
      %1427 = vmatpush2.bf16.msra.mxu0 0
      %1428 = vmatprep.mubr.bf16.mxu0 0
      %1429 = vmatmul.mubr.bf16.gmra.mxu0 %v1391
      %v1430 = vpop.f32.mrf.mxu0
      %v1431 = vadd.f32 %v1332, %v1430
      %v1432 = vpop.f32.mrf.mxu0
      %v1433 = vadd.f32 %v1334, %v1432
      %v1434 = vpop.f32.mrf.mxu0
      %v1435 = vadd.f32 %v1336, %v1434
      %v1436 = vpop.f32.mrf.mxu0
      %v1437 = vadd.f32 %v1338, %v1436
      %1438 = vmatprep.mubr.bf16.mxu0 0
      %1439 = vmatmul.mubr.bf16.gmra.mxu0 %v1394
      %v1440 = vpop.f32.mrf.mxu0
      %v1441 = vadd.f32 %v1342, %v1440
      %v1442 = vpop.f32.mrf.mxu0
      %v1443 = vadd.f32 %v1344, %v1442
      %v1444 = vpop.f32.mrf.mxu0
      %v1445 = vadd.f32 %v1346, %v1444
      %v1446 = vpop.f32.mrf.mxu0
      %v1447 = vadd.f32 %v1348, %v1446
      %1448 = vmatprep.mubr.bf16.mxu0 0
      %1449 = vmatmul.mubr.bf16.gmra.mxu0 %v1286
      %v1450 = vpop.f32.mrf.mxu0
      %v1451 = vadd.f32 %v1352, %v1450
      %v1452 = vpop.f32.mrf.mxu0
      %v1453 = vadd.f32 %v1354, %v1452
      %v1454 = vpop.f32.mrf.mxu0
      %v1455 = vadd.f32 %v1356, %v1454
      %v1456 = vpop.f32.mrf.mxu0
      %v1457 = vadd.f32 %v1358, %v1456
      %1458 = vmatprep.mubr.bf16.mxu0 0
      %1459 = vmatmul.mubr.bf16.gmra.mxu0 %v1289
      %v1460 = vpop.f32.mrf.mxu0
      %v1461 = vadd.f32 %v1362, %v1460
      %v1462 = vpop.f32.mrf.mxu0
      %v1463 = vadd.f32 %v1364, %v1462
      %v1464 = vpop.f32.mrf.mxu0
      %v1465 = vadd.f32 %v1366, %v1464
      %v1466 = vpop.f32.mrf.mxu0
      %v1467 = vadd.f32 %v1368, %v1466
      %1468 = vdwg.mxu0
      %v1469 = vld [vmem:[%s327 + $0x60] sm:$0xf]
      %v1470 = vld [vmem:[%s327 + $0x64] sm:$0xf]
      %v1471 = vld [vmem:[%s327 + $0x68] sm:$0xf]
      %v1472 = vld [vmem:[%s327 + $0x6c] sm:$0xf]
      %v1473 = vld [vmem:[%s327 + $0x70] sm:$0xf]
      %v1474 = vld [vmem:[%s327 + $0x74] sm:$0xf]
      %v1475 = vld [vmem:[%s327 + $0x78] sm:$0xf]
      %v1476 = vld [vmem:[%s327 + $0x7c] sm:$0xf]
      %v1477 = vld [vmem:[%s582] sm:$0xff]
      %v1478 = vld [vmem:[%s582 + $0x8] sm:$0xff]
      %v1487 = vunpack.c.l.b16 %v1469
      %v1488 = vunpack.c.l.b16 %v1470
      %v1489 = vunpack.c.l.b16 %v1471
      %v1490 = vunpack.c.l.b16 %v1472
      %v1491 = vunpack.c.l.b16 %v1473
      %v1492 = vunpack.c.l.b16 %v1474
      %v1493 = vunpack.c.l.b16 %v1475
      %v1494 = vunpack.c.l.b16 %v1476
      %v1495 = vpack.c.b16 %v1488, %v1487
      %v1496 = vpack.c.b16 %v1490, %v1489
      %v1497 = vpack.c.b16 %v1492, %v1491
      %v1498 = vpack.c.b16 %v1494, %v1493
      %v1501 = vunpack.c.l.b16 %v1477
      %v1502 = vunpack.c.h.b16 %v1477
      %v1503 = vunpack.c.l.b16 %v1478
      %v1504 = vunpack.c.h.b16 %v1478
      %v1505 = vpack.c.b16 %v1503, %v1501
      %v1506 = vpack.c.b16 %v1504, %v1502
      %v1510 = vsel %vm389, %v1495, 0
      %v1513 = vsel %vm389, %v1496, 0
      %v1516 = vsel %vm389, %v1497, 0
      %v1519 = vsel %vm389, %v1498, 0
      %1521 = vmatprep.subr.bf16.mxu0 0
      %1522 = vmatpush1.bf16.msra.mxu0 0
      %1523 = vmatprep.subr.bf16.mxu0 0
      %1524 = vmatpush1.bf16.msra.mxu0 0
      %1525 = vmatprep.subr.bf16.mxu0 0
      %1526 = vmatpush1.bf16.msra.mxu0 0
      %1527 = vmatprep.subr.bf16.mxu0 0
      %1528 = vmatpush1.bf16.msra.mxu0 0
      %1529 = vmatprep.subr.bf16.mxu0 0
      %1530 = vmatpush1.bf16.msra.mxu0 0
      %1531 = vmatprep.subr.bf16.mxu0 0
      %1532 = vmatpush1.bf16.msra.mxu0 0
      %1533 = vmatprep.subr.bf16.mxu0 0
      %1534 = vmatpush1.bf16.msra.mxu0 0
      %1535 = vmatprep.subr.bf16.mxu0 %v1506
      %1536 = vmatpush1.bf16.msra.mxu0 %v1505
      %1537 = vmatprep.subr.bf16.mxu0 0
      %1538 = vmatpush2.bf16.msra.mxu0 0
      %1539 = vmatprep.subr.bf16.mxu0 0
      %1540 = vmatpush2.bf16.msra.mxu0 0
      %1541 = vmatprep.subr.bf16.mxu0 0
      %1542 = vmatpush2.bf16.msra.mxu0 0
      %1543 = vmatprep.subr.bf16.mxu0 0
      %1544 = vmatpush2.bf16.msra.mxu0 0
      %1545 = vmatprep.subr.bf16.mxu0 0
      %1546 = vmatpush2.bf16.msra.mxu0 0
      %1547 = vmatprep.subr.bf16.mxu0 0
      %1548 = vmatpush2.bf16.msra.mxu0 0
      %1549 = vmatprep.subr.bf16.mxu0 0
      %1550 = vmatpush2.bf16.msra.mxu0 0
      %1551 = vmatprep.subr.bf16.mxu0 0
      %1552 = vmatpush2.bf16.msra.mxu0 0
      %1553 = vmatprep.mubr.bf16.mxu0 0
      %1554 = vmatmul.mubr.bf16.gmra.mxu0 %v1510
      %v1555 = vpop.f32.mrf.mxu0
      %v1556 = vadd.f32 0.0, %v1555
      %v1557 = vpop.f32.mrf.mxu0
      %v1558 = vadd.f32 0.0, %v1557
      %v1559 = vpop.f32.mrf.mxu0
      %v1560 = vadd.f32 0.0, %v1559
      %v1561 = vpop.f32.mrf.mxu0
      %v1562 = vadd.f32 0.0, %v1561
      %1563 = vmatprep.mubr.bf16.mxu0 0
      %1564 = vmatmul.mubr.bf16.gmra.mxu0 %v1513
      %v1565 = vpop.f32.mrf.mxu0
      %v1566 = vadd.f32 0.0, %v1565
      %v1567 = vpop.f32.mrf.mxu0
      %v1568 = vadd.f32 0.0, %v1567
      %v1569 = vpop.f32.mrf.mxu0
      %v1570 = vadd.f32 0.0, %v1569
      %v1571 = vpop.f32.mrf.mxu0
      %v1572 = vadd.f32 0.0, %v1571
      %1573 = vmatprep.mubr.bf16.mxu0 0
      %1574 = vmatmul.mubr.bf16.gmra.mxu0 %v1516
      %v1575 = vpop.f32.mrf.mxu0
      %v1576 = vadd.f32 0.0, %v1575
      %v1577 = vpop.f32.mrf.mxu0
      %v1578 = vadd.f32 0.0, %v1577
      %v1579 = vpop.f32.mrf.mxu0
      %v1580 = vadd.f32 0.0, %v1579
      %v1581 = vpop.f32.mrf.mxu0
      %v1582 = vadd.f32 0.0, %v1581
      %1583 = vmatprep.mubr.bf16.mxu0 0
      %1584 = vmatmul.mubr.bf16.gmra.mxu0 %v1519
      %v1585 = vpop.f32.mrf.mxu0
      %v1586 = vadd.f32 0.0, %v1585
      %v1587 = vpop.f32.mrf.mxu0
      %v1588 = vadd.f32 0.0, %v1587
      %v1589 = vpop.f32.mrf.mxu0
      %v1590 = vadd.f32 0.0, %v1589
      %v1591 = vpop.f32.mrf.mxu0
      %v1592 = vadd.f32 0.0, %v1591
      %1593 = vdwg.mxu0
      %v1594 = vadd.f32 %v1431, %v1556
      %v1595 = vadd.f32 %v1433, %v1558
      %v1596 = vadd.f32 %v1435, %v1560
      %v1597 = vadd.f32 %v1437, %v1562
      %v1598 = vadd.f32 %v1441, %v1566
      %v1599 = vadd.f32 %v1443, %v1568
      %v1600 = vadd.f32 %v1445, %v1570
      %v1601 = vadd.f32 %v1447, %v1572
      %v1602 = vadd.f32 %v1451, %v1576
      %v1603 = vadd.f32 %v1453, %v1578
      %v1604 = vadd.f32 %v1455, %v1580
      %v1605 = vadd.f32 %v1457, %v1582
      %v1606 = vadd.f32 %v1461, %v1586
      %v1607 = vadd.f32 %v1463, %v1588
      %v1608 = vadd.f32 %v1465, %v1590
      %v1609 = vadd.f32 %v1467, %v1592
      %v1610 = vld [vmem:[%s2] sm:$0x3]
      %v1612 = vlaneseq
      %v1613 = vshrl.u32 %v1612, 7
      %v1614 = vsub.s32 0, %v1613
      %v1615 = vrot.slane %v1610, %v1614
      %v1616 = vlaneseq
      %v1617 = vshrl.u32 %v1616, 7
      %v1618 = vsub.s32 1, %v1617
      %v1619 = vrot.slane %v1610, %v1618
      %v1622 = vadd.f32 %v1594, %v1615
      %v1623 = vadd.f32 %v1595, %v1619
      %v1624 = vadd.f32 %v1596, %v1615
      %v1625 = vadd.f32 %v1597, %v1619
      %v1626 = vadd.f32 %v1598, %v1615
      %v1627 = vadd.f32 %v1599, %v1619
      %v1628 = vadd.f32 %v1600, %v1615
      %v1629 = vadd.f32 %v1601, %v1619
      %v1630 = vadd.f32 %v1602, %v1615
      %v1631 = vadd.f32 %v1603, %v1619
      %v1632 = vadd.f32 %v1604, %v1615
      %v1633 = vadd.f32 %v1605, %v1619
      %v1634 = vadd.f32 %v1606, %v1615
      %v1635 = vadd.f32 %v1607, %v1619
      %v1636 = vadd.f32 %v1608, %v1615
      %v1637 = vadd.f32 %v1609, %v1619
      %v1638 = vtanh.pop %v1622
      %v1639 = vtanh.pop %v1623
      %v1640 = vtanh.pop %v1624
      %v1641 = vtanh.pop %v1625
      %v1642 = vtanh.pop %v1626
      %v1643 = vtanh.pop %v1627
      %v1644 = vtanh.pop %v1628
      %v1645 = vtanh.pop %v1629
      %v1646 = vtanh.pop %v1630
      %v1647 = vtanh.pop %v1631
      %v1648 = vtanh.pop %v1632
      %v1649 = vtanh.pop %v1633
      %v1650 = vtanh.pop %v1634
      %v1651 = vtanh.pop %v1635
      %v1652 = vtanh.pop %v1636
      %v1653 = vtanh.pop %v1637
      %v1654 = vmax.f32 %v1638, %v1639
      %v1655 = vmax.f32 %v1640, %v1641
      %v1656 = vmax.f32 %v1642, %v1643
      %v1657 = vmax.f32 %v1644, %v1645
      %v1658 = vmax.f32 %v1646, %v1647
      %v1659 = vmax.f32 %v1648, %v1649
      %v1660 = vmax.f32 %v1650, %v1651
      %v1661 = vmax.f32 %v1652, %v1653
      %v1662 = vmax.f32 %v1654, %v1658
      %v1663 = vmax.f32 %v1655, %v1659
      %v1664 = vmax.f32 %v1656, %v1660
      %v1665 = vmax.f32 %v1657, %v1661
      %v1666 = vpack.c.bf16 %v1663, %v1662
      %v1667 = vpack.c.bf16 %v1665, %v1664
      %v1670 = vunpack.c.l.b16 %v1666
      %v1671 = vunpack.c.h.b16 %v1666
      %v1672 = vunpack.c.l.b16 %v1667
      %v1673 = vunpack.c.h.b16 %v1667
      %v1674 = vpack.c.b16 %v1670, %v1670
      %v1675 = vpack.c.b16 %v1671, %v1671
      %v1676 = vpack.c.b16 %v1672, %v1672
      %v1677 = vpack.c.b16 %v1673, %v1673
      %1682 = vst [vmem:[#allocation2 + $0x30] sm:$0xf] %v1674
      %1683 = vst [vmem:[#allocation2 + $0x34] sm:$0xf] %v1675
      %1684 = vst [vmem:[#allocation2 + $0x38] sm:$0xf] %v1676
      %1685 = vst [vmem:[#allocation2 + $0x3c] sm:$0xf] %v1677
      %v1686 = vld [vmem:[%s327 + $0x60] sm:$0xf]
      %v1687 = vld [vmem:[%s327 + $0x64] sm:$0xf]
      %v1688 = vld [vmem:[%s327 + $0x68] sm:$0xf]
      %v1689 = vld [vmem:[%s327 + $0x6c] sm:$0xf]
      %v1690 = vld [vmem:[%s327 + $0x70] sm:$0xf]
      %v1691 = vld [vmem:[%s327 + $0x74] sm:$0xf]
      %v1692 = vld [vmem:[%s327 + $0x78] sm:$0xf]
      %v1693 = vld [vmem:[%s327 + $0x7c] sm:$0xf]
      %v1694 = vld [vmem:[%s1] sm:$0xff]
      %v1695 = vld [vmem:[%s1 + $0x8] sm:$0xff]
      %v1696 = vld [vmem:[%s327 + $0x80] sm:$0xf]
      %v1697 = vld [vmem:[%s327 + $0x84] sm:$0xf]
      %v1698 = vld [vmem:[%s327 + $0x88] sm:$0xf]
      %v1699 = vld [vmem:[%s327 + $0x8c] sm:$0xf]
      %v1700 = vld [vmem:[%s356] sm:$0xff]
      %v1701 = vld [vmem:[%s356 + $0x8] sm:$0xff]
      %v1710 = vunpack.c.l.b16 %v1690
      %v1711 = vunpack.c.l.b16 %v1691
      %v1712 = vunpack.c.l.b16 %v1692
      %v1713 = vunpack.c.l.b16 %v1693
      %v1714 = vunpack.c.l.b16 %v1696
      %v1715 = vunpack.c.l.b16 %v1697
      %v1716 = vunpack.c.l.b16 %v1698
      %v1717 = vunpack.c.l.b16 %v1699
      %v1718 = vpack.c.b16 %v1711, %v1710
      %v1719 = vpack.c.b16 %v1713, %v1712
      %v1720 = vpack.c.b16 %v1715, %v1714
      %v1721 = vpack.c.b16 %v1717, %v1716
      %v1724 = vunpack.c.l.b16 %v1700
      %v1725 = vunpack.c.h.b16 %v1700
      %v1726 = vunpack.c.l.b16 %v1701
      %v1727 = vunpack.c.h.b16 %v1701
      %v1728 = vpack.c.b16 %v1726, %v1724
      %v1729 = vpack.c.b16 %v1727, %v1725
      %v1733 = vsel %vm389, %v1718, 0
      %v1736 = vsel %vm389, %v1719, 0
      %v1739 = vsel %vm389, %v1720, 0
      %v1742 = vsel %vm389, %v1721, 0
      %1744 = vmatprep.subr.bf16.mxu0 0
      %1745 = vmatpush1.bf16.msra.mxu0 0
      %1746 = vmatprep.subr.bf16.mxu0 0
      %1747 = vmatpush1.bf16.msra.mxu0 0
      %1748 = vmatprep.subr.bf16.mxu0 0
      %1749 = vmatpush1.bf16.msra.mxu0 0
      %1750 = vmatprep.subr.bf16.mxu0 0
      %1751 = vmatpush1.bf16.msra.mxu0 0
      %1752 = vmatprep.subr.bf16.mxu0 0
      %1753 = vmatpush1.bf16.msra.mxu0 0
      %1754 = vmatprep.subr.bf16.mxu0 0
      %1755 = vmatpush1.bf16.msra.mxu0 0
      %1756 = vmatprep.subr.bf16.mxu0 0
      %1757 = vmatpush1.bf16.msra.mxu0 0
      %1758 = vmatprep.subr.bf16.mxu0 %v1729
      %1759 = vmatpush1.bf16.msra.mxu0 %v1728
      %1760 = vmatprep.subr.bf16.mxu0 0
      %1761 = vmatpush2.bf16.msra.mxu0 0
      %1762 = vmatprep.subr.bf16.mxu0 0
      %1763 = vmatpush2.bf16.msra.mxu0 0
      %1764 = vmatprep.subr.bf16.mxu0 0
      %1765 = vmatpush2.bf16.msra.mxu0 0
      %1766 = vmatprep.subr.bf16.mxu0 0
      %1767 = vmatpush2.bf16.msra.mxu0 0
      %1768 = vmatprep.subr.bf16.mxu0 0
      %1769 = vmatpush2.bf16.msra.mxu0 0
      %1770 = vmatprep.subr.bf16.mxu0 0
      %1771 = vmatpush2.bf16.msra.mxu0 0
      %1772 = vmatprep.subr.bf16.mxu0 0
      %1773 = vmatpush2.bf16.msra.mxu0 0
      %1774 = vmatprep.subr.bf16.mxu0 0
      %1775 = vmatpush2.bf16.msra.mxu0 0
      %1776 = vmatprep.mubr.bf16.mxu0 0
      %1777 = vmatmul.mubr.bf16.gmra.mxu0 %v1733
      %v1778 = vpop.f32.mrf.mxu0
      %v1779 = vadd.f32 0.0, %v1778
      %v1780 = vpop.f32.mrf.mxu0
      %v1781 = vadd.f32 0.0, %v1780
      %v1782 = vpop.f32.mrf.mxu0
      %v1783 = vadd.f32 0.0, %v1782
      %v1784 = vpop.f32.mrf.mxu0
      %v1785 = vadd.f32 0.0, %v1784
      %1786 = vmatprep.mubr.bf16.mxu0 0
      %1787 = vmatmul.mubr.bf16.gmra.mxu0 %v1736
      %v1788 = vpop.f32.mrf.mxu0
      %v1789 = vadd.f32 0.0, %v1788
      %v1790 = vpop.f32.mrf.mxu0
      %v1791 = vadd.f32 0.0, %v1790
      %v1792 = vpop.f32.mrf.mxu0
      %v1793 = vadd.f32 0.0, %v1792
      %v1794 = vpop.f32.mrf.mxu0
      %v1795 = vadd.f32 0.0, %v1794
      %1796 = vmatprep.mubr.bf16.mxu0 0
      %1797 = vmatmul.mubr.bf16.gmra.mxu0 %v1739
      %v1798 = vpop.f32.mrf.mxu0
      %v1799 = vadd.f32 0.0, %v1798
      %v1800 = vpop.f32.mrf.mxu0
      %v1801 = vadd.f32 0.0, %v1800
      %v1802 = vpop.f32.mrf.mxu0
      %v1803 = vadd.f32 0.0, %v1802
      %v1804 = vpop.f32.mrf.mxu0
      %v1805 = vadd.f32 0.0, %v1804
      %1806 = vmatprep.mubr.bf16.mxu0 0
      %1807 = vmatmul.mubr.bf16.gmra.mxu0 %v1742
      %v1808 = vpop.f32.mrf.mxu0
      %v1809 = vadd.f32 0.0, %v1808
      %v1810 = vpop.f32.mrf.mxu0
      %v1811 = vadd.f32 0.0, %v1810
      %v1812 = vpop.f32.mrf.mxu0
      %v1813 = vadd.f32 0.0, %v1812
      %v1814 = vpop.f32.mrf.mxu0
      %v1815 = vadd.f32 0.0, %v1814
      %1816 = vdwg.mxu0
      %v1821 = vunpack.c.l.b16 %v1686
      %v1822 = vunpack.c.l.b16 %v1687
      %v1823 = vunpack.c.l.b16 %v1688
      %v1824 = vunpack.c.l.b16 %v1689
      %v1825 = vpack.c.b16 %v1822, %v1821
      %v1826 = vpack.c.b16 %v1824, %v1823
      %v1829 = vunpack.c.l.b16 %v1694
      %v1830 = vunpack.c.h.b16 %v1694
      %v1831 = vunpack.c.l.b16 %v1695
      %v1832 = vunpack.c.h.b16 %v1695
      %v1833 = vpack.c.b16 %v1831, %v1829
      %v1834 = vpack.c.b16 %v1832, %v1830
      %v1838 = vsel %vm389, %v1825, 0
      %v1841 = vsel %vm389, %v1826, 0
      %1843 = vmatprep.subr.bf16.mxu0 0
      %1844 = vmatpush1.bf16.msra.mxu0 0
      %1845 = vmatprep.subr.bf16.mxu0 0
      %1846 = vmatpush1.bf16.msra.mxu0 0
      %1847 = vmatprep.subr.bf16.mxu0 0
      %1848 = vmatpush1.bf16.msra.mxu0 0
      %1849 = vmatprep.subr.bf16.mxu0 0
      %1850 = vmatpush1.bf16.msra.mxu0 0
      %1851 = vmatprep.subr.bf16.mxu0 0
      %1852 = vmatpush1.bf16.msra.mxu0 0
      %1853 = vmatprep.subr.bf16.mxu0 0
      %1854 = vmatpush1.bf16.msra.mxu0 0
      %1855 = vmatprep.subr.bf16.mxu0 0
      %1856 = vmatpush1.bf16.msra.mxu0 0
      %1857 = vmatprep.subr.bf16.mxu0 %v1834
      %1858 = vmatpush1.bf16.msra.mxu0 %v1833
      %1859 = vmatprep.subr.bf16.mxu0 0
      %1860 = vmatpush2.bf16.msra.mxu0 0
      %1861 = vmatprep.subr.bf16.mxu0 0
      %1862 = vmatpush2.bf16.msra.mxu0 0
      %1863 = vmatprep.subr.bf16.mxu0 0
      %1864 = vmatpush2.bf16.msra.mxu0 0
      %1865 = vmatprep.subr.bf16.mxu0 0
      %1866 = vmatpush2.bf16.msra.mxu0 0
      %1867 = vmatprep.subr.bf16.mxu0 0
      %1868 = vmatpush2.bf16.msra.mxu0 0
      %1869 = vmatprep.subr.bf16.mxu0 0
      %1870 = vmatpush2.bf16.msra.mxu0 0
      %1871 = vmatprep.subr.bf16.mxu0 0
      %1872 = vmatpush2.bf16.msra.mxu0 0
      %1873 = vmatprep.subr.bf16.mxu0 0
      %1874 = vmatpush2.bf16.msra.mxu0 0
      %1875 = vmatprep.mubr.bf16.mxu0 0
      %1876 = vmatmul.mubr.bf16.gmra.mxu0 %v1838
      %v1877 = vpop.f32.mrf.mxu0
      %v1878 = vadd.f32 %v1779, %v1877
      %v1879 = vpop.f32.mrf.mxu0
      %v1880 = vadd.f32 %v1781, %v1879
      %v1881 = vpop.f32.mrf.mxu0
      %v1882 = vadd.f32 %v1783, %v1881
      %v1883 = vpop.f32.mrf.mxu0
      %v1884 = vadd.f32 %v1785, %v1883
      %1885 = vmatprep.mubr.bf16.mxu0 0
      %1886 = vmatmul.mubr.bf16.gmra.mxu0 %v1841
      %v1887 = vpop.f32.mrf.mxu0
      %v1888 = vadd.f32 %v1789, %v1887
      %v1889 = vpop.f32.mrf.mxu0
      %v1890 = vadd.f32 %v1791, %v1889
      %v1891 = vpop.f32.mrf.mxu0
      %v1892 = vadd.f32 %v1793, %v1891
      %v1893 = vpop.f32.mrf.mxu0
      %v1894 = vadd.f32 %v1795, %v1893
      %1895 = vmatprep.mubr.bf16.mxu0 0
      %1896 = vmatmul.mubr.bf16.gmra.mxu0 %v1733
      %v1897 = vpop.f32.mrf.mxu0
      %v1898 = vadd.f32 %v1799, %v1897
      %v1899 = vpop.f32.mrf.mxu0
      %v1900 = vadd.f32 %v1801, %v1899
      %v1901 = vpop.f32.mrf.mxu0
      %v1902 = vadd.f32 %v1803, %v1901
      %v1903 = vpop.f32.mrf.mxu0
      %v1904 = vadd.f32 %v1805, %v1903
      %1905 = vmatprep.mubr.bf16.mxu0 0
      %1906 = vmatmul.mubr.bf16.gmra.mxu0 %v1736
      %v1907 = vpop.f32.mrf.mxu0
      %v1908 = vadd.f32 %v1809, %v1907
      %v1909 = vpop.f32.mrf.mxu0
      %v1910 = vadd.f32 %v1811, %v1909
      %v1911 = vpop.f32.mrf.mxu0
      %v1912 = vadd.f32 %v1813, %v1911
      %v1913 = vpop.f32.mrf.mxu0
      %v1914 = vadd.f32 %v1815, %v1913
      %1915 = vdwg.mxu0
      %v1916 = vld [vmem:[%s327 + $0x80] sm:$0xf]
      %v1917 = vld [vmem:[%s327 + $0x84] sm:$0xf]
      %v1918 = vld [vmem:[%s327 + $0x88] sm:$0xf]
      %v1919 = vld [vmem:[%s327 + $0x8c] sm:$0xf]
      %v1920 = vld [vmem:[%s327 + $0x90] sm:$0xf]
      %v1921 = vld [vmem:[%s327 + $0x94] sm:$0xf]
      %v1922 = vld [vmem:[%s327 + $0x98] sm:$0xf]
      %v1923 = vld [vmem:[%s327 + $0x9c] sm:$0xf]
      %v1924 = vld [vmem:[%s582] sm:$0xff]
      %v1925 = vld [vmem:[%s582 + $0x8] sm:$0xff]
      %v1934 = vunpack.c.l.b16 %v1916
      %v1935 = vunpack.c.l.b16 %v1917
      %v1936 = vunpack.c.l.b16 %v1918
      %v1937 = vunpack.c.l.b16 %v1919
      %v1938 = vunpack.c.l.b16 %v1920
      %v1939 = vunpack.c.l.b16 %v1921
      %v1940 = vunpack.c.l.b16 %v1922
      %v1941 = vunpack.c.l.b16 %v1923
      %v1942 = vpack.c.b16 %v1935, %v1934
      %v1943 = vpack.c.b16 %v1937, %v1936
      %v1944 = vpack.c.b16 %v1939, %v1938
      %v1945 = vpack.c.b16 %v1941, %v1940
      %v1948 = vunpack.c.l.b16 %v1924
      %v1949 = vunpack.c.h.b16 %v1924
      %v1950 = vunpack.c.l.b16 %v1925
      %v1951 = vunpack.c.h.b16 %v1925
      %v1952 = vpack.c.b16 %v1950, %v1948
      %v1953 = vpack.c.b16 %v1951, %v1949
      %v1957 = vsel %vm389, %v1942, 0
      %v1960 = vsel %vm389, %v1943, 0
      %v1963 = vsel %vm389, %v1944, 0
      %v1966 = vsel %vm389, %v1945, 0
      %1968 = vmatprep.subr.bf16.mxu0 0
      %1969 = vmatpush1.bf16.msra.mxu0 0
      %1970 = vmatprep.subr.bf16.mxu0 0
      %1971 = vmatpush1.bf16.msra.mxu0 0
      %1972 = vmatprep.subr.bf16.mxu0 0
      %1973 = vmatpush1.bf16.msra.mxu0 0
      %1974 = vmatprep.subr.bf16.mxu0 0
      %1975 = vmatpush1.bf16.msra.mxu0 0
      %1976 = vmatprep.subr.bf16.mxu0 0
      %1977 = vmatpush1.bf16.msra.mxu0 0
      %1978 = vmatprep.subr.bf16.mxu0 0
      %1979 = vmatpush1.bf16.msra.mxu0 0
      %1980 = vmatprep.subr.bf16.mxu0 0
      %1981 = vmatpush1.bf16.msra.mxu0 0
      %1982 = vmatprep.subr.bf16.mxu0 %v1953
      %1983 = vmatpush1.bf16.msra.mxu0 %v1952
      %1984 = vmatprep.subr.bf16.mxu0 0
      %1985 = vmatpush2.bf16.msra.mxu0 0
      %1986 = vmatprep.subr.bf16.mxu0 0
      %1987 = vmatpush2.bf16.msra.mxu0 0
      %1988 = vmatprep.subr.bf16.mxu0 0
      %1989 = vmatpush2.bf16.msra.mxu0 0
      %1990 = vmatprep.subr.bf16.mxu0 0
      %1991 = vmatpush2.bf16.msra.mxu0 0
      %1992 = vmatprep.subr.bf16.mxu0 0
      %1993 = vmatpush2.bf16.msra.mxu0 0
      %1994 = vmatprep.subr.bf16.mxu0 0
      %1995 = vmatpush2.bf16.msra.mxu0 0
      %1996 = vmatprep.subr.bf16.mxu0 0
      %1997 = vmatpush2.bf16.msra.mxu0 0
      %1998 = vmatprep.subr.bf16.mxu0 0
      %1999 = vmatpush2.bf16.msra.mxu0 0
      %2000 = vmatprep.mubr.bf16.mxu0 0
      %2001 = vmatmul.mubr.bf16.gmra.mxu0 %v1957
      %v2002 = vpop.f32.mrf.mxu0
      %v2003 = vadd.f32 0.0, %v2002
      %v2004 = vpop.f32.mrf.mxu0
      %v2005 = vadd.f32 0.0, %v2004
      %v2006 = vpop.f32.mrf.mxu0
      %v2007 = vadd.f32 0.0, %v2006
      %v2008 = vpop.f32.mrf.mxu0
      %v2009 = vadd.f32 0.0, %v2008
      %2010 = vmatprep.mubr.bf16.mxu0 0
      %2011 = vmatmul.mubr.bf16.gmra.mxu0 %v1960
      %v2012 = vpop.f32.mrf.mxu0
      %v2013 = vadd.f32 0.0, %v2012
      %v2014 = vpop.f32.mrf.mxu0
      %v2015 = vadd.f32 0.0, %v2014
      %v2016 = vpop.f32.mrf.mxu0
      %v2017 = vadd.f32 0.0, %v2016
      %v2018 = vpop.f32.mrf.mxu0
      %v2019 = vadd.f32 0.0, %v2018
      %2020 = vmatprep.mubr.bf16.mxu0 0
      %2021 = vmatmul.mubr.bf16.gmra.mxu0 %v1963
      %v2022 = vpop.f32.mrf.mxu0
      %v2023 = vadd.f32 0.0, %v2022
      %v2024 = vpop.f32.mrf.mxu0
      %v2025 = vadd.f32 0.0, %v2024
      %v2026 = vpop.f32.mrf.mxu0
      %v2027 = vadd.f32 0.0, %v2026
      %v2028 = vpop.f32.mrf.mxu0
      %v2029 = vadd.f32 0.0, %v2028
      %2030 = vmatprep.mubr.bf16.mxu0 0
      %2031 = vmatmul.mubr.bf16.gmra.mxu0 %v1966
      %v2032 = vpop.f32.mrf.mxu0
      %v2033 = vadd.f32 0.0, %v2032
      %v2034 = vpop.f32.mrf.mxu0
      %v2035 = vadd.f32 0.0, %v2034
      %v2036 = vpop.f32.mrf.mxu0
      %v2037 = vadd.f32 0.0, %v2036
      %v2038 = vpop.f32.mrf.mxu0
      %v2039 = vadd.f32 0.0, %v2038
      %2040 = vdwg.mxu0
      %v2041 = vadd.f32 %v1878, %v2003
      %v2042 = vadd.f32 %v1880, %v2005
      %v2043 = vadd.f32 %v1882, %v2007
      %v2044 = vadd.f32 %v1884, %v2009
      %v2045 = vadd.f32 %v1888, %v2013
      %v2046 = vadd.f32 %v1890, %v2015
      %v2047 = vadd.f32 %v1892, %v2017
      %v2048 = vadd.f32 %v1894, %v2019
      %v2049 = vadd.f32 %v1898, %v2023
      %v2050 = vadd.f32 %v1900, %v2025
      %v2051 = vadd.f32 %v1902, %v2027
      %v2052 = vadd.f32 %v1904, %v2029
      %v2053 = vadd.f32 %v1908, %v2033
      %v2054 = vadd.f32 %v1910, %v2035
      %v2055 = vadd.f32 %v1912, %v2037
      %v2056 = vadd.f32 %v1914, %v2039
      %v2057 = vld [vmem:[%s2] sm:$0x3]
      %v2059 = vlaneseq
      %v2060 = vshrl.u32 %v2059, 7
      %v2061 = vsub.s32 0, %v2060
      %v2062 = vrot.slane %v2057, %v2061
      %v2063 = vlaneseq
      %v2064 = vshrl.u32 %v2063, 7
      %v2065 = vsub.s32 1, %v2064
      %v2066 = vrot.slane %v2057, %v2065
      %v2069 = vadd.f32 %v2041, %v2062
      %v2070 = vadd.f32 %v2042, %v2066
      %v2071 = vadd.f32 %v2043, %v2062
      %v2072 = vadd.f32 %v2044, %v2066
      %v2073 = vadd.f32 %v2045, %v2062
      %v2074 = vadd.f32 %v2046, %v2066
      %v2075 = vadd.f32 %v2047, %v2062
      %v2076 = vadd.f32 %v2048, %v2066
      %v2077 = vadd.f32 %v2049, %v2062
      %v2078 = vadd.f32 %v2050, %v2066
      %v2079 = vadd.f32 %v2051, %v2062
      %v2080 = vadd.f32 %v2052, %v2066
      %v2081 = vadd.f32 %v2053, %v2062
      %v2082 = vadd.f32 %v2054, %v2066
      %v2083 = vadd.f32 %v2055, %v2062
      %v2084 = vadd.f32 %v2056, %v2066
      %v2085 = vtanh.pop %v2069
      %v2086 = vtanh.pop %v2070
      %v2087 = vtanh.pop %v2071
      %v2088 = vtanh.pop %v2072
      %v2089 = vtanh.pop %v2073
      %v2090 = vtanh.pop %v2074
      %v2091 = vtanh.pop %v2075
      %v2092 = vtanh.pop %v2076
      %v2093 = vtanh.pop %v2077
      %v2094 = vtanh.pop %v2078
      %v2095 = vtanh.pop %v2079
      %v2096 = vtanh.pop %v2080
      %v2097 = vtanh.pop %v2081
      %v2098 = vtanh.pop %v2082
      %v2099 = vtanh.pop %v2083
      %v2100 = vtanh.pop %v2084
      %v2101 = vmax.f32 %v2085, %v2086
      %v2102 = vmax.f32 %v2087, %v2088
      %v2103 = vmax.f32 %v2089, %v2090
      %v2104 = vmax.f32 %v2091, %v2092
      %v2105 = vmax.f32 %v2093, %v2094
      %v2106 = vmax.f32 %v2095, %v2096
      %v2107 = vmax.f32 %v2097, %v2098
      %v2108 = vmax.f32 %v2099, %v2100
      %v2109 = vmax.f32 %v2101, %v2105
      %v2110 = vmax.f32 %v2102, %v2106
      %v2111 = vmax.f32 %v2103, %v2107
      %v2112 = vmax.f32 %v2104, %v2108
      %v2113 = vpack.c.bf16 %v2110, %v2109
      %v2114 = vpack.c.bf16 %v2112, %v2111
      %v2117 = vunpack.c.l.b16 %v2113
      %v2118 = vunpack.c.h.b16 %v2113
      %v2119 = vunpack.c.l.b16 %v2114
      %v2120 = vunpack.c.h.b16 %v2114
      %v2121 = vpack.c.b16 %v2117, %v2117
      %v2122 = vpack.c.b16 %v2118, %v2118
      %v2123 = vpack.c.b16 %v2119, %v2119
      %v2124 = vpack.c.b16 %v2120, %v2120
      %2129 = vst [vmem:[#allocation2 + $0x40] sm:$0xf] %v2121
      %2130 = vst [vmem:[#allocation2 + $0x44] sm:$0xf] %v2122
      %2131 = vst [vmem:[#allocation2 + $0x48] sm:$0xf] %v2123
      %2132 = vst [vmem:[#allocation2 + $0x4c] sm:$0xf] %v2124
      %v2133 = vld [vmem:[%s327 + $0x80] sm:$0xf]
      %v2134 = vld [vmem:[%s327 + $0x84] sm:$0xf]
      %v2135 = vld [vmem:[%s327 + $0x88] sm:$0xf]
      %v2136 = vld [vmem:[%s327 + $0x8c] sm:$0xf]
      %v2137 = vld [vmem:[%s327 + $0x90] sm:$0xf]
      %v2138 = vld [vmem:[%s327 + $0x94] sm:$0xf]
      %v2139 = vld [vmem:[%s327 + $0x98] sm:$0xf]
      %v2140 = vld [vmem:[%s327 + $0x9c] sm:$0xf]
      %v2141 = vld [vmem:[%s1] sm:$0xff]
      %v2142 = vld [vmem:[%s1 + $0x8] sm:$0xff]
      %v2143 = vld [vmem:[%s327 + $0xa0] sm:$0xf]
      %v2144 = vld [vmem:[%s327 + $0xa4] sm:$0xf]
      %v2145 = vld [vmem:[%s327 + $0xa8] sm:$0xf]
      %v2146 = vld [vmem:[%s327 + $0xac] sm:$0xf]
      %v2147 = vld [vmem:[%s356] sm:$0xff]
      %v2148 = vld [vmem:[%s356 + $0x8] sm:$0xff]
      %v2157 = vunpack.c.l.b16 %v2137
      %v2158 = vunpack.c.l.b16 %v2138
      %v2159 = vunpack.c.l.b16 %v2139
      %v2160 = vunpack.c.l.b16 %v2140
      %v2161 = vunpack.c.l.b16 %v2143
      %v2162 = vunpack.c.l.b16 %v2144
      %v2163 = vunpack.c.l.b16 %v2145
      %v2164 = vunpack.c.l.b16 %v2146
      %v2165 = vpack.c.b16 %v2158, %v2157
      %v2166 = vpack.c.b16 %v2160, %v2159
      %v2167 = vpack.c.b16 %v2162, %v2161
      %v2168 = vpack.c.b16 %v2164, %v2163
      %v2171 = vunpack.c.l.b16 %v2147
      %v2172 = vunpack.c.h.b16 %v2147
      %v2173 = vunpack.c.l.b16 %v2148
      %v2174 = vunpack.c.h.b16 %v2148
      %v2175 = vpack.c.b16 %v2173, %v2171
      %v2176 = vpack.c.b16 %v2174, %v2172
      %v2180 = vsel %vm389, %v2165, 0
      %v2183 = vsel %vm389, %v2166, 0
      %v2186 = vsel %vm389, %v2167, 0
      %v2189 = vsel %vm389, %v2168, 0
      %2191 = vmatprep.subr.bf16.mxu0 0
      %2192 = vmatpush1.bf16.msra.mxu0 0
      %2193 = vmatprep.subr.bf16.mxu0 0
      %2194 = vmatpush1.bf16.msra.mxu0 0
      %2195 = vmatprep.subr.bf16.mxu0 0
      %2196 = vmatpush1.bf16.msra.mxu0 0
      %2197 = vmatprep.subr.bf16.mxu0 0
      %2198 = vmatpush1.bf16.msra.mxu0 0
      %2199 = vmatprep.subr.bf16.mxu0 0
      %2200 = vmatpush1.bf16.msra.mxu0 0
      %2201 = vmatprep.subr.bf16.mxu0 0
      %2202 = vmatpush1.bf16.msra.mxu0 0
      %2203 = vmatprep.subr.bf16.mxu0 0
      %2204 = vmatpush1.bf16.msra.mxu0 0
      %2205 = vmatprep.subr.bf16.mxu0 %v2176
      %2206 = vmatpush1.bf16.msra.mxu0 %v2175
      %2207 = vmatprep.subr.bf16.mxu0 0
      %2208 = vmatpush2.bf16.msra.mxu0 0
      %2209 = vmatprep.subr.bf16.mxu0 0
      %2210 = vmatpush2.bf16.msra.mxu0 0
      %2211 = vmatprep.subr.bf16.mxu0 0
      %2212 = vmatpush2.bf16.msra.mxu0 0
      %2213 = vmatprep.subr.bf16.mxu0 0
      %2214 = vmatpush2.bf16.msra.mxu0 0
      %2215 = vmatprep.subr.bf16.mxu0 0
      %2216 = vmatpush2.bf16.msra.mxu0 0
      %2217 = vmatprep.subr.bf16.mxu0 0
      %2218 = vmatpush2.bf16.msra.mxu0 0
      %2219 = vmatprep.subr.bf16.mxu0 0
      %2220 = vmatpush2.bf16.msra.mxu0 0
      %2221 = vmatprep.subr.bf16.mxu0 0
      %2222 = vmatpush2.bf16.msra.mxu0 0
      %2223 = vmatprep.mubr.bf16.mxu0 0
      %2224 = vmatmul.mubr.bf16.gmra.mxu0 %v2180
      %v2225 = vpop.f32.mrf.mxu0
      %v2226 = vadd.f32 0.0, %v2225
      %v2227 = vpop.f32.mrf.mxu0
      %v2228 = vadd.f32 0.0, %v2227
      %v2229 = vpop.f32.mrf.mxu0
      %v2230 = vadd.f32 0.0, %v2229
      %v2231 = vpop.f32.mrf.mxu0
      %v2232 = vadd.f32 0.0, %v2231
      %2233 = vmatprep.mubr.bf16.mxu0 0
      %2234 = vmatmul.mubr.bf16.gmra.mxu0 %v2183
      %v2235 = vpop.f32.mrf.mxu0
      %v2236 = vadd.f32 0.0, %v2235
      %v2237 = vpop.f32.mrf.mxu0
      %v2238 = vadd.f32 0.0, %v2237
      %v2239 = vpop.f32.mrf.mxu0
      %v2240 = vadd.f32 0.0, %v2239
      %v2241 = vpop.f32.mrf.mxu0
      %v2242 = vadd.f32 0.0, %v2241
      %2243 = vmatprep.mubr.bf16.mxu0 0
      %2244 = vmatmul.mubr.bf16.gmra.mxu0 %v2186
      %v2245 = vpop.f32.mrf.mxu0
      %v2246 = vadd.f32 0.0, %v2245
      %v2247 = vpop.f32.mrf.mxu0
      %v2248 = vadd.f32 0.0, %v2247
      %v2249 = vpop.f32.mrf.mxu0
      %v2250 = vadd.f32 0.0, %v2249
      %v2251 = vpop.f32.mrf.mxu0
      %v2252 = vadd.f32 0.0, %v2251
      %2253 = vmatprep.mubr.bf16.mxu0 0
      %2254 = vmatmul.mubr.bf16.gmra.mxu0 %v2189
      %v2255 = vpop.f32.mrf.mxu0
      %v2256 = vadd.f32 0.0, %v2255
      %v2257 = vpop.f32.mrf.mxu0
      %v2258 = vadd.f32 0.0, %v2257
      %v2259 = vpop.f32.mrf.mxu0
      %v2260 = vadd.f32 0.0, %v2259
      %v2261 = vpop.f32.mrf.mxu0
      %v2262 = vadd.f32 0.0, %v2261
      %2263 = vdwg.mxu0
      %v2268 = vunpack.c.l.b16 %v2133
      %v2269 = vunpack.c.l.b16 %v2134
      %v2270 = vunpack.c.l.b16 %v2135
      %v2271 = vunpack.c.l.b16 %v2136
      %v2272 = vpack.c.b16 %v2269, %v2268
      %v2273 = vpack.c.b16 %v2271, %v2270
      %v2276 = vunpack.c.l.b16 %v2141
      %v2277 = vunpack.c.h.b16 %v2141
      %v2278 = vunpack.c.l.b16 %v2142
      %v2279 = vunpack.c.h.b16 %v2142
      %v2280 = vpack.c.b16 %v2278, %v2276
      %v2281 = vpack.c.b16 %v2279, %v2277
      %v2285 = vsel %vm389, %v2272, 0
      %v2288 = vsel %vm389, %v2273, 0
      %2290 = vmatprep.subr.bf16.mxu0 0
      %2291 = vmatpush1.bf16.msra.mxu0 0
      %2292 = vmatprep.subr.bf16.mxu0 0
      %2293 = vmatpush1.bf16.msra.mxu0 0
      %2294 = vmatprep.subr.bf16.mxu0 0
      %2295 = vmatpush1.bf16.msra.mxu0 0
      %2296 = vmatprep.subr.bf16.mxu0 0
      %2297 = vmatpush1.bf16.msra.mxu0 0
      %2298 = vmatprep.subr.bf16.mxu0 0
      %2299 = vmatpush1.bf16.msra.mxu0 0
      %2300 = vmatprep.subr.bf16.mxu0 0
      %2301 = vmatpush1.bf16.msra.mxu0 0
      %2302 = vmatprep.subr.bf16.mxu0 0
      %2303 = vmatpush1.bf16.msra.mxu0 0
      %2304 = vmatprep.subr.bf16.mxu0 %v2281
      %2305 = vmatpush1.bf16.msra.mxu0 %v2280
      %2306 = vmatprep.subr.bf16.mxu0 0
      %2307 = vmatpush2.bf16.msra.mxu0 0
      %2308 = vmatprep.subr.bf16.mxu0 0
      %2309 = vmatpush2.bf16.msra.mxu0 0
      %2310 = vmatprep.subr.bf16.mxu0 0
      %2311 = vmatpush2.bf16.msra.mxu0 0
      %2312 = vmatprep.subr.bf16.mxu0 0
      %2313 = vmatpush2.bf16.msra.mxu0 0
      %2314 = vmatprep.subr.bf16.mxu0 0
      %2315 = vmatpush2.bf16.msra.mxu0 0
      %2316 = vmatprep.subr.bf16.mxu0 0
      %2317 = vmatpush2.bf16.msra.mxu0 0
      %2318 = vmatprep.subr.bf16.mxu0 0
      %2319 = vmatpush2.bf16.msra.mxu0 0
      %2320 = vmatprep.subr.bf16.mxu0 0
      %2321 = vmatpush2.bf16.msra.mxu0 0
      %2322 = vmatprep.mubr.bf16.mxu0 0
      %2323 = vmatmul.mubr.bf16.gmra.mxu0 %v2285
      %v2324 = vpop.f32.mrf.mxu0
      %v2325 = vadd.f32 %v2226, %v2324
      %v2326 = vpop.f32.mrf.mxu0
      %v2327 = vadd.f32 %v2228, %v2326
      %v2328 = vpop.f32.mrf.mxu0
      %v2329 = vadd.f32 %v2230, %v2328
      %v2330 = vpop.f32.mrf.mxu0
      %v2331 = vadd.f32 %v2232, %v2330
      %2332 = vmatprep.mubr.bf16.mxu0 0
      %2333 = vmatmul.mubr.bf16.gmra.mxu0 %v2288
      %v2334 = vpop.f32.mrf.mxu0
      %v2335 = vadd.f32 %v2236, %v2334
      %v2336 = vpop.f32.mrf.mxu0
      %v2337 = vadd.f32 %v2238, %v2336
      %v2338 = vpop.f32.mrf.mxu0
      %v2339 = vadd.f32 %v2240, %v2338
      %v2340 = vpop.f32.mrf.mxu0
      %v2341 = vadd.f32 %v2242, %v2340
      %2342 = vmatprep.mubr.bf16.mxu0 0
      %2343 = vmatmul.mubr.bf16.gmra.mxu0 %v2180
      %v2344 = vpop.f32.mrf.mxu0
      %v2345 = vadd.f32 %v2246, %v2344
      %v2346 = vpop.f32.mrf.mxu0
      %v2347 = vadd.f32 %v2248, %v2346
      %v2348 = vpop.f32.mrf.mxu0
      %v2349 = vadd.f32 %v2250, %v2348
      %v2350 = vpop.f32.mrf.mxu0
      %v2351 = vadd.f32 %v2252, %v2350
      %2352 = vmatprep.mubr.bf16.mxu0 0
      %2353 = vmatmul.mubr.bf16.gmra.mxu0 %v2183
      %v2354 = vpop.f32.mrf.mxu0
      %v2355 = vadd.f32 %v2256, %v2354
      %v2356 = vpop.f32.mrf.mxu0
      %v2357 = vadd.f32 %v2258, %v2356
      %v2358 = vpop.f32.mrf.mxu0
      %v2359 = vadd.f32 %v2260, %v2358
      %v2360 = vpop.f32.mrf.mxu0
      %v2361 = vadd.f32 %v2262, %v2360
      %2362 = vdwg.mxu0
      %v2363 = vld [vmem:[%s327 + $0xa0] sm:$0xf]
      %v2364 = vld [vmem:[%s327 + $0xa4] sm:$0xf]
      %v2365 = vld [vmem:[%s327 + $0xa8] sm:$0xf]
      %v2366 = vld [vmem:[%s327 + $0xac] sm:$0xf]
      %v2367 = vld [vmem:[%s327 + $0xb0] sm:$0xf]
      %v2368 = vld [vmem:[%s327 + $0xb4] sm:$0xf]
      %v2369 = vld [vmem:[%s327 + $0xb8] sm:$0xf]
      %v2370 = vld [vmem:[%s327 + $0xbc] sm:$0xf]
      %v2371 = vld [vmem:[%s582] sm:$0xff]
      %v2372 = vld [vmem:[%s582 + $0x8] sm:$0xff]
      %v2381 = vunpack.c.l.b16 %v2363
      %v2382 = vunpack.c.l.b16 %v2364
      %v2383 = vunpack.c.l.b16 %v2365
      %v2384 = vunpack.c.l.b16 %v2366
      %v2385 = vunpack.c.l.b16 %v2367
      %v2386 = vunpack.c.l.b16 %v2368
      %v2387 = vunpack.c.l.b16 %v2369
      %v2388 = vunpack.c.l.b16 %v2370
      %v2389 = vpack.c.b16 %v2382, %v2381
      %v2390 = vpack.c.b16 %v2384, %v2383
      %v2391 = vpack.c.b16 %v2386, %v2385
      %v2392 = vpack.c.b16 %v2388, %v2387
      %v2395 = vunpack.c.l.b16 %v2371
      %v2396 = vunpack.c.h.b16 %v2371
      %v2397 = vunpack.c.l.b16 %v2372
      %v2398 = vunpack.c.h.b16 %v2372
      %v2399 = vpack.c.b16 %v2397, %v2395
      %v2400 = vpack.c.b16 %v2398, %v2396
      %v2404 = vsel %vm389, %v2389, 0
      %v2407 = vsel %vm389, %v2390, 0
      %v2410 = vsel %vm389, %v2391, 0
      %v2413 = vsel %vm389, %v2392, 0
      %2415 = vmatprep.subr.bf16.mxu0 0
      %2416 = vmatpush1.bf16.msra.mxu0 0
      %2417 = vmatprep.subr.bf16.mxu0 0
      %2418 = vmatpush1.bf16.msra.mxu0 0
      %2419 = vmatprep.subr.bf16.mxu0 0
      %2420 = vmatpush1.bf16.msra.mxu0 0
      %2421 = vmatprep.subr.bf16.mxu0 0
      %2422 = vmatpush1.bf16.msra.mxu0 0
      %2423 = vmatprep.subr.bf16.mxu0 0
      %2424 = vmatpush1.bf16.msra.mxu0 0
      %2425 = vmatprep.subr.bf16.mxu0 0
      %2426 = vmatpush1.bf16.msra.mxu0 0
      %2427 = vmatprep.subr.bf16.mxu0 0
      %2428 = vmatpush1.bf16.msra.mxu0 0
      %2429 = vmatprep.subr.bf16.mxu0 %v2400
      %2430 = vmatpush1.bf16.msra.mxu0 %v2399
      %2431 = vmatprep.subr.bf16.mxu0 0
      %2432 = vmatpush2.bf16.msra.mxu0 0
      %2433 = vmatprep.subr.bf16.mxu0 0
      %2434 = vmatpush2.bf16.msra.mxu0 0
      %2435 = vmatprep.subr.bf16.mxu0 0
      %2436 = vmatpush2.bf16.msra.mxu0 0
      %2437 = vmatprep.subr.bf16.mxu0 0
      %2438 = vmatpush2.bf16.msra.mxu0 0
      %2439 = vmatprep.subr.bf16.mxu0 0
      %2440 = vmatpush2.bf16.msra.mxu0 0
      %2441 = vmatprep.subr.bf16.mxu0 0
      %2442 = vmatpush2.bf16.msra.mxu0 0
      %2443 = vmatprep.subr.bf16.mxu0 0
      %2444 = vmatpush2.bf16.msra.mxu0 0
      %2445 = vmatprep.subr.bf16.mxu0 0
      %2446 = vmatpush2.bf16.msra.mxu0 0
      %2447 = vmatprep.mubr.bf16.mxu0 0
      %2448 = vmatmul.mubr.bf16.gmra.mxu0 %v2404
      %v2449 = vpop.f32.mrf.mxu0
      %v2450 = vadd.f32 0.0, %v2449
      %v2451 = vpop.f32.mrf.mxu0
      %v2452 = vadd.f32 0.0, %v2451
      %v2453 = vpop.f32.mrf.mxu0
      %v2454 = vadd.f32 0.0, %v2453
      %v2455 = vpop.f32.mrf.mxu0
      %v2456 = vadd.f32 0.0, %v2455
      %2457 = vmatprep.mubr.bf16.mxu0 0
      %2458 = vmatmul.mubr.bf16.gmra.mxu0 %v2407
      %v2459 = vpop.f32.mrf.mxu0
      %v2460 = vadd.f32 0.0, %v2459
      %v2461 = vpop.f32.mrf.mxu0
      %v2462 = vadd.f32 0.0, %v2461
      %v2463 = vpop.f32.mrf.mxu0
      %v2464 = vadd.f32 0.0, %v2463
      %v2465 = vpop.f32.mrf.mxu0
      %v2466 = vadd.f32 0.0, %v2465
      %2467 = vmatprep.mubr.bf16.mxu0 0
      %2468 = vmatmul.mubr.bf16.gmra.mxu0 %v2410
      %v2469 = vpop.f32.mrf.mxu0
      %v2470 = vadd.f32 0.0, %v2469
      %v2471 = vpop.f32.mrf.mxu0
      %v2472 = vadd.f32 0.0, %v2471
      %v2473 = vpop.f32.mrf.mxu0
      %v2474 = vadd.f32 0.0, %v2473
      %v2475 = vpop.f32.mrf.mxu0
      %v2476 = vadd.f32 0.0, %v2475
      %2477 = vmatprep.mubr.bf16.mxu0 0
      %2478 = vmatmul.mubr.bf16.gmra.mxu0 %v2413
      %v2479 = vpop.f32.mrf.mxu0
      %v2480 = vadd.f32 0.0, %v2479
      %v2481 = vpop.f32.mrf.mxu0
      %v2482 = vadd.f32 0.0, %v2481
      %v2483 = vpop.f32.mrf.mxu0
      %v2484 = vadd.f32 0.0, %v2483
      %v2485 = vpop.f32.mrf.mxu0
      %v2486 = vadd.f32 0.0, %v2485
      %2487 = vdwg.mxu0
      %v2488 = vadd.f32 %v2325, %v2450
      %v2489 = vadd.f32 %v2327, %v2452
      %v2490 = vadd.f32 %v2329, %v2454
      %v2491 = vadd.f32 %v2331, %v2456
      %v2492 = vadd.f32 %v2335, %v2460
      %v2493 = vadd.f32 %v2337, %v2462
      %v2494 = vadd.f32 %v2339, %v2464
      %v2495 = vadd.f32 %v2341, %v2466
      %v2496 = vadd.f32 %v2345, %v2470
      %v2497 = vadd.f32 %v2347, %v2472
      %v2498 = vadd.f32 %v2349, %v2474
      %v2499 = vadd.f32 %v2351, %v2476
      %v2500 = vadd.f32 %v2355, %v2480
      %v2501 = vadd.f32 %v2357, %v2482
      %v2502 = vadd.f32 %v2359, %v2484
      %v2503 = vadd.f32 %v2361, %v2486
      %v2504 = vld [vmem:[%s2] sm:$0x3]
      %v2506 = vlaneseq
      %v2507 = vshrl.u32 %v2506, 7
      %v2508 = vsub.s32 0, %v2507
      %v2509 = vrot.slane %v2504, %v2508
      %v2510 = vlaneseq
      %v2511 = vshrl.u32 %v2510, 7
      %v2512 = vsub.s32 1, %v2511
      %v2513 = vrot.slane %v2504, %v2512
      %v2516 = vadd.f32 %v2488, %v2509
      %v2517 = vadd.f32 %v2489, %v2513
      %v2518 = vadd.f32 %v2490, %v2509
      %v2519 = vadd.f32 %v2491, %v2513
      %v2520 = vadd.f32 %v2492, %v2509
      %v2521 = vadd.f32 %v2493, %v2513
      %v2522 = vadd.f32 %v2494, %v2509
      %v2523 = vadd.f32 %v2495, %v2513
      %v2524 = vadd.f32 %v2496, %v2509
      %v2525 = vadd.f32 %v2497, %v2513
      %v2526 = vadd.f32 %v2498, %v2509
      %v2527 = vadd.f32 %v2499, %v2513
      %v2528 = vadd.f32 %v2500, %v2509
      %v2529 = vadd.f32 %v2501, %v2513
      %v2530 = vadd.f32 %v2502, %v2509
      %v2531 = vadd.f32 %v2503, %v2513
      %v2532 = vtanh.pop %v2516
      %v2533 = vtanh.pop %v2517
      %v2534 = vtanh.pop %v2518
      %v2535 = vtanh.pop %v2519
      %v2536 = vtanh.pop %v2520
      %v2537 = vtanh.pop %v2521
      %v2538 = vtanh.pop %v2522
      %v2539 = vtanh.pop %v2523
      %v2540 = vtanh.pop %v2524
      %v2541 = vtanh.pop %v2525
      %v2542 = vtanh.pop %v2526
      %v2543 = vtanh.pop %v2527
      %v2544 = vtanh.pop %v2528
      %v2545 = vtanh.pop %v2529
      %v2546 = vtanh.pop %v2530
      %v2547 = vtanh.pop %v2531
      %v2548 = vmax.f32 %v2532, %v2533
      %v2549 = vmax.f32 %v2534, %v2535
      %v2550 = vmax.f32 %v2536, %v2537
      %v2551 = vmax.f32 %v2538, %v2539
      %v2552 = vmax.f32 %v2540, %v2541
      %v2553 = vmax.f32 %v2542, %v2543
      %v2554 = vmax.f32 %v2544, %v2545
      %v2555 = vmax.f32 %v2546, %v2547
      %v2556 = vmax.f32 %v2548, %v2552
      %v2557 = vmax.f32 %v2549, %v2553
      %v2558 = vmax.f32 %v2550, %v2554
      %v2559 = vmax.f32 %v2551, %v2555
      %v2560 = vpack.c.bf16 %v2557, %v2556
      %v2561 = vpack.c.bf16 %v2559, %v2558
      %v2564 = vunpack.c.l.b16 %v2560
      %v2565 = vunpack.c.h.b16 %v2560
      %v2566 = vunpack.c.l.b16 %v2561
      %v2567 = vunpack.c.h.b16 %v2561
      %v2568 = vpack.c.b16 %v2564, %v2564
      %v2569 = vpack.c.b16 %v2565, %v2565
      %v2570 = vpack.c.b16 %v2566, %v2566
      %v2571 = vpack.c.b16 %v2567, %v2567
      %2576 = vst [vmem:[#allocation2 + $0x50] sm:$0xf] %v2568
      %2577 = vst [vmem:[#allocation2 + $0x54] sm:$0xf] %v2569
      %2578 = vst [vmem:[#allocation2 + $0x58] sm:$0xf] %v2570
      %2579 = vst [vmem:[#allocation2 + $0x5c] sm:$0xf] %v2571
      %v2580 = vld [vmem:[%s327 + $0xa0] sm:$0xf]
      %v2581 = vld [vmem:[%s327 + $0xa4] sm:$0xf]
      %v2582 = vld [vmem:[%s327 + $0xa8] sm:$0xf]
      %v2583 = vld [vmem:[%s327 + $0xac] sm:$0xf]
      %v2584 = vld [vmem:[%s327 + $0xb0] sm:$0xf]
      %v2585 = vld [vmem:[%s327 + $0xb4] sm:$0xf]
      %v2586 = vld [vmem:[%s327 + $0xb8] sm:$0xf]
      %v2587 = vld [vmem:[%s327 + $0xbc] sm:$0xf]
      %v2588 = vld [vmem:[%s1] sm:$0xff]
      %v2589 = vld [vmem:[%s1 + $0x8] sm:$0xff]
      %v2590 = vld [vmem:[%s327 + $0xc0] sm:$0xf]
      %v2591 = vld [vmem:[%s327 + $0xc4] sm:$0xf]
      %v2592 = vld [vmem:[%s327 + $0xc8] sm:$0xf]
      %v2593 = vld [vmem:[%s327 + $0xcc] sm:$0xf]
      %v2594 = vld [vmem:[%s356] sm:$0xff]
      %v2595 = vld [vmem:[%s356 + $0x8] sm:$0xff]
      %v2604 = vunpack.c.l.b16 %v2584
      %v2605 = vunpack.c.l.b16 %v2585
      %v2606 = vunpack.c.l.b16 %v2586
      %v2607 = vunpack.c.l.b16 %v2587
      %v2608 = vunpack.c.l.b16 %v2590
      %v2609 = vunpack.c.l.b16 %v2591
      %v2610 = vunpack.c.l.b16 %v2592
      %v2611 = vunpack.c.l.b16 %v2593
      %v2612 = vpack.c.b16 %v2605, %v2604
      %v2613 = vpack.c.b16 %v2607, %v2606
      %v2614 = vpack.c.b16 %v2609, %v2608
      %v2615 = vpack.c.b16 %v2611, %v2610
      %v2618 = vunpack.c.l.b16 %v2594
      %v2619 = vunpack.c.h.b16 %v2594
      %v2620 = vunpack.c.l.b16 %v2595
      %v2621 = vunpack.c.h.b16 %v2595
      %v2622 = vpack.c.b16 %v2620, %v2618
      %v2623 = vpack.c.b16 %v2621, %v2619
      %v2627 = vsel %vm389, %v2612, 0
      %v2630 = vsel %vm389, %v2613, 0
      %v2633 = vsel %vm389, %v2614, 0
      %v2636 = vsel %vm389, %v2615, 0
      %2638 = vmatprep.subr.bf16.mxu0 0
      %2639 = vmatpush1.bf16.msra.mxu0 0
      %2640 = vmatprep.subr.bf16.mxu0 0
      %2641 = vmatpush1.bf16.msra.mxu0 0
      %2642 = vmatprep.subr.bf16.mxu0 0
      %2643 = vmatpush1.bf16.msra.mxu0 0
      %2644 = vmatprep.subr.bf16.mxu0 0
      %2645 = vmatpush1.bf16.msra.mxu0 0
      %2646 = vmatprep.subr.bf16.mxu0 0
      %2647 = vmatpush1.bf16.msra.mxu0 0
      %2648 = vmatprep.subr.bf16.mxu0 0
      %2649 = vmatpush1.bf16.msra.mxu0 0
      %2650 = vmatprep.subr.bf16.mxu0 0
      %2651 = vmatpush1.bf16.msra.mxu0 0
      %2652 = vmatprep.subr.bf16.mxu0 %v2623
      %2653 = vmatpush1.bf16.msra.mxu0 %v2622
      %2654 = vmatprep.subr.bf16.mxu0 0
      %2655 = vmatpush2.bf16.msra.mxu0 0
      %2656 = vmatprep.subr.bf16.mxu0 0
      %2657 = vmatpush2.bf16.msra.mxu0 0
      %2658 = vmatprep.subr.bf16.mxu0 0
      %2659 = vmatpush2.bf16.msra.mxu0 0
      %2660 = vmatprep.subr.bf16.mxu0 0
      %2661 = vmatpush2.bf16.msra.mxu0 0
      %2662 = vmatprep.subr.bf16.mxu0 0
      %2663 = vmatpush2.bf16.msra.mxu0 0
      %2664 = vmatprep.subr.bf16.mxu0 0
      %2665 = vmatpush2.bf16.msra.mxu0 0
      %2666 = vmatprep.subr.bf16.mxu0 0
      %2667 = vmatpush2.bf16.msra.mxu0 0
      %2668 = vmatprep.subr.bf16.mxu0 0
      %2669 = vmatpush2.bf16.msra.mxu0 0
      %2670 = vmatprep.mubr.bf16.mxu0 0
      %2671 = vmatmul.mubr.bf16.gmra.mxu0 %v2627
      %v2672 = vpop.f32.mrf.mxu0
      %v2673 = vadd.f32 0.0, %v2672
      %v2674 = vpop.f32.mrf.mxu0
      %v2675 = vadd.f32 0.0, %v2674
      %v2676 = vpop.f32.mrf.mxu0
      %v2677 = vadd.f32 0.0, %v2676
      %v2678 = vpop.f32.mrf.mxu0
      %v2679 = vadd.f32 0.0, %v2678
      %2680 = vmatprep.mubr.bf16.mxu0 0
      %2681 = vmatmul.mubr.bf16.gmra.mxu0 %v2630
      %v2682 = vpop.f32.mrf.mxu0
      %v2683 = vadd.f32 0.0, %v2682
      %v2684 = vpop.f32.mrf.mxu0
      %v2685 = vadd.f32 0.0, %v2684
      %v2686 = vpop.f32.mrf.mxu0
      %v2687 = vadd.f32 0.0, %v2686
      %v2688 = vpop.f32.mrf.mxu0
      %v2689 = vadd.f32 0.0, %v2688
      %2690 = vmatprep.mubr.bf16.mxu0 0
      %2691 = vmatmul.mubr.bf16.gmra.mxu0 %v2633
      %v2692 = vpop.f32.mrf.mxu0
      %v2693 = vadd.f32 0.0, %v2692
      %v2694 = vpop.f32.mrf.mxu0
      %v2695 = vadd.f32 0.0, %v2694
      %v2696 = vpop.f32.mrf.mxu0
      %v2697 = vadd.f32 0.0, %v2696
      %v2698 = vpop.f32.mrf.mxu0
      %v2699 = vadd.f32 0.0, %v2698
      %2700 = vmatprep.mubr.bf16.mxu0 0
      %2701 = vmatmul.mubr.bf16.gmra.mxu0 %v2636
      %v2702 = vpop.f32.mrf.mxu0
      %v2703 = vadd.f32 0.0, %v2702
      %v2704 = vpop.f32.mrf.mxu0
      %v2705 = vadd.f32 0.0, %v2704
      %v2706 = vpop.f32.mrf.mxu0
      %v2707 = vadd.f32 0.0, %v2706
      %v2708 = vpop.f32.mrf.mxu0
      %v2709 = vadd.f32 0.0, %v2708
      %2710 = vdwg.mxu0
      %v2715 = vunpack.c.l.b16 %v2580
      %v2716 = vunpack.c.l.b16 %v2581
      %v2717 = vunpack.c.l.b16 %v2582
      %v2718 = vunpack.c.l.b16 %v2583
      %v2719 = vpack.c.b16 %v2716, %v2715
      %v2720 = vpack.c.b16 %v2718, %v2717
      %v2723 = vunpack.c.l.b16 %v2588
      %v2724 = vunpack.c.h.b16 %v2588
      %v2725 = vunpack.c.l.b16 %v2589
      %v2726 = vunpack.c.h.b16 %v2589
      %v2727 = vpack.c.b16 %v2725, %v2723
      %v2728 = vpack.c.b16 %v2726, %v2724
      %v2732 = vsel %vm389, %v2719, 0
      %v2735 = vsel %vm389, %v2720, 0
      %2737 = vmatprep.subr.bf16.mxu0 0
      %2738 = vmatpush1.bf16.msra.mxu0 0
      %2739 = vmatprep.subr.bf16.mxu0 0
      %2740 = vmatpush1.bf16.msra.mxu0 0
      %2741 = vmatprep.subr.bf16.mxu0 0
      %2742 = vmatpush1.bf16.msra.mxu0 0
      %2743 = vmatprep.subr.bf16.mxu0 0
      %2744 = vmatpush1.bf16.msra.mxu0 0
      %2745 = vmatprep.subr.bf16.mxu0 0
      %2746 = vmatpush1.bf16.msra.mxu0 0
      %2747 = vmatprep.subr.bf16.mxu0 0
      %2748 = vmatpush1.bf16.msra.mxu0 0
      %2749 = vmatprep.subr.bf16.mxu0 0
      %2750 = vmatpush1.bf16.msra.mxu0 0
      %2751 = vmatprep.subr.bf16.mxu0 %v2728
      %2752 = vmatpush1.bf16.msra.mxu0 %v2727
      %2753 = vmatprep.subr.bf16.mxu0 0
      %2754 = vmatpush2.bf16.msra.mxu0 0
      %2755 = vmatprep.subr.bf16.mxu0 0
      %2756 = vmatpush2.bf16.msra.mxu0 0
      %2757 = vmatprep.subr.bf16.mxu0 0
      %2758 = vmatpush2.bf16.msra.mxu0 0
      %2759 = vmatprep.subr.bf16.mxu0 0
      %2760 = vmatpush2.bf16.msra.mxu0 0
      %2761 = vmatprep.subr.bf16.mxu0 0
      %2762 = vmatpush2.bf16.msra.mxu0 0
      %2763 = vmatprep.subr.bf16.mxu0 0
      %2764 = vmatpush2.bf16.msra.mxu0 0
      %2765 = vmatprep.subr.bf16.mxu0 0
      %2766 = vmatpush2.bf16.msra.mxu0 0
      %2767 = vmatprep.subr.bf16.mxu0 0
      %2768 = vmatpush2.bf16.msra.mxu0 0
      %2769 = vmatprep.mubr.bf16.mxu0 0
      %2770 = vmatmul.mubr.bf16.gmra.mxu0 %v2732
      %v2771 = vpop.f32.mrf.mxu0
      %v2772 = vadd.f32 %v2673, %v2771
      %v2773 = vpop.f32.mrf.mxu0
      %v2774 = vadd.f32 %v2675, %v2773
      %v2775 = vpop.f32.mrf.mxu0
      %v2776 = vadd.f32 %v2677, %v2775
      %v2777 = vpop.f32.mrf.mxu0
      %v2778 = vadd.f32 %v2679, %v2777
      %2779 = vmatprep.mubr.bf16.mxu0 0
      %2780 = vmatmul.mubr.bf16.gmra.mxu0 %v2735
      %v2781 = vpop.f32.mrf.mxu0
      %v2782 = vadd.f32 %v2683, %v2781
      %v2783 = vpop.f32.mrf.mxu0
      %v2784 = vadd.f32 %v2685, %v2783
      %v2785 = vpop.f32.mrf.mxu0
      %v2786 = vadd.f32 %v2687, %v2785
      %v2787 = vpop.f32.mrf.mxu0
      %v2788 = vadd.f32 %v2689, %v2787
      %2789 = vmatprep.mubr.bf16.mxu0 0
      %2790 = vmatmul.mubr.bf16.gmra.mxu0 %v2627
      %v2791 = vpop.f32.mrf.mxu0
      %v2792 = vadd.f32 %v2693, %v2791
      %v2793 = vpop.f32.mrf.mxu0
      %v2794 = vadd.f32 %v2695, %v2793
      %v2795 = vpop.f32.mrf.mxu0
      %v2796 = vadd.f32 %v2697, %v2795
      %v2797 = vpop.f32.mrf.mxu0
      %v2798 = vadd.f32 %v2699, %v2797
      %2799 = vmatprep.mubr.bf16.mxu0 0
      %2800 = vmatmul.mubr.bf16.gmra.mxu0 %v2630
      %v2801 = vpop.f32.mrf.mxu0
      %v2802 = vadd.f32 %v2703, %v2801
      %v2803 = vpop.f32.mrf.mxu0
      %v2804 = vadd.f32 %v2705, %v2803
      %v2805 = vpop.f32.mrf.mxu0
      %v2806 = vadd.f32 %v2707, %v2805
      %v2807 = vpop.f32.mrf.mxu0
      %v2808 = vadd.f32 %v2709, %v2807
      %2809 = vdwg.mxu0
      %v2810 = vld [vmem:[%s327 + $0xc0] sm:$0xf]
      %v2811 = vld [vmem:[%s327 + $0xc4] sm:$0xf]
      %v2812 = vld [vmem:[%s327 + $0xc8] sm:$0xf]
      %v2813 = vld [vmem:[%s327 + $0xcc] sm:$0xf]
      %v2814 = vld [vmem:[%s327 + $0xd0] sm:$0xf]
      %v2815 = vld [vmem:[%s327 + $0xd4] sm:$0xf]
      %v2816 = vld [vmem:[%s327 + $0xd8] sm:$0xf]
      %v2817 = vld [vmem:[%s327 + $0xdc] sm:$0xf]
      %v2818 = vld [vmem:[%s582] sm:$0xff]
      %v2819 = vld [vmem:[%s582 + $0x8] sm:$0xff]
      %v2828 = vunpack.c.l.b16 %v2810
      %v2829 = vunpack.c.l.b16 %v2811
      %v2830 = vunpack.c.l.b16 %v2812
      %v2831 = vunpack.c.l.b16 %v2813
      %v2832 = vunpack.c.l.b16 %v2814
      %v2833 = vunpack.c.l.b16 %v2815
      %v2834 = vunpack.c.l.b16 %v2816
      %v2835 = vunpack.c.l.b16 %v2817
      %v2836 = vpack.c.b16 %v2829, %v2828
      %v2837 = vpack.c.b16 %v2831, %v2830
      %v2838 = vpack.c.b16 %v2833, %v2832
      %v2839 = vpack.c.b16 %v2835, %v2834
      %v2842 = vunpack.c.l.b16 %v2818
      %v2843 = vunpack.c.h.b16 %v2818
      %v2844 = vunpack.c.l.b16 %v2819
      %v2845 = vunpack.c.h.b16 %v2819
      %v2846 = vpack.c.b16 %v2844, %v2842
      %v2847 = vpack.c.b16 %v2845, %v2843
      %v2851 = vsel %vm389, %v2836, 0
      %v2854 = vsel %vm389, %v2837, 0
      %v2857 = vsel %vm389, %v2838, 0
      %v2860 = vsel %vm389, %v2839, 0
      %2862 = vmatprep.subr.bf16.mxu0 0
      %2863 = vmatpush1.bf16.msra.mxu0 0
      %2864 = vmatprep.subr.bf16.mxu0 0
      %2865 = vmatpush1.bf16.msra.mxu0 0
      %2866 = vmatprep.subr.bf16.mxu0 0
      %2867 = vmatpush1.bf16.msra.mxu0 0
      %2868 = vmatprep.subr.bf16.mxu0 0
      %2869 = vmatpush1.bf16.msra.mxu0 0
      %2870 = vmatprep.subr.bf16.mxu0 0
      %2871 = vmatpush1.bf16.msra.mxu0 0
      %2872 = vmatprep.subr.bf16.mxu0 0
      %2873 = vmatpush1.bf16.msra.mxu0 0
      %2874 = vmatprep.subr.bf16.mxu0 0
      %2875 = vmatpush1.bf16.msra.mxu0 0
      %2876 = vmatprep.subr.bf16.mxu0 %v2847
      %2877 = vmatpush1.bf16.msra.mxu0 %v2846
      %2878 = vmatprep.subr.bf16.mxu0 0
      %2879 = vmatpush2.bf16.msra.mxu0 0
      %2880 = vmatprep.subr.bf16.mxu0 0
      %2881 = vmatpush2.bf16.msra.mxu0 0
      %2882 = vmatprep.subr.bf16.mxu0 0
      %2883 = vmatpush2.bf16.msra.mxu0 0
      %2884 = vmatprep.subr.bf16.mxu0 0
      %2885 = vmatpush2.bf16.msra.mxu0 0
      %2886 = vmatprep.subr.bf16.mxu0 0
      %2887 = vmatpush2.bf16.msra.mxu0 0
      %2888 = vmatprep.subr.bf16.mxu0 0
      %2889 = vmatpush2.bf16.msra.mxu0 0
      %2890 = vmatprep.subr.bf16.mxu0 0
      %2891 = vmatpush2.bf16.msra.mxu0 0
      %2892 = vmatprep.subr.bf16.mxu0 0
      %2893 = vmatpush2.bf16.msra.mxu0 0
      %2894 = vmatprep.mubr.bf16.mxu0 0
      %2895 = vmatmul.mubr.bf16.gmra.mxu0 %v2851
      %v2896 = vpop.f32.mrf.mxu0
      %v2897 = vadd.f32 0.0, %v2896
      %v2898 = vpop.f32.mrf.mxu0
      %v2899 = vadd.f32 0.0, %v2898
      %v2900 = vpop.f32.mrf.mxu0
      %v2901 = vadd.f32 0.0, %v2900
      %v2902 = vpop.f32.mrf.mxu0
      %v2903 = vadd.f32 0.0, %v2902
      %2904 = vmatprep.mubr.bf16.mxu0 0
      %2905 = vmatmul.mubr.bf16.gmra.mxu0 %v2854
      %v2906 = vpop.f32.mrf.mxu0
      %v2907 = vadd.f32 0.0, %v2906
      %v2908 = vpop.f32.mrf.mxu0
      %v2909 = vadd.f32 0.0, %v2908
      %v2910 = vpop.f32.mrf.mxu0
      %v2911 = vadd.f32 0.0, %v2910
      %v2912 = vpop.f32.mrf.mxu0
      %v2913 = vadd.f32 0.0, %v2912
      %2914 = vmatprep.mubr.bf16.mxu0 0
      %2915 = vmatmul.mubr.bf16.gmra.mxu0 %v2857
      %v2916 = vpop.f32.mrf.mxu0
      %v2917 = vadd.f32 0.0, %v2916
      %v2918 = vpop.f32.mrf.mxu0
      %v2919 = vadd.f32 0.0, %v2918
      %v2920 = vpop.f32.mrf.mxu0
      %v2921 = vadd.f32 0.0, %v2920
      %v2922 = vpop.f32.mrf.mxu0
      %v2923 = vadd.f32 0.0, %v2922
      %2924 = vmatprep.mubr.bf16.mxu0 0
      %2925 = vmatmul.mubr.bf16.gmra.mxu0 %v2860
      %v2926 = vpop.f32.mrf.mxu0
      %v2927 = vadd.f32 0.0, %v2926
      %v2928 = vpop.f32.mrf.mxu0
      %v2929 = vadd.f32 0.0, %v2928
      %v2930 = vpop.f32.mrf.mxu0
      %v2931 = vadd.f32 0.0, %v2930
      %v2932 = vpop.f32.mrf.mxu0
      %v2933 = vadd.f32 0.0, %v2932
      %2934 = vdwg.mxu0
      %v2935 = vadd.f32 %v2772, %v2897
      %v2936 = vadd.f32 %v2774, %v2899
      %v2937 = vadd.f32 %v2776, %v2901
      %v2938 = vadd.f32 %v2778, %v2903
      %v2939 = vadd.f32 %v2782, %v2907
      %v2940 = vadd.f32 %v2784, %v2909
      %v2941 = vadd.f32 %v2786, %v2911
      %v2942 = vadd.f32 %v2788, %v2913
      %v2943 = vadd.f32 %v2792, %v2917
      %v2944 = vadd.f32 %v2794, %v2919
      %v2945 = vadd.f32 %v2796, %v2921
      %v2946 = vadd.f32 %v2798, %v2923
      %v2947 = vadd.f32 %v2802, %v2927
      %v2948 = vadd.f32 %v2804, %v2929
      %v2949 = vadd.f32 %v2806, %v2931
      %v2950 = vadd.f32 %v2808, %v2933
      %v2951 = vld [vmem:[%s2] sm:$0x3]
      %v2953 = vlaneseq
      %v2954 = vshrl.u32 %v2953, 7
      %v2955 = vsub.s32 0, %v2954
      %v2956 = vrot.slane %v2951, %v2955
      %v2957 = vlaneseq
      %v2958 = vshrl.u32 %v2957, 7
      %v2959 = vsub.s32 1, %v2958
      %v2960 = vrot.slane %v2951, %v2959
      %v2963 = vadd.f32 %v2935, %v2956
      %v2964 = vadd.f32 %v2936, %v2960
      %v2965 = vadd.f32 %v2937, %v2956
      %v2966 = vadd.f32 %v2938, %v2960
      %v2967 = vadd.f32 %v2939, %v2956
      %v2968 = vadd.f32 %v2940, %v2960
      %v2969 = vadd.f32 %v2941, %v2956
      %v2970 = vadd.f32 %v2942, %v2960
      %v2971 = vadd.f32 %v2943, %v2956
      %v2972 = vadd.f32 %v2944, %v2960
      %v2973 = vadd.f32 %v2945, %v2956
      %v2974 = vadd.f32 %v2946, %v2960
      %v2975 = vadd.f32 %v2947, %v2956
      %v2976 = vadd.f32 %v2948, %v2960
      %v2977 = vadd.f32 %v2949, %v2956
      %v2978 = vadd.f32 %v2950, %v2960
      %v2979 = vtanh.pop %v2963
      %v2980 = vtanh.pop %v2964
      %v2981 = vtanh.pop %v2965
      %v2982 = vtanh.pop %v2966
      %v2983 = vtanh.pop %v2967
      %v2984 = vtanh.pop %v2968
      %v2985 = vtanh.pop %v2969
      %v2986 = vtanh.pop %v2970
      %v2987 = vtanh.pop %v2971
      %v2988 = vtanh.pop %v2972
      %v2989 = vtanh.pop %v2973
      %v2990 = vtanh.pop %v2974
      %v2991 = vtanh.pop %v2975
      %v2992 = vtanh.pop %v2976
      %v2993 = vtanh.pop %v2977
      %v2994 = vtanh.pop %v2978
      %v2995 = vmax.f32 %v2979, %v2980
      %v2996 = vmax.f32 %v2981, %v2982
      %v2997 = vmax.f32 %v2983, %v2984
      %v2998 = vmax.f32 %v2985, %v2986
      %v2999 = vmax.f32 %v2987, %v2988
      %v3000 = vmax.f32 %v2989, %v2990
      %v3001 = vmax.f32 %v2991, %v2992
      %v3002 = vmax.f32 %v2993, %v2994
      %v3003 = vmax.f32 %v2995, %v2999
      %v3004 = vmax.f32 %v2996, %v3000
      %v3005 = vmax.f32 %v2997, %v3001
      %v3006 = vmax.f32 %v2998, %v3002
      %v3007 = vpack.c.bf16 %v3004, %v3003
      %v3008 = vpack.c.bf16 %v3006, %v3005
      %v3011 = vunpack.c.l.b16 %v3007
      %v3012 = vunpack.c.h.b16 %v3007
      %v3013 = vunpack.c.l.b16 %v3008
      %v3014 = vunpack.c.h.b16 %v3008
      %v3015 = vpack.c.b16 %v3011, %v3011
      %v3016 = vpack.c.b16 %v3012, %v3012
      %v3017 = vpack.c.b16 %v3013, %v3013
      %v3018 = vpack.c.b16 %v3014, %v3014
      %3023 = vst [vmem:[#allocation2 + $0x60] sm:$0xf] %v3015
      %3024 = vst [vmem:[#allocation2 + $0x64] sm:$0xf] %v3016
      %3025 = vst [vmem:[#allocation2 + $0x68] sm:$0xf] %v3017
      %3026 = vst [vmem:[#allocation2 + $0x6c] sm:$0xf] %v3018
      %v3027 = vld [vmem:[%s327 + $0xc0] sm:$0xf]
      %v3028 = vld [vmem:[%s327 + $0xc4] sm:$0xf]
      %v3029 = vld [vmem:[%s327 + $0xc8] sm:$0xf]
      %v3030 = vld [vmem:[%s327 + $0xcc] sm:$0xf]
      %v3031 = vld [vmem:[%s327 + $0xd0] sm:$0xf]
      %v3032 = vld [vmem:[%s327 + $0xd4] sm:$0xf]
      %v3033 = vld [vmem:[%s327 + $0xd8] sm:$0xf]
      %v3034 = vld [vmem:[%s327 + $0xdc] sm:$0xf]
      %v3035 = vld [vmem:[%s1] sm:$0xff]
      %v3036 = vld [vmem:[%s1 + $0x8] sm:$0xff]
      %v3037 = vld [vmem:[%s327 + $0xe0] sm:$0xf]
      %v3038 = vld [vmem:[%s327 + $0xe4] sm:$0xf]
      %v3039 = vld [vmem:[%s327 + $0xe8] sm:$0xf]
      %v3040 = vld [vmem:[%s327 + $0xec] sm:$0xf]
      %v3041 = vld [vmem:[%s356] sm:$0xff]
      %v3042 = vld [vmem:[%s356 + $0x8] sm:$0xff]
      %v3051 = vunpack.c.l.b16 %v3031
      %v3052 = vunpack.c.l.b16 %v3032
      %v3053 = vunpack.c.l.b16 %v3033
      %v3054 = vunpack.c.l.b16 %v3034
      %v3055 = vunpack.c.l.b16 %v3037
      %v3056 = vunpack.c.l.b16 %v3038
      %v3057 = vunpack.c.l.b16 %v3039
      %v3058 = vunpack.c.l.b16 %v3040
      %v3059 = vpack.c.b16 %v3052, %v3051
      %v3060 = vpack.c.b16 %v3054, %v3053
      %v3061 = vpack.c.b16 %v3056, %v3055
      %v3062 = vpack.c.b16 %v3058, %v3057
      %v3065 = vunpack.c.l.b16 %v3041
      %v3066 = vunpack.c.h.b16 %v3041
      %v3067 = vunpack.c.l.b16 %v3042
      %v3068 = vunpack.c.h.b16 %v3042
      %v3069 = vpack.c.b16 %v3067, %v3065
      %v3070 = vpack.c.b16 %v3068, %v3066
      %v3074 = vsel %vm389, %v3059, 0
      %v3077 = vsel %vm389, %v3060, 0
      %v3080 = vsel %vm389, %v3061, 0
      %v3083 = vsel %vm389, %v3062, 0
      %3085 = vmatprep.subr.bf16.mxu0 0
      %3086 = vmatpush1.bf16.msra.mxu0 0
      %3087 = vmatprep.subr.bf16.mxu0 0
      %3088 = vmatpush1.bf16.msra.mxu0 0
      %3089 = vmatprep.subr.bf16.mxu0 0
      %3090 = vmatpush1.bf16.msra.mxu0 0
      %3091 = vmatprep.subr.bf16.mxu0 0
      %3092 = vmatpush1.bf16.msra.mxu0 0
      %3093 = vmatprep.subr.bf16.mxu0 0
      %3094 = vmatpush1.bf16.msra.mxu0 0
      %3095 = vmatprep.subr.bf16.mxu0 0
      %3096 = vmatpush1.bf16.msra.mxu0 0
      %3097 = vmatprep.subr.bf16.mxu0 0
      %3098 = vmatpush1.bf16.msra.mxu0 0
      %3099 = vmatprep.subr.bf16.mxu0 %v3070
      %3100 = vmatpush1.bf16.msra.mxu0 %v3069
      %3101 = vmatprep.subr.bf16.mxu0 0
      %3102 = vmatpush2.bf16.msra.mxu0 0
      %3103 = vmatprep.subr.bf16.mxu0 0
      %3104 = vmatpush2.bf16.msra.mxu0 0
      %3105 = vmatprep.subr.bf16.mxu0 0
      %3106 = vmatpush2.bf16.msra.mxu0 0
      %3107 = vmatprep.subr.bf16.mxu0 0
      %3108 = vmatpush2.bf16.msra.mxu0 0
      %3109 = vmatprep.subr.bf16.mxu0 0
      %3110 = vmatpush2.bf16.msra.mxu0 0
      %3111 = vmatprep.subr.bf16.mxu0 0
      %3112 = vmatpush2.bf16.msra.mxu0 0
      %3113 = vmatprep.subr.bf16.mxu0 0
      %3114 = vmatpush2.bf16.msra.mxu0 0
      %3115 = vmatprep.subr.bf16.mxu0 0
      %3116 = vmatpush2.bf16.msra.mxu0 0
      %3117 = vmatprep.mubr.bf16.mxu0 0
      %3118 = vmatmul.mubr.bf16.gmra.mxu0 %v3074
      %v3119 = vpop.f32.mrf.mxu0
      %v3120 = vadd.f32 0.0, %v3119
      %v3121 = vpop.f32.mrf.mxu0
      %v3122 = vadd.f32 0.0, %v3121
      %v3123 = vpop.f32.mrf.mxu0
      %v3124 = vadd.f32 0.0, %v3123
      %v3125 = vpop.f32.mrf.mxu0
      %v3126 = vadd.f32 0.0, %v3125
      %3127 = vmatprep.mubr.bf16.mxu0 0
      %3128 = vmatmul.mubr.bf16.gmra.mxu0 %v3077
      %v3129 = vpop.f32.mrf.mxu0
      %v3130 = vadd.f32 0.0, %v3129
      %v3131 = vpop.f32.mrf.mxu0
      %v3132 = vadd.f32 0.0, %v3131
      %v3133 = vpop.f32.mrf.mxu0
      %v3134 = vadd.f32 0.0, %v3133
      %v3135 = vpop.f32.mrf.mxu0
      %v3136 = vadd.f32 0.0, %v3135
      %3137 = vmatprep.mubr.bf16.mxu0 0
      %3138 = vmatmul.mubr.bf16.gmra.mxu0 %v3080
      %v3139 = vpop.f32.mrf.mxu0
      %v3140 = vadd.f32 0.0, %v3139
      %v3141 = vpop.f32.mrf.mxu0
      %v3142 = vadd.f32 0.0, %v3141
      %v3143 = vpop.f32.mrf.mxu0
      %v3144 = vadd.f32 0.0, %v3143
      %v3145 = vpop.f32.mrf.mxu0
      %v3146 = vadd.f32 0.0, %v3145
      %3147 = vmatprep.mubr.bf16.mxu0 0
      %3148 = vmatmul.mubr.bf16.gmra.mxu0 %v3083
      %v3149 = vpop.f32.mrf.mxu0
      %v3150 = vadd.f32 0.0, %v3149
      %v3151 = vpop.f32.mrf.mxu0
      %v3152 = vadd.f32 0.0, %v3151
      %v3153 = vpop.f32.mrf.mxu0
      %v3154 = vadd.f32 0.0, %v3153
      %v3155 = vpop.f32.mrf.mxu0
      %v3156 = vadd.f32 0.0, %v3155
      %3157 = vdwg.mxu0
      %v3162 = vunpack.c.l.b16 %v3027
      %v3163 = vunpack.c.l.b16 %v3028
      %v3164 = vunpack.c.l.b16 %v3029
      %v3165 = vunpack.c.l.b16 %v3030
      %v3166 = vpack.c.b16 %v3163, %v3162
      %v3167 = vpack.c.b16 %v3165, %v3164
      %v3170 = vunpack.c.l.b16 %v3035
      %v3171 = vunpack.c.h.b16 %v3035
      %v3172 = vunpack.c.l.b16 %v3036
      %v3173 = vunpack.c.h.b16 %v3036
      %v3174 = vpack.c.b16 %v3172, %v3170
      %v3175 = vpack.c.b16 %v3173, %v3171
      %v3179 = vsel %vm389, %v3166, 0
      %v3182 = vsel %vm389, %v3167, 0
      %3184 = vmatprep.subr.bf16.mxu0 0
      %3185 = vmatpush1.bf16.msra.mxu0 0
      %3186 = vmatprep.subr.bf16.mxu0 0
      %3187 = vmatpush1.bf16.msra.mxu0 0
      %3188 = vmatprep.subr.bf16.mxu0 0
      %3189 = vmatpush1.bf16.msra.mxu0 0
      %3190 = vmatprep.subr.bf16.mxu0 0
      %3191 = vmatpush1.bf16.msra.mxu0 0
      %3192 = vmatprep.subr.bf16.mxu0 0
      %3193 = vmatpush1.bf16.msra.mxu0 0
      %3194 = vmatprep.subr.bf16.mxu0 0
      %3195 = vmatpush1.bf16.msra.mxu0 0
      %3196 = vmatprep.subr.bf16.mxu0 0
      %3197 = vmatpush1.bf16.msra.mxu0 0
      %3198 = vmatprep.subr.bf16.mxu0 %v3175
      %3199 = vmatpush1.bf16.msra.mxu0 %v3174
      %3200 = vmatprep.subr.bf16.mxu0 0
      %3201 = vmatpush2.bf16.msra.mxu0 0
      %3202 = vmatprep.subr.bf16.mxu0 0
      %3203 = vmatpush2.bf16.msra.mxu0 0
      %3204 = vmatprep.subr.bf16.mxu0 0
      %3205 = vmatpush2.bf16.msra.mxu0 0
      %3206 = vmatprep.subr.bf16.mxu0 0
      %3207 = vmatpush2.bf16.msra.mxu0 0
      %3208 = vmatprep.subr.bf16.mxu0 0
      %3209 = vmatpush2.bf16.msra.mxu0 0
      %3210 = vmatprep.subr.bf16.mxu0 0
      %3211 = vmatpush2.bf16.msra.mxu0 0
      %3212 = vmatprep.subr.bf16.mxu0 0
      %3213 = vmatpush2.bf16.msra.mxu0 0
      %3214 = vmatprep.subr.bf16.mxu0 0
      %3215 = vmatpush2.bf16.msra.mxu0 0
      %3216 = vmatprep.mubr.bf16.mxu0 0
      %3217 = vmatmul.mubr.bf16.gmra.mxu0 %v3179
      %v3218 = vpop.f32.mrf.mxu0
      %v3219 = vadd.f32 %v3120, %v3218
      %v3220 = vpop.f32.mrf.mxu0
      %v3221 = vadd.f32 %v3122, %v3220
      %v3222 = vpop.f32.mrf.mxu0
      %v3223 = vadd.f32 %v3124, %v3222
      %v3224 = vpop.f32.mrf.mxu0
      %v3225 = vadd.f32 %v3126, %v3224
      %3226 = vmatprep.mubr.bf16.mxu0 0
      %3227 = vmatmul.mubr.bf16.gmra.mxu0 %v3182
      %v3228 = vpop.f32.mrf.mxu0
      %v3229 = vadd.f32 %v3130, %v3228
      %v3230 = vpop.f32.mrf.mxu0
      %v3231 = vadd.f32 %v3132, %v3230
      %v3232 = vpop.f32.mrf.mxu0
      %v3233 = vadd.f32 %v3134, %v3232
      %v3234 = vpop.f32.mrf.mxu0
      %v3235 = vadd.f32 %v3136, %v3234
      %3236 = vmatprep.mubr.bf16.mxu0 0
      %3237 = vmatmul.mubr.bf16.gmra.mxu0 %v3074
      %v3238 = vpop.f32.mrf.mxu0
      %v3239 = vadd.f32 %v3140, %v3238
      %v3240 = vpop.f32.mrf.mxu0
      %v3241 = vadd.f32 %v3142, %v3240
      %v3242 = vpop.f32.mrf.mxu0
      %v3243 = vadd.f32 %v3144, %v3242
      %v3244 = vpop.f32.mrf.mxu0
      %v3245 = vadd.f32 %v3146, %v3244
      %3246 = vmatprep.mubr.bf16.mxu0 0
      %3247 = vmatmul.mubr.bf16.gmra.mxu0 %v3077
      %v3248 = vpop.f32.mrf.mxu0
      %v3249 = vadd.f32 %v3150, %v3248
      %v3250 = vpop.f32.mrf.mxu0
      %v3251 = vadd.f32 %v3152, %v3250
      %v3252 = vpop.f32.mrf.mxu0
      %v3253 = vadd.f32 %v3154, %v3252
      %v3254 = vpop.f32.mrf.mxu0
      %v3255 = vadd.f32 %v3156, %v3254
      %3256 = vdwg.mxu0
      %v3257 = vld [vmem:[%s327 + $0xe0] sm:$0xf]
      %v3258 = vld [vmem:[%s327 + $0xe4] sm:$0xf]
      %v3259 = vld [vmem:[%s327 + $0xe8] sm:$0xf]
      %v3260 = vld [vmem:[%s327 + $0xec] sm:$0xf]
      %v3261 = vld [vmem:[%s327 + $0xf0] sm:$0xf]
      %v3262 = vld [vmem:[%s327 + $0xf4] sm:$0xf]
      %v3263 = vld [vmem:[%s327 + $0xf8] sm:$0xf]
      %v3264 = vld [vmem:[%s327 + $0xfc] sm:$0xf]
      %v3265 = vld [vmem:[%s582] sm:$0xff]
      %v3266 = vld [vmem:[%s582 + $0x8] sm:$0xff]
      %v3275 = vunpack.c.l.b16 %v3257
      %v3276 = vunpack.c.l.b16 %v3258
      %v3277 = vunpack.c.l.b16 %v3259
      %v3278 = vunpack.c.l.b16 %v3260
      %v3279 = vunpack.c.l.b16 %v3261
      %v3280 = vunpack.c.l.b16 %v3262
      %v3281 = vunpack.c.l.b16 %v3263
      %v3282 = vunpack.c.l.b16 %v3264
      %v3283 = vpack.c.b16 %v3276, %v3275
      %v3284 = vpack.c.b16 %v3278, %v3277
      %v3285 = vpack.c.b16 %v3280, %v3279
      %v3286 = vpack.c.b16 %v3282, %v3281
      %v3289 = vunpack.c.l.b16 %v3265
      %v3290 = vunpack.c.h.b16 %v3265
      %v3291 = vunpack.c.l.b16 %v3266
      %v3292 = vunpack.c.h.b16 %v3266
      %v3293 = vpack.c.b16 %v3291, %v3289
      %v3294 = vpack.c.b16 %v3292, %v3290
      %v3298 = vsel %vm389, %v3283, 0
      %v3301 = vsel %vm389, %v3284, 0
      %v3304 = vsel %vm389, %v3285, 0
      %v3307 = vsel %vm389, %v3286, 0
      %3309 = vmatprep.subr.bf16.mxu0 0
      %3310 = vmatpush1.bf16.msra.mxu0 0
      %3311 = vmatprep.subr.bf16.mxu0 0
      %3312 = vmatpush1.bf16.msra.mxu0 0
      %3313 = vmatprep.subr.bf16.mxu0 0
      %3314 = vmatpush1.bf16.msra.mxu0 0
      %3315 = vmatprep.subr.bf16.mxu0 0
      %3316 = vmatpush1.bf16.msra.mxu0 0
      %3317 = vmatprep.subr.bf16.mxu0 0
      %3318 = vmatpush1.bf16.msra.mxu0 0
      %3319 = vmatprep.subr.bf16.mxu0 0
      %3320 = vmatpush1.bf16.msra.mxu0 0
      %3321 = vmatprep.subr.bf16.mxu0 0
      %3322 = vmatpush1.bf16.msra.mxu0 0
      %3323 = vmatprep.subr.bf16.mxu0 %v3294
      %3324 = vmatpush1.bf16.msra.mxu0 %v3293
      %3325 = vmatprep.subr.bf16.mxu0 0
      %3326 = vmatpush2.bf16.msra.mxu0 0
      %3327 = vmatprep.subr.bf16.mxu0 0
      %3328 = vmatpush2.bf16.msra.mxu0 0
      %3329 = vmatprep.subr.bf16.mxu0 0
      %3330 = vmatpush2.bf16.msra.mxu0 0
      %3331 = vmatprep.subr.bf16.mxu0 0
      %3332 = vmatpush2.bf16.msra.mxu0 0
      %3333 = vmatprep.subr.bf16.mxu0 0
      %3334 = vmatpush2.bf16.msra.mxu0 0
      %3335 = vmatprep.subr.bf16.mxu0 0
      %3336 = vmatpush2.bf16.msra.mxu0 0
      %3337 = vmatprep.subr.bf16.mxu0 0
      %3338 = vmatpush2.bf16.msra.mxu0 0
      %3339 = vmatprep.subr.bf16.mxu0 0
      %3340 = vmatpush2.bf16.msra.mxu0 0
      %3341 = vmatprep.mubr.bf16.mxu0 0
      %3342 = vmatmul.mubr.bf16.gmra.mxu0 %v3298
      %v3343 = vpop.f32.mrf.mxu0
      %v3344 = vadd.f32 0.0, %v3343
      %v3345 = vpop.f32.mrf.mxu0
      %v3346 = vadd.f32 0.0, %v3345
      %v3347 = vpop.f32.mrf.mxu0
      %v3348 = vadd.f32 0.0, %v3347
      %v3349 = vpop.f32.mrf.mxu0
      %v3350 = vadd.f32 0.0, %v3349
      %3351 = vmatprep.mubr.bf16.mxu0 0
      %3352 = vmatmul.mubr.bf16.gmra.mxu0 %v3301
      %v3353 = vpop.f32.mrf.mxu0
      %v3354 = vadd.f32 0.0, %v3353
      %v3355 = vpop.f32.mrf.mxu0
      %v3356 = vadd.f32 0.0, %v3355
      %v3357 = vpop.f32.mrf.mxu0
      %v3358 = vadd.f32 0.0, %v3357
      %v3359 = vpop.f32.mrf.mxu0
      %v3360 = vadd.f32 0.0, %v3359
      %3361 = vmatprep.mubr.bf16.mxu0 0
      %3362 = vmatmul.mubr.bf16.gmra.mxu0 %v3304
      %v3363 = vpop.f32.mrf.mxu0
      %v3364 = vadd.f32 0.0, %v3363
      %v3365 = vpop.f32.mrf.mxu0
      %v3366 = vadd.f32 0.0, %v3365
      %v3367 = vpop.f32.mrf.mxu0
      %v3368 = vadd.f32 0.0, %v3367
      %v3369 = vpop.f32.mrf.mxu0
      %v3370 = vadd.f32 0.0, %v3369
      %3371 = vmatprep.mubr.bf16.mxu0 0
      %3372 = vmatmul.mubr.bf16.gmra.mxu0 %v3307
      %v3373 = vpop.f32.mrf.mxu0
      %v3374 = vadd.f32 0.0, %v3373
      %v3375 = vpop.f32.mrf.mxu0
      %v3376 = vadd.f32 0.0, %v3375
      %v3377 = vpop.f32.mrf.mxu0
      %v3378 = vadd.f32 0.0, %v3377
      %v3379 = vpop.f32.mrf.mxu0
      %v3380 = vadd.f32 0.0, %v3379
      %3381 = vdwg.mxu0
      %v3382 = vadd.f32 %v3219, %v3344
      %v3383 = vadd.f32 %v3221, %v3346
      %v3384 = vadd.f32 %v3223, %v3348
      %v3385 = vadd.f32 %v3225, %v3350
      %v3386 = vadd.f32 %v3229, %v3354
      %v3387 = vadd.f32 %v3231, %v3356
      %v3388 = vadd.f32 %v3233, %v3358
      %v3389 = vadd.f32 %v3235, %v3360
      %v3390 = vadd.f32 %v3239, %v3364
      %v3391 = vadd.f32 %v3241, %v3366
      %v3392 = vadd.f32 %v3243, %v3368
      %v3393 = vadd.f32 %v3245, %v3370
      %v3394 = vadd.f32 %v3249, %v3374
      %v3395 = vadd.f32 %v3251, %v3376
      %v3396 = vadd.f32 %v3253, %v3378
      %v3397 = vadd.f32 %v3255, %v3380
      %v3398 = vld [vmem:[%s2] sm:$0x3]
      %v3400 = vlaneseq
      %v3401 = vshrl.u32 %v3400, 7
      %v3402 = vsub.s32 0, %v3401
      %v3403 = vrot.slane %v3398, %v3402
      %v3404 = vlaneseq
      %v3405 = vshrl.u32 %v3404, 7
      %v3406 = vsub.s32 1, %v3405
      %v3407 = vrot.slane %v3398, %v3406
      %v3410 = vadd.f32 %v3382, %v3403
      %v3411 = vadd.f32 %v3383, %v3407
      %v3412 = vadd.f32 %v3384, %v3403
      %v3413 = vadd.f32 %v3385, %v3407
      %v3414 = vadd.f32 %v3386, %v3403
      %v3415 = vadd.f32 %v3387, %v3407
      %v3416 = vadd.f32 %v3388, %v3403
      %v3417 = vadd.f32 %v3389, %v3407
      %v3418 = vadd.f32 %v3390, %v3403
      %v3419 = vadd.f32 %v3391, %v3407
      %v3420 = vadd.f32 %v3392, %v3403
      %v3421 = vadd.f32 %v3393, %v3407
      %v3422 = vadd.f32 %v3394, %v3403
      %v3423 = vadd.f32 %v3395, %v3407
      %v3424 = vadd.f32 %v3396, %v3403
      %v3425 = vadd.f32 %v3397, %v3407
      %v3426 = vtanh.pop %v3410
      %v3427 = vtanh.pop %v3411
      %v3428 = vtanh.pop %v3412
      %v3429 = vtanh.pop %v3413
      %v3430 = vtanh.pop %v3414
      %v3431 = vtanh.pop %v3415
      %v3432 = vtanh.pop %v3416
      %v3433 = vtanh.pop %v3417
      %v3434 = vtanh.pop %v3418
      %v3435 = vtanh.pop %v3419
      %v3436 = vtanh.pop %v3420
      %v3437 = vtanh.pop %v3421
      %v3438 = vtanh.pop %v3422
      %v3439 = vtanh.pop %v3423
      %v3440 = vtanh.pop %v3424
      %v3441 = vtanh.pop %v3425
      %v3442 = vmax.f32 %v3426, %v3427
      %v3443 = vmax.f32 %v3428, %v3429
      %v3444 = vmax.f32 %v3430, %v3431
      %v3445 = vmax.f32 %v3432, %v3433
      %v3446 = vmax.f32 %v3434, %v3435
      %v3447 = vmax.f32 %v3436, %v3437
      %v3448 = vmax.f32 %v3438, %v3439
      %v3449 = vmax.f32 %v3440, %v3441
      %v3450 = vmax.f32 %v3442, %v3446
      %v3451 = vmax.f32 %v3443, %v3447
      %v3452 = vmax.f32 %v3444, %v3448
      %v3453 = vmax.f32 %v3445, %v3449
      %v3454 = vpack.c.bf16 %v3451, %v3450
      %v3455 = vpack.c.bf16 %v3453, %v3452
      %v3458 = vunpack.c.l.b16 %v3454
      %v3459 = vunpack.c.h.b16 %v3454
      %v3460 = vunpack.c.l.b16 %v3455
      %v3461 = vunpack.c.h.b16 %v3455
      %v3462 = vpack.c.b16 %v3458, %v3458
      %v3463 = vpack.c.b16 %v3459, %v3459
      %v3464 = vpack.c.b16 %v3460, %v3460
      %v3465 = vpack.c.b16 %v3461, %v3461
      %3470 = vst [vmem:[#allocation2 + $0x70] sm:$0xf] %v3462
      %3471 = vst [vmem:[#allocation2 + $0x74] sm:$0xf] %v3463
      %3472 = vst [vmem:[#allocation2 + $0x78] sm:$0xf] %v3464
      %3473 = vst [vmem:[#allocation2 + $0x7c] sm:$0xf] %v3465
      %v3474 = vld [vmem:[%s327 + $0xe0] sm:$0xf]
      %v3475 = vld [vmem:[%s327 + $0xe4] sm:$0xf]
      %v3476 = vld [vmem:[%s327 + $0xe8] sm:$0xf]
      %v3477 = vld [vmem:[%s327 + $0xec] sm:$0xf]
      %v3478 = vld [vmem:[%s327 + $0xf0] sm:$0xf]
      %v3479 = vld [vmem:[%s327 + $0xf4] sm:$0xf]
      %v3480 = vld [vmem:[%s327 + $0xf8] sm:$0xf]
      %v3481 = vld [vmem:[%s327 + $0xfc] sm:$0xf]
      %v3482 = vld [vmem:[%s1] sm:$0xff]
      %v3483 = vld [vmem:[%s1 + $0x8] sm:$0xff]
      %v3484 = vld [vmem:[%s327 + $0x100] sm:$0xf]
      %v3485 = vld [vmem:[%s327 + $0x104] sm:$0xf]
      %v3486 = vld [vmem:[%s327 + $0x108] sm:$0xf]
      %v3487 = vld [vmem:[%s327 + $0x10c] sm:$0xf]
      %v3488 = vld [vmem:[%s356] sm:$0xff]
      %v3489 = vld [vmem:[%s356 + $0x8] sm:$0xff]
      %v3498 = vunpack.c.l.b16 %v3478
      %v3499 = vunpack.c.l.b16 %v3479
      %v3500 = vunpack.c.l.b16 %v3480
      %v3501 = vunpack.c.l.b16 %v3481
      %v3502 = vunpack.c.l.b16 %v3484
      %v3503 = vunpack.c.l.b16 %v3485
      %v3504 = vunpack.c.l.b16 %v3486
      %v3505 = vunpack.c.l.b16 %v3487
      %v3506 = vpack.c.b16 %v3499, %v3498
      %v3507 = vpack.c.b16 %v3501, %v3500
      %v3508 = vpack.c.b16 %v3503, %v3502
      %v3509 = vpack.c.b16 %v3505, %v3504
      %v3512 = vunpack.c.l.b16 %v3488
      %v3513 = vunpack.c.h.b16 %v3488
      %v3514 = vunpack.c.l.b16 %v3489
      %v3515 = vunpack.c.h.b16 %v3489
      %v3516 = vpack.c.b16 %v3514, %v3512
      %v3517 = vpack.c.b16 %v3515, %v3513
      %v3521 = vsel %vm389, %v3506, 0
      %v3524 = vsel %vm389, %v3507, 0
      %v3527 = vsel %vm389, %v3508, 0
      %v3530 = vsel %vm389, %v3509, 0
      %3532 = vmatprep.subr.bf16.mxu0 0
      %3533 = vmatpush1.bf16.msra.mxu0 0
      %3534 = vmatprep.subr.bf16.mxu0 0
      %3535 = vmatpush1.bf16.msra.mxu0 0
      %3536 = vmatprep.subr.bf16.mxu0 0
      %3537 = vmatpush1.bf16.msra.mxu0 0
      %3538 = vmatprep.subr.bf16.mxu0 0
      %3539 = vmatpush1.bf16.msra.mxu0 0
      %3540 = vmatprep.subr.bf16.mxu0 0
      %3541 = vmatpush1.bf16.msra.mxu0 0
      %3542 = vmatprep.subr.bf16.mxu0 0
      %3543 = vmatpush1.bf16.msra.mxu0 0
      %3544 = vmatprep.subr.bf16.mxu0 0
      %3545 = vmatpush1.bf16.msra.mxu0 0
      %3546 = vmatprep.subr.bf16.mxu0 %v3517
      %3547 = vmatpush1.bf16.msra.mxu0 %v3516
      %3548 = vmatprep.subr.bf16.mxu0 0
      %3549 = vmatpush2.bf16.msra.mxu0 0
      %3550 = vmatprep.subr.bf16.mxu0 0
      %3551 = vmatpush2.bf16.msra.mxu0 0
      %3552 = vmatprep.subr.bf16.mxu0 0
      %3553 = vmatpush2.bf16.msra.mxu0 0
      %3554 = vmatprep.subr.bf16.mxu0 0
      %3555 = vmatpush2.bf16.msra.mxu0 0
      %3556 = vmatprep.subr.bf16.mxu0 0
      %3557 = vmatpush2.bf16.msra.mxu0 0
      %3558 = vmatprep.subr.bf16.mxu0 0
      %3559 = vmatpush2.bf16.msra.mxu0 0
      %3560 = vmatprep.subr.bf16.mxu0 0
      %3561 = vmatpush2.bf16.msra.mxu0 0
      %3562 = vmatprep.subr.bf16.mxu0 0
      %3563 = vmatpush2.bf16.msra.mxu0 0
      %3564 = vmatprep.mubr.bf16.mxu0 0
      %3565 = vmatmul.mubr.bf16.gmra.mxu0 %v3521
      %v3566 = vpop.f32.mrf.mxu0
      %v3567 = vadd.f32 0.0, %v3566
      %v3568 = vpop.f32.mrf.mxu0
      %v3569 = vadd.f32 0.0, %v3568
      %v3570 = vpop.f32.mrf.mxu0
      %v3571 = vadd.f32 0.0, %v3570
      %v3572 = vpop.f32.mrf.mxu0
      %v3573 = vadd.f32 0.0, %v3572
      %3574 = vmatprep.mubr.bf16.mxu0 0
      %3575 = vmatmul.mubr.bf16.gmra.mxu0 %v3524
      %v3576 = vpop.f32.mrf.mxu0
      %v3577 = vadd.f32 0.0, %v3576
      %v3578 = vpop.f32.mrf.mxu0
      %v3579 = vadd.f32 0.0, %v3578
      %v3580 = vpop.f32.mrf.mxu0
      %v3581 = vadd.f32 0.0, %v3580
      %v3582 = vpop.f32.mrf.mxu0
      %v3583 = vadd.f32 0.0, %v3582
      %3584 = vmatprep.mubr.bf16.mxu0 0
      %3585 = vmatmul.mubr.bf16.gmra.mxu0 %v3527
      %v3586 = vpop.f32.mrf.mxu0
      %v3587 = vadd.f32 0.0, %v3586
      %v3588 = vpop.f32.mrf.mxu0
      %v3589 = vadd.f32 0.0, %v3588
      %v3590 = vpop.f32.mrf.mxu0
      %v3591 = vadd.f32 0.0, %v3590
      %v3592 = vpop.f32.mrf.mxu0
      %v3593 = vadd.f32 0.0, %v3592
      %3594 = vmatprep.mubr.bf16.mxu0 0
      %3595 = vmatmul.mubr.bf16.gmra.mxu0 %v3530
      %v3596 = vpop.f32.mrf.mxu0
      %v3597 = vadd.f32 0.0, %v3596
      %v3598 = vpop.f32.mrf.mxu0
      %v3599 = vadd.f32 0.0, %v3598
      %v3600 = vpop.f32.mrf.mxu0
      %v3601 = vadd.f32 0.0, %v3600
      %v3602 = vpop.f32.mrf.mxu0
      %v3603 = vadd.f32 0.0, %v3602
      %3604 = vdwg.mxu0
      %v3609 = vunpack.c.l.b16 %v3474
      %v3610 = vunpack.c.l.b16 %v3475
      %v3611 = vunpack.c.l.b16 %v3476
      %v3612 = vunpack.c.l.b16 %v3477
      %v3613 = vpack.c.b16 %v3610, %v3609
      %v3614 = vpack.c.b16 %v3612, %v3611
      %v3617 = vunpack.c.l.b16 %v3482
      %v3618 = vunpack.c.h.b16 %v3482
      %v3619 = vunpack.c.l.b16 %v3483
      %v3620 = vunpack.c.h.b16 %v3483
      %v3621 = vpack.c.b16 %v3619, %v3617
      %v3622 = vpack.c.b16 %v3620, %v3618
      %v3626 = vsel %vm389, %v3613, 0
      %v3629 = vsel %vm389, %v3614, 0
      %3631 = vmatprep.subr.bf16.mxu0 0
      %3632 = vmatpush1.bf16.msra.mxu0 0
      %3633 = vmatprep.subr.bf16.mxu0 0
      %3634 = vmatpush1.bf16.msra.mxu0 0
      %3635 = vmatprep.subr.bf16.mxu0 0
      %3636 = vmatpush1.bf16.msra.mxu0 0
      %3637 = vmatprep.subr.bf16.mxu0 0
      %3638 = vmatpush1.bf16.msra.mxu0 0
      %3639 = vmatprep.subr.bf16.mxu0 0
      %3640 = vmatpush1.bf16.msra.mxu0 0
      %3641 = vmatprep.subr.bf16.mxu0 0
      %3642 = vmatpush1.bf16.msra.mxu0 0
      %3643 = vmatprep.subr.bf16.mxu0 0
      %3644 = vmatpush1.bf16.msra.mxu0 0
      %3645 = vmatprep.subr.bf16.mxu0 %v3622
      %3646 = vmatpush1.bf16.msra.mxu0 %v3621
      %3647 = vmatprep.subr.bf16.mxu0 0
      %3648 = vmatpush2.bf16.msra.mxu0 0
      %3649 = vmatprep.subr.bf16.mxu0 0
      %3650 = vmatpush2.bf16.msra.mxu0 0
      %3651 = vmatprep.subr.bf16.mxu0 0
      %3652 = vmatpush2.bf16.msra.mxu0 0
      %3653 = vmatprep.subr.bf16.mxu0 0
      %3654 = vmatpush2.bf16.msra.mxu0 0
      %3655 = vmatprep.subr.bf16.mxu0 0
      %3656 = vmatpush2.bf16.msra.mxu0 0
      %3657 = vmatprep.subr.bf16.mxu0 0
      %3658 = vmatpush2.bf16.msra.mxu0 0
      %3659 = vmatprep.subr.bf16.mxu0 0
      %3660 = vmatpush2.bf16.msra.mxu0 0
      %3661 = vmatprep.subr.bf16.mxu0 0
      %3662 = vmatpush2.bf16.msra.mxu0 0
      %3663 = vmatprep.mubr.bf16.mxu0 0
      %3664 = vmatmul.mubr.bf16.gmra.mxu0 %v3626
      %v3665 = vpop.f32.mrf.mxu0
      %v3666 = vadd.f32 %v3567, %v3665
      %v3667 = vpop.f32.mrf.mxu0
      %v3668 = vadd.f32 %v3569, %v3667
      %v3669 = vpop.f32.mrf.mxu0
      %v3670 = vadd.f32 %v3571, %v3669
      %v3671 = vpop.f32.mrf.mxu0
      %v3672 = vadd.f32 %v3573, %v3671
      %3673 = vmatprep.mubr.bf16.mxu0 0
      %3674 = vmatmul.mubr.bf16.gmra.mxu0 %v3629
      %v3675 = vpop.f32.mrf.mxu0
      %v3676 = vadd.f32 %v3577, %v3675
      %v3677 = vpop.f32.mrf.mxu0
      %v3678 = vadd.f32 %v3579, %v3677
      %v3679 = vpop.f32.mrf.mxu0
      %v3680 = vadd.f32 %v3581, %v3679
      %v3681 = vpop.f32.mrf.mxu0
      %v3682 = vadd.f32 %v3583, %v3681
      %3683 = vmatprep.mubr.bf16.mxu0 0
      %3684 = vmatmul.mubr.bf16.gmra.mxu0 %v3521
      %v3685 = vpop.f32.mrf.mxu0
      %v3686 = vadd.f32 %v3587, %v3685
      %v3687 = vpop.f32.mrf.mxu0
      %v3688 = vadd.f32 %v3589, %v3687
      %v3689 = vpop.f32.mrf.mxu0
      %v3690 = vadd.f32 %v3591, %v3689
      %v3691 = vpop.f32.mrf.mxu0
      %v3692 = vadd.f32 %v3593, %v3691
      %3693 = vmatprep.mubr.bf16.mxu0 0
      %3694 = vmatmul.mubr.bf16.gmra.mxu0 %v3524
      %v3695 = vpop.f32.mrf.mxu0
      %v3696 = vadd.f32 %v3597, %v3695
      %v3697 = vpop.f32.mrf.mxu0
      %v3698 = vadd.f32 %v3599, %v3697
      %v3699 = vpop.f32.mrf.mxu0
      %v3700 = vadd.f32 %v3601, %v3699
      %v3701 = vpop.f32.mrf.mxu0
      %v3702 = vadd.f32 %v3603, %v3701
      %3703 = vdwg.mxu0
      %v3704 = vld [vmem:[%s327 + $0x100] sm:$0xf]
      %v3705 = vld [vmem:[%s327 + $0x104] sm:$0xf]
      %v3706 = vld [vmem:[%s327 + $0x108] sm:$0xf]
      %v3707 = vld [vmem:[%s327 + $0x10c] sm:$0xf]
      %v3708 = vld [vmem:[%s327 + $0x110] sm:$0xf]
      %v3709 = vld [vmem:[%s327 + $0x114] sm:$0xf]
      %v3710 = vld [vmem:[%s327 + $0x118] sm:$0xf]
      %v3711 = vld [vmem:[%s327 + $0x11c] sm:$0xf]
      %v3712 = vld [vmem:[%s582] sm:$0xff]
      %v3713 = vld [vmem:[%s582 + $0x8] sm:$0xff]
      %v3722 = vunpack.c.l.b16 %v3704
      %v3723 = vunpack.c.l.b16 %v3705
      %v3724 = vunpack.c.l.b16 %v3706
      %v3725 = vunpack.c.l.b16 %v3707
      %v3726 = vunpack.c.l.b16 %v3708
      %v3727 = vunpack.c.l.b16 %v3709
      %v3728 = vunpack.c.l.b16 %v3710
      %v3729 = vunpack.c.l.b16 %v3711
      %v3730 = vpack.c.b16 %v3723, %v3722
      %v3731 = vpack.c.b16 %v3725, %v3724
      %v3732 = vpack.c.b16 %v3727, %v3726
      %v3733 = vpack.c.b16 %v3729, %v3728
      %v3736 = vunpack.c.l.b16 %v3712
      %v3737 = vunpack.c.h.b16 %v3712
      %v3738 = vunpack.c.l.b16 %v3713
      %v3739 = vunpack.c.h.b16 %v3713
      %v3740 = vpack.c.b16 %v3738, %v3736
      %v3741 = vpack.c.b16 %v3739, %v3737
      %v3745 = vsel %vm389, %v3730, 0
      %v3748 = vsel %vm389, %v3731, 0
      %v3751 = vsel %vm389, %v3732, 0
      %v3754 = vsel %vm389, %v3733, 0
      %3756 = vmatprep.subr.bf16.mxu0 0
      %3757 = vmatpush1.bf16.msra.mxu0 0
      %3758 = vmatprep.subr.bf16.mxu0 0
      %3759 = vmatpush1.bf16.msra.mxu0 0
      %3760 = vmatprep.subr.bf16.mxu0 0
      %3761 = vmatpush1.bf16.msra.mxu0 0
      %3762 = vmatprep.subr.bf16.mxu0 0
      %3763 = vmatpush1.bf16.msra.mxu0 0
      %3764 = vmatprep.subr.bf16.mxu0 0
      %3765 = vmatpush1.bf16.msra.mxu0 0
      %3766 = vmatprep.subr.bf16.mxu0 0
      %3767 = vmatpush1.bf16.msra.mxu0 0
      %3768 = vmatprep.subr.bf16.mxu0 0
      %3769 = vmatpush1.bf16.msra.mxu0 0
      %3770 = vmatprep.subr.bf16.mxu0 %v3741
      %3771 = vmatpush1.bf16.msra.mxu0 %v3740
      %3772 = vmatprep.subr.bf16.mxu0 0
      %3773 = vmatpush2.bf16.msra.mxu0 0
      %3774 = vmatprep.subr.bf16.mxu0 0
      %3775 = vmatpush2.bf16.msra.mxu0 0
      %3776 = vmatprep.subr.bf16.mxu0 0
      %3777 = vmatpush2.bf16.msra.mxu0 0
      %3778 = vmatprep.subr.bf16.mxu0 0
      %3779 = vmatpush2.bf16.msra.mxu0 0
      %3780 = vmatprep.subr.bf16.mxu0 0
      %3781 = vmatpush2.bf16.msra.mxu0 0
      %3782 = vmatprep.subr.bf16.mxu0 0
      %3783 = vmatpush2.bf16.msra.mxu0 0
      %3784 = vmatprep.subr.bf16.mxu0 0
      %3785 = vmatpush2.bf16.msra.mxu0 0
      %3786 = vmatprep.subr.bf16.mxu0 0
      %3787 = vmatpush2.bf16.msra.mxu0 0
      %3788 = vmatprep.mubr.bf16.mxu0 0
      %3789 = vmatmul.mubr.bf16.gmra.mxu0 %v3745
      %v3790 = vpop.f32.mrf.mxu0
      %v3791 = vadd.f32 0.0, %v3790
      %v3792 = vpop.f32.mrf.mxu0
      %v3793 = vadd.f32 0.0, %v3792
      %v3794 = vpop.f32.mrf.mxu0
      %v3795 = vadd.f32 0.0, %v3794
      %v3796 = vpop.f32.mrf.mxu0
      %v3797 = vadd.f32 0.0, %v3796
      %3798 = vmatprep.mubr.bf16.mxu0 0
      %3799 = vmatmul.mubr.bf16.gmra.mxu0 %v3748
      %v3800 = vpop.f32.mrf.mxu0
      %v3801 = vadd.f32 0.0, %v3800
      %v3802 = vpop.f32.mrf.mxu0
      %v3803 = vadd.f32 0.0, %v3802
      %v3804 = vpop.f32.mrf.mxu0
      %v3805 = vadd.f32 0.0, %v3804
      %v3806 = vpop.f32.mrf.mxu0
      %v3807 = vadd.f32 0.0, %v3806
      %3808 = vmatprep.mubr.bf16.mxu0 0
      %3809 = vmatmul.mubr.bf16.gmra.mxu0 %v3751
      %v3810 = vpop.f32.mrf.mxu0
      %v3811 = vadd.f32 0.0, %v3810
      %v3812 = vpop.f32.mrf.mxu0
      %v3813 = vadd.f32 0.0, %v3812
      %v3814 = vpop.f32.mrf.mxu0
      %v3815 = vadd.f32 0.0, %v3814
      %v3816 = vpop.f32.mrf.mxu0
      %v3817 = vadd.f32 0.0, %v3816
      %3818 = vmatprep.mubr.bf16.mxu0 0
      %3819 = vmatmul.mubr.bf16.gmra.mxu0 %v3754
      %v3820 = vpop.f32.mrf.mxu0
      %v3821 = vadd.f32 0.0, %v3820
      %v3822 = vpop.f32.mrf.mxu0
      %v3823 = vadd.f32 0.0, %v3822
      %v3824 = vpop.f32.mrf.mxu0
      %v3825 = vadd.f32 0.0, %v3824
      %v3826 = vpop.f32.mrf.mxu0
      %v3827 = vadd.f32 0.0, %v3826
      %3828 = vdwg.mxu0
      %v3829 = vadd.f32 %v3666, %v3791
      %v3830 = vadd.f32 %v3668, %v3793
      %v3831 = vadd.f32 %v3670, %v3795
      %v3832 = vadd.f32 %v3672, %v3797
      %v3833 = vadd.f32 %v3676, %v3801
      %v3834 = vadd.f32 %v3678, %v3803
      %v3835 = vadd.f32 %v3680, %v3805
      %v3836 = vadd.f32 %v3682, %v3807
      %v3837 = vadd.f32 %v3686, %v3811
      %v3838 = vadd.f32 %v3688, %v3813
      %v3839 = vadd.f32 %v3690, %v3815
      %v3840 = vadd.f32 %v3692, %v3817
      %v3841 = vadd.f32 %v3696, %v3821
      %v3842 = vadd.f32 %v3698, %v3823
      %v3843 = vadd.f32 %v3700, %v3825
      %v3844 = vadd.f32 %v3702, %v3827
      %v3845 = vld [vmem:[%s2] sm:$0x3]
      %v3847 = vlaneseq
      %v3848 = vshrl.u32 %v3847, 7
      %v3849 = vsub.s32 0, %v3848
      %v3850 = vrot.slane %v3845, %v3849
      %v3851 = vlaneseq
      %v3852 = vshrl.u32 %v3851, 7
      %v3853 = vsub.s32 1, %v3852
      %v3854 = vrot.slane %v3845, %v3853
      %v3857 = vadd.f32 %v3829, %v3850
      %v3858 = vadd.f32 %v3830, %v3854
      %v3859 = vadd.f32 %v3831, %v3850
      %v3860 = vadd.f32 %v3832, %v3854
      %v3861 = vadd.f32 %v3833, %v3850
      %v3862 = vadd.f32 %v3834, %v3854
      %v3863 = vadd.f32 %v3835, %v3850
      %v3864 = vadd.f32 %v3836, %v3854
      %v3865 = vadd.f32 %v3837, %v3850
      %v3866 = vadd.f32 %v3838, %v3854
      %v3867 = vadd.f32 %v3839, %v3850
      %v3868 = vadd.f32 %v3840, %v3854
      %v3869 = vadd.f32 %v3841, %v3850
      %v3870 = vadd.f32 %v3842, %v3854
      %v3871 = vadd.f32 %v3843, %v3850
      %v3872 = vadd.f32 %v3844, %v3854
      %v3873 = vtanh.pop %v3857
      %v3874 = vtanh.pop %v3858
      %v3875 = vtanh.pop %v3859
      %v3876 = vtanh.pop %v3860
      %v3877 = vtanh.pop %v3861
      %v3878 = vtanh.pop %v3862
      %v3879 = vtanh.pop %v3863
      %v3880 = vtanh.pop %v3864
      %v3881 = vtanh.pop %v3865
      %v3882 = vtanh.pop %v3866
      %v3883 = vtanh.pop %v3867
      %v3884 = vtanh.pop %v3868
      %v3885 = vtanh.pop %v3869
      %v3886 = vtanh.pop %v3870
      %v3887 = vtanh.pop %v3871
      %v3888 = vtanh.pop %v3872
      %v3889 = vmax.f32 %v3873, %v3874
      %v3890 = vmax.f32 %v3875, %v3876
      %v3891 = vmax.f32 %v3877, %v3878
      %v3892 = vmax.f32 %v3879, %v3880
      %v3893 = vmax.f32 %v3881, %v3882
      %v3894 = vmax.f32 %v3883, %v3884
      %v3895 = vmax.f32 %v3885, %v3886
      %v3896 = vmax.f32 %v3887, %v3888
      %v3897 = vmax.f32 %v3889, %v3893
      %v3898 = vmax.f32 %v3890, %v3894
      %v3899 = vmax.f32 %v3891, %v3895
      %v3900 = vmax.f32 %v3892, %v3896
      %v3901 = vpack.c.bf16 %v3898, %v3897
      %v3902 = vpack.c.bf16 %v3900, %v3899
      %v3905 = vunpack.c.l.b16 %v3901
      %v3906 = vunpack.c.h.b16 %v3901
      %v3907 = vunpack.c.l.b16 %v3902
      %v3908 = vunpack.c.h.b16 %v3902
      %v3909 = vpack.c.b16 %v3905, %v3905
      %v3910 = vpack.c.b16 %v3906, %v3906
      %v3911 = vpack.c.b16 %v3907, %v3907
      %v3912 = vpack.c.b16 %v3908, %v3908
      %3917 = vst [vmem:[#allocation2 + $0x80] sm:$0xf] %v3909
      %3918 = vst [vmem:[#allocation2 + $0x84] sm:$0xf] %v3910
      %3919 = vst [vmem:[#allocation2 + $0x88] sm:$0xf] %v3911
      %3920 = vst [vmem:[#allocation2 + $0x8c] sm:$0xf] %v3912
      %v3921 = vld [vmem:[%s327 + $0x100] sm:$0xf]
      %v3922 = vld [vmem:[%s327 + $0x104] sm:$0xf]
      %v3923 = vld [vmem:[%s327 + $0x108] sm:$0xf]
      %v3924 = vld [vmem:[%s327 + $0x10c] sm:$0xf]
      %v3925 = vld [vmem:[%s327 + $0x110] sm:$0xf]
      %v3926 = vld [vmem:[%s327 + $0x114] sm:$0xf]
      %v3927 = vld [vmem:[%s327 + $0x118] sm:$0xf]
      %v3928 = vld [vmem:[%s327 + $0x11c] sm:$0xf]
      %v3929 = vld [vmem:[%s1] sm:$0xff]
      %v3930 = vld [vmem:[%s1 + $0x8] sm:$0xff]
      %v3931 = vld [vmem:[%s327 + $0x120] sm:$0xf]
      %v3932 = vld [vmem:[%s327 + $0x124] sm:$0xf]
      %v3933 = vld [vmem:[%s327 + $0x128] sm:$0xf]
      %v3934 = vld [vmem:[%s327 + $0x12c] sm:$0xf]
      %v3935 = vld [vmem:[%s356] sm:$0xff]
      %v3936 = vld [vmem:[%s356 + $0x8] sm:$0xff]
      %v3945 = vunpack.c.l.b16 %v3925
      %v3946 = vunpack.c.l.b16 %v3926
      %v3947 = vunpack.c.l.b16 %v3927
      %v3948 = vunpack.c.l.b16 %v3928
      %v3949 = vunpack.c.l.b16 %v3931
      %v3950 = vunpack.c.l.b16 %v3932
      %v3951 = vunpack.c.l.b16 %v3933
      %v3952 = vunpack.c.l.b16 %v3934
      %v3953 = vpack.c.b16 %v3946, %v3945
      %v3954 = vpack.c.b16 %v3948, %v3947
      %v3955 = vpack.c.b16 %v3950, %v3949
      %v3956 = vpack.c.b16 %v3952, %v3951
      %v3959 = vunpack.c.l.b16 %v3935
      %v3960 = vunpack.c.h.b16 %v3935
      %v3961 = vunpack.c.l.b16 %v3936
      %v3962 = vunpack.c.h.b16 %v3936
      %v3963 = vpack.c.b16 %v3961, %v3959
      %v3964 = vpack.c.b16 %v3962, %v3960
      %v3968 = vsel %vm389, %v3953, 0
      %v3971 = vsel %vm389, %v3954, 0
      %v3974 = vsel %vm389, %v3955, 0
      %v3977 = vsel %vm389, %v3956, 0
      %3979 = vmatprep.subr.bf16.mxu0 0
      %3980 = vmatpush1.bf16.msra.mxu0 0
      %3981 = vmatprep.subr.bf16.mxu0 0
      %3982 = vmatpush1.bf16.msra.mxu0 0
      %3983 = vmatprep.subr.bf16.mxu0 0
      %3984 = vmatpush1.bf16.msra.mxu0 0
      %3985 = vmatprep.subr.bf16.mxu0 0
      %3986 = vmatpush1.bf16.msra.mxu0 0
      %3987 = vmatprep.subr.bf16.mxu0 0
      %3988 = vmatpush1.bf16.msra.mxu0 0
      %3989 = vmatprep.subr.bf16.mxu0 0
      %3990 = vmatpush1.bf16.msra.mxu0 0
      %3991 = vmatprep.subr.bf16.mxu0 0
      %3992 = vmatpush1.bf16.msra.mxu0 0
      %3993 = vmatprep.subr.bf16.mxu0 %v3964
      %3994 = vmatpush1.bf16.msra.mxu0 %v3963
      %3995 = vmatprep.subr.bf16.mxu0 0
      %3996 = vmatpush2.bf16.msra.mxu0 0
      %3997 = vmatprep.subr.bf16.mxu0 0
      %3998 = vmatpush2.bf16.msra.mxu0 0
      %3999 = vmatprep.subr.bf16.mxu0 0
      %4000 = vmatpush2.bf16.msra.mxu0 0
      %4001 = vmatprep.subr.bf16.mxu0 0
      %4002 = vmatpush2.bf16.msra.mxu0 0
      %4003 = vmatprep.subr.bf16.mxu0 0
      %4004 = vmatpush2.bf16.msra.mxu0 0
      %4005 = vmatprep.subr.bf16.mxu0 0
      %4006 = vmatpush2.bf16.msra.mxu0 0
      %4007 = vmatprep.subr.bf16.mxu0 0
      %4008 = vmatpush2.bf16.msra.mxu0 0
      %4009 = vmatprep.subr.bf16.mxu0 0
      %4010 = vmatpush2.bf16.msra.mxu0 0
      %4011 = vmatprep.mubr.bf16.mxu0 0
      %4012 = vmatmul.mubr.bf16.gmra.mxu0 %v3968
      %v4013 = vpop.f32.mrf.mxu0
      %v4014 = vadd.f32 0.0, %v4013
      %v4015 = vpop.f32.mrf.mxu0
      %v4016 = vadd.f32 0.0, %v4015
      %v4017 = vpop.f32.mrf.mxu0
      %v4018 = vadd.f32 0.0, %v4017
      %v4019 = vpop.f32.mrf.mxu0
      %v4020 = vadd.f32 0.0, %v4019
      %4021 = vmatprep.mubr.bf16.mxu0 0
      %4022 = vmatmul.mubr.bf16.gmra.mxu0 %v3971
      %v4023 = vpop.f32.mrf.mxu0
      %v4024 = vadd.f32 0.0, %v4023
      %v4025 = vpop.f32.mrf.mxu0
      %v4026 = vadd.f32 0.0, %v4025
      %v4027 = vpop.f32.mrf.mxu0
      %v4028 = vadd.f32 0.0, %v4027
      %v4029 = vpop.f32.mrf.mxu0
      %v4030 = vadd.f32 0.0, %v4029
      %4031 = vmatprep.mubr.bf16.mxu0 0
      %4032 = vmatmul.mubr.bf16.gmra.mxu0 %v3974
      %v4033 = vpop.f32.mrf.mxu0
      %v4034 = vadd.f32 0.0, %v4033
      %v4035 = vpop.f32.mrf.mxu0
      %v4036 = vadd.f32 0.0, %v4035
      %v4037 = vpop.f32.mrf.mxu0
      %v4038 = vadd.f32 0.0, %v4037
      %v4039 = vpop.f32.mrf.mxu0
      %v4040 = vadd.f32 0.0, %v4039
      %4041 = vmatprep.mubr.bf16.mxu0 0
      %4042 = vmatmul.mubr.bf16.gmra.mxu0 %v3977
      %v4043 = vpop.f32.mrf.mxu0
      %v4044 = vadd.f32 0.0, %v4043
      %v4045 = vpop.f32.mrf.mxu0
      %v4046 = vadd.f32 0.0, %v4045
      %v4047 = vpop.f32.mrf.mxu0
      %v4048 = vadd.f32 0.0, %v4047
      %v4049 = vpop.f32.mrf.mxu0
      %v4050 = vadd.f32 0.0, %v4049
      %4051 = vdwg.mxu0
      %v4056 = vunpack.c.l.b16 %v3921
      %v4057 = vunpack.c.l.b16 %v3922
      %v4058 = vunpack.c.l.b16 %v3923
      %v4059 = vunpack.c.l.b16 %v3924
      %v4060 = vpack.c.b16 %v4057, %v4056
      %v4061 = vpack.c.b16 %v4059, %v4058
      %v4064 = vunpack.c.l.b16 %v3929
      %v4065 = vunpack.c.h.b16 %v3929
      %v4066 = vunpack.c.l.b16 %v3930
      %v4067 = vunpack.c.h.b16 %v3930
      %v4068 = vpack.c.b16 %v4066, %v4064
      %v4069 = vpack.c.b16 %v4067, %v4065
      %v4073 = vsel %vm389, %v4060, 0
      %v4076 = vsel %vm389, %v4061, 0
      %4078 = vmatprep.subr.bf16.mxu0 0
      %4079 = vmatpush1.bf16.msra.mxu0 0
      %4080 = vmatprep.subr.bf16.mxu0 0
      %4081 = vmatpush1.bf16.msra.mxu0 0
      %4082 = vmatprep.subr.bf16.mxu0 0
      %4083 = vmatpush1.bf16.msra.mxu0 0
      %4084 = vmatprep.subr.bf16.mxu0 0
      %4085 = vmatpush1.bf16.msra.mxu0 0
      %4086 = vmatprep.subr.bf16.mxu0 0
      %4087 = vmatpush1.bf16.msra.mxu0 0
      %4088 = vmatprep.subr.bf16.mxu0 0
      %4089 = vmatpush1.bf16.msra.mxu0 0
      %4090 = vmatprep.subr.bf16.mxu0 0
      %4091 = vmatpush1.bf16.msra.mxu0 0
      %4092 = vmatprep.subr.bf16.mxu0 %v4069
      %4093 = vmatpush1.bf16.msra.mxu0 %v4068
      %4094 = vmatprep.subr.bf16.mxu0 0
      %4095 = vmatpush2.bf16.msra.mxu0 0
      %4096 = vmatprep.subr.bf16.mxu0 0
      %4097 = vmatpush2.bf16.msra.mxu0 0
      %4098 = vmatprep.subr.bf16.mxu0 0
      %4099 = vmatpush2.bf16.msra.mxu0 0
      %4100 = vmatprep.subr.bf16.mxu0 0
      %4101 = vmatpush2.bf16.msra.mxu0 0
      %4102 = vmatprep.subr.bf16.mxu0 0
      %4103 = vmatpush2.bf16.msra.mxu0 0
      %4104 = vmatprep.subr.bf16.mxu0 0
      %4105 = vmatpush2.bf16.msra.mxu0 0
      %4106 = vmatprep.subr.bf16.mxu0 0
      %4107 = vmatpush2.bf16.msra.mxu0 0
      %4108 = vmatprep.subr.bf16.mxu0 0
      %4109 = vmatpush2.bf16.msra.mxu0 0
      %4110 = vmatprep.mubr.bf16.mxu0 0
      %4111 = vmatmul.mubr.bf16.gmra.mxu0 %v4073
      %v4112 = vpop.f32.mrf.mxu0
      %v4113 = vadd.f32 %v4014, %v4112
      %v4114 = vpop.f32.mrf.mxu0
      %v4115 = vadd.f32 %v4016, %v4114
      %v4116 = vpop.f32.mrf.mxu0
      %v4117 = vadd.f32 %v4018, %v4116
      %v4118 = vpop.f32.mrf.mxu0
      %v4119 = vadd.f32 %v4020, %v4118
      %4120 = vmatprep.mubr.bf16.mxu0 0
      %4121 = vmatmul.mubr.bf16.gmra.mxu0 %v4076
      %v4122 = vpop.f32.mrf.mxu0
      %v4123 = vadd.f32 %v4024, %v4122
      %v4124 = vpop.f32.mrf.mxu0
      %v4125 = vadd.f32 %v4026, %v4124
      %v4126 = vpop.f32.mrf.mxu0
      %v4127 = vadd.f32 %v4028, %v4126
      %v4128 = vpop.f32.mrf.mxu0
      %v4129 = vadd.f32 %v4030, %v4128
      %4130 = vmatprep.mubr.bf16.mxu0 0
      %4131 = vmatmul.mubr.bf16.gmra.mxu0 %v3968
      %v4132 = vpop.f32.mrf.mxu0
      %v4133 = vadd.f32 %v4034, %v4132
      %v4134 = vpop.f32.mrf.mxu0
      %v4135 = vadd.f32 %v4036, %v4134
      %v4136 = vpop.f32.mrf.mxu0
      %v4137 = vadd.f32 %v4038, %v4136
      %v4138 = vpop.f32.mrf.mxu0
      %v4139 = vadd.f32 %v4040, %v4138
      %4140 = vmatprep.mubr.bf16.mxu0 0
      %4141 = vmatmul.mubr.bf16.gmra.mxu0 %v3971
      %v4142 = vpop.f32.mrf.mxu0
      %v4143 = vadd.f32 %v4044, %v4142
      %v4144 = vpop.f32.mrf.mxu0
      %v4145 = vadd.f32 %v4046, %v4144
      %v4146 = vpop.f32.mrf.mxu0
      %v4147 = vadd.f32 %v4048, %v4146
      %v4148 = vpop.f32.mrf.mxu0
      %v4149 = vadd.f32 %v4050, %v4148
      %4150 = vdwg.mxu0
      %v4151 = vld [vmem:[%s327 + $0x120] sm:$0xf]
      %v4152 = vld [vmem:[%s327 + $0x124] sm:$0xf]
      %v4153 = vld [vmem:[%s327 + $0x128] sm:$0xf]
      %v4154 = vld [vmem:[%s327 + $0x12c] sm:$0xf]
      %v4155 = vld [vmem:[%s327 + $0x130] sm:$0xf]
      %v4156 = vld [vmem:[%s327 + $0x134] sm:$0xf]
      %v4157 = vld [vmem:[%s327 + $0x138] sm:$0xf]
      %v4158 = vld [vmem:[%s327 + $0x13c] sm:$0xf]
      %v4159 = vld [vmem:[%s582] sm:$0xff]
      %v4160 = vld [vmem:[%s582 + $0x8] sm:$0xff]
      %v4169 = vunpack.c.l.b16 %v4151
      %v4170 = vunpack.c.l.b16 %v4152
      %v4171 = vunpack.c.l.b16 %v4153
      %v4172 = vunpack.c.l.b16 %v4154
      %v4173 = vunpack.c.l.b16 %v4155
      %v4174 = vunpack.c.l.b16 %v4156
      %v4175 = vunpack.c.l.b16 %v4157
      %v4176 = vunpack.c.l.b16 %v4158
      %v4177 = vpack.c.b16 %v4170, %v4169
      %v4178 = vpack.c.b16 %v4172, %v4171
      %v4179 = vpack.c.b16 %v4174, %v4173
      %v4180 = vpack.c.b16 %v4176, %v4175
      %v4183 = vunpack.c.l.b16 %v4159
      %v4184 = vunpack.c.h.b16 %v4159
      %v4185 = vunpack.c.l.b16 %v4160
      %v4186 = vunpack.c.h.b16 %v4160
      %v4187 = vpack.c.b16 %v4185, %v4183
      %v4188 = vpack.c.b16 %v4186, %v4184
      %v4192 = vsel %vm389, %v4177, 0
      %v4195 = vsel %vm389, %v4178, 0
      %v4198 = vsel %vm389, %v4179, 0
      %v4201 = vsel %vm389, %v4180, 0
      %4203 = vmatprep.subr.bf16.mxu0 0
      %4204 = vmatpush1.bf16.msra.mxu0 0
      %4205 = vmatprep.subr.bf16.mxu0 0
      %4206 = vmatpush1.bf16.msra.mxu0 0
      %4207 = vmatprep.subr.bf16.mxu0 0
      %4208 = vmatpush1.bf16.msra.mxu0 0
      %4209 = vmatprep.subr.bf16.mxu0 0
      %4210 = vmatpush1.bf16.msra.mxu0 0
      %4211 = vmatprep.subr.bf16.mxu0 0
      %4212 = vmatpush1.bf16.msra.mxu0 0
      %4213 = vmatprep.subr.bf16.mxu0 0
      %4214 = vmatpush1.bf16.msra.mxu0 0
      %4215 = vmatprep.subr.bf16.mxu0 0
      %4216 = vmatpush1.bf16.msra.mxu0 0
      %4217 = vmatprep.subr.bf16.mxu0 %v4188
      %4218 = vmatpush1.bf16.msra.mxu0 %v4187
      %4219 = vmatprep.subr.bf16.mxu0 0
      %4220 = vmatpush2.bf16.msra.mxu0 0
      %4221 = vmatprep.subr.bf16.mxu0 0
      %4222 = vmatpush2.bf16.msra.mxu0 0
      %4223 = vmatprep.subr.bf16.mxu0 0
      %4224 = vmatpush2.bf16.msra.mxu0 0
      %4225 = vmatprep.subr.bf16.mxu0 0
      %4226 = vmatpush2.bf16.msra.mxu0 0
      %4227 = vmatprep.subr.bf16.mxu0 0
      %4228 = vmatpush2.bf16.msra.mxu0 0
      %4229 = vmatprep.subr.bf16.mxu0 0
      %4230 = vmatpush2.bf16.msra.mxu0 0
      %4231 = vmatprep.subr.bf16.mxu0 0
      %4232 = vmatpush2.bf16.msra.mxu0 0
      %4233 = vmatprep.subr.bf16.mxu0 0
      %4234 = vmatpush2.bf16.msra.mxu0 0
      %4235 = vmatprep.mubr.bf16.mxu0 0
      %4236 = vmatmul.mubr.bf16.gmra.mxu0 %v4192
      %v4237 = vpop.f32.mrf.mxu0
      %v4238 = vadd.f32 0.0, %v4237
      %v4239 = vpop.f32.mrf.mxu0
      %v4240 = vadd.f32 0.0, %v4239
      %v4241 = vpop.f32.mrf.mxu0
      %v4242 = vadd.f32 0.0, %v4241
      %v4243 = vpop.f32.mrf.mxu0
      %v4244 = vadd.f32 0.0, %v4243
      %4245 = vmatprep.mubr.bf16.mxu0 0
      %4246 = vmatmul.mubr.bf16.gmra.mxu0 %v4195
      %v4247 = vpop.f32.mrf.mxu0
      %v4248 = vadd.f32 0.0, %v4247
      %v4249 = vpop.f32.mrf.mxu0
      %v4250 = vadd.f32 0.0, %v4249
      %v4251 = vpop.f32.mrf.mxu0
      %v4252 = vadd.f32 0.0, %v4251
      %v4253 = vpop.f32.mrf.mxu0
      %v4254 = vadd.f32 0.0, %v4253
      %4255 = vmatprep.mubr.bf16.mxu0 0
      %4256 = vmatmul.mubr.bf16.gmra.mxu0 %v4198
      %v4257 = vpop.f32.mrf.mxu0
      %v4258 = vadd.f32 0.0, %v4257
      %v4259 = vpop.f32.mrf.mxu0
      %v4260 = vadd.f32 0.0, %v4259
      %v4261 = vpop.f32.mrf.mxu0
      %v4262 = vadd.f32 0.0, %v4261
      %v4263 = vpop.f32.mrf.mxu0
      %v4264 = vadd.f32 0.0, %v4263
      %4265 = vmatprep.mubr.bf16.mxu0 0
      %4266 = vmatmul.mubr.bf16.gmra.mxu0 %v4201
      %v4267 = vpop.f32.mrf.mxu0
      %v4268 = vadd.f32 0.0, %v4267
      %v4269 = vpop.f32.mrf.mxu0
      %v4270 = vadd.f32 0.0, %v4269
      %v4271 = vpop.f32.mrf.mxu0
      %v4272 = vadd.f32 0.0, %v4271
      %v4273 = vpop.f32.mrf.mxu0
      %v4274 = vadd.f32 0.0, %v4273
      %4275 = vdwg.mxu0
      %v4276 = vadd.f32 %v4113, %v4238
      %v4277 = vadd.f32 %v4115, %v4240
      %v4278 = vadd.f32 %v4117, %v4242
      %v4279 = vadd.f32 %v4119, %v4244
      %v4280 = vadd.f32 %v4123, %v4248
      %v4281 = vadd.f32 %v4125, %v4250
      %v4282 = vadd.f32 %v4127, %v4252
      %v4283 = vadd.f32 %v4129, %v4254
      %v4284 = vadd.f32 %v4133, %v4258
      %v4285 = vadd.f32 %v4135, %v4260
      %v4286 = vadd.f32 %v4137, %v4262
      %v4287 = vadd.f32 %v4139, %v4264
      %v4288 = vadd.f32 %v4143, %v4268
      %v4289 = vadd.f32 %v4145, %v4270
      %v4290 = vadd.f32 %v4147, %v4272
      %v4291 = vadd.f32 %v4149, %v4274
      %v4292 = vld [vmem:[%s2] sm:$0x3]
      %v4294 = vlaneseq
      %v4295 = vshrl.u32 %v4294, 7
      %v4296 = vsub.s32 0, %v4295
      %v4297 = vrot.slane %v4292, %v4296
      %v4298 = vlaneseq
      %v4299 = vshrl.u32 %v4298, 7
      %v4300 = vsub.s32 1, %v4299
      %v4301 = vrot.slane %v4292, %v4300
      %v4304 = vadd.f32 %v4276, %v4297
      %v4305 = vadd.f32 %v4277, %v4301
      %v4306 = vadd.f32 %v4278, %v4297
      %v4307 = vadd.f32 %v4279, %v4301
      %v4308 = vadd.f32 %v4280, %v4297
      %v4309 = vadd.f32 %v4281, %v4301
      %v4310 = vadd.f32 %v4282, %v4297
      %v4311 = vadd.f32 %v4283, %v4301
      %v4312 = vadd.f32 %v4284, %v4297
      %v4313 = vadd.f32 %v4285, %v4301
      %v4314 = vadd.f32 %v4286, %v4297
      %v4315 = vadd.f32 %v4287, %v4301
      %v4316 = vadd.f32 %v4288, %v4297
      %v4317 = vadd.f32 %v4289, %v4301
      %v4318 = vadd.f32 %v4290, %v4297
      %v4319 = vadd.f32 %v4291, %v4301
      %v4320 = vtanh.pop %v4304
      %v4321 = vtanh.pop %v4305
      %v4322 = vtanh.pop %v4306
      %v4323 = vtanh.pop %v4307
      %v4324 = vtanh.pop %v4308
      %v4325 = vtanh.pop %v4309
      %v4326 = vtanh.pop %v4310
      %v4327 = vtanh.pop %v4311
      %v4328 = vtanh.pop %v4312
      %v4329 = vtanh.pop %v4313
      %v4330 = vtanh.pop %v4314
      %v4331 = vtanh.pop %v4315
      %v4332 = vtanh.pop %v4316
      %v4333 = vtanh.pop %v4317
      %v4334 = vtanh.pop %v4318
      %v4335 = vtanh.pop %v4319
      %v4336 = vmax.f32 %v4320, %v4321
      %v4337 = vmax.f32 %v4322, %v4323
      %v4338 = vmax.f32 %v4324, %v4325
      %v4339 = vmax.f32 %v4326, %v4327
      %v4340 = vmax.f32 %v4328, %v4329
      %v4341 = vmax.f32 %v4330, %v4331
      %v4342 = vmax.f32 %v4332, %v4333
      %v4343 = vmax.f32 %v4334, %v4335
      %v4344 = vmax.f32 %v4336, %v4340
      %v4345 = vmax.f32 %v4337, %v4341
      %v4346 = vmax.f32 %v4338, %v4342
      %v4347 = vmax.f32 %v4339, %v4343
      %v4348 = vpack.c.bf16 %v4345, %v4344
      %v4349 = vpack.c.bf16 %v4347, %v4346
      %v4352 = vunpack.c.l.b16 %v4348
      %v4353 = vunpack.c.h.b16 %v4348
      %v4354 = vunpack.c.l.b16 %v4349
      %v4355 = vunpack.c.h.b16 %v4349
      %v4356 = vpack.c.b16 %v4352, %v4352
      %v4357 = vpack.c.b16 %v4353, %v4353
      %v4358 = vpack.c.b16 %v4354, %v4354
      %v4359 = vpack.c.b16 %v4355, %v4355
      %4364 = vst [vmem:[#allocation2 + $0x90] sm:$0xf] %v4356
      %4365 = vst [vmem:[#allocation2 + $0x94] sm:$0xf] %v4357
      %4366 = vst [vmem:[#allocation2 + $0x98] sm:$0xf] %v4358
      %4367 = vst [vmem:[#allocation2 + $0x9c] sm:$0xf] %v4359
      %v4368 = vld [vmem:[%s327 + $0x120] sm:$0xf]
      %v4369 = vld [vmem:[%s327 + $0x124] sm:$0xf]
      %v4370 = vld [vmem:[%s327 + $0x128] sm:$0xf]
      %v4371 = vld [vmem:[%s327 + $0x12c] sm:$0xf]
      %v4372 = vld [vmem:[%s327 + $0x130] sm:$0xf]
      %v4373 = vld [vmem:[%s327 + $0x134] sm:$0xf]
      %v4374 = vld [vmem:[%s327 + $0x138] sm:$0xf]
      %v4375 = vld [vmem:[%s327 + $0x13c] sm:$0xf]
      %v4376 = vld [vmem:[%s1] sm:$0xff]
      %v4377 = vld [vmem:[%s1 + $0x8] sm:$0xff]
      %v4378 = vld [vmem:[%s327 + $0x140] sm:$0xf]
      %v4379 = vld [vmem:[%s327 + $0x144] sm:$0xf]
      %v4380 = vld [vmem:[%s327 + $0x148] sm:$0xf]
      %v4381 = vld [vmem:[%s327 + $0x14c] sm:$0xf]
      %v4382 = vld [vmem:[%s356] sm:$0xff]
      %v4383 = vld [vmem:[%s356 + $0x8] sm:$0xff]
      %v4392 = vunpack.c.l.b16 %v4372
      %v4393 = vunpack.c.l.b16 %v4373
      %v4394 = vunpack.c.l.b16 %v4374
      %v4395 = vunpack.c.l.b16 %v4375
      %v4396 = vunpack.c.l.b16 %v4378
      %v4397 = vunpack.c.l.b16 %v4379
      %v4398 = vunpack.c.l.b16 %v4380
      %v4399 = vunpack.c.l.b16 %v4381
      %v4400 = vpack.c.b16 %v4393, %v4392
      %v4401 = vpack.c.b16 %v4395, %v4394
      %v4402 = vpack.c.b16 %v4397, %v4396
      %v4403 = vpack.c.b16 %v4399, %v4398
      %v4406 = vunpack.c.l.b16 %v4382
      %v4407 = vunpack.c.h.b16 %v4382
      %v4408 = vunpack.c.l.b16 %v4383
      %v4409 = vunpack.c.h.b16 %v4383
      %v4410 = vpack.c.b16 %v4408, %v4406
      %v4411 = vpack.c.b16 %v4409, %v4407
      %v4415 = vsel %vm389, %v4400, 0
      %v4418 = vsel %vm389, %v4401, 0
      %v4421 = vsel %vm389, %v4402, 0
      %v4424 = vsel %vm389, %v4403, 0
      %4426 = vmatprep.subr.bf16.mxu0 0
      %4427 = vmatpush1.bf16.msra.mxu0 0
      %4428 = vmatprep.subr.bf16.mxu0 0
      %4429 = vmatpush1.bf16.msra.mxu0 0
      %4430 = vmatprep.subr.bf16.mxu0 0
      %4431 = vmatpush1.bf16.msra.mxu0 0
      %4432 = vmatprep.subr.bf16.mxu0 0
      %4433 = vmatpush1.bf16.msra.mxu0 0
      %4434 = vmatprep.subr.bf16.mxu0 0
      %4435 = vmatpush1.bf16.msra.mxu0 0
      %4436 = vmatprep.subr.bf16.mxu0 0
      %4437 = vmatpush1.bf16.msra.mxu0 0
      %4438 = vmatprep.subr.bf16.mxu0 0
      %4439 = vmatpush1.bf16.msra.mxu0 0
      %4440 = vmatprep.subr.bf16.mxu0 %v4411
      %4441 = vmatpush1.bf16.msra.mxu0 %v4410
      %4442 = vmatprep.subr.bf16.mxu0 0
      %4443 = vmatpush2.bf16.msra.mxu0 0
      %4444 = vmatprep.subr.bf16.mxu0 0
      %4445 = vmatpush2.bf16.msra.mxu0 0
      %4446 = vmatprep.subr.bf16.mxu0 0
      %4447 = vmatpush2.bf16.msra.mxu0 0
      %4448 = vmatprep.subr.bf16.mxu0 0
      %4449 = vmatpush2.bf16.msra.mxu0 0
      %4450 = vmatprep.subr.bf16.mxu0 0
      %4451 = vmatpush2.bf16.msra.mxu0 0
      %4452 = vmatprep.subr.bf16.mxu0 0
      %4453 = vmatpush2.bf16.msra.mxu0 0
      %4454 = vmatprep.subr.bf16.mxu0 0
      %4455 = vmatpush2.bf16.msra.mxu0 0
      %4456 = vmatprep.subr.bf16.mxu0 0
      %4457 = vmatpush2.bf16.msra.mxu0 0
      %4458 = vmatprep.mubr.bf16.mxu0 0
      %4459 = vmatmul.mubr.bf16.gmra.mxu0 %v4415
      %v4460 = vpop.f32.mrf.mxu0
      %v4461 = vadd.f32 0.0, %v4460
      %v4462 = vpop.f32.mrf.mxu0
      %v4463 = vadd.f32 0.0, %v4462
      %v4464 = vpop.f32.mrf.mxu0
      %v4465 = vadd.f32 0.0, %v4464
      %v4466 = vpop.f32.mrf.mxu0
      %v4467 = vadd.f32 0.0, %v4466
      %4468 = vmatprep.mubr.bf16.mxu0 0
      %4469 = vmatmul.mubr.bf16.gmra.mxu0 %v4418
      %v4470 = vpop.f32.mrf.mxu0
      %v4471 = vadd.f32 0.0, %v4470
      %v4472 = vpop.f32.mrf.mxu0
      %v4473 = vadd.f32 0.0, %v4472
      %v4474 = vpop.f32.mrf.mxu0
      %v4475 = vadd.f32 0.0, %v4474
      %v4476 = vpop.f32.mrf.mxu0
      %v4477 = vadd.f32 0.0, %v4476
      %4478 = vmatprep.mubr.bf16.mxu0 0
      %4479 = vmatmul.mubr.bf16.gmra.mxu0 %v4421
      %v4480 = vpop.f32.mrf.mxu0
      %v4481 = vadd.f32 0.0, %v4480
      %v4482 = vpop.f32.mrf.mxu0
      %v4483 = vadd.f32 0.0, %v4482
      %v4484 = vpop.f32.mrf.mxu0
      %v4485 = vadd.f32 0.0, %v4484
      %v4486 = vpop.f32.mrf.mxu0
      %v4487 = vadd.f32 0.0, %v4486
      %4488 = vmatprep.mubr.bf16.mxu0 0
      %4489 = vmatmul.mubr.bf16.gmra.mxu0 %v4424
      %v4490 = vpop.f32.mrf.mxu0
      %v4491 = vadd.f32 0.0, %v4490
      %v4492 = vpop.f32.mrf.mxu0
      %v4493 = vadd.f32 0.0, %v4492
      %v4494 = vpop.f32.mrf.mxu0
      %v4495 = vadd.f32 0.0, %v4494
      %v4496 = vpop.f32.mrf.mxu0
      %v4497 = vadd.f32 0.0, %v4496
      %4498 = vdwg.mxu0
      %v4503 = vunpack.c.l.b16 %v4368
      %v4504 = vunpack.c.l.b16 %v4369
      %v4505 = vunpack.c.l.b16 %v4370
      %v4506 = vunpack.c.l.b16 %v4371
      %v4507 = vpack.c.b16 %v4504, %v4503
      %v4508 = vpack.c.b16 %v4506, %v4505
      %v4511 = vunpack.c.l.b16 %v4376
      %v4512 = vunpack.c.h.b16 %v4376
      %v4513 = vunpack.c.l.b16 %v4377
      %v4514 = vunpack.c.h.b16 %v4377
      %v4515 = vpack.c.b16 %v4513, %v4511
      %v4516 = vpack.c.b16 %v4514, %v4512
      %v4520 = vsel %vm389, %v4507, 0
      %v4523 = vsel %vm389, %v4508, 0
      %4525 = vmatprep.subr.bf16.mxu0 0
      %4526 = vmatpush1.bf16.msra.mxu0 0
      %4527 = vmatprep.subr.bf16.mxu0 0
      %4528 = vmatpush1.bf16.msra.mxu0 0
      %4529 = vmatprep.subr.bf16.mxu0 0
      %4530 = vmatpush1.bf16.msra.mxu0 0
      %4531 = vmatprep.subr.bf16.mxu0 0
      %4532 = vmatpush1.bf16.msra.mxu0 0
      %4533 = vmatprep.subr.bf16.mxu0 0
      %4534 = vmatpush1.bf16.msra.mxu0 0
      %4535 = vmatprep.subr.bf16.mxu0 0
      %4536 = vmatpush1.bf16.msra.mxu0 0
      %4537 = vmatprep.subr.bf16.mxu0 0
      %4538 = vmatpush1.bf16.msra.mxu0 0
      %4539 = vmatprep.subr.bf16.mxu0 %v4516
      %4540 = vmatpush1.bf16.msra.mxu0 %v4515
      %4541 = vmatprep.subr.bf16.mxu0 0
      %4542 = vmatpush2.bf16.msra.mxu0 0
      %4543 = vmatprep.subr.bf16.mxu0 0
      %4544 = vmatpush2.bf16.msra.mxu0 0
      %4545 = vmatprep.subr.bf16.mxu0 0
      %4546 = vmatpush2.bf16.msra.mxu0 0
      %4547 = vmatprep.subr.bf16.mxu0 0
      %4548 = vmatpush2.bf16.msra.mxu0 0
      %4549 = vmatprep.subr.bf16.mxu0 0
      %4550 = vmatpush2.bf16.msra.mxu0 0
      %4551 = vmatprep.subr.bf16.mxu0 0
      %4552 = vmatpush2.bf16.msra.mxu0 0
      %4553 = vmatprep.subr.bf16.mxu0 0
      %4554 = vmatpush2.bf16.msra.mxu0 0
      %4555 = vmatprep.subr.bf16.mxu0 0
      %4556 = vmatpush2.bf16.msra.mxu0 0
      %4557 = vmatprep.mubr.bf16.mxu0 0
      %4558 = vmatmul.mubr.bf16.gmra.mxu0 %v4520
      %v4559 = vpop.f32.mrf.mxu0
      %v4560 = vadd.f32 %v4461, %v4559
      %v4561 = vpop.f32.mrf.mxu0
      %v4562 = vadd.f32 %v4463, %v4561
      %v4563 = vpop.f32.mrf.mxu0
      %v4564 = vadd.f32 %v4465, %v4563
      %v4565 = vpop.f32.mrf.mxu0
      %v4566 = vadd.f32 %v4467, %v4565
      %4567 = vmatprep.mubr.bf16.mxu0 0
      %4568 = vmatmul.mubr.bf16.gmra.mxu0 %v4523
      %v4569 = vpop.f32.mrf.mxu0
      %v4570 = vadd.f32 %v4471, %v4569
      %v4571 = vpop.f32.mrf.mxu0
      %v4572 = vadd.f32 %v4473, %v4571
      %v4573 = vpop.f32.mrf.mxu0
      %v4574 = vadd.f32 %v4475, %v4573
      %v4575 = vpop.f32.mrf.mxu0
      %v4576 = vadd.f32 %v4477, %v4575
      %4577 = vmatprep.mubr.bf16.mxu0 0
      %4578 = vmatmul.mubr.bf16.gmra.mxu0 %v4415
      %v4579 = vpop.f32.mrf.mxu0
      %v4580 = vadd.f32 %v4481, %v4579
      %v4581 = vpop.f32.mrf.mxu0
      %v4582 = vadd.f32 %v4483, %v4581
      %v4583 = vpop.f32.mrf.mxu0
      %v4584 = vadd.f32 %v4485, %v4583
      %v4585 = vpop.f32.mrf.mxu0
      %v4586 = vadd.f32 %v4487, %v4585
      %4587 = vmatprep.mubr.bf16.mxu0 0
      %4588 = vmatmul.mubr.bf16.gmra.mxu0 %v4418
      %v4589 = vpop.f32.mrf.mxu0
      %v4590 = vadd.f32 %v4491, %v4589
      %v4591 = vpop.f32.mrf.mxu0
      %v4592 = vadd.f32 %v4493, %v4591
      %v4593 = vpop.f32.mrf.mxu0
      %v4594 = vadd.f32 %v4495, %v4593
      %v4595 = vpop.f32.mrf.mxu0
      %v4596 = vadd.f32 %v4497, %v4595
      %4597 = vdwg.mxu0
      %v4598 = vld [vmem:[%s327 + $0x140] sm:$0xf]
      %v4599 = vld [vmem:[%s327 + $0x144] sm:$0xf]
      %v4600 = vld [vmem:[%s327 + $0x148] sm:$0xf]
      %v4601 = vld [vmem:[%s327 + $0x14c] sm:$0xf]
      %v4602 = vld [vmem:[%s327 + $0x150] sm:$0xf]
      %v4603 = vld [vmem:[%s327 + $0x154] sm:$0xf]
      %v4604 = vld [vmem:[%s327 + $0x158] sm:$0xf]
      %v4605 = vld [vmem:[%s327 + $0x15c] sm:$0xf]
      %v4606 = vld [vmem:[%s582] sm:$0xff]
      %v4607 = vld [vmem:[%s582 + $0x8] sm:$0xff]
      %v4616 = vunpack.c.l.b16 %v4598
      %v4617 = vunpack.c.l.b16 %v4599
      %v4618 = vunpack.c.l.b16 %v4600
      %v4619 = vunpack.c.l.b16 %v4601
      %v4620 = vunpack.c.l.b16 %v4602
      %v4621 = vunpack.c.l.b16 %v4603
      %v4622 = vunpack.c.l.b16 %v4604
      %v4623 = vunpack.c.l.b16 %v4605
      %v4624 = vpack.c.b16 %v4617, %v4616
      %v4625 = vpack.c.b16 %v4619, %v4618
      %v4626 = vpack.c.b16 %v4621, %v4620
      %v4627 = vpack.c.b16 %v4623, %v4622
      %v4630 = vunpack.c.l.b16 %v4606
      %v4631 = vunpack.c.h.b16 %v4606
      %v4632 = vunpack.c.l.b16 %v4607
      %v4633 = vunpack.c.h.b16 %v4607
      %v4634 = vpack.c.b16 %v4632, %v4630
      %v4635 = vpack.c.b16 %v4633, %v4631
      %v4639 = vsel %vm389, %v4624, 0
      %v4642 = vsel %vm389, %v4625, 0
      %v4645 = vsel %vm389, %v4626, 0
      %v4648 = vsel %vm389, %v4627, 0
      %4650 = vmatprep.subr.bf16.mxu0 0
      %4651 = vmatpush1.bf16.msra.mxu0 0
      %4652 = vmatprep.subr.bf16.mxu0 0
      %4653 = vmatpush1.bf16.msra.mxu0 0
      %4654 = vmatprep.subr.bf16.mxu0 0
      %4655 = vmatpush1.bf16.msra.mxu0 0
      %4656 = vmatprep.subr.bf16.mxu0 0
      %4657 = vmatpush1.bf16.msra.mxu0 0
      %4658 = vmatprep.subr.bf16.mxu0 0
      %4659 = vmatpush1.bf16.msra.mxu0 0
      %4660 = vmatprep.subr.bf16.mxu0 0
      %4661 = vmatpush1.bf16.msra.mxu0 0
      %4662 = vmatprep.subr.bf16.mxu0 0
      %4663 = vmatpush1.bf16.msra.mxu0 0
      %4664 = vmatprep.subr.bf16.mxu0 %v4635
      %4665 = vmatpush1.bf16.msra.mxu0 %v4634
      %4666 = vmatprep.subr.bf16.mxu0 0
      %4667 = vmatpush2.bf16.msra.mxu0 0
      %4668 = vmatprep.subr.bf16.mxu0 0
      %4669 = vmatpush2.bf16.msra.mxu0 0
      %4670 = vmatprep.subr.bf16.mxu0 0
      %4671 = vmatpush2.bf16.msra.mxu0 0
      %4672 = vmatprep.subr.bf16.mxu0 0
      %4673 = vmatpush2.bf16.msra.mxu0 0
      %4674 = vmatprep.subr.bf16.mxu0 0
      %4675 = vmatpush2.bf16.msra.mxu0 0
      %4676 = vmatprep.subr.bf16.mxu0 0
      %4677 = vmatpush2.bf16.msra.mxu0 0
      %4678 = vmatprep.subr.bf16.mxu0 0
      %4679 = vmatpush2.bf16.msra.mxu0 0
      %4680 = vmatprep.subr.bf16.mxu0 0
      %4681 = vmatpush2.bf16.msra.mxu0 0
      %4682 = vmatprep.mubr.bf16.mxu0 0
      %4683 = vmatmul.mubr.bf16.gmra.mxu0 %v4639
      %v4684 = vpop.f32.mrf.mxu0
      %v4685 = vadd.f32 0.0, %v4684
      %v4686 = vpop.f32.mrf.mxu0
      %v4687 = vadd.f32 0.0, %v4686
      %v4688 = vpop.f32.mrf.mxu0
      %v4689 = vadd.f32 0.0, %v4688
      %v4690 = vpop.f32.mrf.mxu0
      %v4691 = vadd.f32 0.0, %v4690
      %4692 = vmatprep.mubr.bf16.mxu0 0
      %4693 = vmatmul.mubr.bf16.gmra.mxu0 %v4642
      %v4694 = vpop.f32.mrf.mxu0
      %v4695 = vadd.f32 0.0, %v4694
      %v4696 = vpop.f32.mrf.mxu0
      %v4697 = vadd.f32 0.0, %v4696
      %v4698 = vpop.f32.mrf.mxu0
      %v4699 = vadd.f32 0.0, %v4698
      %v4700 = vpop.f32.mrf.mxu0
      %v4701 = vadd.f32 0.0, %v4700
      %4702 = vmatprep.mubr.bf16.mxu0 0
      %4703 = vmatmul.mubr.bf16.gmra.mxu0 %v4645
      %v4704 = vpop.f32.mrf.mxu0
      %v4705 = vadd.f32 0.0, %v4704
      %v4706 = vpop.f32.mrf.mxu0
      %v4707 = vadd.f32 0.0, %v4706
      %v4708 = vpop.f32.mrf.mxu0
      %v4709 = vadd.f32 0.0, %v4708
      %v4710 = vpop.f32.mrf.mxu0
      %v4711 = vadd.f32 0.0, %v4710
      %4712 = vmatprep.mubr.bf16.mxu0 0
      %4713 = vmatmul.mubr.bf16.gmra.mxu0 %v4648
      %v4714 = vpop.f32.mrf.mxu0
      %v4715 = vadd.f32 0.0, %v4714
      %v4716 = vpop.f32.mrf.mxu0
      %v4717 = vadd.f32 0.0, %v4716
      %v4718 = vpop.f32.mrf.mxu0
      %v4719 = vadd.f32 0.0, %v4718
      %v4720 = vpop.f32.mrf.mxu0
      %v4721 = vadd.f32 0.0, %v4720
      %4722 = vdwg.mxu0
      %v4723 = vadd.f32 %v4560, %v4685
      %v4724 = vadd.f32 %v4562, %v4687
      %v4725 = vadd.f32 %v4564, %v4689
      %v4726 = vadd.f32 %v4566, %v4691
      %v4727 = vadd.f32 %v4570, %v4695
      %v4728 = vadd.f32 %v4572, %v4697
      %v4729 = vadd.f32 %v4574, %v4699
      %v4730 = vadd.f32 %v4576, %v4701
      %v4731 = vadd.f32 %v4580, %v4705
      %v4732 = vadd.f32 %v4582, %v4707
      %v4733 = vadd.f32 %v4584, %v4709
      %v4734 = vadd.f32 %v4586, %v4711
      %v4735 = vadd.f32 %v4590, %v4715
      %v4736 = vadd.f32 %v4592, %v4717
      %v4737 = vadd.f32 %v4594, %v4719
      %v4738 = vadd.f32 %v4596, %v4721
      %v4739 = vld [vmem:[%s2] sm:$0x3]
      %v4741 = vlaneseq
      %v4742 = vshrl.u32 %v4741, 7
      %v4743 = vsub.s32 0, %v4742
      %v4744 = vrot.slane %v4739, %v4743
      %v4745 = vlaneseq
      %v4746 = vshrl.u32 %v4745, 7
      %v4747 = vsub.s32 1, %v4746
      %v4748 = vrot.slane %v4739, %v4747
      %v4751 = vadd.f32 %v4723, %v4744
      %v4752 = vadd.f32 %v4724, %v4748
      %v4753 = vadd.f32 %v4725, %v4744
      %v4754 = vadd.f32 %v4726, %v4748
      %v4755 = vadd.f32 %v4727, %v4744
      %v4756 = vadd.f32 %v4728, %v4748
      %v4757 = vadd.f32 %v4729, %v4744
      %v4758 = vadd.f32 %v4730, %v4748
      %v4759 = vadd.f32 %v4731, %v4744
      %v4760 = vadd.f32 %v4732, %v4748
      %v4761 = vadd.f32 %v4733, %v4744
      %v4762 = vadd.f32 %v4734, %v4748
      %v4763 = vadd.f32 %v4735, %v4744
      %v4764 = vadd.f32 %v4736, %v4748
      %v4765 = vadd.f32 %v4737, %v4744
      %v4766 = vadd.f32 %v4738, %v4748
      %v4767 = vtanh.pop %v4751
      %v4768 = vtanh.pop %v4752
      %v4769 = vtanh.pop %v4753
      %v4770 = vtanh.pop %v4754
      %v4771 = vtanh.pop %v4755
      %v4772 = vtanh.pop %v4756
      %v4773 = vtanh.pop %v4757
      %v4774 = vtanh.pop %v4758
      %v4775 = vtanh.pop %v4759
      %v4776 = vtanh.pop %v4760
      %v4777 = vtanh.pop %v4761
      %v4778 = vtanh.pop %v4762
      %v4779 = vtanh.pop %v4763
      %v4780 = vtanh.pop %v4764
      %v4781 = vtanh.pop %v4765
      %v4782 = vtanh.pop %v4766
      %v4783 = vmax.f32 %v4767, %v4768
      %v4784 = vmax.f32 %v4769, %v4770
      %v4785 = vmax.f32 %v4771, %v4772
      %v4786 = vmax.f32 %v4773, %v4774
      %v4787 = vmax.f32 %v4775, %v4776
      %v4788 = vmax.f32 %v4777, %v4778
      %v4789 = vmax.f32 %v4779, %v4780
      %v4790 = vmax.f32 %v4781, %v4782
      %v4791 = vmax.f32 %v4783, %v4787
      %v4792 = vmax.f32 %v4784, %v4788
      %v4793 = vmax.f32 %v4785, %v4789
      %v4794 = vmax.f32 %v4786, %v4790
      %v4795 = vpack.c.bf16 %v4792, %v4791
      %v4796 = vpack.c.bf16 %v4794, %v4793
      %v4799 = vunpack.c.l.b16 %v4795
      %v4800 = vunpack.c.h.b16 %v4795
      %v4801 = vunpack.c.l.b16 %v4796
      %v4802 = vunpack.c.h.b16 %v4796
      %v4803 = vpack.c.b16 %v4799, %v4799
      %v4804 = vpack.c.b16 %v4800, %v4800
      %v4805 = vpack.c.b16 %v4801, %v4801
      %v4806 = vpack.c.b16 %v4802, %v4802
      %4811 = vst [vmem:[#allocation2 + $0xa0] sm:$0xf] %v4803
      %4812 = vst [vmem:[#allocation2 + $0xa4] sm:$0xf] %v4804
      %4813 = vst [vmem:[#allocation2 + $0xa8] sm:$0xf] %v4805
      %4814 = vst [vmem:[#allocation2 + $0xac] sm:$0xf] %v4806
      %4815 = vst [vmem:[#allocation3] sm:$0xff] 0.0
      %4816 = vst [vmem:[#allocation3 + $0x8] sm:$0xff] 0.0
      %4817 = vst [vmem:[#allocation3 + $0x10] sm:$0xff] 0.0
      %4818 = vst [vmem:[#allocation3 + $0x18] sm:$0xff] 0.0
      %4819 = vst [vmem:[#allocation3 + $0x20] sm:$0xff] 0.0
      %4820 = vst [vmem:[#allocation3 + $0x28] sm:$0xff] 0.0
      %4821 = vst [vmem:[#allocation3 + $0x30] sm:$0xff] 0.0
      %4822 = vst [vmem:[#allocation3 + $0x38] sm:$0xff] 0.0
      %v4823 = vld [vmem:[#allocation2] sm:$0xf]
      %v4824 = vld [vmem:[#allocation2 + $0x4] sm:$0xf]
      %v4825 = vld [vmem:[#allocation2 + $0x8] sm:$0xf]
      %v4826 = vld [vmem:[#allocation2 + $0xc] sm:$0xf]
      %v4827 = vld [vmem:[#allocation2 + $0x10] sm:$0xf]
      %v4828 = vld [vmem:[#allocation2 + $0x14] sm:$0xf]
      %v4829 = vld [vmem:[#allocation2 + $0x18] sm:$0xf]
      %v4830 = vld [vmem:[#allocation2 + $0x1c] sm:$0xf]
      %v4831 = vld [vmem:[%s3] sm:$0xff]
      %v4832 = vld [vmem:[%s3 + $0x8] sm:$0xff]
      %v4833 = vld [vmem:[%s3 + $0x10] sm:$0xff]
      %v4834 = vld [vmem:[%s3 + $0x18] sm:$0xff]
      %v4835 = vld [vmem:[%s3 + $0x20] sm:$0xff]
      %v4836 = vld [vmem:[%s3 + $0x28] sm:$0xff]
      %v4837 = vld [vmem:[%s3 + $0x30] sm:$0xff]
      %v4838 = vld [vmem:[%s3 + $0x38] sm:$0xff]
      %v4839 = vld [vmem:[%s3 + $0x40] sm:$0xff]
      %v4840 = vld [vmem:[%s3 + $0x48] sm:$0xff]
      %v4841 = vld [vmem:[%s3 + $0x50] sm:$0xff]
      %v4842 = vld [vmem:[%s3 + $0x58] sm:$0xff]
      %v4843 = vld [vmem:[%s3 + $0x60] sm:$0xff]
      %v4844 = vld [vmem:[%s3 + $0x68] sm:$0xff]
      %v4845 = vld [vmem:[%s3 + $0x70] sm:$0xff]
      %v4846 = vld [vmem:[%s3 + $0x78] sm:$0xff]
      %v4847 = vld [vmem:[#allocation2 + $0x20] sm:$0xf]
      %v4848 = vld [vmem:[#allocation2 + $0x24] sm:$0xf]
      %v4849 = vld [vmem:[#allocation2 + $0x28] sm:$0xf]
      %v4850 = vld [vmem:[#allocation2 + $0x2c] sm:$0xf]
      %s4851 = scalar_lea.vmem %s3, 128
      %v4852 = vld [vmem:[%s4851] sm:$0xff]
      %v4853 = vld [vmem:[%s4851 + $0x8] sm:$0xff]
      %v4854 = vld [vmem:[%s4851 + $0x10] sm:$0xff]
      %v4855 = vld [vmem:[%s4851 + $0x18] sm:$0xff]
      %v4856 = vld [vmem:[%s4851 + $0x20] sm:$0xff]
      %v4857 = vld [vmem:[%s4851 + $0x28] sm:$0xff]
      %v4858 = vld [vmem:[%s4851 + $0x30] sm:$0xff]
      %v4859 = vld [vmem:[%s4851 + $0x38] sm:$0xff]
      %v4860 = vld [vmem:[%s4851 + $0x40] sm:$0xff]
      %v4861 = vld [vmem:[%s4851 + $0x48] sm:$0xff]
      %v4862 = vld [vmem:[%s4851 + $0x50] sm:$0xff]
      %v4863 = vld [vmem:[%s4851 + $0x58] sm:$0xff]
      %v4864 = vld [vmem:[%s4851 + $0x60] sm:$0xff]
      %v4865 = vld [vmem:[%s4851 + $0x68] sm:$0xff]
      %v4866 = vld [vmem:[%s4851 + $0x70] sm:$0xff]
      %v4867 = vld [vmem:[%s4851 + $0x78] sm:$0xff]
      %v4876 = vunpack.c.l.b16 %v4827
      %v4877 = vunpack.c.l.b16 %v4828
      %v4878 = vunpack.c.l.b16 %v4829
      %v4879 = vunpack.c.l.b16 %v4830
      %v4880 = vunpack.c.l.b16 %v4847
      %v4881 = vunpack.c.l.b16 %v4848
      %v4882 = vunpack.c.l.b16 %v4849
      %v4883 = vunpack.c.l.b16 %v4850
      %v4884 = vpack.c.b16 %v4877, %v4876
      %v4885 = vpack.c.b16 %v4879, %v4878
      %v4886 = vpack.c.b16 %v4881, %v4880
      %v4887 = vpack.c.b16 %v4883, %v4882
      %v4908 = vunpack.c.l.b16 %v4852
      %v4909 = vunpack.c.h.b16 %v4852
      %v4910 = vunpack.c.l.b16 %v4853
      %v4911 = vunpack.c.h.b16 %v4853
      %v4912 = vunpack.c.l.b16 %v4854
      %v4913 = vunpack.c.h.b16 %v4854
      %v4914 = vunpack.c.l.b16 %v4855
      %v4915 = vunpack.c.h.b16 %v4855
      %v4916 = vunpack.c.l.b16 %v4856
      %v4917 = vunpack.c.h.b16 %v4856
      %v4918 = vunpack.c.l.b16 %v4857
      %v4919 = vunpack.c.h.b16 %v4857
      %v4920 = vunpack.c.l.b16 %v4858
      %v4921 = vunpack.c.h.b16 %v4858
      %v4922 = vunpack.c.l.b16 %v4859
      %v4923 = vunpack.c.h.b16 %v4859
      %v4924 = vunpack.c.l.b16 %v4860
      %v4925 = vunpack.c.h.b16 %v4860
      %v4926 = vunpack.c.l.b16 %v4861
      %v4927 = vunpack.c.h.b16 %v4861
      %v4928 = vunpack.c.l.b16 %v4862
      %v4929 = vunpack.c.h.b16 %v4862
      %v4930 = vunpack.c.l.b16 %v4863
      %v4931 = vunpack.c.h.b16 %v4863
      %v4932 = vunpack.c.l.b16 %v4864
      %v4933 = vunpack.c.h.b16 %v4864
      %v4934 = vunpack.c.l.b16 %v4865
      %v4935 = vunpack.c.h.b16 %v4865
      %v4936 = vunpack.c.l.b16 %v4866
      %v4937 = vunpack.c.h.b16 %v4866
      %v4938 = vunpack.c.l.b16 %v4867
      %v4939 = vunpack.c.h.b16 %v4867
      %v4940 = vpack.c.b16 %v4910, %v4908
      %v4941 = vpack.c.b16 %v4911, %v4909
      %v4942 = vpack.c.b16 %v4914, %v4912
      %v4943 = vpack.c.b16 %v4915, %v4913
      %v4944 = vpack.c.b16 %v4918, %v4916
      %v4945 = vpack.c.b16 %v4919, %v4917
      %v4946 = vpack.c.b16 %v4922, %v4920
      %v4947 = vpack.c.b16 %v4923, %v4921
      %v4948 = vpack.c.b16 %v4926, %v4924
      %v4949 = vpack.c.b16 %v4927, %v4925
      %v4950 = vpack.c.b16 %v4930, %v4928
      %v4951 = vpack.c.b16 %v4931, %v4929
      %v4952 = vpack.c.b16 %v4934, %v4932
      %v4953 = vpack.c.b16 %v4935, %v4933
      %v4954 = vpack.c.b16 %v4938, %v4936
      %v4955 = vpack.c.b16 %v4939, %v4937
      %4972 = vmatprep.subr.bf16.mxu0 %v4955
      %4973 = vmatpush1.bf16.msra.mxu0 %v4954
      %4974 = vmatprep.subr.bf16.mxu0 %v4953
      %4975 = vmatpush1.bf16.msra.mxu0 %v4952
      %4976 = vmatprep.subr.bf16.mxu0 %v4951
      %4977 = vmatpush1.bf16.msra.mxu0 %v4950
      %4978 = vmatprep.subr.bf16.mxu0 %v4949
      %4979 = vmatpush1.bf16.msra.mxu0 %v4948
      %4980 = vmatprep.subr.bf16.mxu0 %v4947
      %4981 = vmatpush1.bf16.msra.mxu0 %v4946
      %4982 = vmatprep.subr.bf16.mxu0 %v4945
      %4983 = vmatpush1.bf16.msra.mxu0 %v4944
      %4984 = vmatprep.subr.bf16.mxu0 %v4943
      %4985 = vmatpush1.bf16.msra.mxu0 %v4942
      %4986 = vmatprep.subr.bf16.mxu0 %v4941
      %4987 = vmatpush1.bf16.msra.mxu0 %v4940
      %4988 = vmatprep.subr.bf16.mxu0 0
      %4989 = vmatpush2.bf16.msra.mxu0 0
      %4990 = vmatprep.subr.bf16.mxu0 0
      %4991 = vmatpush2.bf16.msra.mxu0 0
      %4992 = vmatprep.subr.bf16.mxu0 0
      %4993 = vmatpush2.bf16.msra.mxu0 0
      %4994 = vmatprep.subr.bf16.mxu0 0
      %4995 = vmatpush2.bf16.msra.mxu0 0
      %4996 = vmatprep.subr.bf16.mxu0 0
      %4997 = vmatpush2.bf16.msra.mxu0 0
      %4998 = vmatprep.subr.bf16.mxu0 0
      %4999 = vmatpush2.bf16.msra.mxu0 0
      %5000 = vmatprep.subr.bf16.mxu0 0
      %5001 = vmatpush2.bf16.msra.mxu0 0
      %5002 = vmatprep.subr.bf16.mxu0 0
      %5003 = vmatpush2.bf16.msra.mxu0 0
      %5004 = vmatprep.mubr.bf16.mxu0 0
      %5005 = vmatmul.mubr.bf16.gmra.mxu0 %v4884
      %v5006 = vpop.f32.mrf.mxu0
      %v5007 = vadd.f32 0.0, %v5006
      %v5008 = vpop.f32.mrf.mxu0
      %v5009 = vadd.f32 0.0, %v5008
      %v5010 = vpop.f32.mrf.mxu0
      %v5011 = vadd.f32 0.0, %v5010
      %v5012 = vpop.f32.mrf.mxu0
      %v5013 = vadd.f32 0.0, %v5012
      %5014 = vmatprep.mubr.bf16.mxu0 0
      %5015 = vmatmul.mubr.bf16.gmra.mxu0 %v4885
      %v5016 = vpop.f32.mrf.mxu0
      %v5017 = vadd.f32 0.0, %v5016
      %v5018 = vpop.f32.mrf.mxu0
      %v5019 = vadd.f32 0.0, %v5018
      %v5020 = vpop.f32.mrf.mxu0
      %v5021 = vadd.f32 0.0, %v5020
      %v5022 = vpop.f32.mrf.mxu0
      %v5023 = vadd.f32 0.0, %v5022
      %5024 = vmatprep.mubr.bf16.mxu0 0
      %5025 = vmatmul.mubr.bf16.gmra.mxu0 %v4886
      %v5026 = vpop.f32.mrf.mxu0
      %v5027 = vadd.f32 0.0, %v5026
      %v5028 = vpop.f32.mrf.mxu0
      %v5029 = vadd.f32 0.0, %v5028
      %v5030 = vpop.f32.mrf.mxu0
      %v5031 = vadd.f32 0.0, %v5030
      %v5032 = vpop.f32.mrf.mxu0
      %v5033 = vadd.f32 0.0, %v5032
      %5034 = vmatprep.mubr.bf16.mxu0 0
      %5035 = vmatmul.mubr.bf16.gmra.mxu0 %v4887
      %v5036 = vpop.f32.mrf.mxu0
      %v5037 = vadd.f32 0.0, %v5036
      %v5038 = vpop.f32.mrf.mxu0
      %v5039 = vadd.f32 0.0, %v5038
      %v5040 = vpop.f32.mrf.mxu0
      %v5041 = vadd.f32 0.0, %v5040
      %v5042 = vpop.f32.mrf.mxu0
      %v5043 = vadd.f32 0.0, %v5042
      %5044 = vdwg.mxu0
      %v5049 = vunpack.c.l.b16 %v4823
      %v5050 = vunpack.c.l.b16 %v4824
      %v5051 = vunpack.c.l.b16 %v4825
      %v5052 = vunpack.c.l.b16 %v4826
      %v5053 = vpack.c.b16 %v5050, %v5049
      %v5054 = vpack.c.b16 %v5052, %v5051
      %v5073 = vunpack.c.l.b16 %v4831
      %v5074 = vunpack.c.h.b16 %v4831
      %v5075 = vunpack.c.l.b16 %v4832
      %v5076 = vunpack.c.h.b16 %v4832
      %v5077 = vunpack.c.l.b16 %v4833
      %v5078 = vunpack.c.h.b16 %v4833
      %v5079 = vunpack.c.l.b16 %v4834
      %v5080 = vunpack.c.h.b16 %v4834
      %v5081 = vunpack.c.l.b16 %v4835
      %v5082 = vunpack.c.h.b16 %v4835
      %v5083 = vunpack.c.l.b16 %v4836
      %v5084 = vunpack.c.h.b16 %v4836
      %v5085 = vunpack.c.l.b16 %v4837
      %v5086 = vunpack.c.h.b16 %v4837
      %v5087 = vunpack.c.l.b16 %v4838
      %v5088 = vunpack.c.h.b16 %v4838
      %v5089 = vunpack.c.l.b16 %v4839
      %v5090 = vunpack.c.h.b16 %v4839
      %v5091 = vunpack.c.l.b16 %v4840
      %v5092 = vunpack.c.h.b16 %v4840
      %v5093 = vunpack.c.l.b16 %v4841
      %v5094 = vunpack.c.h.b16 %v4841
      %v5095 = vunpack.c.l.b16 %v4842
      %v5096 = vunpack.c.h.b16 %v4842
      %v5097 = vunpack.c.l.b16 %v4843
      %v5098 = vunpack.c.h.b16 %v4843
      %v5099 = vunpack.c.l.b16 %v4844
      %v5100 = vunpack.c.h.b16 %v4844
      %v5101 = vunpack.c.l.b16 %v4845
      %v5102 = vunpack.c.h.b16 %v4845
      %v5103 = vunpack.c.l.b16 %v4846
      %v5104 = vunpack.c.h.b16 %v4846
      %v5105 = vpack.c.b16 %v5075, %v5073
      %v5106 = vpack.c.b16 %v5076, %v5074
      %v5107 = vpack.c.b16 %v5079, %v5077
      %v5108 = vpack.c.b16 %v5080, %v5078
      %v5109 = vpack.c.b16 %v5083, %v5081
      %v5110 = vpack.c.b16 %v5084, %v5082
      %v5111 = vpack.c.b16 %v5087, %v5085
      %v5112 = vpack.c.b16 %v5088, %v5086
      %v5113 = vpack.c.b16 %v5091, %v5089
      %v5114 = vpack.c.b16 %v5092, %v5090
      %v5115 = vpack.c.b16 %v5095, %v5093
      %v5116 = vpack.c.b16 %v5096, %v5094
      %v5117 = vpack.c.b16 %v5099, %v5097
      %v5118 = vpack.c.b16 %v5100, %v5098
      %v5119 = vpack.c.b16 %v5103, %v5101
      %v5120 = vpack.c.b16 %v5104, %v5102
      %5137 = vmatprep.subr.bf16.mxu0 %v5120
      %5138 = vmatpush1.bf16.msra.mxu0 %v5119
      %5139 = vmatprep.subr.bf16.mxu0 %v5118
      %5140 = vmatpush1.bf16.msra.mxu0 %v5117
      %5141 = vmatprep.subr.bf16.mxu0 %v5116
      %5142 = vmatpush1.bf16.msra.mxu0 %v5115
      %5143 = vmatprep.subr.bf16.mxu0 %v5114
      %5144 = vmatpush1.bf16.msra.mxu0 %v5113
      %5145 = vmatprep.subr.bf16.mxu0 %v5112
      %5146 = vmatpush1.bf16.msra.mxu0 %v5111
      %5147 = vmatprep.subr.bf16.mxu0 %v5110
      %5148 = vmatpush1.bf16.msra.mxu0 %v5109
      %5149 = vmatprep.subr.bf16.mxu0 %v5108
      %5150 = vmatpush1.bf16.msra.mxu0 %v5107
      %5151 = vmatprep.subr.bf16.mxu0 %v5106
      %5152 = vmatpush1.bf16.msra.mxu0 %v5105
      %5153 = vmatprep.subr.bf16.mxu0 0
      %5154 = vmatpush2.bf16.msra.mxu0 0
      %5155 = vmatprep.subr.bf16.mxu0 0
      %5156 = vmatpush2.bf16.msra.mxu0 0
      %5157 = vmatprep.subr.bf16.mxu0 0
      %5158 = vmatpush2.bf16.msra.mxu0 0
      %5159 = vmatprep.subr.bf16.mxu0 0
      %5160 = vmatpush2.bf16.msra.mxu0 0
      %5161 = vmatprep.subr.bf16.mxu0 0
      %5162 = vmatpush2.bf16.msra.mxu0 0
      %5163 = vmatprep.subr.bf16.mxu0 0
      %5164 = vmatpush2.bf16.msra.mxu0 0
      %5165 = vmatprep.subr.bf16.mxu0 0
      %5166 = vmatpush2.bf16.msra.mxu0 0
      %5167 = vmatprep.subr.bf16.mxu0 0
      %5168 = vmatpush2.bf16.msra.mxu0 0
      %5169 = vmatprep.mubr.bf16.mxu0 0
      %5170 = vmatmul.mubr.bf16.gmra.mxu0 %v5053
      %v5171 = vpop.f32.mrf.mxu0
      %v5172 = vadd.f32 %v5007, %v5171
      %v5173 = vpop.f32.mrf.mxu0
      %v5174 = vadd.f32 %v5009, %v5173
      %v5175 = vpop.f32.mrf.mxu0
      %v5176 = vadd.f32 %v5011, %v5175
      %v5177 = vpop.f32.mrf.mxu0
      %v5178 = vadd.f32 %v5013, %v5177
      %5179 = vmatprep.mubr.bf16.mxu0 0
      %5180 = vmatmul.mubr.bf16.gmra.mxu0 %v5054
      %v5181 = vpop.f32.mrf.mxu0
      %v5182 = vadd.f32 %v5017, %v5181
      %v5183 = vpop.f32.mrf.mxu0
      %v5184 = vadd.f32 %v5019, %v5183
      %v5185 = vpop.f32.mrf.mxu0
      %v5186 = vadd.f32 %v5021, %v5185
      %v5187 = vpop.f32.mrf.mxu0
      %v5188 = vadd.f32 %v5023, %v5187
      %5189 = vmatprep.mubr.bf16.mxu0 0
      %5190 = vmatmul.mubr.bf16.gmra.mxu0 %v4884
      %v5191 = vpop.f32.mrf.mxu0
      %v5192 = vadd.f32 %v5027, %v5191
      %v5193 = vpop.f32.mrf.mxu0
      %v5194 = vadd.f32 %v5029, %v5193
      %v5195 = vpop.f32.mrf.mxu0
      %v5196 = vadd.f32 %v5031, %v5195
      %v5197 = vpop.f32.mrf.mxu0
      %v5198 = vadd.f32 %v5033, %v5197
      %5199 = vmatprep.mubr.bf16.mxu0 0
      %5200 = vmatmul.mubr.bf16.gmra.mxu0 %v4885
      %v5201 = vpop.f32.mrf.mxu0
      %v5202 = vadd.f32 %v5037, %v5201
      %v5203 = vpop.f32.mrf.mxu0
      %v5204 = vadd.f32 %v5039, %v5203
      %v5205 = vpop.f32.mrf.mxu0
      %v5206 = vadd.f32 %v5041, %v5205
      %v5207 = vpop.f32.mrf.mxu0
      %v5208 = vadd.f32 %v5043, %v5207
      %5209 = vdwg.mxu0
      %v5210 = vld [vmem:[#allocation2 + $0x20] sm:$0xf]
      %v5211 = vld [vmem:[#allocation2 + $0x24] sm:$0xf]
      %v5212 = vld [vmem:[#allocation2 + $0x28] sm:$0xf]
      %v5213 = vld [vmem:[#allocation2 + $0x2c] sm:$0xf]
      %v5214 = vld [vmem:[#allocation2 + $0x30] sm:$0xf]
      %v5215 = vld [vmem:[#allocation2 + $0x34] sm:$0xf]
      %v5216 = vld [vmem:[#allocation2 + $0x38] sm:$0xf]
      %v5217 = vld [vmem:[#allocation2 + $0x3c] sm:$0xf]
      %s5218 = scalar_lea.vmem %s3, 256
      %v5219 = vld [vmem:[%s5218] sm:$0xff]
      %v5220 = vld [vmem:[%s5218 + $0x8] sm:$0xff]
      %v5221 = vld [vmem:[%s5218 + $0x10] sm:$0xff]
      %v5222 = vld [vmem:[%s5218 + $0x18] sm:$0xff]
      %v5223 = vld [vmem:[%s5218 + $0x20] sm:$0xff]
      %v5224 = vld [vmem:[%s5218 + $0x28] sm:$0xff]
      %v5225 = vld [vmem:[%s5218 + $0x30] sm:$0xff]
      %v5226 = vld [vmem:[%s5218 + $0x38] sm:$0xff]
      %v5227 = vld [vmem:[%s5218 + $0x40] sm:$0xff]
      %v5228 = vld [vmem:[%s5218 + $0x48] sm:$0xff]
      %v5229 = vld [vmem:[%s5218 + $0x50] sm:$0xff]
      %v5230 = vld [vmem:[%s5218 + $0x58] sm:$0xff]
      %v5231 = vld [vmem:[%s5218 + $0x60] sm:$0xff]
      %v5232 = vld [vmem:[%s5218 + $0x68] sm:$0xff]
      %v5233 = vld [vmem:[%s5218 + $0x70] sm:$0xff]
      %v5234 = vld [vmem:[%s5218 + $0x78] sm:$0xff]
      %v5243 = vunpack.c.l.b16 %v5210
      %v5244 = vunpack.c.l.b16 %v5211
      %v5245 = vunpack.c.l.b16 %v5212
      %v5246 = vunpack.c.l.b16 %v5213
      %v5247 = vunpack.c.l.b16 %v5214
      %v5248 = vunpack.c.l.b16 %v5215
      %v5249 = vunpack.c.l.b16 %v5216
      %v5250 = vunpack.c.l.b16 %v5217
      %v5251 = vpack.c.b16 %v5244, %v5243
      %v5252 = vpack.c.b16 %v5246, %v5245
      %v5253 = vpack.c.b16 %v5248, %v5247
      %v5254 = vpack.c.b16 %v5250, %v5249
      %v5275 = vunpack.c.l.b16 %v5219
      %v5276 = vunpack.c.h.b16 %v5219
      %v5277 = vunpack.c.l.b16 %v5220
      %v5278 = vunpack.c.h.b16 %v5220
      %v5279 = vunpack.c.l.b16 %v5221
      %v5280 = vunpack.c.h.b16 %v5221
      %v5281 = vunpack.c.l.b16 %v5222
      %v5282 = vunpack.c.h.b16 %v5222
      %v5283 = vunpack.c.l.b16 %v5223
      %v5284 = vunpack.c.h.b16 %v5223
      %v5285 = vunpack.c.l.b16 %v5224
      %v5286 = vunpack.c.h.b16 %v5224
      %v5287 = vunpack.c.l.b16 %v5225
      %v5288 = vunpack.c.h.b16 %v5225
      %v5289 = vunpack.c.l.b16 %v5226
      %v5290 = vunpack.c.h.b16 %v5226
      %v5291 = vunpack.c.l.b16 %v5227
      %v5292 = vunpack.c.h.b16 %v5227
      %v5293 = vunpack.c.l.b16 %v5228
      %v5294 = vunpack.c.h.b16 %v5228
      %v5295 = vunpack.c.l.b16 %v5229
      %v5296 = vunpack.c.h.b16 %v5229
      %v5297 = vunpack.c.l.b16 %v5230
      %v5298 = vunpack.c.h.b16 %v5230
      %v5299 = vunpack.c.l.b16 %v5231
      %v5300 = vunpack.c.h.b16 %v5231
      %v5301 = vunpack.c.l.b16 %v5232
      %v5302 = vunpack.c.h.b16 %v5232
      %v5303 = vunpack.c.l.b16 %v5233
      %v5304 = vunpack.c.h.b16 %v5233
      %v5305 = vunpack.c.l.b16 %v5234
      %v5306 = vunpack.c.h.b16 %v5234
      %v5307 = vpack.c.b16 %v5277, %v5275
      %v5308 = vpack.c.b16 %v5278, %v5276
      %v5309 = vpack.c.b16 %v5281, %v5279
      %v5310 = vpack.c.b16 %v5282, %v5280
      %v5311 = vpack.c.b16 %v5285, %v5283
      %v5312 = vpack.c.b16 %v5286, %v5284
      %v5313 = vpack.c.b16 %v5289, %v5287
      %v5314 = vpack.c.b16 %v5290, %v5288
      %v5315 = vpack.c.b16 %v5293, %v5291
      %v5316 = vpack.c.b16 %v5294, %v5292
      %v5317 = vpack.c.b16 %v5297, %v5295
      %v5318 = vpack.c.b16 %v5298, %v5296
      %v5319 = vpack.c.b16 %v5301, %v5299
      %v5320 = vpack.c.b16 %v5302, %v5300
      %v5321 = vpack.c.b16 %v5305, %v5303
      %v5322 = vpack.c.b16 %v5306, %v5304
      %5339 = vmatprep.subr.bf16.mxu0 %v5322
      %5340 = vmatpush1.bf16.msra.mxu0 %v5321
      %5341 = vmatprep.subr.bf16.mxu0 %v5320
      %5342 = vmatpush1.bf16.msra.mxu0 %v5319
      %5343 = vmatprep.subr.bf16.mxu0 %v5318
      %5344 = vmatpush1.bf16.msra.mxu0 %v5317
      %5345 = vmatprep.subr.bf16.mxu0 %v5316
      %5346 = vmatpush1.bf16.msra.mxu0 %v5315
      %5347 = vmatprep.subr.bf16.mxu0 %v5314
      %5348 = vmatpush1.bf16.msra.mxu0 %v5313
      %5349 = vmatprep.subr.bf16.mxu0 %v5312
      %5350 = vmatpush1.bf16.msra.mxu0 %v5311
      %5351 = vmatprep.subr.bf16.mxu0 %v5310
      %5352 = vmatpush1.bf16.msra.mxu0 %v5309
      %5353 = vmatprep.subr.bf16.mxu0 %v5308
      %5354 = vmatpush1.bf16.msra.mxu0 %v5307
      %5355 = vmatprep.subr.bf16.mxu0 0
      %5356 = vmatpush2.bf16.msra.mxu0 0
      %5357 = vmatprep.subr.bf16.mxu0 0
      %5358 = vmatpush2.bf16.msra.mxu0 0
      %5359 = vmatprep.subr.bf16.mxu0 0
      %5360 = vmatpush2.bf16.msra.mxu0 0
      %5361 = vmatprep.subr.bf16.mxu0 0
      %5362 = vmatpush2.bf16.msra.mxu0 0
      %5363 = vmatprep.subr.bf16.mxu0 0
      %5364 = vmatpush2.bf16.msra.mxu0 0
      %5365 = vmatprep.subr.bf16.mxu0 0
      %5366 = vmatpush2.bf16.msra.mxu0 0
      %5367 = vmatprep.subr.bf16.mxu0 0
      %5368 = vmatpush2.bf16.msra.mxu0 0
      %5369 = vmatprep.subr.bf16.mxu0 0
      %5370 = vmatpush2.bf16.msra.mxu0 0
      %5371 = vmatprep.mubr.bf16.mxu0 0
      %5372 = vmatmul.mubr.bf16.gmra.mxu0 %v5251
      %v5373 = vpop.f32.mrf.mxu0
      %v5374 = vadd.f32 0.0, %v5373
      %v5375 = vpop.f32.mrf.mxu0
      %v5376 = vadd.f32 0.0, %v5375
      %v5377 = vpop.f32.mrf.mxu0
      %v5378 = vadd.f32 0.0, %v5377
      %v5379 = vpop.f32.mrf.mxu0
      %v5380 = vadd.f32 0.0, %v5379
      %5381 = vmatprep.mubr.bf16.mxu0 0
      %5382 = vmatmul.mubr.bf16.gmra.mxu0 %v5252
      %v5383 = vpop.f32.mrf.mxu0
      %v5384 = vadd.f32 0.0, %v5383
      %v5385 = vpop.f32.mrf.mxu0
      %v5386 = vadd.f32 0.0, %v5385
      %v5387 = vpop.f32.mrf.mxu0
      %v5388 = vadd.f32 0.0, %v5387
      %v5389 = vpop.f32.mrf.mxu0
      %v5390 = vadd.f32 0.0, %v5389
      %5391 = vmatprep.mubr.bf16.mxu0 0
      %5392 = vmatmul.mubr.bf16.gmra.mxu0 %v5253
      %v5393 = vpop.f32.mrf.mxu0
      %v5394 = vadd.f32 0.0, %v5393
      %v5395 = vpop.f32.mrf.mxu0
      %v5396 = vadd.f32 0.0, %v5395
      %v5397 = vpop.f32.mrf.mxu0
      %v5398 = vadd.f32 0.0, %v5397
      %v5399 = vpop.f32.mrf.mxu0
      %v5400 = vadd.f32 0.0, %v5399
      %5401 = vmatprep.mubr.bf16.mxu0 0
      %5402 = vmatmul.mubr.bf16.gmra.mxu0 %v5254
      %v5403 = vpop.f32.mrf.mxu0
      %v5404 = vadd.f32 0.0, %v5403
      %v5405 = vpop.f32.mrf.mxu0
      %v5406 = vadd.f32 0.0, %v5405
      %v5407 = vpop.f32.mrf.mxu0
      %v5408 = vadd.f32 0.0, %v5407
      %v5409 = vpop.f32.mrf.mxu0
      %v5410 = vadd.f32 0.0, %v5409
      %5411 = vdwg.mxu0
      %v5412 = vadd.f32 %v5172, %v5374
      %v5413 = vadd.f32 %v5174, %v5376
      %v5414 = vadd.f32 %v5176, %v5378
      %v5415 = vadd.f32 %v5178, %v5380
      %v5416 = vadd.f32 %v5182, %v5384
      %v5417 = vadd.f32 %v5184, %v5386
      %v5418 = vadd.f32 %v5186, %v5388
      %v5419 = vadd.f32 %v5188, %v5390
      %v5420 = vadd.f32 %v5192, %v5394
      %v5421 = vadd.f32 %v5194, %v5396
      %v5422 = vadd.f32 %v5196, %v5398
      %v5423 = vadd.f32 %v5198, %v5400
      %v5424 = vadd.f32 %v5202, %v5404
      %v5425 = vadd.f32 %v5204, %v5406
      %v5426 = vadd.f32 %v5206, %v5408
      %v5427 = vadd.f32 %v5208, %v5410
      %v5428 = vld [vmem:[%s4] sm:$0x3]
      %v5430 = vlaneseq
      %v5431 = vshrl.u32 %v5430, 7
      %v5432 = vsub.s32 0, %v5431
      %v5433 = vrot.slane %v5428, %v5432
      %v5434 = vlaneseq
      %v5435 = vshrl.u32 %v5434, 7
      %v5436 = vsub.s32 1, %v5435
      %v5437 = vrot.slane %v5428, %v5436
      %v5440 = vadd.f32 %v5412, %v5433
      %v5441 = vadd.f32 %v5413, %v5437
      %v5442 = vadd.f32 %v5414, %v5433
      %v5443 = vadd.f32 %v5415, %v5437
      %v5444 = vadd.f32 %v5416, %v5433
      %v5445 = vadd.f32 %v5417, %v5437
      %v5446 = vadd.f32 %v5418, %v5433
      %v5447 = vadd.f32 %v5419, %v5437
      %v5448 = vadd.f32 %v5420, %v5433
      %v5449 = vadd.f32 %v5421, %v5437
      %v5450 = vadd.f32 %v5422, %v5433
      %v5451 = vadd.f32 %v5423, %v5437
      %v5452 = vadd.f32 %v5424, %v5433
      %v5453 = vadd.f32 %v5425, %v5437
      %v5454 = vadd.f32 %v5426, %v5433
      %v5455 = vadd.f32 %v5427, %v5437
      %v5456 = vtanh.pop %v5440
      %v5457 = vtanh.pop %v5441
      %v5458 = vtanh.pop %v5442
      %v5459 = vtanh.pop %v5443
      %v5460 = vtanh.pop %v5444
      %v5461 = vtanh.pop %v5445
      %v5462 = vtanh.pop %v5446
      %v5463 = vtanh.pop %v5447
      %v5464 = vtanh.pop %v5448
      %v5465 = vtanh.pop %v5449
      %v5466 = vtanh.pop %v5450
      %v5467 = vtanh.pop %v5451
      %v5468 = vtanh.pop %v5452
      %v5469 = vtanh.pop %v5453
      %v5470 = vtanh.pop %v5454
      %v5471 = vtanh.pop %v5455
      %v5472 = vmax.f32 %v5456, %v5457
      %v5473 = vmax.f32 %v5458, %v5459
      %v5474 = vmax.f32 %v5460, %v5461
      %v5475 = vmax.f32 %v5462, %v5463
      %v5476 = vmax.f32 %v5464, %v5465
      %v5477 = vmax.f32 %v5466, %v5467
      %v5478 = vmax.f32 %v5468, %v5469
      %v5479 = vmax.f32 %v5470, %v5471
      %v5480 = vmax.f32 %v5472, %v5476
      %v5481 = vmax.f32 %v5473, %v5477
      %v5482 = vmax.f32 %v5474, %v5478
      %v5483 = vmax.f32 %v5475, %v5479
      %v5484 = vld [vmem:[#allocation3] sm:$0xff]
      %v5485 = vld [vmem:[#allocation3 + $0x8] sm:$0xff]
      %v5486 = vld [vmem:[#allocation3 + $0x10] sm:$0xff]
      %v5487 = vld [vmem:[#allocation3 + $0x18] sm:$0xff]
      %v5488 = vld [vmem:[#allocation3 + $0x20] sm:$0xff]
      %v5489 = vld [vmem:[#allocation3 + $0x28] sm:$0xff]
      %v5490 = vld [vmem:[#allocation3 + $0x30] sm:$0xff]
      %v5491 = vld [vmem:[#allocation3 + $0x38] sm:$0xff]
      %v5492 = vld [vmem:[%s5] sm:$0xff]
      %v5493 = vld [vmem:[%s5 + $0x8] sm:$0xff]
      %v5494 = vld [vmem:[%s5 + $0x10] sm:$0xff]
      %v5495 = vld [vmem:[%s5 + $0x18] sm:$0xff]
      %v5496 = vld [vmem:[%s5 + $0x20] sm:$0xff]
      %v5497 = vld [vmem:[%s5 + $0x28] sm:$0xff]
      %v5498 = vld [vmem:[%s5 + $0x30] sm:$0xff]
      %v5499 = vld [vmem:[%s5 + $0x38] sm:$0xff]
      %v5500 = vld [vmem:[%s5 + $0x40] sm:$0xff]
      %v5501 = vld [vmem:[%s5 + $0x48] sm:$0xff]
      %v5502 = vld [vmem:[%s5 + $0x50] sm:$0xff]
      %v5503 = vld [vmem:[%s5 + $0x58] sm:$0xff]
      %v5504 = vld [vmem:[%s5 + $0x60] sm:$0xff]
      %v5505 = vld [vmem:[%s5 + $0x68] sm:$0xff]
      %v5506 = vld [vmem:[%s5 + $0x70] sm:$0xff]
      %v5507 = vld [vmem:[%s5 + $0x78] sm:$0xff]
      %v5508 = vld [vmem:[%s5 + $0x80] sm:$0xff]
      %v5509 = vld [vmem:[%s5 + $0x88] sm:$0xff]
      %v5510 = vld [vmem:[%s5 + $0x90] sm:$0xff]
      %v5511 = vld [vmem:[%s5 + $0x98] sm:$0xff]
      %v5512 = vld [vmem:[%s5 + $0xa0] sm:$0xff]
      %v5513 = vld [vmem:[%s5 + $0xa8] sm:$0xff]
      %v5514 = vld [vmem:[%s5 + $0xb0] sm:$0xff]
      %v5515 = vld [vmem:[%s5 + $0xb8] sm:$0xff]
      %v5516 = vld [vmem:[%s5 + $0xc0] sm:$0xff]
      %v5517 = vld [vmem:[%s5 + $0xc8] sm:$0xff]
      %v5518 = vld [vmem:[%s5 + $0xd0] sm:$0xff]
      %v5519 = vld [vmem:[%s5 + $0xd8] sm:$0xff]
      %v5520 = vld [vmem:[%s5 + $0xe0] sm:$0xff]
      %v5521 = vld [vmem:[%s5 + $0xe8] sm:$0xff]
      %v5522 = vld [vmem:[%s5 + $0xf0] sm:$0xff]
      %v5523 = vld [vmem:[%s5 + $0xf8] sm:$0xff]
      %5524 = vmatprep.subr.mxu0 %v5523
      %5525 = vmatpush1.msra.mxu0 %v5522
      %5526 = vmatprep.subr.mxu0 %v5521
      %5527 = vmatpush1.msra.mxu0 %v5520
      %5528 = vmatprep.subr.mxu0 %v5519
      %5529 = vmatpush1.msra.mxu0 %v5518
      %5530 = vmatprep.subr.mxu0 %v5517
      %5531 = vmatpush1.msra.mxu0 %v5516
      %5532 = vmatprep.subr.mxu0 %v5515
      %5533 = vmatpush1.msra.mxu0 %v5514
      %5534 = vmatprep.subr.mxu0 %v5513
      %5535 = vmatpush1.msra.mxu0 %v5512
      %5536 = vmatprep.subr.mxu0 %v5511
      %5537 = vmatpush1.msra.mxu0 %v5510
      %5538 = vmatprep.subr.mxu0 %v5509
      %5539 = vmatpush1.msra.mxu0 %v5508
      %5540 = vmatprep.subr.mxu0 %v5507
      %5541 = vmatpush1.msra.mxu0 %v5506
      %5542 = vmatprep.subr.mxu0 %v5505
      %5543 = vmatpush1.msra.mxu0 %v5504
      %5544 = vmatprep.subr.mxu0 %v5503
      %5545 = vmatpush1.msra.mxu0 %v5502
      %5546 = vmatprep.subr.mxu0 %v5501
      %5547 = vmatpush1.msra.mxu0 %v5500
      %5548 = vmatprep.subr.mxu0 %v5499
      %5549 = vmatpush1.msra.mxu0 %v5498
      %5550 = vmatprep.subr.mxu0 %v5497
      %5551 = vmatpush1.msra.mxu0 %v5496
      %5552 = vmatprep.subr.mxu0 %v5495
      %5553 = vmatpush1.msra.mxu0 %v5494
      %5554 = vmatprep.subr.mxu0 %v5493
      %5555 = vmatpush1.msra.mxu0 %v5492
      %5556 = vmatprep.subr.mxu0 0.0
      %5557 = vmatpush2.msra.mxu0 0.0
      %5558 = vmatprep.subr.mxu0 0.0
      %5559 = vmatpush2.msra.mxu0 0.0
      %5560 = vmatprep.subr.mxu0 0.0
      %5561 = vmatpush2.msra.mxu0 0.0
      %5562 = vmatprep.subr.mxu0 0.0
      %5563 = vmatpush2.msra.mxu0 0.0
      %5564 = vmatprep.subr.mxu0 0.0
      %5565 = vmatpush2.msra.mxu0 0.0
      %5566 = vmatprep.subr.mxu0 0.0
      %5567 = vmatpush2.msra.mxu0 0.0
      %5568 = vmatprep.subr.mxu0 0.0
      %5569 = vmatpush2.msra.mxu0 0.0
      %5570 = vmatprep.subr.mxu0 0.0
      %5571 = vmatpush2.msra.mxu0 0.0
      %5572 = vmatprep.subr.mxu0 0.0
      %5573 = vmatpush2.msra.mxu0 0.0
      %5574 = vmatprep.subr.mxu0 0.0
      %5575 = vmatpush2.msra.mxu0 0.0
      %5576 = vmatprep.subr.mxu0 0.0
      %5577 = vmatpush2.msra.mxu0 0.0
      %5578 = vmatprep.subr.mxu0 0.0
      %5579 = vmatpush2.msra.mxu0 0.0
      %5580 = vmatprep.subr.mxu0 0.0
      %5581 = vmatpush2.msra.mxu0 0.0
      %5582 = vmatprep.subr.mxu0 0.0
      %5583 = vmatpush2.msra.mxu0 0.0
      %5584 = vmatprep.subr.mxu0 0.0
      %5585 = vmatpush2.msra.mxu0 0.0
      %5586 = vmatprep.subr.mxu0 0.0
      %5587 = vmatpush2.msra.mxu0 0.0
      %5588 = vmatprep.mubr.f32.mxu0 0.0
      %5589 = vmatmul.mubr.f32.gmra.mxu0 %v5480
      %v5590 = vpop.f32.mrf.mxu0
      %v5591 = vadd.f32 0.0, %v5590
      %v5592 = vpop.f32.mrf.mxu0
      %v5593 = vadd.f32 0.0, %v5592
      %5594 = vmatprep.mubr.f32.mxu0 0.0
      %5595 = vmatmul.mubr.f32.gmra.mxu0 %v5481
      %v5596 = vpop.f32.mrf.mxu0
      %v5597 = vadd.f32 0.0, %v5596
      %v5598 = vpop.f32.mrf.mxu0
      %v5599 = vadd.f32 0.0, %v5598
      %5600 = vmatprep.mubr.f32.mxu0 0.0
      %5601 = vmatmul.mubr.f32.gmra.mxu0 %v5482
      %v5602 = vpop.f32.mrf.mxu0
      %v5603 = vadd.f32 0.0, %v5602
      %v5604 = vpop.f32.mrf.mxu0
      %v5605 = vadd.f32 0.0, %v5604
      %5606 = vmatprep.mubr.f32.mxu0 0.0
      %5607 = vmatmul.mubr.f32.gmra.mxu0 %v5483
      %v5608 = vpop.f32.mrf.mxu0
      %v5609 = vadd.f32 0.0, %v5608
      %v5610 = vpop.f32.mrf.mxu0
      %v5611 = vadd.f32 0.0, %v5610
      %5612 = vdwg.mxu0
      %v5613 = vadd.f32 %v5484, %v5591
      %v5614 = vadd.f32 %v5485, %v5593
      %v5615 = vadd.f32 %v5486, %v5597
      %v5616 = vadd.f32 %v5487, %v5599
      %v5617 = vadd.f32 %v5488, %v5603
      %v5618 = vadd.f32 %v5489, %v5605
      %v5619 = vadd.f32 %v5490, %v5609
      %v5620 = vadd.f32 %v5491, %v5611
      %5621 = vst [vmem:[#allocation3] sm:$0xff] %v5613
      %5622 = vst [vmem:[#allocation3 + $0x8] sm:$0xff] %v5614
      %5623 = vst [vmem:[#allocation3 + $0x10] sm:$0xff] %v5615
      %5624 = vst [vmem:[#allocation3 + $0x18] sm:$0xff] %v5616
      %5625 = vst [vmem:[#allocation3 + $0x20] sm:$0xff] %v5617
      %5626 = vst [vmem:[#allocation3 + $0x28] sm:$0xff] %v5618
      %5627 = vst [vmem:[#allocation3 + $0x30] sm:$0xff] %v5619
      %5628 = vst [vmem:[#allocation3 + $0x38] sm:$0xff] %v5620
      %v5629 = vld [vmem:[#allocation2 + $0x20] sm:$0xf]
      %v5630 = vld [vmem:[#allocation2 + $0x24] sm:$0xf]
      %v5631 = vld [vmem:[#allocation2 + $0x28] sm:$0xf]
      %v5632 = vld [vmem:[#allocation2 + $0x2c] sm:$0xf]
      %v5633 = vld [vmem:[#allocation2 + $0x30] sm:$0xf]
      %v5634 = vld [vmem:[#allocation2 + $0x34] sm:$0xf]
      %v5635 = vld [vmem:[#allocation2 + $0x38] sm:$0xf]
      %v5636 = vld [vmem:[#allocation2 + $0x3c] sm:$0xf]
      %v5637 = vld [vmem:[%s3] sm:$0xff]
      %v5638 = vld [vmem:[%s3 + $0x8] sm:$0xff]
      %v5639 = vld [vmem:[%s3 + $0x10] sm:$0xff]
      %v5640 = vld [vmem:[%s3 + $0x18] sm:$0xff]
      %v5641 = vld [vmem:[%s3 + $0x20] sm:$0xff]
      %v5642 = vld [vmem:[%s3 + $0x28] sm:$0xff]
      %v5643 = vld [vmem:[%s3 + $0x30] sm:$0xff]
      %v5644 = vld [vmem:[%s3 + $0x38] sm:$0xff]
      %v5645 = vld [vmem:[%s3 + $0x40] sm:$0xff]
      %v5646 = vld [vmem:[%s3 + $0x48] sm:$0xff]
      %v5647 = vld [vmem:[%s3 + $0x50] sm:$0xff]
      %v5648 = vld [vmem:[%s3 + $0x58] sm:$0xff]
      %v5649 = vld [vmem:[%s3 + $0x60] sm:$0xff]
      %v5650 = vld [vmem:[%s3 + $0x68] sm:$0xff]
      %v5651 = vld [vmem:[%s3 + $0x70] sm:$0xff]
      %v5652 = vld [vmem:[%s3 + $0x78] sm:$0xff]
      %v5653 = vld [vmem:[#allocation2 + $0x40] sm:$0xf]
      %v5654 = vld [vmem:[#allocation2 + $0x44] sm:$0xf]
      %v5655 = vld [vmem:[#allocation2 + $0x48] sm:$0xf]
      %v5656 = vld [vmem:[#allocation2 + $0x4c] sm:$0xf]
      %v5657 = vld [vmem:[%s4851] sm:$0xff]
      %v5658 = vld [vmem:[%s4851 + $0x8] sm:$0xff]
      %v5659 = vld [vmem:[%s4851 + $0x10] sm:$0xff]
      %v5660 = vld [vmem:[%s4851 + $0x18] sm:$0xff]
      %v5661 = vld [vmem:[%s4851 + $0x20] sm:$0xff]
      %v5662 = vld [vmem:[%s4851 + $0x28] sm:$0xff]
      %v5663 = vld [vmem:[%s4851 + $0x30] sm:$0xff]
      %v5664 = vld [vmem:[%s4851 + $0x38] sm:$0xff]
      %v5665 = vld [vmem:[%s4851 + $0x40] sm:$0xff]
      %v5666 = vld [vmem:[%s4851 + $0x48] sm:$0xff]
      %v5667 = vld [vmem:[%s4851 + $0x50] sm:$0xff]
      %v5668 = vld [vmem:[%s4851 + $0x58] sm:$0xff]
      %v5669 = vld [vmem:[%s4851 + $0x60] sm:$0xff]
      %v5670 = vld [vmem:[%s4851 + $0x68] sm:$0xff]
      %v5671 = vld [vmem:[%s4851 + $0x70] sm:$0xff]
      %v5672 = vld [vmem:[%s4851 + $0x78] sm:$0xff]
      %v5681 = vunpack.c.l.b16 %v5633
      %v5682 = vunpack.c.l.b16 %v5634
      %v5683 = vunpack.c.l.b16 %v5635
      %v5684 = vunpack.c.l.b16 %v5636
      %v5685 = vunpack.c.l.b16 %v5653
      %v5686 = vunpack.c.l.b16 %v5654
      %v5687 = vunpack.c.l.b16 %v5655
      %v5688 = vunpack.c.l.b16 %v5656
      %v5689 = vpack.c.b16 %v5682, %v5681
      %v5690 = vpack.c.b16 %v5684, %v5683
      %v5691 = vpack.c.b16 %v5686, %v5685
      %v5692 = vpack.c.b16 %v5688, %v5687
      %v5713 = vunpack.c.l.b16 %v5657
      %v5714 = vunpack.c.h.b16 %v5657
      %v5715 = vunpack.c.l.b16 %v5658
      %v5716 = vunpack.c.h.b16 %v5658
      %v5717 = vunpack.c.l.b16 %v5659
      %v5718 = vunpack.c.h.b16 %v5659
      %v5719 = vunpack.c.l.b16 %v5660
      %v5720 = vunpack.c.h.b16 %v5660
      %v5721 = vunpack.c.l.b16 %v5661
      %v5722 = vunpack.c.h.b16 %v5661
      %v5723 = vunpack.c.l.b16 %v5662
      %v5724 = vunpack.c.h.b16 %v5662
      %v5725 = vunpack.c.l.b16 %v5663
      %v5726 = vunpack.c.h.b16 %v5663
      %v5727 = vunpack.c.l.b16 %v5664
      %v5728 = vunpack.c.h.b16 %v5664
      %v5729 = vunpack.c.l.b16 %v5665
      %v5730 = vunpack.c.h.b16 %v5665
      %v5731 = vunpack.c.l.b16 %v5666
      %v5732 = vunpack.c.h.b16 %v5666
      %v5733 = vunpack.c.l.b16 %v5667
      %v5734 = vunpack.c.h.b16 %v5667
      %v5735 = vunpack.c.l.b16 %v5668
      %v5736 = vunpack.c.h.b16 %v5668
      %v5737 = vunpack.c.l.b16 %v5669
      %v5738 = vunpack.c.h.b16 %v5669
      %v5739 = vunpack.c.l.b16 %v5670
      %v5740 = vunpack.c.h.b16 %v5670
      %v5741 = vunpack.c.l.b16 %v5671
      %v5742 = vunpack.c.h.b16 %v5671
      %v5743 = vunpack.c.l.b16 %v5672
      %v5744 = vunpack.c.h.b16 %v5672
      %v5745 = vpack.c.b16 %v5715, %v5713
      %v5746 = vpack.c.b16 %v5716, %v5714
      %v5747 = vpack.c.b16 %v5719, %v5717
      %v5748 = vpack.c.b16 %v5720, %v5718
      %v5749 = vpack.c.b16 %v5723, %v5721
      %v5750 = vpack.c.b16 %v5724, %v5722
      %v5751 = vpack.c.b16 %v5727, %v5725
      %v5752 = vpack.c.b16 %v5728, %v5726
      %v5753 = vpack.c.b16 %v5731, %v5729
      %v5754 = vpack.c.b16 %v5732, %v5730
      %v5755 = vpack.c.b16 %v5735, %v5733
      %v5756 = vpack.c.b16 %v5736, %v5734
      %v5757 = vpack.c.b16 %v5739, %v5737
      %v5758 = vpack.c.b16 %v5740, %v5738
      %v5759 = vpack.c.b16 %v5743, %v5741
      %v5760 = vpack.c.b16 %v5744, %v5742
      %5777 = vmatprep.subr.bf16.mxu0 %v5760
      %5778 = vmatpush1.bf16.msra.mxu0 %v5759
      %5779 = vmatprep.subr.bf16.mxu0 %v5758
      %5780 = vmatpush1.bf16.msra.mxu0 %v5757
      %5781 = vmatprep.subr.bf16.mxu0 %v5756
      %5782 = vmatpush1.bf16.msra.mxu0 %v5755
      %5783 = vmatprep.subr.bf16.mxu0 %v5754
      %5784 = vmatpush1.bf16.msra.mxu0 %v5753
      %5785 = vmatprep.subr.bf16.mxu0 %v5752
      %5786 = vmatpush1.bf16.msra.mxu0 %v5751
      %5787 = vmatprep.subr.bf16.mxu0 %v5750
      %5788 = vmatpush1.bf16.msra.mxu0 %v5749
      %5789 = vmatprep.subr.bf16.mxu0 %v5748
      %5790 = vmatpush1.bf16.msra.mxu0 %v5747
      %5791 = vmatprep.subr.bf16.mxu0 %v5746
      %5792 = vmatpush1.bf16.msra.mxu0 %v5745
      %5793 = vmatprep.subr.bf16.mxu0 0
      %5794 = vmatpush2.bf16.msra.mxu0 0
      %5795 = vmatprep.subr.bf16.mxu0 0
      %5796 = vmatpush2.bf16.msra.mxu0 0
      %5797 = vmatprep.subr.bf16.mxu0 0
      %5798 = vmatpush2.bf16.msra.mxu0 0
      %5799 = vmatprep.subr.bf16.mxu0 0
      %5800 = vmatpush2.bf16.msra.mxu0 0
      %5801 = vmatprep.subr.bf16.mxu0 0
      %5802 = vmatpush2.bf16.msra.mxu0 0
      %5803 = vmatprep.subr.bf16.mxu0 0
      %5804 = vmatpush2.bf16.msra.mxu0 0
      %5805 = vmatprep.subr.bf16.mxu0 0
      %5806 = vmatpush2.bf16.msra.mxu0 0
      %5807 = vmatprep.subr.bf16.mxu0 0
      %5808 = vmatpush2.bf16.msra.mxu0 0
      %5809 = vmatprep.mubr.bf16.mxu0 0
      %5810 = vmatmul.mubr.bf16.gmra.mxu0 %v5689
      %v5811 = vpop.f32.mrf.mxu0
      %v5812 = vadd.f32 0.0, %v5811
      %v5813 = vpop.f32.mrf.mxu0
      %v5814 = vadd.f32 0.0, %v5813
      %v5815 = vpop.f32.mrf.mxu0
      %v5816 = vadd.f32 0.0, %v5815
      %v5817 = vpop.f32.mrf.mxu0
      %v5818 = vadd.f32 0.0, %v5817
      %5819 = vmatprep.mubr.bf16.mxu0 0
      %5820 = vmatmul.mubr.bf16.gmra.mxu0 %v5690
      %v5821 = vpop.f32.mrf.mxu0
      %v5822 = vadd.f32 0.0, %v5821
      %v5823 = vpop.f32.mrf.mxu0
      %v5824 = vadd.f32 0.0, %v5823
      %v5825 = vpop.f32.mrf.mxu0
      %v5826 = vadd.f32 0.0, %v5825
      %v5827 = vpop.f32.mrf.mxu0
      %v5828 = vadd.f32 0.0, %v5827
      %5829 = vmatprep.mubr.bf16.mxu0 0
      %5830 = vmatmul.mubr.bf16.gmra.mxu0 %v5691
      %v5831 = vpop.f32.mrf.mxu0
      %v5832 = vadd.f32 0.0, %v5831
      %v5833 = vpop.f32.mrf.mxu0
      %v5834 = vadd.f32 0.0, %v5833
      %v5835 = vpop.f32.mrf.mxu0
      %v5836 = vadd.f32 0.0, %v5835
      %v5837 = vpop.f32.mrf.mxu0
      %v5838 = vadd.f32 0.0, %v5837
      %5839 = vmatprep.mubr.bf16.mxu0 0
      %5840 = vmatmul.mubr.bf16.gmra.mxu0 %v5692
      %v5841 = vpop.f32.mrf.mxu0
      %v5842 = vadd.f32 0.0, %v5841
      %v5843 = vpop.f32.mrf.mxu0
      %v5844 = vadd.f32 0.0, %v5843
      %v5845 = vpop.f32.mrf.mxu0
      %v5846 = vadd.f32 0.0, %v5845
      %v5847 = vpop.f32.mrf.mxu0
      %v5848 = vadd.f32 0.0, %v5847
      %5849 = vdwg.mxu0
      %v5854 = vunpack.c.l.b16 %v5629
      %v5855 = vunpack.c.l.b16 %v5630
      %v5856 = vunpack.c.l.b16 %v5631
      %v5857 = vunpack.c.l.b16 %v5632
      %v5858 = vpack.c.b16 %v5855, %v5854
      %v5859 = vpack.c.b16 %v5857, %v5856
      %v5878 = vunpack.c.l.b16 %v5637
      %v5879 = vunpack.c.h.b16 %v5637
      %v5880 = vunpack.c.l.b16 %v5638
      %v5881 = vunpack.c.h.b16 %v5638
      %v5882 = vunpack.c.l.b16 %v5639
      %v5883 = vunpack.c.h.b16 %v5639
      %v5884 = vunpack.c.l.b16 %v5640
      %v5885 = vunpack.c.h.b16 %v5640
      %v5886 = vunpack.c.l.b16 %v5641
      %v5887 = vunpack.c.h.b16 %v5641
      %v5888 = vunpack.c.l.b16 %v5642
      %v5889 = vunpack.c.h.b16 %v5642
      %v5890 = vunpack.c.l.b16 %v5643
      %v5891 = vunpack.c.h.b16 %v5643
      %v5892 = vunpack.c.l.b16 %v5644
      %v5893 = vunpack.c.h.b16 %v5644
      %v5894 = vunpack.c.l.b16 %v5645
      %v5895 = vunpack.c.h.b16 %v5645
      %v5896 = vunpack.c.l.b16 %v5646
      %v5897 = vunpack.c.h.b16 %v5646
      %v5898 = vunpack.c.l.b16 %v5647
      %v5899 = vunpack.c.h.b16 %v5647
      %v5900 = vunpack.c.l.b16 %v5648
      %v5901 = vunpack.c.h.b16 %v5648
      %v5902 = vunpack.c.l.b16 %v5649
      %v5903 = vunpack.c.h.b16 %v5649
      %v5904 = vunpack.c.l.b16 %v5650
      %v5905 = vunpack.c.h.b16 %v5650
      %v5906 = vunpack.c.l.b16 %v5651
      %v5907 = vunpack.c.h.b16 %v5651
      %v5908 = vunpack.c.l.b16 %v5652
      %v5909 = vunpack.c.h.b16 %v5652
      %v5910 = vpack.c.b16 %v5880, %v5878
      %v5911 = vpack.c.b16 %v5881, %v5879
      %v5912 = vpack.c.b16 %v5884, %v5882
      %v5913 = vpack.c.b16 %v5885, %v5883
      %v5914 = vpack.c.b16 %v5888, %v5886
      %v5915 = vpack.c.b16 %v5889, %v5887
      %v5916 = vpack.c.b16 %v5892, %v5890
      %v5917 = vpack.c.b16 %v5893, %v5891
      %v5918 = vpack.c.b16 %v5896, %v5894
      %v5919 = vpack.c.b16 %v5897, %v5895
      %v5920 = vpack.c.b16 %v5900, %v5898
      %v5921 = vpack.c.b16 %v5901, %v5899
      %v5922 = vpack.c.b16 %v5904, %v5902
      %v5923 = vpack.c.b16 %v5905, %v5903
      %v5924 = vpack.c.b16 %v5908, %v5906
      %v5925 = vpack.c.b16 %v5909, %v5907
      %5942 = vmatprep.subr.bf16.mxu0 %v5925
      %5943 = vmatpush1.bf16.msra.mxu0 %v5924
      %5944 = vmatprep.subr.bf16.mxu0 %v5923
      %5945 = vmatpush1.bf16.msra.mxu0 %v5922
      %5946 = vmatprep.subr.bf16.mxu0 %v5921
      %5947 = vmatpush1.bf16.msra.mxu0 %v5920
      %5948 = vmatprep.subr.bf16.mxu0 %v5919
      %5949 = vmatpush1.bf16.msra.mxu0 %v5918
      %5950 = vmatprep.subr.bf16.mxu0 %v5917
      %5951 = vmatpush1.bf16.msra.mxu0 %v5916
      %5952 = vmatprep.subr.bf16.mxu0 %v5915
      %5953 = vmatpush1.bf16.msra.mxu0 %v5914
      %5954 = vmatprep.subr.bf16.mxu0 %v5913
      %5955 = vmatpush1.bf16.msra.mxu0 %v5912
      %5956 = vmatprep.subr.bf16.mxu0 %v5911
      %5957 = vmatpush1.bf16.msra.mxu0 %v5910
      %5958 = vmatprep.subr.bf16.mxu0 0
      %5959 = vmatpush2.bf16.msra.mxu0 0
      %5960 = vmatprep.subr.bf16.mxu0 0
      %5961 = vmatpush2.bf16.msra.mxu0 0
      %5962 = vmatprep.subr.bf16.mxu0 0
      %5963 = vmatpush2.bf16.msra.mxu0 0
      %5964 = vmatprep.subr.bf16.mxu0 0
      %5965 = vmatpush2.bf16.msra.mxu0 0
      %5966 = vmatprep.subr.bf16.mxu0 0
      %5967 = vmatpush2.bf16.msra.mxu0 0
      %5968 = vmatprep.subr.bf16.mxu0 0
      %5969 = vmatpush2.bf16.msra.mxu0 0
      %5970 = vmatprep.subr.bf16.mxu0 0
      %5971 = vmatpush2.bf16.msra.mxu0 0
      %5972 = vmatprep.subr.bf16.mxu0 0
      %5973 = vmatpush2.bf16.msra.mxu0 0
      %5974 = vmatprep.mubr.bf16.mxu0 0
      %5975 = vmatmul.mubr.bf16.gmra.mxu0 %v5858
      %v5976 = vpop.f32.mrf.mxu0
      %v5977 = vadd.f32 %v5812, %v5976
      %v5978 = vpop.f32.mrf.mxu0
      %v5979 = vadd.f32 %v5814, %v5978
      %v5980 = vpop.f32.mrf.mxu0
      %v5981 = vadd.f32 %v5816, %v5980
      %v5982 = vpop.f32.mrf.mxu0
      %v5983 = vadd.f32 %v5818, %v5982
      %5984 = vmatprep.mubr.bf16.mxu0 0
      %5985 = vmatmul.mubr.bf16.gmra.mxu0 %v5859
      %v5986 = vpop.f32.mrf.mxu0
      %v5987 = vadd.f32 %v5822, %v5986
      %v5988 = vpop.f32.mrf.mxu0
      %v5989 = vadd.f32 %v5824, %v5988
      %v5990 = vpop.f32.mrf.mxu0
      %v5991 = vadd.f32 %v5826, %v5990
      %v5992 = vpop.f32.mrf.mxu0
      %v5993 = vadd.f32 %v5828, %v5992
      %5994 = vmatprep.mubr.bf16.mxu0 0
      %5995 = vmatmul.mubr.bf16.gmra.mxu0 %v5689
      %v5996 = vpop.f32.mrf.mxu0
      %v5997 = vadd.f32 %v5832, %v5996
      %v5998 = vpop.f32.mrf.mxu0
      %v5999 = vadd.f32 %v5834, %v5998
      %v6000 = vpop.f32.mrf.mxu0
      %v6001 = vadd.f32 %v5836, %v6000
      %v6002 = vpop.f32.mrf.mxu0
      %v6003 = vadd.f32 %v5838, %v6002
      %6004 = vmatprep.mubr.bf16.mxu0 0
      %6005 = vmatmul.mubr.bf16.gmra.mxu0 %v5690
      %v6006 = vpop.f32.mrf.mxu0
      %v6007 = vadd.f32 %v5842, %v6006
      %v6008 = vpop.f32.mrf.mxu0
      %v6009 = vadd.f32 %v5844, %v6008
      %v6010 = vpop.f32.mrf.mxu0
      %v6011 = vadd.f32 %v5846, %v6010
      %v6012 = vpop.f32.mrf.mxu0
      %v6013 = vadd.f32 %v5848, %v6012
      %6014 = vdwg.mxu0
      %v6015 = vld [vmem:[#allocation2 + $0x40] sm:$0xf]
      %v6016 = vld [vmem:[#allocation2 + $0x44] sm:$0xf]
      %v6017 = vld [vmem:[#allocation2 + $0x48] sm:$0xf]
      %v6018 = vld [vmem:[#allocation2 + $0x4c] sm:$0xf]
      %v6019 = vld [vmem:[#allocation2 + $0x50] sm:$0xf]
      %v6020 = vld [vmem:[#allocation2 + $0x54] sm:$0xf]
      %v6021 = vld [vmem:[#allocation2 + $0x58] sm:$0xf]
      %v6022 = vld [vmem:[#allocation2 + $0x5c] sm:$0xf]
      %v6023 = vld [vmem:[%s5218] sm:$0xff]
      %v6024 = vld [vmem:[%s5218 + $0x8] sm:$0xff]
      %v6025 = vld [vmem:[%s5218 + $0x10] sm:$0xff]
      %v6026 = vld [vmem:[%s5218 + $0x18] sm:$0xff]
      %v6027 = vld [vmem:[%s5218 + $0x20] sm:$0xff]
      %v6028 = vld [vmem:[%s5218 + $0x28] sm:$0xff]
      %v6029 = vld [vmem:[%s5218 + $0x30] sm:$0xff]
      %v6030 = vld [vmem:[%s5218 + $0x38] sm:$0xff]
      %v6031 = vld [vmem:[%s5218 + $0x40] sm:$0xff]
      %v6032 = vld [vmem:[%s5218 + $0x48] sm:$0xff]
      %v6033 = vld [vmem:[%s5218 + $0x50] sm:$0xff]
      %v6034 = vld [vmem:[%s5218 + $0x58] sm:$0xff]
      %v6035 = vld [vmem:[%s5218 + $0x60] sm:$0xff]
      %v6036 = vld [vmem:[%s5218 + $0x68] sm:$0xff]
      %v6037 = vld [vmem:[%s5218 + $0x70] sm:$0xff]
      %v6038 = vld [vmem:[%s5218 + $0x78] sm:$0xff]
      %v6047 = vunpack.c.l.b16 %v6015
      %v6048 = vunpack.c.l.b16 %v6016
      %v6049 = vunpack.c.l.b16 %v6017
      %v6050 = vunpack.c.l.b16 %v6018
      %v6051 = vunpack.c.l.b16 %v6019
      %v6052 = vunpack.c.l.b16 %v6020
      %v6053 = vunpack.c.l.b16 %v6021
      %v6054 = vunpack.c.l.b16 %v6022
      %v6055 = vpack.c.b16 %v6048, %v6047
      %v6056 = vpack.c.b16 %v6050, %v6049
      %v6057 = vpack.c.b16 %v6052, %v6051
      %v6058 = vpack.c.b16 %v6054, %v6053
      %v6079 = vunpack.c.l.b16 %v6023
      %v6080 = vunpack.c.h.b16 %v6023
      %v6081 = vunpack.c.l.b16 %v6024
      %v6082 = vunpack.c.h.b16 %v6024
      %v6083 = vunpack.c.l.b16 %v6025
      %v6084 = vunpack.c.h.b16 %v6025
      %v6085 = vunpack.c.l.b16 %v6026
      %v6086 = vunpack.c.h.b16 %v6026
      %v6087 = vunpack.c.l.b16 %v6027
      %v6088 = vunpack.c.h.b16 %v6027
      %v6089 = vunpack.c.l.b16 %v6028
      %v6090 = vunpack.c.h.b16 %v6028
      %v6091 = vunpack.c.l.b16 %v6029
      %v6092 = vunpack.c.h.b16 %v6029
      %v6093 = vunpack.c.l.b16 %v6030
      %v6094 = vunpack.c.h.b16 %v6030
      %v6095 = vunpack.c.l.b16 %v6031
      %v6096 = vunpack.c.h.b16 %v6031
      %v6097 = vunpack.c.l.b16 %v6032
      %v6098 = vunpack.c.h.b16 %v6032
      %v6099 = vunpack.c.l.b16 %v6033
      %v6100 = vunpack.c.h.b16 %v6033
      %v6101 = vunpack.c.l.b16 %v6034
      %v6102 = vunpack.c.h.b16 %v6034
      %v6103 = vunpack.c.l.b16 %v6035
      %v6104 = vunpack.c.h.b16 %v6035
      %v6105 = vunpack.c.l.b16 %v6036
      %v6106 = vunpack.c.h.b16 %v6036
      %v6107 = vunpack.c.l.b16 %v6037
      %v6108 = vunpack.c.h.b16 %v6037
      %v6109 = vunpack.c.l.b16 %v6038
      %v6110 = vunpack.c.h.b16 %v6038
      %v6111 = vpack.c.b16 %v6081, %v6079
      %v6112 = vpack.c.b16 %v6082, %v6080
      %v6113 = vpack.c.b16 %v6085, %v6083
      %v6114 = vpack.c.b16 %v6086, %v6084
      %v6115 = vpack.c.b16 %v6089, %v6087
      %v6116 = vpack.c.b16 %v6090, %v6088
      %v6117 = vpack.c.b16 %v6093, %v6091
      %v6118 = vpack.c.b16 %v6094, %v6092
      %v6119 = vpack.c.b16 %v6097, %v6095
      %v6120 = vpack.c.b16 %v6098, %v6096
      %v6121 = vpack.c.b16 %v6101, %v6099
      %v6122 = vpack.c.b16 %v6102, %v6100
      %v6123 = vpack.c.b16 %v6105, %v6103
      %v6124 = vpack.c.b16 %v6106, %v6104
      %v6125 = vpack.c.b16 %v6109, %v6107
      %v6126 = vpack.c.b16 %v6110, %v6108
      %6143 = vmatprep.subr.bf16.mxu0 %v6126
      %6144 = vmatpush1.bf16.msra.mxu0 %v6125
      %6145 = vmatprep.subr.bf16.mxu0 %v6124
      %6146 = vmatpush1.bf16.msra.mxu0 %v6123
      %6147 = vmatprep.subr.bf16.mxu0 %v6122
      %6148 = vmatpush1.bf16.msra.mxu0 %v6121
      %6149 = vmatprep.subr.bf16.mxu0 %v6120
      %6150 = vmatpush1.bf16.msra.mxu0 %v6119
      %6151 = vmatprep.subr.bf16.mxu0 %v6118
      %6152 = vmatpush1.bf16.msra.mxu0 %v6117
      %6153 = vmatprep.subr.bf16.mxu0 %v6116
      %6154 = vmatpush1.bf16.msra.mxu0 %v6115
      %6155 = vmatprep.subr.bf16.mxu0 %v6114
      %6156 = vmatpush1.bf16.msra.mxu0 %v6113
      %6157 = vmatprep.subr.bf16.mxu0 %v6112
      %6158 = vmatpush1.bf16.msra.mxu0 %v6111
      %6159 = vmatprep.subr.bf16.mxu0 0
      %6160 = vmatpush2.bf16.msra.mxu0 0
      %6161 = vmatprep.subr.bf16.mxu0 0
      %6162 = vmatpush2.bf16.msra.mxu0 0
      %6163 = vmatprep.subr.bf16.mxu0 0
      %6164 = vmatpush2.bf16.msra.mxu0 0
      %6165 = vmatprep.subr.bf16.mxu0 0
      %6166 = vmatpush2.bf16.msra.mxu0 0
      %6167 = vmatprep.subr.bf16.mxu0 0
      %6168 = vmatpush2.bf16.msra.mxu0 0
      %6169 = vmatprep.subr.bf16.mxu0 0
      %6170 = vmatpush2.bf16.msra.mxu0 0
      %6171 = vmatprep.subr.bf16.mxu0 0
      %6172 = vmatpush2.bf16.msra.mxu0 0
      %6173 = vmatprep.subr.bf16.mxu0 0
      %6174 = vmatpush2.bf16.msra.mxu0 0
      %6175 = vmatprep.mubr.bf16.mxu0 0
      %6176 = vmatmul.mubr.bf16.gmra.mxu0 %v6055
      %v6177 = vpop.f32.mrf.mxu0
      %v6178 = vadd.f32 0.0, %v6177
      %v6179 = vpop.f32.mrf.mxu0
      %v6180 = vadd.f32 0.0, %v6179
      %v6181 = vpop.f32.mrf.mxu0
      %v6182 = vadd.f32 0.0, %v6181
      %v6183 = vpop.f32.mrf.mxu0
      %v6184 = vadd.f32 0.0, %v6183
      %6185 = vmatprep.mubr.bf16.mxu0 0
      %6186 = vmatmul.mubr.bf16.gmra.mxu0 %v6056
      %v6187 = vpop.f32.mrf.mxu0
      %v6188 = vadd.f32 0.0, %v6187
      %v6189 = vpop.f32.mrf.mxu0
      %v6190 = vadd.f32 0.0, %v6189
      %v6191 = vpop.f32.mrf.mxu0
      %v6192 = vadd.f32 0.0, %v6191
      %v6193 = vpop.f32.mrf.mxu0
      %v6194 = vadd.f32 0.0, %v6193
      %6195 = vmatprep.mubr.bf16.mxu0 0
      %6196 = vmatmul.mubr.bf16.gmra.mxu0 %v6057
      %v6197 = vpop.f32.mrf.mxu0
      %v6198 = vadd.f32 0.0, %v6197
      %v6199 = vpop.f32.mrf.mxu0
      %v6200 = vadd.f32 0.0, %v6199
      %v6201 = vpop.f32.mrf.mxu0
      %v6202 = vadd.f32 0.0, %v6201
      %v6203 = vpop.f32.mrf.mxu0
      %v6204 = vadd.f32 0.0, %v6203
      %6205 = vmatprep.mubr.bf16.mxu0 0
      %6206 = vmatmul.mubr.bf16.gmra.mxu0 %v6058
      %v6207 = vpop.f32.mrf.mxu0
      %v6208 = vadd.f32 0.0, %v6207
      %v6209 = vpop.f32.mrf.mxu0
      %v6210 = vadd.f32 0.0, %v6209
      %v6211 = vpop.f32.mrf.mxu0
      %v6212 = vadd.f32 0.0, %v6211
      %v6213 = vpop.f32.mrf.mxu0
      %v6214 = vadd.f32 0.0, %v6213
      %6215 = vdwg.mxu0
      %v6216 = vadd.f32 %v5977, %v6178
      %v6217 = vadd.f32 %v5979, %v6180
      %v6218 = vadd.f32 %v5981, %v6182
      %v6219 = vadd.f32 %v5983, %v6184
      %v6220 = vadd.f32 %v5987, %v6188
      %v6221 = vadd.f32 %v5989, %v6190
      %v6222 = vadd.f32 %v5991, %v6192
      %v6223 = vadd.f32 %v5993, %v6194
      %v6224 = vadd.f32 %v5997, %v6198
      %v6225 = vadd.f32 %v5999, %v6200
      %v6226 = vadd.f32 %v6001, %v6202
      %v6227 = vadd.f32 %v6003, %v6204
      %v6228 = vadd.f32 %v6007, %v6208
      %v6229 = vadd.f32 %v6009, %v6210
      %v6230 = vadd.f32 %v6011, %v6212
      %v6231 = vadd.f32 %v6013, %v6214
      %v6232 = vld [vmem:[%s4] sm:$0x3]
      %v6234 = vlaneseq
      %v6235 = vshrl.u32 %v6234, 7
      %v6236 = vsub.s32 0, %v6235
      %v6237 = vrot.slane %v6232, %v6236
      %v6238 = vlaneseq
      %v6239 = vshrl.u32 %v6238, 7
      %v6240 = vsub.s32 1, %v6239
      %v6241 = vrot.slane %v6232, %v6240
      %v6244 = vadd.f32 %v6216, %v6237
      %v6245 = vadd.f32 %v6217, %v6241
      %v6246 = vadd.f32 %v6218, %v6237
      %v6247 = vadd.f32 %v6219, %v6241
      %v6248 = vadd.f32 %v6220, %v6237
      %v6249 = vadd.f32 %v6221, %v6241
      %v6250 = vadd.f32 %v6222, %v6237
      %v6251 = vadd.f32 %v6223, %v6241
      %v6252 = vadd.f32 %v6224, %v6237
      %v6253 = vadd.f32 %v6225, %v6241
      %v6254 = vadd.f32 %v6226, %v6237
      %v6255 = vadd.f32 %v6227, %v6241
      %v6256 = vadd.f32 %v6228, %v6237
      %v6257 = vadd.f32 %v6229, %v6241
      %v6258 = vadd.f32 %v6230, %v6237
      %v6259 = vadd.f32 %v6231, %v6241
      %v6260 = vtanh.pop %v6244
      %v6261 = vtanh.pop %v6245
      %v6262 = vtanh.pop %v6246
      %v6263 = vtanh.pop %v6247
      %v6264 = vtanh.pop %v6248
      %v6265 = vtanh.pop %v6249
      %v6266 = vtanh.pop %v6250
      %v6267 = vtanh.pop %v6251
      %v6268 = vtanh.pop %v6252
      %v6269 = vtanh.pop %v6253
      %v6270 = vtanh.pop %v6254
      %v6271 = vtanh.pop %v6255
      %v6272 = vtanh.pop %v6256
      %v6273 = vtanh.pop %v6257
      %v6274 = vtanh.pop %v6258
      %v6275 = vtanh.pop %v6259
      %v6276 = vmax.f32 %v6260, %v6261
      %v6277 = vmax.f32 %v6262, %v6263
      %v6278 = vmax.f32 %v6264, %v6265
      %v6279 = vmax.f32 %v6266, %v6267
      %v6280 = vmax.f32 %v6268, %v6269
      %v6281 = vmax.f32 %v6270, %v6271
      %v6282 = vmax.f32 %v6272, %v6273
      %v6283 = vmax.f32 %v6274, %v6275
      %v6284 = vmax.f32 %v6276, %v6280
      %v6285 = vmax.f32 %v6277, %v6281
      %v6286 = vmax.f32 %v6278, %v6282
      %v6287 = vmax.f32 %v6279, %v6283
      %v6288 = vld [vmem:[#allocation3] sm:$0xff]
      %v6289 = vld [vmem:[#allocation3 + $0x8] sm:$0xff]
      %v6290 = vld [vmem:[#allocation3 + $0x10] sm:$0xff]
      %v6291 = vld [vmem:[#allocation3 + $0x18] sm:$0xff]
      %v6292 = vld [vmem:[#allocation3 + $0x20] sm:$0xff]
      %v6293 = vld [vmem:[#allocation3 + $0x28] sm:$0xff]
      %v6294 = vld [vmem:[#allocation3 + $0x30] sm:$0xff]
      %v6295 = vld [vmem:[#allocation3 + $0x38] sm:$0xff]
      %s6296 = scalar_lea.vmem %s5, 256
      %v6297 = vld [vmem:[%s6296] sm:$0xff]
      %v6298 = vld [vmem:[%s6296 + $0x8] sm:$0xff]
      %v6299 = vld [vmem:[%s6296 + $0x10] sm:$0xff]
      %v6300 = vld [vmem:[%s6296 + $0x18] sm:$0xff]
      %v6301 = vld [vmem:[%s6296 + $0x20] sm:$0xff]
      %v6302 = vld [vmem:[%s6296 + $0x28] sm:$0xff]
      %v6303 = vld [vmem:[%s6296 + $0x30] sm:$0xff]
      %v6304 = vld [vmem:[%s6296 + $0x38] sm:$0xff]
      %v6305 = vld [vmem:[%s6296 + $0x40] sm:$0xff]
      %v6306 = vld [vmem:[%s6296 + $0x48] sm:$0xff]
      %v6307 = vld [vmem:[%s6296 + $0x50] sm:$0xff]
      %v6308 = vld [vmem:[%s6296 + $0x58] sm:$0xff]
      %v6309 = vld [vmem:[%s6296 + $0x60] sm:$0xff]
      %v6310 = vld [vmem:[%s6296 + $0x68] sm:$0xff]
      %v6311 = vld [vmem:[%s6296 + $0x70] sm:$0xff]
      %v6312 = vld [vmem:[%s6296 + $0x78] sm:$0xff]
      %v6313 = vld [vmem:[%s6296 + $0x80] sm:$0xff]
      %v6314 = vld [vmem:[%s6296 + $0x88] sm:$0xff]
      %v6315 = vld [vmem:[%s6296 + $0x90] sm:$0xff]
      %v6316 = vld [vmem:[%s6296 + $0x98] sm:$0xff]
      %v6317 = vld [vmem:[%s6296 + $0xa0] sm:$0xff]
      %v6318 = vld [vmem:[%s6296 + $0xa8] sm:$0xff]
      %v6319 = vld [vmem:[%s6296 + $0xb0] sm:$0xff]
      %v6320 = vld [vmem:[%s6296 + $0xb8] sm:$0xff]
      %v6321 = vld [vmem:[%s6296 + $0xc0] sm:$0xff]
      %v6322 = vld [vmem:[%s6296 + $0xc8] sm:$0xff]
      %v6323 = vld [vmem:[%s6296 + $0xd0] sm:$0xff]
      %v6324 = vld [vmem:[%s6296 + $0xd8] sm:$0xff]
      %v6325 = vld [vmem:[%s6296 + $0xe0] sm:$0xff]
      %v6326 = vld [vmem:[%s6296 + $0xe8] sm:$0xff]
      %v6327 = vld [vmem:[%s6296 + $0xf0] sm:$0xff]
      %v6328 = vld [vmem:[%s6296 + $0xf8] sm:$0xff]
      %6329 = vmatprep.subr.mxu0 %v6328
      %6330 = vmatpush1.msra.mxu0 %v6327
      %6331 = vmatprep.subr.mxu0 %v6326
      %6332 = vmatpush1.msra.mxu0 %v6325
      %6333 = vmatprep.subr.mxu0 %v6324
      %6334 = vmatpush1.msra.mxu0 %v6323
      %6335 = vmatprep.subr.mxu0 %v6322
      %6336 = vmatpush1.msra.mxu0 %v6321
      %6337 = vmatprep.subr.mxu0 %v6320
      %6338 = vmatpush1.msra.mxu0 %v6319
      %6339 = vmatprep.subr.mxu0 %v6318
      %6340 = vmatpush1.msra.mxu0 %v6317
      %6341 = vmatprep.subr.mxu0 %v6316
      %6342 = vmatpush1.msra.mxu0 %v6315
      %6343 = vmatprep.subr.mxu0 %v6314
      %6344 = vmatpush1.msra.mxu0 %v6313
      %6345 = vmatprep.subr.mxu0 %v6312
      %6346 = vmatpush1.msra.mxu0 %v6311
      %6347 = vmatprep.subr.mxu0 %v6310
      %6348 = vmatpush1.msra.mxu0 %v6309
      %6349 = vmatprep.subr.mxu0 %v6308
      %6350 = vmatpush1.msra.mxu0 %v6307
      %6351 = vmatprep.subr.mxu0 %v6306
      %6352 = vmatpush1.msra.mxu0 %v6305
      %6353 = vmatprep.subr.mxu0 %v6304
      %6354 = vmatpush1.msra.mxu0 %v6303
      %6355 = vmatprep.subr.mxu0 %v6302
      %6356 = vmatpush1.msra.mxu0 %v6301
      %6357 = vmatprep.subr.mxu0 %v6300
      %6358 = vmatpush1.msra.mxu0 %v6299
      %6359 = vmatprep.subr.mxu0 %v6298
      %6360 = vmatpush1.msra.mxu0 %v6297
      %6361 = vmatprep.subr.mxu0 0.0
      %6362 = vmatpush2.msra.mxu0 0.0
      %6363 = vmatprep.subr.mxu0 0.0
      %6364 = vmatpush2.msra.mxu0 0.0
      %6365 = vmatprep.subr.mxu0 0.0
      %6366 = vmatpush2.msra.mxu0 0.0
      %6367 = vmatprep.subr.mxu0 0.0
      %6368 = vmatpush2.msra.mxu0 0.0
      %6369 = vmatprep.subr.mxu0 0.0
      %6370 = vmatpush2.msra.mxu0 0.0
      %6371 = vmatprep.subr.mxu0 0.0
      %6372 = vmatpush2.msra.mxu0 0.0
      %6373 = vmatprep.subr.mxu0 0.0
      %6374 = vmatpush2.msra.mxu0 0.0
      %6375 = vmatprep.subr.mxu0 0.0
      %6376 = vmatpush2.msra.mxu0 0.0
      %6377 = vmatprep.subr.mxu0 0.0
      %6378 = vmatpush2.msra.mxu0 0.0
      %6379 = vmatprep.subr.mxu0 0.0
      %6380 = vmatpush2.msra.mxu0 0.0
      %6381 = vmatprep.subr.mxu0 0.0
      %6382 = vmatpush2.msra.mxu0 0.0
      %6383 = vmatprep.subr.mxu0 0.0
      %6384 = vmatpush2.msra.mxu0 0.0
      %6385 = vmatprep.subr.mxu0 0.0
      %6386 = vmatpush2.msra.mxu0 0.0
      %6387 = vmatprep.subr.mxu0 0.0
      %6388 = vmatpush2.msra.mxu0 0.0
      %6389 = vmatprep.subr.mxu0 0.0
      %6390 = vmatpush2.msra.mxu0 0.0
      %6391 = vmatprep.subr.mxu0 0.0
      %6392 = vmatpush2.msra.mxu0 0.0
      %6393 = vmatprep.mubr.f32.mxu0 0.0
      %6394 = vmatmul.mubr.f32.gmra.mxu0 %v6284
      %v6395 = vpop.f32.mrf.mxu0
      %v6396 = vadd.f32 0.0, %v6395
      %v6397 = vpop.f32.mrf.mxu0
      %v6398 = vadd.f32 0.0, %v6397
      %6399 = vmatprep.mubr.f32.mxu0 0.0
      %6400 = vmatmul.mubr.f32.gmra.mxu0 %v6285
      %v6401 = vpop.f32.mrf.mxu0
      %v6402 = vadd.f32 0.0, %v6401
      %v6403 = vpop.f32.mrf.mxu0
      %v6404 = vadd.f32 0.0, %v6403
      %6405 = vmatprep.mubr.f32.mxu0 0.0
      %6406 = vmatmul.mubr.f32.gmra.mxu0 %v6286
      %v6407 = vpop.f32.mrf.mxu0
      %v6408 = vadd.f32 0.0, %v6407
      %v6409 = vpop.f32.mrf.mxu0
      %v6410 = vadd.f32 0.0, %v6409
      %6411 = vmatprep.mubr.f32.mxu0 0.0
      %6412 = vmatmul.mubr.f32.gmra.mxu0 %v6287
      %v6413 = vpop.f32.mrf.mxu0
      %v6414 = vadd.f32 0.0, %v6413
      %v6415 = vpop.f32.mrf.mxu0
      %v6416 = vadd.f32 0.0, %v6415
      %6417 = vdwg.mxu0
      %v6418 = vadd.f32 %v6288, %v6396
      %v6419 = vadd.f32 %v6289, %v6398
      %v6420 = vadd.f32 %v6290, %v6402
      %v6421 = vadd.f32 %v6291, %v6404
      %v6422 = vadd.f32 %v6292, %v6408
      %v6423 = vadd.f32 %v6293, %v6410
      %v6424 = vadd.f32 %v6294, %v6414
      %v6425 = vadd.f32 %v6295, %v6416
      %6426 = vst [vmem:[#allocation3] sm:$0xff] %v6418
      %6427 = vst [vmem:[#allocation3 + $0x8] sm:$0xff] %v6419
      %6428 = vst [vmem:[#allocation3 + $0x10] sm:$0xff] %v6420
      %6429 = vst [vmem:[#allocation3 + $0x18] sm:$0xff] %v6421
      %6430 = vst [vmem:[#allocation3 + $0x20] sm:$0xff] %v6422
      %6431 = vst [vmem:[#allocation3 + $0x28] sm:$0xff] %v6423
      %6432 = vst [vmem:[#allocation3 + $0x30] sm:$0xff] %v6424
      %6433 = vst [vmem:[#allocation3 + $0x38] sm:$0xff] %v6425
      %v6434 = vld [vmem:[#allocation2 + $0x40] sm:$0xf]
      %v6435 = vld [vmem:[#allocation2 + $0x44] sm:$0xf]
      %v6436 = vld [vmem:[#allocation2 + $0x48] sm:$0xf]
      %v6437 = vld [vmem:[#allocation2 + $0x4c] sm:$0xf]
      %v6438 = vld [vmem:[#allocation2 + $0x50] sm:$0xf]
      %v6439 = vld [vmem:[#allocation2 + $0x54] sm:$0xf]
      %v6440 = vld [vmem:[#allocation2 + $0x58] sm:$0xf]
      %v6441 = vld [vmem:[#allocation2 + $0x5c] sm:$0xf]
      %v6442 = vld [vmem:[%s3] sm:$0xff]
      %v6443 = vld [vmem:[%s3 + $0x8] sm:$0xff]
      %v6444 = vld [vmem:[%s3 + $0x10] sm:$0xff]
      %v6445 = vld [vmem:[%s3 + $0x18] sm:$0xff]
      %v6446 = vld [vmem:[%s3 + $0x20] sm:$0xff]
      %v6447 = vld [vmem:[%s3 + $0x28] sm:$0xff]
      %v6448 = vld [vmem:[%s3 + $0x30] sm:$0xff]
      %v6449 = vld [vmem:[%s3 + $0x38] sm:$0xff]
      %v6450 = vld [vmem:[%s3 + $0x40] sm:$0xff]
      %v6451 = vld [vmem:[%s3 + $0x48] sm:$0xff]
      %v6452 = vld [vmem:[%s3 + $0x50] sm:$0xff]
      %v6453 = vld [vmem:[%s3 + $0x58] sm:$0xff]
      %v6454 = vld [vmem:[%s3 + $0x60] sm:$0xff]
      %v6455 = vld [vmem:[%s3 + $0x68] sm:$0xff]
      %v6456 = vld [vmem:[%s3 + $0x70] sm:$0xff]
      %v6457 = vld [vmem:[%s3 + $0x78] sm:$0xff]
      %v6458 = vld [vmem:[#allocation2 + $0x60] sm:$0xf]
      %v6459 = vld [vmem:[#allocation2 + $0x64] sm:$0xf]
      %v6460 = vld [vmem:[#allocation2 + $0x68] sm:$0xf]
      %v6461 = vld [vmem:[#allocation2 + $0x6c] sm:$0xf]
      %v6462 = vld [vmem:[%s4851] sm:$0xff]
      %v6463 = vld [vmem:[%s4851 + $0x8] sm:$0xff]
      %v6464 = vld [vmem:[%s4851 + $0x10] sm:$0xff]
      %v6465 = vld [vmem:[%s4851 + $0x18] sm:$0xff]
      %v6466 = vld [vmem:[%s4851 + $0x20] sm:$0xff]
      %v6467 = vld [vmem:[%s4851 + $0x28] sm:$0xff]
      %v6468 = vld [vmem:[%s4851 + $0x30] sm:$0xff]
      %v6469 = vld [vmem:[%s4851 + $0x38] sm:$0xff]
      %v6470 = vld [vmem:[%s4851 + $0x40] sm:$0xff]
      %v6471 = vld [vmem:[%s4851 + $0x48] sm:$0xff]
      %v6472 = vld [vmem:[%s4851 + $0x50] sm:$0xff]
      %v6473 = vld [vmem:[%s4851 + $0x58] sm:$0xff]
      %v6474 = vld [vmem:[%s4851 + $0x60] sm:$0xff]
      %v6475 = vld [vmem:[%s4851 + $0x68] sm:$0xff]
      %v6476 = vld [vmem:[%s4851 + $0x70] sm:$0xff]
      %v6477 = vld [vmem:[%s4851 + $0x78] sm:$0xff]
      %v6486 = vunpack.c.l.b16 %v6438
      %v6487 = vunpack.c.l.b16 %v6439
      %v6488 = vunpack.c.l.b16 %v6440
      %v6489 = vunpack.c.l.b16 %v6441
      %v6490 = vunpack.c.l.b16 %v6458
      %v6491 = vunpack.c.l.b16 %v6459
      %v6492 = vunpack.c.l.b16 %v6460
      %v6493 = vunpack.c.l.b16 %v6461
      %v6494 = vpack.c.b16 %v6487, %v6486
      %v6495 = vpack.c.b16 %v6489, %v6488
      %v6496 = vpack.c.b16 %v6491, %v6490
      %v6497 = vpack.c.b16 %v6493, %v6492
      %v6518 = vunpack.c.l.b16 %v6462
      %v6519 = vunpack.c.h.b16 %v6462
      %v6520 = vunpack.c.l.b16 %v6463
      %v6521 = vunpack.c.h.b16 %v6463
      %v6522 = vunpack.c.l.b16 %v6464
      %v6523 = vunpack.c.h.b16 %v6464
      %v6524 = vunpack.c.l.b16 %v6465
      %v6525 = vunpack.c.h.b16 %v6465
      %v6526 = vunpack.c.l.b16 %v6466
      %v6527 = vunpack.c.h.b16 %v6466
      %v6528 = vunpack.c.l.b16 %v6467
      %v6529 = vunpack.c.h.b16 %v6467
      %v6530 = vunpack.c.l.b16 %v6468
      %v6531 = vunpack.c.h.b16 %v6468
      %v6532 = vunpack.c.l.b16 %v6469
      %v6533 = vunpack.c.h.b16 %v6469
      %v6534 = vunpack.c.l.b16 %v6470
      %v6535 = vunpack.c.h.b16 %v6470
      %v6536 = vunpack.c.l.b16 %v6471
      %v6537 = vunpack.c.h.b16 %v6471
      %v6538 = vunpack.c.l.b16 %v6472
      %v6539 = vunpack.c.h.b16 %v6472
      %v6540 = vunpack.c.l.b16 %v6473
      %v6541 = vunpack.c.h.b16 %v6473
      %v6542 = vunpack.c.l.b16 %v6474
      %v6543 = vunpack.c.h.b16 %v6474
      %v6544 = vunpack.c.l.b16 %v6475
      %v6545 = vunpack.c.h.b16 %v6475
      %v6546 = vunpack.c.l.b16 %v6476
      %v6547 = vunpack.c.h.b16 %v6476
      %v6548 = vunpack.c.l.b16 %v6477
      %v6549 = vunpack.c.h.b16 %v6477
      %v6550 = vpack.c.b16 %v6520, %v6518
      %v6551 = vpack.c.b16 %v6521, %v6519
      %v6552 = vpack.c.b16 %v6524, %v6522
      %v6553 = vpack.c.b16 %v6525, %v6523
      %v6554 = vpack.c.b16 %v6528, %v6526
      %v6555 = vpack.c.b16 %v6529, %v6527
      %v6556 = vpack.c.b16 %v6532, %v6530
      %v6557 = vpack.c.b16 %v6533, %v6531
      %v6558 = vpack.c.b16 %v6536, %v6534
      %v6559 = vpack.c.b16 %v6537, %v6535
      %v6560 = vpack.c.b16 %v6540, %v6538
      %v6561 = vpack.c.b16 %v6541, %v6539
      %v6562 = vpack.c.b16 %v6544, %v6542
      %v6563 = vpack.c.b16 %v6545, %v6543
      %v6564 = vpack.c.b16 %v6548, %v6546
      %v6565 = vpack.c.b16 %v6549, %v6547
      %6582 = vmatprep.subr.bf16.mxu0 %v6565
      %6583 = vmatpush1.bf16.msra.mxu0 %v6564
      %6584 = vmatprep.subr.bf16.mxu0 %v6563
      %6585 = vmatpush1.bf16.msra.mxu0 %v6562
      %6586 = vmatprep.subr.bf16.mxu0 %v6561
      %6587 = vmatpush1.bf16.msra.mxu0 %v6560
      %6588 = vmatprep.subr.bf16.mxu0 %v6559
      %6589 = vmatpush1.bf16.msra.mxu0 %v6558
      %6590 = vmatprep.subr.bf16.mxu0 %v6557
      %6591 = vmatpush1.bf16.msra.mxu0 %v6556
      %6592 = vmatprep.subr.bf16.mxu0 %v6555
      %6593 = vmatpush1.bf16.msra.mxu0 %v6554
      %6594 = vmatprep.subr.bf16.mxu0 %v6553
      %6595 = vmatpush1.bf16.msra.mxu0 %v6552
      %6596 = vmatprep.subr.bf16.mxu0 %v6551
      %6597 = vmatpush1.bf16.msra.mxu0 %v6550
      %6598 = vmatprep.subr.bf16.mxu0 0
      %6599 = vmatpush2.bf16.msra.mxu0 0
      %6600 = vmatprep.subr.bf16.mxu0 0
      %6601 = vmatpush2.bf16.msra.mxu0 0
      %6602 = vmatprep.subr.bf16.mxu0 0
      %6603 = vmatpush2.bf16.msra.mxu0 0
      %6604 = vmatprep.subr.bf16.mxu0 0
      %6605 = vmatpush2.bf16.msra.mxu0 0
      %6606 = vmatprep.subr.bf16.mxu0 0
      %6607 = vmatpush2.bf16.msra.mxu0 0
      %6608 = vmatprep.subr.bf16.mxu0 0
      %6609 = vmatpush2.bf16.msra.mxu0 0
      %6610 = vmatprep.subr.bf16.mxu0 0
      %6611 = vmatpush2.bf16.msra.mxu0 0
      %6612 = vmatprep.subr.bf16.mxu0 0
      %6613 = vmatpush2.bf16.msra.mxu0 0
      %6614 = vmatprep.mubr.bf16.mxu0 0
      %6615 = vmatmul.mubr.bf16.gmra.mxu0 %v6494
      %v6616 = vpop.f32.mrf.mxu0
      %v6617 = vadd.f32 0.0, %v6616
      %v6618 = vpop.f32.mrf.mxu0
      %v6619 = vadd.f32 0.0, %v6618
      %v6620 = vpop.f32.mrf.mxu0
      %v6621 = vadd.f32 0.0, %v6620
      %v6622 = vpop.f32.mrf.mxu0
      %v6623 = vadd.f32 0.0, %v6622
      %6624 = vmatprep.mubr.bf16.mxu0 0
      %6625 = vmatmul.mubr.bf16.gmra.mxu0 %v6495
      %v6626 = vpop.f32.mrf.mxu0
      %v6627 = vadd.f32 0.0, %v6626
      %v6628 = vpop.f32.mrf.mxu0
      %v6629 = vadd.f32 0.0, %v6628
      %v6630 = vpop.f32.mrf.mxu0
      %v6631 = vadd.f32 0.0, %v6630
      %v6632 = vpop.f32.mrf.mxu0
      %v6633 = vadd.f32 0.0, %v6632
      %6634 = vmatprep.mubr.bf16.mxu0 0
      %6635 = vmatmul.mubr.bf16.gmra.mxu0 %v6496
      %v6636 = vpop.f32.mrf.mxu0
      %v6637 = vadd.f32 0.0, %v6636
      %v6638 = vpop.f32.mrf.mxu0
      %v6639 = vadd.f32 0.0, %v6638
      %v6640 = vpop.f32.mrf.mxu0
      %v6641 = vadd.f32 0.0, %v6640
      %v6642 = vpop.f32.mrf.mxu0
      %v6643 = vadd.f32 0.0, %v6642
      %6644 = vmatprep.mubr.bf16.mxu0 0
      %6645 = vmatmul.mubr.bf16.gmra.mxu0 %v6497
      %v6646 = vpop.f32.mrf.mxu0
      %v6647 = vadd.f32 0.0, %v6646
      %v6648 = vpop.f32.mrf.mxu0
      %v6649 = vadd.f32 0.0, %v6648
      %v6650 = vpop.f32.mrf.mxu0
      %v6651 = vadd.f32 0.0, %v6650
      %v6652 = vpop.f32.mrf.mxu0
      %v6653 = vadd.f32 0.0, %v6652
      %6654 = vdwg.mxu0
      %v6659 = vunpack.c.l.b16 %v6434
      %v6660 = vunpack.c.l.b16 %v6435
      %v6661 = vunpack.c.l.b16 %v6436
      %v6662 = vunpack.c.l.b16 %v6437
      %v6663 = vpack.c.b16 %v6660, %v6659
      %v6664 = vpack.c.b16 %v6662, %v6661
      %v6683 = vunpack.c.l.b16 %v6442
      %v6684 = vunpack.c.h.b16 %v6442
      %v6685 = vunpack.c.l.b16 %v6443
      %v6686 = vunpack.c.h.b16 %v6443
      %v6687 = vunpack.c.l.b16 %v6444
      %v6688 = vunpack.c.h.b16 %v6444
      %v6689 = vunpack.c.l.b16 %v6445
      %v6690 = vunpack.c.h.b16 %v6445
      %v6691 = vunpack.c.l.b16 %v6446
      %v6692 = vunpack.c.h.b16 %v6446
      %v6693 = vunpack.c.l.b16 %v6447
      %v6694 = vunpack.c.h.b16 %v6447
      %v6695 = vunpack.c.l.b16 %v6448
      %v6696 = vunpack.c.h.b16 %v6448
      %v6697 = vunpack.c.l.b16 %v6449
      %v6698 = vunpack.c.h.b16 %v6449
      %v6699 = vunpack.c.l.b16 %v6450
      %v6700 = vunpack.c.h.b16 %v6450
      %v6701 = vunpack.c.l.b16 %v6451
      %v6702 = vunpack.c.h.b16 %v6451
      %v6703 = vunpack.c.l.b16 %v6452
      %v6704 = vunpack.c.h.b16 %v6452
      %v6705 = vunpack.c.l.b16 %v6453
      %v6706 = vunpack.c.h.b16 %v6453
      %v6707 = vunpack.c.l.b16 %v6454
      %v6708 = vunpack.c.h.b16 %v6454
      %v6709 = vunpack.c.l.b16 %v6455
      %v6710 = vunpack.c.h.b16 %v6455
      %v6711 = vunpack.c.l.b16 %v6456
      %v6712 = vunpack.c.h.b16 %v6456
      %v6713 = vunpack.c.l.b16 %v6457
      %v6714 = vunpack.c.h.b16 %v6457
      %v6715 = vpack.c.b16 %v6685, %v6683
      %v6716 = vpack.c.b16 %v6686, %v6684
      %v6717 = vpack.c.b16 %v6689, %v6687
      %v6718 = vpack.c.b16 %v6690, %v6688
      %v6719 = vpack.c.b16 %v6693, %v6691
      %v6720 = vpack.c.b16 %v6694, %v6692
      %v6721 = vpack.c.b16 %v6697, %v6695
      %v6722 = vpack.c.b16 %v6698, %v6696
      %v6723 = vpack.c.b16 %v6701, %v6699
      %v6724 = vpack.c.b16 %v6702, %v6700
      %v6725 = vpack.c.b16 %v6705, %v6703
      %v6726 = vpack.c.b16 %v6706, %v6704
      %v6727 = vpack.c.b16 %v6709, %v6707
      %v6728 = vpack.c.b16 %v6710, %v6708
      %v6729 = vpack.c.b16 %v6713, %v6711
      %v6730 = vpack.c.b16 %v6714, %v6712
      %6747 = vmatprep.subr.bf16.mxu0 %v6730
      %6748 = vmatpush1.bf16.msra.mxu0 %v6729
      %6749 = vmatprep.subr.bf16.mxu0 %v6728
      %6750 = vmatpush1.bf16.msra.mxu0 %v6727
      %6751 = vmatprep.subr.bf16.mxu0 %v6726
      %6752 = vmatpush1.bf16.msra.mxu0 %v6725
      %6753 = vmatprep.subr.bf16.mxu0 %v6724
      %6754 = vmatpush1.bf16.msra.mxu0 %v6723
      %6755 = vmatprep.subr.bf16.mxu0 %v6722
      %6756 = vmatpush1.bf16.msra.mxu0 %v6721
      %6757 = vmatprep.subr.bf16.mxu0 %v6720
      %6758 = vmatpush1.bf16.msra.mxu0 %v6719
      %6759 = vmatprep.subr.bf16.mxu0 %v6718
      %6760 = vmatpush1.bf16.msra.mxu0 %v6717
      %6761 = vmatprep.subr.bf16.mxu0 %v6716
      %6762 = vmatpush1.bf16.msra.mxu0 %v6715
      %6763 = vmatprep.subr.bf16.mxu0 0
      %6764 = vmatpush2.bf16.msra.mxu0 0
      %6765 = vmatprep.subr.bf16.mxu0 0
      %6766 = vmatpush2.bf16.msra.mxu0 0
      %6767 = vmatprep.subr.bf16.mxu0 0
      %6768 = vmatpush2.bf16.msra.mxu0 0
      %6769 = vmatprep.subr.bf16.mxu0 0
      %6770 = vmatpush2.bf16.msra.mxu0 0
      %6771 = vmatprep.subr.bf16.mxu0 0
      %6772 = vmatpush2.bf16.msra.mxu0 0
      %6773 = vmatprep.subr.bf16.mxu0 0
      %6774 = vmatpush2.bf16.msra.mxu0 0
      %6775 = vmatprep.subr.bf16.mxu0 0
      %6776 = vmatpush2.bf16.msra.mxu0 0
      %6777 = vmatprep.subr.bf16.mxu0 0
      %6778 = vmatpush2.bf16.msra.mxu0 0
      %6779 = vmatprep.mubr.bf16.mxu0 0
      %6780 = vmatmul.mubr.bf16.gmra.mxu0 %v6663
      %v6781 = vpop.f32.mrf.mxu0
      %v6782 = vadd.f32 %v6617, %v6781
      %v6783 = vpop.f32.mrf.mxu0
      %v6784 = vadd.f32 %v6619, %v6783
      %v6785 = vpop.f32.mrf.mxu0
      %v6786 = vadd.f32 %v6621, %v6785
      %v6787 = vpop.f32.mrf.mxu0
      %v6788 = vadd.f32 %v6623, %v6787
      %6789 = vmatprep.mubr.bf16.mxu0 0
      %6790 = vmatmul.mubr.bf16.gmra.mxu0 %v6664
      %v6791 = vpop.f32.mrf.mxu0
      %v6792 = vadd.f32 %v6627, %v6791
      %v6793 = vpop.f32.mrf.mxu0
      %v6794 = vadd.f32 %v6629, %v6793
      %v6795 = vpop.f32.mrf.mxu0
      %v6796 = vadd.f32 %v6631, %v6795
      %v6797 = vpop.f32.mrf.mxu0
      %v6798 = vadd.f32 %v6633, %v6797
      %6799 = vmatprep.mubr.bf16.mxu0 0
      %6800 = vmatmul.mubr.bf16.gmra.mxu0 %v6494
      %v6801 = vpop.f32.mrf.mxu0
      %v6802 = vadd.f32 %v6637, %v6801
      %v6803 = vpop.f32.mrf.mxu0
      %v6804 = vadd.f32 %v6639, %v6803
      %v6805 = vpop.f32.mrf.mxu0
      %v6806 = vadd.f32 %v6641, %v6805
      %v6807 = vpop.f32.mrf.mxu0
      %v6808 = vadd.f32 %v6643, %v6807
      %6809 = vmatprep.mubr.bf16.mxu0 0
      %6810 = vmatmul.mubr.bf16.gmra.mxu0 %v6495
      %v6811 = vpop.f32.mrf.mxu0
      %v6812 = vadd.f32 %v6647, %v6811
      %v6813 = vpop.f32.mrf.mxu0
      %v6814 = vadd.f32 %v6649, %v6813
      %v6815 = vpop.f32.mrf.mxu0
      %v6816 = vadd.f32 %v6651, %v6815
      %v6817 = vpop.f32.mrf.mxu0
      %v6818 = vadd.f32 %v6653, %v6817
      %6819 = vdwg.mxu0
      %v6820 = vld [vmem:[#allocation2 + $0x60] sm:$0xf]
      %v6821 = vld [vmem:[#allocation2 + $0x64] sm:$0xf]
      %v6822 = vld [vmem:[#allocation2 + $0x68] sm:$0xf]
      %v6823 = vld [vmem:[#allocation2 + $0x6c] sm:$0xf]
      %v6824 = vld [vmem:[#allocation2 + $0x70] sm:$0xf]
      %v6825 = vld [vmem:[#allocation2 + $0x74] sm:$0xf]
      %v6826 = vld [vmem:[#allocation2 + $0x78] sm:$0xf]
      %v6827 = vld [vmem:[#allocation2 + $0x7c] sm:$0xf]
      %v6828 = vld [vmem:[%s5218] sm:$0xff]
      %v6829 = vld [vmem:[%s5218 + $0x8] sm:$0xff]
      %v6830 = vld [vmem:[%s5218 + $0x10] sm:$0xff]
      %v6831 = vld [vmem:[%s5218 + $0x18] sm:$0xff]
      %v6832 = vld [vmem:[%s5218 + $0x20] sm:$0xff]
      %v6833 = vld [vmem:[%s5218 + $0x28] sm:$0xff]
      %v6834 = vld [vmem:[%s5218 + $0x30] sm:$0xff]
      %v6835 = vld [vmem:[%s5218 + $0x38] sm:$0xff]
      %v6836 = vld [vmem:[%s5218 + $0x40] sm:$0xff]
      %v6837 = vld [vmem:[%s5218 + $0x48] sm:$0xff]
      %v6838 = vld [vmem:[%s5218 + $0x50] sm:$0xff]
      %v6839 = vld [vmem:[%s5218 + $0x58] sm:$0xff]
      %v6840 = vld [vmem:[%s5218 + $0x60] sm:$0xff]
      %v6841 = vld [vmem:[%s5218 + $0x68] sm:$0xff]
      %v6842 = vld [vmem:[%s5218 + $0x70] sm:$0xff]
      %v6843 = vld [vmem:[%s5218 + $0x78] sm:$0xff]
      %v6852 = vunpack.c.l.b16 %v6820
      %v6853 = vunpack.c.l.b16 %v6821
      %v6854 = vunpack.c.l.b16 %v6822
      %v6855 = vunpack.c.l.b16 %v6823
      %v6856 = vunpack.c.l.b16 %v6824
      %v6857 = vunpack.c.l.b16 %v6825
      %v6858 = vunpack.c.l.b16 %v6826
      %v6859 = vunpack.c.l.b16 %v6827
      %v6860 = vpack.c.b16 %v6853, %v6852
      %v6861 = vpack.c.b16 %v6855, %v6854
      %v6862 = vpack.c.b16 %v6857, %v6856
      %v6863 = vpack.c.b16 %v6859, %v6858
      %v6884 = vunpack.c.l.b16 %v6828
      %v6885 = vunpack.c.h.b16 %v6828
      %v6886 = vunpack.c.l.b16 %v6829
      %v6887 = vunpack.c.h.b16 %v6829
      %v6888 = vunpack.c.l.b16 %v6830
      %v6889 = vunpack.c.h.b16 %v6830
      %v6890 = vunpack.c.l.b16 %v6831
      %v6891 = vunpack.c.h.b16 %v6831
      %v6892 = vunpack.c.l.b16 %v6832
      %v6893 = vunpack.c.h.b16 %v6832
      %v6894 = vunpack.c.l.b16 %v6833
      %v6895 = vunpack.c.h.b16 %v6833
      %v6896 = vunpack.c.l.b16 %v6834
      %v6897 = vunpack.c.h.b16 %v6834
      %v6898 = vunpack.c.l.b16 %v6835
      %v6899 = vunpack.c.h.b16 %v6835
      %v6900 = vunpack.c.l.b16 %v6836
      %v6901 = vunpack.c.h.b16 %v6836
      %v6902 = vunpack.c.l.b16 %v6837
      %v6903 = vunpack.c.h.b16 %v6837
      %v6904 = vunpack.c.l.b16 %v6838
      %v6905 = vunpack.c.h.b16 %v6838
      %v6906 = vunpack.c.l.b16 %v6839
      %v6907 = vunpack.c.h.b16 %v6839
      %v6908 = vunpack.c.l.b16 %v6840
      %v6909 = vunpack.c.h.b16 %v6840
      %v6910 = vunpack.c.l.b16 %v6841
      %v6911 = vunpack.c.h.b16 %v6841
      %v6912 = vunpack.c.l.b16 %v6842
      %v6913 = vunpack.c.h.b16 %v6842
      %v6914 = vunpack.c.l.b16 %v6843
      %v6915 = vunpack.c.h.b16 %v6843
      %v6916 = vpack.c.b16 %v6886, %v6884
      %v6917 = vpack.c.b16 %v6887, %v6885
      %v6918 = vpack.c.b16 %v6890, %v6888
      %v6919 = vpack.c.b16 %v6891, %v6889
      %v6920 = vpack.c.b16 %v6894, %v6892
      %v6921 = vpack.c.b16 %v6895, %v6893
      %v6922 = vpack.c.b16 %v6898, %v6896
      %v6923 = vpack.c.b16 %v6899, %v6897
      %v6924 = vpack.c.b16 %v6902, %v6900
      %v6925 = vpack.c.b16 %v6903, %v6901
      %v6926 = vpack.c.b16 %v6906, %v6904
      %v6927 = vpack.c.b16 %v6907, %v6905
      %v6928 = vpack.c.b16 %v6910, %v6908
      %v6929 = vpack.c.b16 %v6911, %v6909
      %v6930 = vpack.c.b16 %v6914, %v6912
      %v6931 = vpack.c.b16 %v6915, %v6913
      %6948 = vmatprep.subr.bf16.mxu0 %v6931
      %6949 = vmatpush1.bf16.msra.mxu0 %v6930
      %6950 = vmatprep.subr.bf16.mxu0 %v6929
      %6951 = vmatpush1.bf16.msra.mxu0 %v6928
      %6952 = vmatprep.subr.bf16.mxu0 %v6927
      %6953 = vmatpush1.bf16.msra.mxu0 %v6926
      %6954 = vmatprep.subr.bf16.mxu0 %v6925
      %6955 = vmatpush1.bf16.msra.mxu0 %v6924
      %6956 = vmatprep.subr.bf16.mxu0 %v6923
      %6957 = vmatpush1.bf16.msra.mxu0 %v6922
      %6958 = vmatprep.subr.bf16.mxu0 %v6921
      %6959 = vmatpush1.bf16.msra.mxu0 %v6920
      %6960 = vmatprep.subr.bf16.mxu0 %v6919
      %6961 = vmatpush1.bf16.msra.mxu0 %v6918
      %6962 = vmatprep.subr.bf16.mxu0 %v6917
      %6963 = vmatpush1.bf16.msra.mxu0 %v6916
      %6964 = vmatprep.subr.bf16.mxu0 0
      %6965 = vmatpush2.bf16.msra.mxu0 0
      %6966 = vmatprep.subr.bf16.mxu0 0
      %6967 = vmatpush2.bf16.msra.mxu0 0
      %6968 = vmatprep.subr.bf16.mxu0 0
      %6969 = vmatpush2.bf16.msra.mxu0 0
      %6970 = vmatprep.subr.bf16.mxu0 0
      %6971 = vmatpush2.bf16.msra.mxu0 0
      %6972 = vmatprep.subr.bf16.mxu0 0
      %6973 = vmatpush2.bf16.msra.mxu0 0
      %6974 = vmatprep.subr.bf16.mxu0 0
      %6975 = vmatpush2.bf16.msra.mxu0 0
      %6976 = vmatprep.subr.bf16.mxu0 0
      %6977 = vmatpush2.bf16.msra.mxu0 0
      %6978 = vmatprep.subr.bf16.mxu0 0
      %6979 = vmatpush2.bf16.msra.mxu0 0
      %6980 = vmatprep.mubr.bf16.mxu0 0
      %6981 = vmatmul.mubr.bf16.gmra.mxu0 %v6860
      %v6982 = vpop.f32.mrf.mxu0
      %v6983 = vadd.f32 0.0, %v6982
      %v6984 = vpop.f32.mrf.mxu0
      %v6985 = vadd.f32 0.0, %v6984
      %v6986 = vpop.f32.mrf.mxu0
      %v6987 = vadd.f32 0.0, %v6986
      %v6988 = vpop.f32.mrf.mxu0
      %v6989 = vadd.f32 0.0, %v6988
      %6990 = vmatprep.mubr.bf16.mxu0 0
      %6991 = vmatmul.mubr.bf16.gmra.mxu0 %v6861
      %v6992 = vpop.f32.mrf.mxu0
      %v6993 = vadd.f32 0.0, %v6992
      %v6994 = vpop.f32.mrf.mxu0
      %v6995 = vadd.f32 0.0, %v6994
      %v6996 = vpop.f32.mrf.mxu0
      %v6997 = vadd.f32 0.0, %v6996
      %v6998 = vpop.f32.mrf.mxu0
      %v6999 = vadd.f32 0.0, %v6998
      %7000 = vmatprep.mubr.bf16.mxu0 0
      %7001 = vmatmul.mubr.bf16.gmra.mxu0 %v6862
      %v7002 = vpop.f32.mrf.mxu0
      %v7003 = vadd.f32 0.0, %v7002
      %v7004 = vpop.f32.mrf.mxu0
      %v7005 = vadd.f32 0.0, %v7004
      %v7006 = vpop.f32.mrf.mxu0
      %v7007 = vadd.f32 0.0, %v7006
      %v7008 = vpop.f32.mrf.mxu0
      %v7009 = vadd.f32 0.0, %v7008
      %7010 = vmatprep.mubr.bf16.mxu0 0
      %7011 = vmatmul.mubr.bf16.gmra.mxu0 %v6863
      %v7012 = vpop.f32.mrf.mxu0
      %v7013 = vadd.f32 0.0, %v7012
      %v7014 = vpop.f32.mrf.mxu0
      %v7015 = vadd.f32 0.0, %v7014
      %v7016 = vpop.f32.mrf.mxu0
      %v7017 = vadd.f32 0.0, %v7016
      %v7018 = vpop.f32.mrf.mxu0
      %v7019 = vadd.f32 0.0, %v7018
      %7020 = vdwg.mxu0
      %v7021 = vadd.f32 %v6782, %v6983
      %v7022 = vadd.f32 %v6784, %v6985
      %v7023 = vadd.f32 %v6786, %v6987
      %v7024 = vadd.f32 %v6788, %v6989
      %v7025 = vadd.f32 %v6792, %v6993
      %v7026 = vadd.f32 %v6794, %v6995
      %v7027 = vadd.f32 %v6796, %v6997
      %v7028 = vadd.f32 %v6798, %v6999
      %v7029 = vadd.f32 %v6802, %v7003
      %v7030 = vadd.f32 %v6804, %v7005
      %v7031 = vadd.f32 %v6806, %v7007
      %v7032 = vadd.f32 %v6808, %v7009
      %v7033 = vadd.f32 %v6812, %v7013
      %v7034 = vadd.f32 %v6814, %v7015
      %v7035 = vadd.f32 %v6816, %v7017
      %v7036 = vadd.f32 %v6818, %v7019
      %v7037 = vld [vmem:[%s4] sm:$0x3]
      %v7039 = vlaneseq
      %v7040 = vshrl.u32 %v7039, 7
      %v7041 = vsub.s32 0, %v7040
      %v7042 = vrot.slane %v7037, %v7041
      %v7043 = vlaneseq
      %v7044 = vshrl.u32 %v7043, 7
      %v7045 = vsub.s32 1, %v7044
      %v7046 = vrot.slane %v7037, %v7045
      %v7049 = vadd.f32 %v7021, %v7042
      %v7050 = vadd.f32 %v7022, %v7046
      %v7051 = vadd.f32 %v7023, %v7042
      %v7052 = vadd.f32 %v7024, %v7046
      %v7053 = vadd.f32 %v7025, %v7042
      %v7054 = vadd.f32 %v7026, %v7046
      %v7055 = vadd.f32 %v7027, %v7042
      %v7056 = vadd.f32 %v7028, %v7046
      %v7057 = vadd.f32 %v7029, %v7042
      %v7058 = vadd.f32 %v7030, %v7046
      %v7059 = vadd.f32 %v7031, %v7042
      %v7060 = vadd.f32 %v7032, %v7046
      %v7061 = vadd.f32 %v7033, %v7042
      %v7062 = vadd.f32 %v7034, %v7046
      %v7063 = vadd.f32 %v7035, %v7042
      %v7064 = vadd.f32 %v7036, %v7046
      %v7065 = vtanh.pop %v7049
      %v7066 = vtanh.pop %v7050
      %v7067 = vtanh.pop %v7051
      %v7068 = vtanh.pop %v7052
      %v7069 = vtanh.pop %v7053
      %v7070 = vtanh.pop %v7054
      %v7071 = vtanh.pop %v7055
      %v7072 = vtanh.pop %v7056
      %v7073 = vtanh.pop %v7057
      %v7074 = vtanh.pop %v7058
      %v7075 = vtanh.pop %v7059
      %v7076 = vtanh.pop %v7060
      %v7077 = vtanh.pop %v7061
      %v7078 = vtanh.pop %v7062
      %v7079 = vtanh.pop %v7063
      %v7080 = vtanh.pop %v7064
      %v7081 = vmax.f32 %v7065, %v7066
      %v7082 = vmax.f32 %v7067, %v7068
      %v7083 = vmax.f32 %v7069, %v7070
      %v7084 = vmax.f32 %v7071, %v7072
      %v7085 = vmax.f32 %v7073, %v7074
      %v7086 = vmax.f32 %v7075, %v7076
      %v7087 = vmax.f32 %v7077, %v7078
      %v7088 = vmax.f32 %v7079, %v7080
      %v7089 = vmax.f32 %v7081, %v7085
      %v7090 = vmax.f32 %v7082, %v7086
      %v7091 = vmax.f32 %v7083, %v7087
      %v7092 = vmax.f32 %v7084, %v7088
      %v7093 = vld [vmem:[#allocation3] sm:$0xff]
      %v7094 = vld [vmem:[#allocation3 + $0x8] sm:$0xff]
      %v7095 = vld [vmem:[#allocation3 + $0x10] sm:$0xff]
      %v7096 = vld [vmem:[#allocation3 + $0x18] sm:$0xff]
      %v7097 = vld [vmem:[#allocation3 + $0x20] sm:$0xff]
      %v7098 = vld [vmem:[#allocation3 + $0x28] sm:$0xff]
      %v7099 = vld [vmem:[#allocation3 + $0x30] sm:$0xff]
      %v7100 = vld [vmem:[#allocation3 + $0x38] sm:$0xff]
      %s7101 = scalar_lea.vmem %s5, 512
      %v7102 = vld [vmem:[%s7101] sm:$0xff]
      %v7103 = vld [vmem:[%s7101 + $0x8] sm:$0xff]
      %v7104 = vld [vmem:[%s7101 + $0x10] sm:$0xff]
      %v7105 = vld [vmem:[%s7101 + $0x18] sm:$0xff]
      %v7106 = vld [vmem:[%s7101 + $0x20] sm:$0xff]
      %v7107 = vld [vmem:[%s7101 + $0x28] sm:$0xff]
      %v7108 = vld [vmem:[%s7101 + $0x30] sm:$0xff]
      %v7109 = vld [vmem:[%s7101 + $0x38] sm:$0xff]
      %v7110 = vld [vmem:[%s7101 + $0x40] sm:$0xff]
      %v7111 = vld [vmem:[%s7101 + $0x48] sm:$0xff]
      %v7112 = vld [vmem:[%s7101 + $0x50] sm:$0xff]
      %v7113 = vld [vmem:[%s7101 + $0x58] sm:$0xff]
      %v7114 = vld [vmem:[%s7101 + $0x60] sm:$0xff]
      %v7115 = vld [vmem:[%s7101 + $0x68] sm:$0xff]
      %v7116 = vld [vmem:[%s7101 + $0x70] sm:$0xff]
      %v7117 = vld [vmem:[%s7101 + $0x78] sm:$0xff]
      %v7118 = vld [vmem:[%s7101 + $0x80] sm:$0xff]
      %v7119 = vld [vmem:[%s7101 + $0x88] sm:$0xff]
      %v7120 = vld [vmem:[%s7101 + $0x90] sm:$0xff]
      %v7121 = vld [vmem:[%s7101 + $0x98] sm:$0xff]
      %v7122 = vld [vmem:[%s7101 + $0xa0] sm:$0xff]
      %v7123 = vld [vmem:[%s7101 + $0xa8] sm:$0xff]
      %v7124 = vld [vmem:[%s7101 + $0xb0] sm:$0xff]
      %v7125 = vld [vmem:[%s7101 + $0xb8] sm:$0xff]
      %v7126 = vld [vmem:[%s7101 + $0xc0] sm:$0xff]
      %v7127 = vld [vmem:[%s7101 + $0xc8] sm:$0xff]
      %v7128 = vld [vmem:[%s7101 + $0xd0] sm:$0xff]
      %v7129 = vld [vmem:[%s7101 + $0xd8] sm:$0xff]
      %v7130 = vld [vmem:[%s7101 + $0xe0] sm:$0xff]
      %v7131 = vld [vmem:[%s7101 + $0xe8] sm:$0xff]
      %v7132 = vld [vmem:[%s7101 + $0xf0] sm:$0xff]
      %v7133 = vld [vmem:[%s7101 + $0xf8] sm:$0xff]
      %7134 = vmatprep.subr.mxu0 %v7133
      %7135 = vmatpush1.msra.mxu0 %v7132
      %7136 = vmatprep.subr.mxu0 %v7131
      %7137 = vmatpush1.msra.mxu0 %v7130
      %7138 = vmatprep.subr.mxu0 %v7129
      %7139 = vmatpush1.msra.mxu0 %v7128
      %7140 = vmatprep.subr.mxu0 %v7127
      %7141 = vmatpush1.msra.mxu0 %v7126
      %7142 = vmatprep.subr.mxu0 %v7125
      %7143 = vmatpush1.msra.mxu0 %v7124
      %7144 = vmatprep.subr.mxu0 %v7123
      %7145 = vmatpush1.msra.mxu0 %v7122
      %7146 = vmatprep.subr.mxu0 %v7121
      %7147 = vmatpush1.msra.mxu0 %v7120
      %7148 = vmatprep.subr.mxu0 %v7119
      %7149 = vmatpush1.msra.mxu0 %v7118
      %7150 = vmatprep.subr.mxu0 %v7117
      %7151 = vmatpush1.msra.mxu0 %v7116
      %7152 = vmatprep.subr.mxu0 %v7115
      %7153 = vmatpush1.msra.mxu0 %v7114
      %7154 = vmatprep.subr.mxu0 %v7113
      %7155 = vmatpush1.msra.mxu0 %v7112
      %7156 = vmatprep.subr.mxu0 %v7111
      %7157 = vmatpush1.msra.mxu0 %v7110
      %7158 = vmatprep.subr.mxu0 %v7109
      %7159 = vmatpush1.msra.mxu0 %v7108
      %7160 = vmatprep.subr.mxu0 %v7107
      %7161 = vmatpush1.msra.mxu0 %v7106
      %7162 = vmatprep.subr.mxu0 %v7105
      %7163 = vmatpush1.msra.mxu0 %v7104
      %7164 = vmatprep.subr.mxu0 %v7103
      %7165 = vmatpush1.msra.mxu0 %v7102
      %7166 = vmatprep.subr.mxu0 0.0
      %7167 = vmatpush2.msra.mxu0 0.0
      %7168 = vmatprep.subr.mxu0 0.0
      %7169 = vmatpush2.msra.mxu0 0.0
      %7170 = vmatprep.subr.mxu0 0.0
      %7171 = vmatpush2.msra.mxu0 0.0
      %7172 = vmatprep.subr.mxu0 0.0
      %7173 = vmatpush2.msra.mxu0 0.0
      %7174 = vmatprep.subr.mxu0 0.0
      %7175 = vmatpush2.msra.mxu0 0.0
      %7176 = vmatprep.subr.mxu0 0.0
      %7177 = vmatpush2.msra.mxu0 0.0
      %7178 = vmatprep.subr.mxu0 0.0
      %7179 = vmatpush2.msra.mxu0 0.0
      %7180 = vmatprep.subr.mxu0 0.0
      %7181 = vmatpush2.msra.mxu0 0.0
      %7182 = vmatprep.subr.mxu0 0.0
      %7183 = vmatpush2.msra.mxu0 0.0
      %7184 = vmatprep.subr.mxu0 0.0
      %7185 = vmatpush2.msra.mxu0 0.0
      %7186 = vmatprep.subr.mxu0 0.0
      %7187 = vmatpush2.msra.mxu0 0.0
      %7188 = vmatprep.subr.mxu0 0.0
      %7189 = vmatpush2.msra.mxu0 0.0
      %7190 = vmatprep.subr.mxu0 0.0
      %7191 = vmatpush2.msra.mxu0 0.0
      %7192 = vmatprep.subr.mxu0 0.0
      %7193 = vmatpush2.msra.mxu0 0.0
      %7194 = vmatprep.subr.mxu0 0.0
      %7195 = vmatpush2.msra.mxu0 0.0
      %7196 = vmatprep.subr.mxu0 0.0
      %7197 = vmatpush2.msra.mxu0 0.0
      %7198 = vmatprep.mubr.f32.mxu0 0.0
      %7199 = vmatmul.mubr.f32.gmra.mxu0 %v7089
      %v7200 = vpop.f32.mrf.mxu0
      %v7201 = vadd.f32 0.0, %v7200
      %v7202 = vpop.f32.mrf.mxu0
      %v7203 = vadd.f32 0.0, %v7202
      %7204 = vmatprep.mubr.f32.mxu0 0.0
      %7205 = vmatmul.mubr.f32.gmra.mxu0 %v7090
      %v7206 = vpop.f32.mrf.mxu0
      %v7207 = vadd.f32 0.0, %v7206
      %v7208 = vpop.f32.mrf.mxu0
      %v7209 = vadd.f32 0.0, %v7208
      %7210 = vmatprep.mubr.f32.mxu0 0.0
      %7211 = vmatmul.mubr.f32.gmra.mxu0 %v7091
      %v7212 = vpop.f32.mrf.mxu0
      %v7213 = vadd.f32 0.0, %v7212
      %v7214 = vpop.f32.mrf.mxu0
      %v7215 = vadd.f32 0.0, %v7214
      %7216 = vmatprep.mubr.f32.mxu0 0.0
      %7217 = vmatmul.mubr.f32.gmra.mxu0 %v7092
      %v7218 = vpop.f32.mrf.mxu0
      %v7219 = vadd.f32 0.0, %v7218
      %v7220 = vpop.f32.mrf.mxu0
      %v7221 = vadd.f32 0.0, %v7220
      %7222 = vdwg.mxu0
      %v7223 = vadd.f32 %v7093, %v7201
      %v7224 = vadd.f32 %v7094, %v7203
      %v7225 = vadd.f32 %v7095, %v7207
      %v7226 = vadd.f32 %v7096, %v7209
      %v7227 = vadd.f32 %v7097, %v7213
      %v7228 = vadd.f32 %v7098, %v7215
      %v7229 = vadd.f32 %v7099, %v7219
      %v7230 = vadd.f32 %v7100, %v7221
      %7231 = vst [vmem:[#allocation3] sm:$0xff] %v7223
      %7232 = vst [vmem:[#allocation3 + $0x8] sm:$0xff] %v7224
      %7233 = vst [vmem:[#allocation3 + $0x10] sm:$0xff] %v7225
      %7234 = vst [vmem:[#allocation3 + $0x18] sm:$0xff] %v7226
      %7235 = vst [vmem:[#allocation3 + $0x20] sm:$0xff] %v7227
      %7236 = vst [vmem:[#allocation3 + $0x28] sm:$0xff] %v7228
      %7237 = vst [vmem:[#allocation3 + $0x30] sm:$0xff] %v7229
      %7238 = vst [vmem:[#allocation3 + $0x38] sm:$0xff] %v7230
      %v7239 = vld [vmem:[#allocation2 + $0x60] sm:$0xf]
      %v7240 = vld [vmem:[#allocation2 + $0x64] sm:$0xf]
      %v7241 = vld [vmem:[#allocation2 + $0x68] sm:$0xf]
      %v7242 = vld [vmem:[#allocation2 + $0x6c] sm:$0xf]
      %v7243 = vld [vmem:[#allocation2 + $0x70] sm:$0xf]
      %v7244 = vld [vmem:[#allocation2 + $0x74] sm:$0xf]
      %v7245 = vld [vmem:[#allocation2 + $0x78] sm:$0xf]
      %v7246 = vld [vmem:[#allocation2 + $0x7c] sm:$0xf]
      %v7247 = vld [vmem:[%s3] sm:$0xff]
      %v7248 = vld [vmem:[%s3 + $0x8] sm:$0xff]
      %v7249 = vld [vmem:[%s3 + $0x10] sm:$0xff]
      %v7250 = vld [vmem:[%s3 + $0x18] sm:$0xff]
      %v7251 = vld [vmem:[%s3 + $0x20] sm:$0xff]
      %v7252 = vld [vmem:[%s3 + $0x28] sm:$0xff]
      %v7253 = vld [vmem:[%s3 + $0x30] sm:$0xff]
      %v7254 = vld [vmem:[%s3 + $0x38] sm:$0xff]
      %v7255 = vld [vmem:[%s3 + $0x40] sm:$0xff]
      %v7256 = vld [vmem:[%s3 + $0x48] sm:$0xff]
      %v7257 = vld [vmem:[%s3 + $0x50] sm:$0xff]
      %v7258 = vld [vmem:[%s3 + $0x58] sm:$0xff]
      %v7259 = vld [vmem:[%s3 + $0x60] sm:$0xff]
      %v7260 = vld [vmem:[%s3 + $0x68] sm:$0xff]
      %v7261 = vld [vmem:[%s3 + $0x70] sm:$0xff]
      %v7262 = vld [vmem:[%s3 + $0x78] sm:$0xff]
      %v7263 = vld [vmem:[#allocation2 + $0x80] sm:$0xf]
      %v7264 = vld [vmem:[#allocation2 + $0x84] sm:$0xf]
      %v7265 = vld [vmem:[#allocation2 + $0x88] sm:$0xf]
      %v7266 = vld [vmem:[#allocation2 + $0x8c] sm:$0xf]
      %v7267 = vld [vmem:[%s4851] sm:$0xff]
      %v7268 = vld [vmem:[%s4851 + $0x8] sm:$0xff]
      %v7269 = vld [vmem:[%s4851 + $0x10] sm:$0xff]
      %v7270 = vld [vmem:[%s4851 + $0x18] sm:$0xff]
      %v7271 = vld [vmem:[%s4851 + $0x20] sm:$0xff]
      %v7272 = vld [vmem:[%s4851 + $0x28] sm:$0xff]
      %v7273 = vld [vmem:[%s4851 + $0x30] sm:$0xff]
      %v7274 = vld [vmem:[%s4851 + $0x38] sm:$0xff]
      %v7275 = vld [vmem:[%s4851 + $0x40] sm:$0xff]
      %v7276 = vld [vmem:[%s4851 + $0x48] sm:$0xff]
      %v7277 = vld [vmem:[%s4851 + $0x50] sm:$0xff]
      %v7278 = vld [vmem:[%s4851 + $0x58] sm:$0xff]
      %v7279 = vld [vmem:[%s4851 + $0x60] sm:$0xff]
      %v7280 = vld [vmem:[%s4851 + $0x68] sm:$0xff]
      %v7281 = vld [vmem:[%s4851 + $0x70] sm:$0xff]
      %v7282 = vld [vmem:[%s4851 + $0x78] sm:$0xff]
      %v7291 = vunpack.c.l.b16 %v7243
      %v7292 = vunpack.c.l.b16 %v7244
      %v7293 = vunpack.c.l.b16 %v7245
      %v7294 = vunpack.c.l.b16 %v7246
      %v7295 = vunpack.c.l.b16 %v7263
      %v7296 = vunpack.c.l.b16 %v7264
      %v7297 = vunpack.c.l.b16 %v7265
      %v7298 = vunpack.c.l.b16 %v7266
      %v7299 = vpack.c.b16 %v7292, %v7291
      %v7300 = vpack.c.b16 %v7294, %v7293
      %v7301 = vpack.c.b16 %v7296, %v7295
      %v7302 = vpack.c.b16 %v7298, %v7297
      %v7323 = vunpack.c.l.b16 %v7267
      %v7324 = vunpack.c.h.b16 %v7267
      %v7325 = vunpack.c.l.b16 %v7268
      %v7326 = vunpack.c.h.b16 %v7268
      %v7327 = vunpack.c.l.b16 %v7269
      %v7328 = vunpack.c.h.b16 %v7269
      %v7329 = vunpack.c.l.b16 %v7270
      %v7330 = vunpack.c.h.b16 %v7270
      %v7331 = vunpack.c.l.b16 %v7271
      %v7332 = vunpack.c.h.b16 %v7271
      %v7333 = vunpack.c.l.b16 %v7272
      %v7334 = vunpack.c.h.b16 %v7272
      %v7335 = vunpack.c.l.b16 %v7273
      %v7336 = vunpack.c.h.b16 %v7273
      %v7337 = vunpack.c.l.b16 %v7274
      %v7338 = vunpack.c.h.b16 %v7274
      %v7339 = vunpack.c.l.b16 %v7275
      %v7340 = vunpack.c.h.b16 %v7275
      %v7341 = vunpack.c.l.b16 %v7276
      %v7342 = vunpack.c.h.b16 %v7276
      %v7343 = vunpack.c.l.b16 %v7277
      %v7344 = vunpack.c.h.b16 %v7277
      %v7345 = vunpack.c.l.b16 %v7278
      %v7346 = vunpack.c.h.b16 %v7278
      %v7347 = vunpack.c.l.b16 %v7279
      %v7348 = vunpack.c.h.b16 %v7279
      %v7349 = vunpack.c.l.b16 %v7280
      %v7350 = vunpack.c.h.b16 %v7280
      %v7351 = vunpack.c.l.b16 %v7281
      %v7352 = vunpack.c.h.b16 %v7281
      %v7353 = vunpack.c.l.b16 %v7282
      %v7354 = vunpack.c.h.b16 %v7282
      %v7355 = vpack.c.b16 %v7325, %v7323
      %v7356 = vpack.c.b16 %v7326, %v7324
      %v7357 = vpack.c.b16 %v7329, %v7327
      %v7358 = vpack.c.b16 %v7330, %v7328
      %v7359 = vpack.c.b16 %v7333, %v7331
      %v7360 = vpack.c.b16 %v7334, %v7332
      %v7361 = vpack.c.b16 %v7337, %v7335
      %v7362 = vpack.c.b16 %v7338, %v7336
      %v7363 = vpack.c.b16 %v7341, %v7339
      %v7364 = vpack.c.b16 %v7342, %v7340
      %v7365 = vpack.c.b16 %v7345, %v7343
      %v7366 = vpack.c.b16 %v7346, %v7344
      %v7367 = vpack.c.b16 %v7349, %v7347
      %v7368 = vpack.c.b16 %v7350, %v7348
      %v7369 = vpack.c.b16 %v7353, %v7351
      %v7370 = vpack.c.b16 %v7354, %v7352
      %7387 = vmatprep.subr.bf16.mxu0 %v7370
      %7388 = vmatpush1.bf16.msra.mxu0 %v7369
      %7389 = vmatprep.subr.bf16.mxu0 %v7368
      %7390 = vmatpush1.bf16.msra.mxu0 %v7367
      %7391 = vmatprep.subr.bf16.mxu0 %v7366
      %7392 = vmatpush1.bf16.msra.mxu0 %v7365
      %7393 = vmatprep.subr.bf16.mxu0 %v7364
      %7394 = vmatpush1.bf16.msra.mxu0 %v7363
      %7395 = vmatprep.subr.bf16.mxu0 %v7362
      %7396 = vmatpush1.bf16.msra.mxu0 %v7361
      %7397 = vmatprep.subr.bf16.mxu0 %v7360
      %7398 = vmatpush1.bf16.msra.mxu0 %v7359
      %7399 = vmatprep.subr.bf16.mxu0 %v7358
      %7400 = vmatpush1.bf16.msra.mxu0 %v7357
      %7401 = vmatprep.subr.bf16.mxu0 %v7356
      %7402 = vmatpush1.bf16.msra.mxu0 %v7355
      %7403 = vmatprep.subr.bf16.mxu0 0
      %7404 = vmatpush2.bf16.msra.mxu0 0
      %7405 = vmatprep.subr.bf16.mxu0 0
      %7406 = vmatpush2.bf16.msra.mxu0 0
      %7407 = vmatprep.subr.bf16.mxu0 0
      %7408 = vmatpush2.bf16.msra.mxu0 0
      %7409 = vmatprep.subr.bf16.mxu0 0
      %7410 = vmatpush2.bf16.msra.mxu0 0
      %7411 = vmatprep.subr.bf16.mxu0 0
      %7412 = vmatpush2.bf16.msra.mxu0 0
      %7413 = vmatprep.subr.bf16.mxu0 0
      %7414 = vmatpush2.bf16.msra.mxu0 0
      %7415 = vmatprep.subr.bf16.mxu0 0
      %7416 = vmatpush2.bf16.msra.mxu0 0
      %7417 = vmatprep.subr.bf16.mxu0 0
      %7418 = vmatpush2.bf16.msra.mxu0 0
      %7419 = vmatprep.mubr.bf16.mxu0 0
      %7420 = vmatmul.mubr.bf16.gmra.mxu0 %v7299
      %v7421 = vpop.f32.mrf.mxu0
      %v7422 = vadd.f32 0.0, %v7421
      %v7423 = vpop.f32.mrf.mxu0
      %v7424 = vadd.f32 0.0, %v7423
      %v7425 = vpop.f32.mrf.mxu0
      %v7426 = vadd.f32 0.0, %v7425
      %v7427 = vpop.f32.mrf.mxu0
      %v7428 = vadd.f32 0.0, %v7427
      %7429 = vmatprep.mubr.bf16.mxu0 0
      %7430 = vmatmul.mubr.bf16.gmra.mxu0 %v7300
      %v7431 = vpop.f32.mrf.mxu0
      %v7432 = vadd.f32 0.0, %v7431
      %v7433 = vpop.f32.mrf.mxu0
      %v7434 = vadd.f32 0.0, %v7433
      %v7435 = vpop.f32.mrf.mxu0
      %v7436 = vadd.f32 0.0, %v7435
      %v7437 = vpop.f32.mrf.mxu0
      %v7438 = vadd.f32 0.0, %v7437
      %7439 = vmatprep.mubr.bf16.mxu0 0
      %7440 = vmatmul.mubr.bf16.gmra.mxu0 %v7301
      %v7441 = vpop.f32.mrf.mxu0
      %v7442 = vadd.f32 0.0, %v7441
      %v7443 = vpop.f32.mrf.mxu0
      %v7444 = vadd.f32 0.0, %v7443
      %v7445 = vpop.f32.mrf.mxu0
      %v7446 = vadd.f32 0.0, %v7445
      %v7447 = vpop.f32.mrf.mxu0
      %v7448 = vadd.f32 0.0, %v7447
      %7449 = vmatprep.mubr.bf16.mxu0 0
      %7450 = vmatmul.mubr.bf16.gmra.mxu0 %v7302
      %v7451 = vpop.f32.mrf.mxu0
      %v7452 = vadd.f32 0.0, %v7451
      %v7453 = vpop.f32.mrf.mxu0
      %v7454 = vadd.f32 0.0, %v7453
      %v7455 = vpop.f32.mrf.mxu0
      %v7456 = vadd.f32 0.0, %v7455
      %v7457 = vpop.f32.mrf.mxu0
      %v7458 = vadd.f32 0.0, %v7457
      %7459 = vdwg.mxu0
      %v7464 = vunpack.c.l.b16 %v7239
      %v7465 = vunpack.c.l.b16 %v7240
      %v7466 = vunpack.c.l.b16 %v7241
      %v7467 = vunpack.c.l.b16 %v7242
      %v7468 = vpack.c.b16 %v7465, %v7464
      %v7469 = vpack.c.b16 %v7467, %v7466
      %v7488 = vunpack.c.l.b16 %v7247
      %v7489 = vunpack.c.h.b16 %v7247
      %v7490 = vunpack.c.l.b16 %v7248
      %v7491 = vunpack.c.h.b16 %v7248
      %v7492 = vunpack.c.l.b16 %v7249
      %v7493 = vunpack.c.h.b16 %v7249
      %v7494 = vunpack.c.l.b16 %v7250
      %v7495 = vunpack.c.h.b16 %v7250
      %v7496 = vunpack.c.l.b16 %v7251
      %v7497 = vunpack.c.h.b16 %v7251
      %v7498 = vunpack.c.l.b16 %v7252
      %v7499 = vunpack.c.h.b16 %v7252
      %v7500 = vunpack.c.l.b16 %v7253
      %v7501 = vunpack.c.h.b16 %v7253
      %v7502 = vunpack.c.l.b16 %v7254
      %v7503 = vunpack.c.h.b16 %v7254
      %v7504 = vunpack.c.l.b16 %v7255
      %v7505 = vunpack.c.h.b16 %v7255
      %v7506 = vunpack.c.l.b16 %v7256
      %v7507 = vunpack.c.h.b16 %v7256
      %v7508 = vunpack.c.l.b16 %v7257
      %v7509 = vunpack.c.h.b16 %v7257
      %v7510 = vunpack.c.l.b16 %v7258
      %v7511 = vunpack.c.h.b16 %v7258
      %v7512 = vunpack.c.l.b16 %v7259
      %v7513 = vunpack.c.h.b16 %v7259
      %v7514 = vunpack.c.l.b16 %v7260
      %v7515 = vunpack.c.h.b16 %v7260
      %v7516 = vunpack.c.l.b16 %v7261
      %v7517 = vunpack.c.h.b16 %v7261
      %v7518 = vunpack.c.l.b16 %v7262
      %v7519 = vunpack.c.h.b16 %v7262
      %v7520 = vpack.c.b16 %v7490, %v7488
      %v7521 = vpack.c.b16 %v7491, %v7489
      %v7522 = vpack.c.b16 %v7494, %v7492
      %v7523 = vpack.c.b16 %v7495, %v7493
      %v7524 = vpack.c.b16 %v7498, %v7496
      %v7525 = vpack.c.b16 %v7499, %v7497
      %v7526 = vpack.c.b16 %v7502, %v7500
      %v7527 = vpack.c.b16 %v7503, %v7501
      %v7528 = vpack.c.b16 %v7506, %v7504
      %v7529 = vpack.c.b16 %v7507, %v7505
      %v7530 = vpack.c.b16 %v7510, %v7508
      %v7531 = vpack.c.b16 %v7511, %v7509
      %v7532 = vpack.c.b16 %v7514, %v7512
      %v7533 = vpack.c.b16 %v7515, %v7513
      %v7534 = vpack.c.b16 %v7518, %v7516
      %v7535 = vpack.c.b16 %v7519, %v7517
      %7552 = vmatprep.subr.bf16.mxu0 %v7535
      %7553 = vmatpush1.bf16.msra.mxu0 %v7534
      %7554 = vmatprep.subr.bf16.mxu0 %v7533
      %7555 = vmatpush1.bf16.msra.mxu0 %v7532
      %7556 = vmatprep.subr.bf16.mxu0 %v7531
      %7557 = vmatpush1.bf16.msra.mxu0 %v7530
      %7558 = vmatprep.subr.bf16.mxu0 %v7529
      %7559 = vmatpush1.bf16.msra.mxu0 %v7528
      %7560 = vmatprep.subr.bf16.mxu0 %v7527
      %7561 = vmatpush1.bf16.msra.mxu0 %v7526
      %7562 = vmatprep.subr.bf16.mxu0 %v7525
      %7563 = vmatpush1.bf16.msra.mxu0 %v7524
      %7564 = vmatprep.subr.bf16.mxu0 %v7523
      %7565 = vmatpush1.bf16.msra.mxu0 %v7522
      %7566 = vmatprep.subr.bf16.mxu0 %v7521
      %7567 = vmatpush1.bf16.msra.mxu0 %v7520
      %7568 = vmatprep.subr.bf16.mxu0 0
      %7569 = vmatpush2.bf16.msra.mxu0 0
      %7570 = vmatprep.subr.bf16.mxu0 0
      %7571 = vmatpush2.bf16.msra.mxu0 0
      %7572 = vmatprep.subr.bf16.mxu0 0
      %7573 = vmatpush2.bf16.msra.mxu0 0
      %7574 = vmatprep.subr.bf16.mxu0 0
      %7575 = vmatpush2.bf16.msra.mxu0 0
      %7576 = vmatprep.subr.bf16.mxu0 0
      %7577 = vmatpush2.bf16.msra.mxu0 0
      %7578 = vmatprep.subr.bf16.mxu0 0
      %7579 = vmatpush2.bf16.msra.mxu0 0
      %7580 = vmatprep.subr.bf16.mxu0 0
      %7581 = vmatpush2.bf16.msra.mxu0 0
      %7582 = vmatprep.subr.bf16.mxu0 0
      %7583 = vmatpush2.bf16.msra.mxu0 0
      %7584 = vmatprep.mubr.bf16.mxu0 0
      %7585 = vmatmul.mubr.bf16.gmra.mxu0 %v7468
      %v7586 = vpop.f32.mrf.mxu0
      %v7587 = vadd.f32 %v7422, %v7586
      %v7588 = vpop.f32.mrf.mxu0
      %v7589 = vadd.f32 %v7424, %v7588
      %v7590 = vpop.f32.mrf.mxu0
      %v7591 = vadd.f32 %v7426, %v7590
      %v7592 = vpop.f32.mrf.mxu0
      %v7593 = vadd.f32 %v7428, %v7592
      %7594 = vmatprep.mubr.bf16.mxu0 0
      %7595 = vmatmul.mubr.bf16.gmra.mxu0 %v7469
      %v7596 = vpop.f32.mrf.mxu0
      %v7597 = vadd.f32 %v7432, %v7596
      %v7598 = vpop.f32.mrf.mxu0
      %v7599 = vadd.f32 %v7434, %v7598
      %v7600 = vpop.f32.mrf.mxu0
      %v7601 = vadd.f32 %v7436, %v7600
      %v7602 = vpop.f32.mrf.mxu0
      %v7603 = vadd.f32 %v7438, %v7602
      %7604 = vmatprep.mubr.bf16.mxu0 0
      %7605 = vmatmul.mubr.bf16.gmra.mxu0 %v7299
      %v7606 = vpop.f32.mrf.mxu0
      %v7607 = vadd.f32 %v7442, %v7606
      %v7608 = vpop.f32.mrf.mxu0
      %v7609 = vadd.f32 %v7444, %v7608
      %v7610 = vpop.f32.mrf.mxu0
      %v7611 = vadd.f32 %v7446, %v7610
      %v7612 = vpop.f32.mrf.mxu0
      %v7613 = vadd.f32 %v7448, %v7612
      %7614 = vmatprep.mubr.bf16.mxu0 0
      %7615 = vmatmul.mubr.bf16.gmra.mxu0 %v7300
      %v7616 = vpop.f32.mrf.mxu0
      %v7617 = vadd.f32 %v7452, %v7616
      %v7618 = vpop.f32.mrf.mxu0
      %v7619 = vadd.f32 %v7454, %v7618
      %v7620 = vpop.f32.mrf.mxu0
      %v7621 = vadd.f32 %v7456, %v7620
      %v7622 = vpop.f32.mrf.mxu0
      %v7623 = vadd.f32 %v7458, %v7622
      %7624 = vdwg.mxu0
      %v7625 = vld [vmem:[#allocation2 + $0x80] sm:$0xf]
      %v7626 = vld [vmem:[#allocation2 + $0x84] sm:$0xf]
      %v7627 = vld [vmem:[#allocation2 + $0x88] sm:$0xf]
      %v7628 = vld [vmem:[#allocation2 + $0x8c] sm:$0xf]
      %v7629 = vld [vmem:[#allocation2 + $0x90] sm:$0xf]
      %v7630 = vld [vmem:[#allocation2 + $0x94] sm:$0xf]
      %v7631 = vld [vmem:[#allocation2 + $0x98] sm:$0xf]
      %v7632 = vld [vmem:[#allocation2 + $0x9c] sm:$0xf]
      %v7633 = vld [vmem:[%s5218] sm:$0xff]
      %v7634 = vld [vmem:[%s5218 + $0x8] sm:$0xff]
      %v7635 = vld [vmem:[%s5218 + $0x10] sm:$0xff]
      %v7636 = vld [vmem:[%s5218 + $0x18] sm:$0xff]
      %v7637 = vld [vmem:[%s5218 + $0x20] sm:$0xff]
      %v7638 = vld [vmem:[%s5218 + $0x28] sm:$0xff]
      %v7639 = vld [vmem:[%s5218 + $0x30] sm:$0xff]
      %v7640 = vld [vmem:[%s5218 + $0x38] sm:$0xff]
      %v7641 = vld [vmem:[%s5218 + $0x40] sm:$0xff]
      %v7642 = vld [vmem:[%s5218 + $0x48] sm:$0xff]
      %v7643 = vld [vmem:[%s5218 + $0x50] sm:$0xff]
      %v7644 = vld [vmem:[%s5218 + $0x58] sm:$0xff]
      %v7645 = vld [vmem:[%s5218 + $0x60] sm:$0xff]
      %v7646 = vld [vmem:[%s5218 + $0x68] sm:$0xff]
      %v7647 = vld [vmem:[%s5218 + $0x70] sm:$0xff]
      %v7648 = vld [vmem:[%s5218 + $0x78] sm:$0xff]
      %v7657 = vunpack.c.l.b16 %v7625
      %v7658 = vunpack.c.l.b16 %v7626
      %v7659 = vunpack.c.l.b16 %v7627
      %v7660 = vunpack.c.l.b16 %v7628
      %v7661 = vunpack.c.l.b16 %v7629
      %v7662 = vunpack.c.l.b16 %v7630
      %v7663 = vunpack.c.l.b16 %v7631
      %v7664 = vunpack.c.l.b16 %v7632
      %v7665 = vpack.c.b16 %v7658, %v7657
      %v7666 = vpack.c.b16 %v7660, %v7659
      %v7667 = vpack.c.b16 %v7662, %v7661
      %v7668 = vpack.c.b16 %v7664, %v7663
      %v7689 = vunpack.c.l.b16 %v7633
      %v7690 = vunpack.c.h.b16 %v7633
      %v7691 = vunpack.c.l.b16 %v7634
      %v7692 = vunpack.c.h.b16 %v7634
      %v7693 = vunpack.c.l.b16 %v7635
      %v7694 = vunpack.c.h.b16 %v7635
      %v7695 = vunpack.c.l.b16 %v7636
      %v7696 = vunpack.c.h.b16 %v7636
      %v7697 = vunpack.c.l.b16 %v7637
      %v7698 = vunpack.c.h.b16 %v7637
      %v7699 = vunpack.c.l.b16 %v7638
      %v7700 = vunpack.c.h.b16 %v7638
      %v7701 = vunpack.c.l.b16 %v7639
      %v7702 = vunpack.c.h.b16 %v7639
      %v7703 = vunpack.c.l.b16 %v7640
      %v7704 = vunpack.c.h.b16 %v7640
      %v7705 = vunpack.c.l.b16 %v7641
      %v7706 = vunpack.c.h.b16 %v7641
      %v7707 = vunpack.c.l.b16 %v7642
      %v7708 = vunpack.c.h.b16 %v7642
      %v7709 = vunpack.c.l.b16 %v7643
      %v7710 = vunpack.c.h.b16 %v7643
      %v7711 = vunpack.c.l.b16 %v7644
      %v7712 = vunpack.c.h.b16 %v7644
      %v7713 = vunpack.c.l.b16 %v7645
      %v7714 = vunpack.c.h.b16 %v7645
      %v7715 = vunpack.c.l.b16 %v7646
      %v7716 = vunpack.c.h.b16 %v7646
      %v7717 = vunpack.c.l.b16 %v7647
      %v7718 = vunpack.c.h.b16 %v7647
      %v7719 = vunpack.c.l.b16 %v7648
      %v7720 = vunpack.c.h.b16 %v7648
      %v7721 = vpack.c.b16 %v7691, %v7689
      %v7722 = vpack.c.b16 %v7692, %v7690
      %v7723 = vpack.c.b16 %v7695, %v7693
      %v7724 = vpack.c.b16 %v7696, %v7694
      %v7725 = vpack.c.b16 %v7699, %v7697
      %v7726 = vpack.c.b16 %v7700, %v7698
      %v7727 = vpack.c.b16 %v7703, %v7701
      %v7728 = vpack.c.b16 %v7704, %v7702
      %v7729 = vpack.c.b16 %v7707, %v7705
      %v7730 = vpack.c.b16 %v7708, %v7706
      %v7731 = vpack.c.b16 %v7711, %v7709
      %v7732 = vpack.c.b16 %v7712, %v7710
      %v7733 = vpack.c.b16 %v7715, %v7713
      %v7734 = vpack.c.b16 %v7716, %v7714
      %v7735 = vpack.c.b16 %v7719, %v7717
      %v7736 = vpack.c.b16 %v7720, %v7718
      %7753 = vmatprep.subr.bf16.mxu0 %v7736
      %7754 = vmatpush1.bf16.msra.mxu0 %v7735
      %7755 = vmatprep.subr.bf16.mxu0 %v7734
      %7756 = vmatpush1.bf16.msra.mxu0 %v7733
      %7757 = vmatprep.subr.bf16.mxu0 %v7732
      %7758 = vmatpush1.bf16.msra.mxu0 %v7731
      %7759 = vmatprep.subr.bf16.mxu0 %v7730
      %7760 = vmatpush1.bf16.msra.mxu0 %v7729
      %7761 = vmatprep.subr.bf16.mxu0 %v7728
      %7762 = vmatpush1.bf16.msra.mxu0 %v7727
      %7763 = vmatprep.subr.bf16.mxu0 %v7726
      %7764 = vmatpush1.bf16.msra.mxu0 %v7725
      %7765 = vmatprep.subr.bf16.mxu0 %v7724
      %7766 = vmatpush1.bf16.msra.mxu0 %v7723
      %7767 = vmatprep.subr.bf16.mxu0 %v7722
      %7768 = vmatpush1.bf16.msra.mxu0 %v7721
      %7769 = vmatprep.subr.bf16.mxu0 0
      %7770 = vmatpush2.bf16.msra.mxu0 0
      %7771 = vmatprep.subr.bf16.mxu0 0
      %7772 = vmatpush2.bf16.msra.mxu0 0
      %7773 = vmatprep.subr.bf16.mxu0 0
      %7774 = vmatpush2.bf16.msra.mxu0 0
      %7775 = vmatprep.subr.bf16.mxu0 0
      %7776 = vmatpush2.bf16.msra.mxu0 0
      %7777 = vmatprep.subr.bf16.mxu0 0
      %7778 = vmatpush2.bf16.msra.mxu0 0
      %7779 = vmatprep.subr.bf16.mxu0 0
      %7780 = vmatpush2.bf16.msra.mxu0 0
      %7781 = vmatprep.subr.bf16.mxu0 0
      %7782 = vmatpush2.bf16.msra.mxu0 0
      %7783 = vmatprep.subr.bf16.mxu0 0
      %7784 = vmatpush2.bf16.msra.mxu0 0
      %7785 = vmatprep.mubr.bf16.mxu0 0
      %7786 = vmatmul.mubr.bf16.gmra.mxu0 %v7665
      %v7787 = vpop.f32.mrf.mxu0
      %v7788 = vadd.f32 0.0, %v7787
      %v7789 = vpop.f32.mrf.mxu0
      %v7790 = vadd.f32 0.0, %v7789
      %v7791 = vpop.f32.mrf.mxu0
      %v7792 = vadd.f32 0.0, %v7791
      %v7793 = vpop.f32.mrf.mxu0
      %v7794 = vadd.f32 0.0, %v7793
      %7795 = vmatprep.mubr.bf16.mxu0 0
      %7796 = vmatmul.mubr.bf16.gmra.mxu0 %v7666
      %v7797 = vpop.f32.mrf.mxu0
      %v7798 = vadd.f32 0.0, %v7797
      %v7799 = vpop.f32.mrf.mxu0
      %v7800 = vadd.f32 0.0, %v7799
      %v7801 = vpop.f32.mrf.mxu0
      %v7802 = vadd.f32 0.0, %v7801
      %v7803 = vpop.f32.mrf.mxu0
      %v7804 = vadd.f32 0.0, %v7803
      %7805 = vmatprep.mubr.bf16.mxu0 0
      %7806 = vmatmul.mubr.bf16.gmra.mxu0 %v7667
      %v7807 = vpop.f32.mrf.mxu0
      %v7808 = vadd.f32 0.0, %v7807
      %v7809 = vpop.f32.mrf.mxu0
      %v7810 = vadd.f32 0.0, %v7809
      %v7811 = vpop.f32.mrf.mxu0
      %v7812 = vadd.f32 0.0, %v7811
      %v7813 = vpop.f32.mrf.mxu0
      %v7814 = vadd.f32 0.0, %v7813
      %7815 = vmatprep.mubr.bf16.mxu0 0
      %7816 = vmatmul.mubr.bf16.gmra.mxu0 %v7668
      %v7817 = vpop.f32.mrf.mxu0
      %v7818 = vadd.f32 0.0, %v7817
      %v7819 = vpop.f32.mrf.mxu0
      %v7820 = vadd.f32 0.0, %v7819
      %v7821 = vpop.f32.mrf.mxu0
      %v7822 = vadd.f32 0.0, %v7821
      %v7823 = vpop.f32.mrf.mxu0
      %v7824 = vadd.f32 0.0, %v7823
      %7825 = vdwg.mxu0
      %v7826 = vadd.f32 %v7587, %v7788
      %v7827 = vadd.f32 %v7589, %v7790
      %v7828 = vadd.f32 %v7591, %v7792
      %v7829 = vadd.f32 %v7593, %v7794
      %v7830 = vadd.f32 %v7597, %v7798
      %v7831 = vadd.f32 %v7599, %v7800
      %v7832 = vadd.f32 %v7601, %v7802
      %v7833 = vadd.f32 %v7603, %v7804
      %v7834 = vadd.f32 %v7607, %v7808
      %v7835 = vadd.f32 %v7609, %v7810
      %v7836 = vadd.f32 %v7611, %v7812
      %v7837 = vadd.f32 %v7613, %v7814
      %v7838 = vadd.f32 %v7617, %v7818
      %v7839 = vadd.f32 %v7619, %v7820
      %v7840 = vadd.f32 %v7621, %v7822
      %v7841 = vadd.f32 %v7623, %v7824
      %v7842 = vld [vmem:[%s4] sm:$0x3]
      %v7844 = vlaneseq
      %v7845 = vshrl.u32 %v7844, 7
      %v7846 = vsub.s32 0, %v7845
      %v7847 = vrot.slane %v7842, %v7846
      %v7848 = vlaneseq
      %v7849 = vshrl.u32 %v7848, 7
      %v7850 = vsub.s32 1, %v7849
      %v7851 = vrot.slane %v7842, %v7850
      %v7854 = vadd.f32 %v7826, %v7847
      %v7855 = vadd.f32 %v7827, %v7851
      %v7856 = vadd.f32 %v7828, %v7847
      %v7857 = vadd.f32 %v7829, %v7851
      %v7858 = vadd.f32 %v7830, %v7847
      %v7859 = vadd.f32 %v7831, %v7851
      %v7860 = vadd.f32 %v7832, %v7847
      %v7861 = vadd.f32 %v7833, %v7851
      %v7862 = vadd.f32 %v7834, %v7847
      %v7863 = vadd.f32 %v7835, %v7851
      %v7864 = vadd.f32 %v7836, %v7847
      %v7865 = vadd.f32 %v7837, %v7851
      %v7866 = vadd.f32 %v7838, %v7847
      %v7867 = vadd.f32 %v7839, %v7851
      %v7868 = vadd.f32 %v7840, %v7847
      %v7869 = vadd.f32 %v7841, %v7851
      %v7870 = vtanh.pop %v7854
      %v7871 = vtanh.pop %v7855
      %v7872 = vtanh.pop %v7856
      %v7873 = vtanh.pop %v7857
      %v7874 = vtanh.pop %v7858
      %v7875 = vtanh.pop %v7859
      %v7876 = vtanh.pop %v7860
      %v7877 = vtanh.pop %v7861
      %v7878 = vtanh.pop %v7862
      %v7879 = vtanh.pop %v7863
      %v7880 = vtanh.pop %v7864
      %v7881 = vtanh.pop %v7865
      %v7882 = vtanh.pop %v7866
      %v7883 = vtanh.pop %v7867
      %v7884 = vtanh.pop %v7868
      %v7885 = vtanh.pop %v7869
      %v7886 = vmax.f32 %v7870, %v7871
      %v7887 = vmax.f32 %v7872, %v7873
      %v7888 = vmax.f32 %v7874, %v7875
      %v7889 = vmax.f32 %v7876, %v7877
      %v7890 = vmax.f32 %v7878, %v7879
      %v7891 = vmax.f32 %v7880, %v7881
      %v7892 = vmax.f32 %v7882, %v7883
      %v7893 = vmax.f32 %v7884, %v7885
      %v7894 = vmax.f32 %v7886, %v7890
      %v7895 = vmax.f32 %v7887, %v7891
      %v7896 = vmax.f32 %v7888, %v7892
      %v7897 = vmax.f32 %v7889, %v7893
      %v7898 = vld [vmem:[#allocation3] sm:$0xff]
      %v7899 = vld [vmem:[#allocation3 + $0x8] sm:$0xff]
      %v7900 = vld [vmem:[#allocation3 + $0x10] sm:$0xff]
      %v7901 = vld [vmem:[#allocation3 + $0x18] sm:$0xff]
      %v7902 = vld [vmem:[#allocation3 + $0x20] sm:$0xff]
      %v7903 = vld [vmem:[#allocation3 + $0x28] sm:$0xff]
      %v7904 = vld [vmem:[#allocation3 + $0x30] sm:$0xff]
      %v7905 = vld [vmem:[#allocation3 + $0x38] sm:$0xff]
      %s7906 = scalar_lea.vmem %s5, 768
      %v7907 = vld [vmem:[%s7906] sm:$0xff]
      %v7908 = vld [vmem:[%s7906 + $0x8] sm:$0xff]
      %v7909 = vld [vmem:[%s7906 + $0x10] sm:$0xff]
      %v7910 = vld [vmem:[%s7906 + $0x18] sm:$0xff]
      %v7911 = vld [vmem:[%s7906 + $0x20] sm:$0xff]
      %v7912 = vld [vmem:[%s7906 + $0x28] sm:$0xff]
      %v7913 = vld [vmem:[%s7906 + $0x30] sm:$0xff]
      %v7914 = vld [vmem:[%s7906 + $0x38] sm:$0xff]
      %v7915 = vld [vmem:[%s7906 + $0x40] sm:$0xff]
      %v7916 = vld [vmem:[%s7906 + $0x48] sm:$0xff]
      %v7917 = vld [vmem:[%s7906 + $0x50] sm:$0xff]
      %v7918 = vld [vmem:[%s7906 + $0x58] sm:$0xff]
      %v7919 = vld [vmem:[%s7906 + $0x60] sm:$0xff]
      %v7920 = vld [vmem:[%s7906 + $0x68] sm:$0xff]
      %v7921 = vld [vmem:[%s7906 + $0x70] sm:$0xff]
      %v7922 = vld [vmem:[%s7906 + $0x78] sm:$0xff]
      %v7923 = vld [vmem:[%s7906 + $0x80] sm:$0xff]
      %v7924 = vld [vmem:[%s7906 + $0x88] sm:$0xff]
      %v7925 = vld [vmem:[%s7906 + $0x90] sm:$0xff]
      %v7926 = vld [vmem:[%s7906 + $0x98] sm:$0xff]
      %v7927 = vld [vmem:[%s7906 + $0xa0] sm:$0xff]
      %v7928 = vld [vmem:[%s7906 + $0xa8] sm:$0xff]
      %v7929 = vld [vmem:[%s7906 + $0xb0] sm:$0xff]
      %v7930 = vld [vmem:[%s7906 + $0xb8] sm:$0xff]
      %v7931 = vld [vmem:[%s7906 + $0xc0] sm:$0xff]
      %v7932 = vld [vmem:[%s7906 + $0xc8] sm:$0xff]
      %v7933 = vld [vmem:[%s7906 + $0xd0] sm:$0xff]
      %v7934 = vld [vmem:[%s7906 + $0xd8] sm:$0xff]
      %v7935 = vld [vmem:[%s7906 + $0xe0] sm:$0xff]
      %v7936 = vld [vmem:[%s7906 + $0xe8] sm:$0xff]
      %v7937 = vld [vmem:[%s7906 + $0xf0] sm:$0xff]
      %v7938 = vld [vmem:[%s7906 + $0xf8] sm:$0xff]
      %7939 = vmatprep.subr.mxu0 %v7938
      %7940 = vmatpush1.msra.mxu0 %v7937
      %7941 = vmatprep.subr.mxu0 %v7936
      %7942 = vmatpush1.msra.mxu0 %v7935
      %7943 = vmatprep.subr.mxu0 %v7934
      %7944 = vmatpush1.msra.mxu0 %v7933
      %7945 = vmatprep.subr.mxu0 %v7932
      %7946 = vmatpush1.msra.mxu0 %v7931
      %7947 = vmatprep.subr.mxu0 %v7930
      %7948 = vmatpush1.msra.mxu0 %v7929
      %7949 = vmatprep.subr.mxu0 %v7928
      %7950 = vmatpush1.msra.mxu0 %v7927
      %7951 = vmatprep.subr.mxu0 %v7926
      %7952 = vmatpush1.msra.mxu0 %v7925
      %7953 = vmatprep.subr.mxu0 %v7924
      %7954 = vmatpush1.msra.mxu0 %v7923
      %7955 = vmatprep.subr.mxu0 %v7922
      %7956 = vmatpush1.msra.mxu0 %v7921
      %7957 = vmatprep.subr.mxu0 %v7920
      %7958 = vmatpush1.msra.mxu0 %v7919
      %7959 = vmatprep.subr.mxu0 %v7918
      %7960 = vmatpush1.msra.mxu0 %v7917
      %7961 = vmatprep.subr.mxu0 %v7916
      %7962 = vmatpush1.msra.mxu0 %v7915
      %7963 = vmatprep.subr.mxu0 %v7914
      %7964 = vmatpush1.msra.mxu0 %v7913
      %7965 = vmatprep.subr.mxu0 %v7912
      %7966 = vmatpush1.msra.mxu0 %v7911
      %7967 = vmatprep.subr.mxu0 %v7910
      %7968 = vmatpush1.msra.mxu0 %v7909
      %7969 = vmatprep.subr.mxu0 %v7908
      %7970 = vmatpush1.msra.mxu0 %v7907
      %7971 = vmatprep.subr.mxu0 0.0
      %7972 = vmatpush2.msra.mxu0 0.0
      %7973 = vmatprep.subr.mxu0 0.0
      %7974 = vmatpush2.msra.mxu0 0.0
      %7975 = vmatprep.subr.mxu0 0.0
      %7976 = vmatpush2.msra.mxu0 0.0
      %7977 = vmatprep.subr.mxu0 0.0
      %7978 = vmatpush2.msra.mxu0 0.0
      %7979 = vmatprep.subr.mxu0 0.0
      %7980 = vmatpush2.msra.mxu0 0.0
      %7981 = vmatprep.subr.mxu0 0.0
      %7982 = vmatpush2.msra.mxu0 0.0
      %7983 = vmatprep.subr.mxu0 0.0
      %7984 = vmatpush2.msra.mxu0 0.0
      %7985 = vmatprep.subr.mxu0 0.0
      %7986 = vmatpush2.msra.mxu0 0.0
      %7987 = vmatprep.subr.mxu0 0.0
      %7988 = vmatpush2.msra.mxu0 0.0
      %7989 = vmatprep.subr.mxu0 0.0
      %7990 = vmatpush2.msra.mxu0 0.0
      %7991 = vmatprep.subr.mxu0 0.0
      %7992 = vmatpush2.msra.mxu0 0.0
      %7993 = vmatprep.subr.mxu0 0.0
      %7994 = vmatpush2.msra.mxu0 0.0
      %7995 = vmatprep.subr.mxu0 0.0
      %7996 = vmatpush2.msra.mxu0 0.0
      %7997 = vmatprep.subr.mxu0 0.0
      %7998 = vmatpush2.msra.mxu0 0.0
      %7999 = vmatprep.subr.mxu0 0.0
      %8000 = vmatpush2.msra.mxu0 0.0
      %8001 = vmatprep.subr.mxu0 0.0
      %8002 = vmatpush2.msra.mxu0 0.0
      %8003 = vmatprep.mubr.f32.mxu0 0.0
      %8004 = vmatmul.mubr.f32.gmra.mxu0 %v7894
      %v8005 = vpop.f32.mrf.mxu0
      %v8006 = vadd.f32 0.0, %v8005
      %v8007 = vpop.f32.mrf.mxu0
      %v8008 = vadd.f32 0.0, %v8007
      %8009 = vmatprep.mubr.f32.mxu0 0.0
      %8010 = vmatmul.mubr.f32.gmra.mxu0 %v7895
      %v8011 = vpop.f32.mrf.mxu0
      %v8012 = vadd.f32 0.0, %v8011
      %v8013 = vpop.f32.mrf.mxu0
      %v8014 = vadd.f32 0.0, %v8013
      %8015 = vmatprep.mubr.f32.mxu0 0.0
      %8016 = vmatmul.mubr.f32.gmra.mxu0 %v7896
      %v8017 = vpop.f32.mrf.mxu0
      %v8018 = vadd.f32 0.0, %v8017
      %v8019 = vpop.f32.mrf.mxu0
      %v8020 = vadd.f32 0.0, %v8019
      %8021 = vmatprep.mubr.f32.mxu0 0.0
      %8022 = vmatmul.mubr.f32.gmra.mxu0 %v7897
      %v8023 = vpop.f32.mrf.mxu0
      %v8024 = vadd.f32 0.0, %v8023
      %v8025 = vpop.f32.mrf.mxu0
      %v8026 = vadd.f32 0.0, %v8025
      %8027 = vdwg.mxu0
      %v8028 = vadd.f32 %v7898, %v8006
      %v8029 = vadd.f32 %v7899, %v8008
      %v8030 = vadd.f32 %v7900, %v8012
      %v8031 = vadd.f32 %v7901, %v8014
      %v8032 = vadd.f32 %v7902, %v8018
      %v8033 = vadd.f32 %v7903, %v8020
      %v8034 = vadd.f32 %v7904, %v8024
      %v8035 = vadd.f32 %v7905, %v8026
      %8036 = vst [vmem:[#allocation3] sm:$0xff] %v8028
      %8037 = vst [vmem:[#allocation3 + $0x8] sm:$0xff] %v8029
      %8038 = vst [vmem:[#allocation3 + $0x10] sm:$0xff] %v8030
      %8039 = vst [vmem:[#allocation3 + $0x18] sm:$0xff] %v8031
      %8040 = vst [vmem:[#allocation3 + $0x20] sm:$0xff] %v8032
      %8041 = vst [vmem:[#allocation3 + $0x28] sm:$0xff] %v8033
      %8042 = vst [vmem:[#allocation3 + $0x30] sm:$0xff] %v8034
      %8043 = vst [vmem:[#allocation3 + $0x38] sm:$0xff] %v8035
      %v8044 = vld [vmem:[#allocation2 + $0x80] sm:$0xf]
      %v8045 = vld [vmem:[#allocation2 + $0x84] sm:$0xf]
      %v8046 = vld [vmem:[#allocation2 + $0x88] sm:$0xf]
      %v8047 = vld [vmem:[#allocation2 + $0x8c] sm:$0xf]
      %v8048 = vld [vmem:[#allocation2 + $0x90] sm:$0xf]
      %v8049 = vld [vmem:[#allocation2 + $0x94] sm:$0xf]
      %v8050 = vld [vmem:[#allocation2 + $0x98] sm:$0xf]
      %v8051 = vld [vmem:[#allocation2 + $0x9c] sm:$0xf]
      %v8052 = vld [vmem:[%s3] sm:$0xff]
      %v8053 = vld [vmem:[%s3 + $0x8] sm:$0xff]
      %v8054 = vld [vmem:[%s3 + $0x10] sm:$0xff]
      %v8055 = vld [vmem:[%s3 + $0x18] sm:$0xff]
      %v8056 = vld [vmem:[%s3 + $0x20] sm:$0xff]
      %v8057 = vld [vmem:[%s3 + $0x28] sm:$0xff]
      %v8058 = vld [vmem:[%s3 + $0x30] sm:$0xff]
      %v8059 = vld [vmem:[%s3 + $0x38] sm:$0xff]
      %v8060 = vld [vmem:[%s3 + $0x40] sm:$0xff]
      %v8061 = vld [vmem:[%s3 + $0x48] sm:$0xff]
      %v8062 = vld [vmem:[%s3 + $0x50] sm:$0xff]
      %v8063 = vld [vmem:[%s3 + $0x58] sm:$0xff]
      %v8064 = vld [vmem:[%s3 + $0x60] sm:$0xff]
      %v8065 = vld [vmem:[%s3 + $0x68] sm:$0xff]
      %v8066 = vld [vmem:[%s3 + $0x70] sm:$0xff]
      %v8067 = vld [vmem:[%s3 + $0x78] sm:$0xff]
      %v8068 = vld [vmem:[#allocation2 + $0xa0] sm:$0xf]
      %v8069 = vld [vmem:[#allocation2 + $0xa4] sm:$0xf]
      %v8070 = vld [vmem:[#allocation2 + $0xa8] sm:$0xf]
      %v8071 = vld [vmem:[#allocation2 + $0xac] sm:$0xf]
      %v8072 = vld [vmem:[%s4851] sm:$0xff]
      %v8073 = vld [vmem:[%s4851 + $0x8] sm:$0xff]
      %v8074 = vld [vmem:[%s4851 + $0x10] sm:$0xff]
      %v8075 = vld [vmem:[%s4851 + $0x18] sm:$0xff]
      %v8076 = vld [vmem:[%s4851 + $0x20] sm:$0xff]
      %v8077 = vld [vmem:[%s4851 + $0x28] sm:$0xff]
      %v8078 = vld [vmem:[%s4851 + $0x30] sm:$0xff]
      %v8079 = vld [vmem:[%s4851 + $0x38] sm:$0xff]
      %v8080 = vld [vmem:[%s4851 + $0x40] sm:$0xff]
      %v8081 = vld [vmem:[%s4851 + $0x48] sm:$0xff]
      %v8082 = vld [vmem:[%s4851 + $0x50] sm:$0xff]
      %v8083 = vld [vmem:[%s4851 + $0x58] sm:$0xff]
      %v8084 = vld [vmem:[%s4851 + $0x60] sm:$0xff]
      %v8085 = vld [vmem:[%s4851 + $0x68] sm:$0xff]
      %v8086 = vld [vmem:[%s4851 + $0x70] sm:$0xff]
      %v8087 = vld [vmem:[%s4851 + $0x78] sm:$0xff]
      %v8096 = vunpack.c.l.b16 %v8048
      %v8097 = vunpack.c.l.b16 %v8049
      %v8098 = vunpack.c.l.b16 %v8050
      %v8099 = vunpack.c.l.b16 %v8051
      %v8100 = vunpack.c.l.b16 %v8068
      %v8101 = vunpack.c.l.b16 %v8069
      %v8102 = vunpack.c.l.b16 %v8070
      %v8103 = vunpack.c.l.b16 %v8071
      %v8104 = vpack.c.b16 %v8097, %v8096
      %v8105 = vpack.c.b16 %v8099, %v8098
      %v8106 = vpack.c.b16 %v8101, %v8100
      %v8107 = vpack.c.b16 %v8103, %v8102
      %v8128 = vunpack.c.l.b16 %v8072
      %v8129 = vunpack.c.h.b16 %v8072
      %v8130 = vunpack.c.l.b16 %v8073
      %v8131 = vunpack.c.h.b16 %v8073
      %v8132 = vunpack.c.l.b16 %v8074
      %v8133 = vunpack.c.h.b16 %v8074
      %v8134 = vunpack.c.l.b16 %v8075
      %v8135 = vunpack.c.h.b16 %v8075
      %v8136 = vunpack.c.l.b16 %v8076
      %v8137 = vunpack.c.h.b16 %v8076
      %v8138 = vunpack.c.l.b16 %v8077
      %v8139 = vunpack.c.h.b16 %v8077
      %v8140 = vunpack.c.l.b16 %v8078
      %v8141 = vunpack.c.h.b16 %v8078
      %v8142 = vunpack.c.l.b16 %v8079
      %v8143 = vunpack.c.h.b16 %v8079
      %v8144 = vunpack.c.l.b16 %v8080
      %v8145 = vunpack.c.h.b16 %v8080
      %v8146 = vunpack.c.l.b16 %v8081
      %v8147 = vunpack.c.h.b16 %v8081
      %v8148 = vunpack.c.l.b16 %v8082
      %v8149 = vunpack.c.h.b16 %v8082
      %v8150 = vunpack.c.l.b16 %v8083
      %v8151 = vunpack.c.h.b16 %v8083
      %v8152 = vunpack.c.l.b16 %v8084
      %v8153 = vunpack.c.h.b16 %v8084
      %v8154 = vunpack.c.l.b16 %v8085
      %v8155 = vunpack.c.h.b16 %v8085
      %v8156 = vunpack.c.l.b16 %v8086
      %v8157 = vunpack.c.h.b16 %v8086
      %v8158 = vunpack.c.l.b16 %v8087
      %v8159 = vunpack.c.h.b16 %v8087
      %v8160 = vpack.c.b16 %v8130, %v8128
      %v8161 = vpack.c.b16 %v8131, %v8129
      %v8162 = vpack.c.b16 %v8134, %v8132
      %v8163 = vpack.c.b16 %v8135, %v8133
      %v8164 = vpack.c.b16 %v8138, %v8136
      %v8165 = vpack.c.b16 %v8139, %v8137
      %v8166 = vpack.c.b16 %v8142, %v8140
      %v8167 = vpack.c.b16 %v8143, %v8141
      %v8168 = vpack.c.b16 %v8146, %v8144
      %v8169 = vpack.c.b16 %v8147, %v8145
      %v8170 = vpack.c.b16 %v8150, %v8148
      %v8171 = vpack.c.b16 %v8151, %v8149
      %v8172 = vpack.c.b16 %v8154, %v8152
      %v8173 = vpack.c.b16 %v8155, %v8153
      %v8174 = vpack.c.b16 %v8158, %v8156
      %v8175 = vpack.c.b16 %v8159, %v8157
      %8192 = vmatprep.subr.bf16.mxu0 %v8175
      %8193 = vmatpush1.bf16.msra.mxu0 %v8174
      %8194 = vmatprep.subr.bf16.mxu0 %v8173
      %8195 = vmatpush1.bf16.msra.mxu0 %v8172
      %8196 = vmatprep.subr.bf16.mxu0 %v8171
      %8197 = vmatpush1.bf16.msra.mxu0 %v8170
      %8198 = vmatprep.subr.bf16.mxu0 %v8169
      %8199 = vmatpush1.bf16.msra.mxu0 %v8168
      %8200 = vmatprep.subr.bf16.mxu0 %v8167
      %8201 = vmatpush1.bf16.msra.mxu0 %v8166
      %8202 = vmatprep.subr.bf16.mxu0 %v8165
      %8203 = vmatpush1.bf16.msra.mxu0 %v8164
      %8204 = vmatprep.subr.bf16.mxu0 %v8163
      %8205 = vmatpush1.bf16.msra.mxu0 %v8162
      %8206 = vmatprep.subr.bf16.mxu0 %v8161
      %8207 = vmatpush1.bf16.msra.mxu0 %v8160
      %8208 = vmatprep.subr.bf16.mxu0 0
      %8209 = vmatpush2.bf16.msra.mxu0 0
      %8210 = vmatprep.subr.bf16.mxu0 0
      %8211 = vmatpush2.bf16.msra.mxu0 0
      %8212 = vmatprep.subr.bf16.mxu0 0
      %8213 = vmatpush2.bf16.msra.mxu0 0
      %8214 = vmatprep.subr.bf16.mxu0 0
      %8215 = vmatpush2.bf16.msra.mxu0 0
      %8216 = vmatprep.subr.bf16.mxu0 0
      %8217 = vmatpush2.bf16.msra.mxu0 0
      %8218 = vmatprep.subr.bf16.mxu0 0
      %8219 = vmatpush2.bf16.msra.mxu0 0
      %8220 = vmatprep.subr.bf16.mxu0 0
      %8221 = vmatpush2.bf16.msra.mxu0 0
      %8222 = vmatprep.subr.bf16.mxu0 0
      %8223 = vmatpush2.bf16.msra.mxu0 0
      %8224 = vmatprep.mubr.bf16.mxu0 0
      %8225 = vmatmul.mubr.bf16.gmra.mxu0 %v8104
      %v8226 = vpop.f32.mrf.mxu0
      %v8227 = vadd.f32 0.0, %v8226
      %v8228 = vpop.f32.mrf.mxu0
      %v8229 = vadd.f32 0.0, %v8228
      %v8230 = vpop.f32.mrf.mxu0
      %v8231 = vadd.f32 0.0, %v8230
      %v8232 = vpop.f32.mrf.mxu0
      %v8233 = vadd.f32 0.0, %v8232
      %8234 = vmatprep.mubr.bf16.mxu0 0
      %8235 = vmatmul.mubr.bf16.gmra.mxu0 %v8105
      %v8236 = vpop.f32.mrf.mxu0
      %v8237 = vadd.f32 0.0, %v8236
      %v8238 = vpop.f32.mrf.mxu0
      %v8239 = vadd.f32 0.0, %v8238
      %v8240 = vpop.f32.mrf.mxu0
      %v8241 = vadd.f32 0.0, %v8240
      %v8242 = vpop.f32.mrf.mxu0
      %v8243 = vadd.f32 0.0, %v8242
      %8244 = vmatprep.mubr.bf16.mxu0 0
      %8245 = vmatmul.mubr.bf16.gmra.mxu0 %v8106
      %v8246 = vpop.f32.mrf.mxu0
      %v8247 = vadd.f32 0.0, %v8246
      %v8248 = vpop.f32.mrf.mxu0
      %v8249 = vadd.f32 0.0, %v8248
      %v8250 = vpop.f32.mrf.mxu0
      %v8251 = vadd.f32 0.0, %v8250
      %v8252 = vpop.f32.mrf.mxu0
      %v8253 = vadd.f32 0.0, %v8252
      %8254 = vmatprep.mubr.bf16.mxu0 0
      %8255 = vmatmul.mubr.bf16.gmra.mxu0 %v8107
      %v8256 = vpop.f32.mrf.mxu0
      %v8257 = vadd.f32 0.0, %v8256
      %v8258 = vpop.f32.mrf.mxu0
      %v8259 = vadd.f32 0.0, %v8258
      %v8260 = vpop.f32.mrf.mxu0
      %v8261 = vadd.f32 0.0, %v8260
      %v8262 = vpop.f32.mrf.mxu0
      %v8263 = vadd.f32 0.0, %v8262
      %8264 = vdwg.mxu0
      %v8269 = vunpack.c.l.b16 %v8044
      %v8270 = vunpack.c.l.b16 %v8045
      %v8271 = vunpack.c.l.b16 %v8046
      %v8272 = vunpack.c.l.b16 %v8047
      %v8273 = vpack.c.b16 %v8270, %v8269
      %v8274 = vpack.c.b16 %v8272, %v8271
      %v8293 = vunpack.c.l.b16 %v8052
      %v8294 = vunpack.c.h.b16 %v8052
      %v8295 = vunpack.c.l.b16 %v8053
      %v8296 = vunpack.c.h.b16 %v8053
      %v8297 = vunpack.c.l.b16 %v8054
      %v8298 = vunpack.c.h.b16 %v8054
      %v8299 = vunpack.c.l.b16 %v8055
      %v8300 = vunpack.c.h.b16 %v8055
      %v8301 = vunpack.c.l.b16 %v8056
      %v8302 = vunpack.c.h.b16 %v8056
      %v8303 = vunpack.c.l.b16 %v8057
      %v8304 = vunpack.c.h.b16 %v8057
      %v8305 = vunpack.c.l.b16 %v8058
      %v8306 = vunpack.c.h.b16 %v8058
      %v8307 = vunpack.c.l.b16 %v8059
      %v8308 = vunpack.c.h.b16 %v8059
      %v8309 = vunpack.c.l.b16 %v8060
      %v8310 = vunpack.c.h.b16 %v8060
      %v8311 = vunpack.c.l.b16 %v8061
      %v8312 = vunpack.c.h.b16 %v8061
      %v8313 = vunpack.c.l.b16 %v8062
      %v8314 = vunpack.c.h.b16 %v8062
      %v8315 = vunpack.c.l.b16 %v8063
      %v8316 = vunpack.c.h.b16 %v8063
      %v8317 = vunpack.c.l.b16 %v8064
      %v8318 = vunpack.c.h.b16 %v8064
      %v8319 = vunpack.c.l.b16 %v8065
      %v8320 = vunpack.c.h.b16 %v8065
      %v8321 = vunpack.c.l.b16 %v8066
      %v8322 = vunpack.c.h.b16 %v8066
      %v8323 = vunpack.c.l.b16 %v8067
      %v8324 = vunpack.c.h.b16 %v8067
      %v8325 = vpack.c.b16 %v8295, %v8293
      %v8326 = vpack.c.b16 %v8296, %v8294
      %v8327 = vpack.c.b16 %v8299, %v8297
      %v8328 = vpack.c.b16 %v8300, %v8298
      %v8329 = vpack.c.b16 %v8303, %v8301
      %v8330 = vpack.c.b16 %v8304, %v8302
      %v8331 = vpack.c.b16 %v8307, %v8305
      %v8332 = vpack.c.b16 %v8308, %v8306
      %v8333 = vpack.c.b16 %v8311, %v8309
      %v8334 = vpack.c.b16 %v8312, %v8310
      %v8335 = vpack.c.b16 %v8315, %v8313
      %v8336 = vpack.c.b16 %v8316, %v8314
      %v8337 = vpack.c.b16 %v8319, %v8317
      %v8338 = vpack.c.b16 %v8320, %v8318
      %v8339 = vpack.c.b16 %v8323, %v8321
      %v8340 = vpack.c.b16 %v8324, %v8322
      %8357 = vmatprep.subr.bf16.mxu0 %v8340
      %8358 = vmatpush1.bf16.msra.mxu0 %v8339
      %8359 = vmatprep.subr.bf16.mxu0 %v8338
      %8360 = vmatpush1.bf16.msra.mxu0 %v8337
      %8361 = vmatprep.subr.bf16.mxu0 %v8336
      %8362 = vmatpush1.bf16.msra.mxu0 %v8335
      %8363 = vmatprep.subr.bf16.mxu0 %v8334
      %8364 = vmatpush1.bf16.msra.mxu0 %v8333
      %8365 = vmatprep.subr.bf16.mxu0 %v8332
      %8366 = vmatpush1.bf16.msra.mxu0 %v8331
      %8367 = vmatprep.subr.bf16.mxu0 %v8330
      %8368 = vmatpush1.bf16.msra.mxu0 %v8329
      %8369 = vmatprep.subr.bf16.mxu0 %v8328
      %8370 = vmatpush1.bf16.msra.mxu0 %v8327
      %8371 = vmatprep.subr.bf16.mxu0 %v8326
      %8372 = vmatpush1.bf16.msra.mxu0 %v8325
      %8373 = vmatprep.subr.bf16.mxu0 0
      %8374 = vmatpush2.bf16.msra.mxu0 0
      %8375 = vmatprep.subr.bf16.mxu0 0
      %8376 = vmatpush2.bf16.msra.mxu0 0
      %8377 = vmatprep.subr.bf16.mxu0 0
      %8378 = vmatpush2.bf16.msra.mxu0 0
      %8379 = vmatprep.subr.bf16.mxu0 0
      %8380 = vmatpush2.bf16.msra.mxu0 0
      %8381 = vmatprep.subr.bf16.mxu0 0
      %8382 = vmatpush2.bf16.msra.mxu0 0
      %8383 = vmatprep.subr.bf16.mxu0 0
      %8384 = vmatpush2.bf16.msra.mxu0 0
      %8385 = vmatprep.subr.bf16.mxu0 0
      %8386 = vmatpush2.bf16.msra.mxu0 0
      %8387 = vmatprep.subr.bf16.mxu0 0
      %8388 = vmatpush2.bf16.msra.mxu0 0
      %8389 = vmatprep.mubr.bf16.mxu0 0
      %8390 = vmatmul.mubr.bf16.gmra.mxu0 %v8273
      %v8391 = vpop.f32.mrf.mxu0
      %v8392 = vadd.f32 %v8227, %v8391
      %v8393 = vpop.f32.mrf.mxu0
      %v8394 = vadd.f32 %v8229, %v8393
      %v8395 = vpop.f32.mrf.mxu0
      %v8396 = vadd.f32 %v8231, %v8395
      %v8397 = vpop.f32.mrf.mxu0
      %v8398 = vadd.f32 %v8233, %v8397
      %8399 = vmatprep.mubr.bf16.mxu0 0
      %8400 = vmatmul.mubr.bf16.gmra.mxu0 %v8274
      %v8401 = vpop.f32.mrf.mxu0
      %v8402 = vadd.f32 %v8237, %v8401
      %v8403 = vpop.f32.mrf.mxu0
      %v8404 = vadd.f32 %v8239, %v8403
      %v8405 = vpop.f32.mrf.mxu0
      %v8406 = vadd.f32 %v8241, %v8405
      %v8407 = vpop.f32.mrf.mxu0
      %v8408 = vadd.f32 %v8243, %v8407
      %8409 = vmatprep.mubr.bf16.mxu0 0
      %8410 = vmatmul.mubr.bf16.gmra.mxu0 %v8104
      %v8411 = vpop.f32.mrf.mxu0
      %v8412 = vadd.f32 %v8247, %v8411
      %v8413 = vpop.f32.mrf.mxu0
      %v8414 = vadd.f32 %v8249, %v8413
      %v8415 = vpop.f32.mrf.mxu0
      %v8416 = vadd.f32 %v8251, %v8415
      %v8417 = vpop.f32.mrf.mxu0
      %v8418 = vadd.f32 %v8253, %v8417
      %8419 = vmatprep.mubr.bf16.mxu0 0
      %8420 = vmatmul.mubr.bf16.gmra.mxu0 %v8105
      %v8421 = vpop.f32.mrf.mxu0
      %v8422 = vadd.f32 %v8257, %v8421
      %v8423 = vpop.f32.mrf.mxu0
      %v8424 = vadd.f32 %v8259, %v8423
      %v8425 = vpop.f32.mrf.mxu0
      %v8426 = vadd.f32 %v8261, %v8425
      %v8427 = vpop.f32.mrf.mxu0
      %v8428 = vadd.f32 %v8263, %v8427
      %8429 = vdwg.mxu0
      %v8430 = vld [vmem:[#allocation2 + $0xa0] sm:$0xf]
      %v8431 = vld [vmem:[#allocation2 + $0xa4] sm:$0xf]
      %v8432 = vld [vmem:[#allocation2 + $0xa8] sm:$0xf]
      %v8433 = vld [vmem:[#allocation2 + $0xac] sm:$0xf]
      %v8434 = vld [vmem:[#allocation2 + $0xb0] sm:$0xf]
      %v8435 = vld [vmem:[#allocation2 + $0xb4] sm:$0xf]
      %v8436 = vld [vmem:[#allocation2 + $0xb8] sm:$0xf]
      %v8437 = vld [vmem:[#allocation2 + $0xbc] sm:$0xf]
      %v8438 = vld [vmem:[%s5218] sm:$0xff]
      %v8439 = vld [vmem:[%s5218 + $0x8] sm:$0xff]
      %v8440 = vld [vmem:[%s5218 + $0x10] sm:$0xff]
      %v8441 = vld [vmem:[%s5218 + $0x18] sm:$0xff]
      %v8442 = vld [vmem:[%s5218 + $0x20] sm:$0xff]
      %v8443 = vld [vmem:[%s5218 + $0x28] sm:$0xff]
      %v8444 = vld [vmem:[%s5218 + $0x30] sm:$0xff]
      %v8445 = vld [vmem:[%s5218 + $0x38] sm:$0xff]
      %v8446 = vld [vmem:[%s5218 + $0x40] sm:$0xff]
      %v8447 = vld [vmem:[%s5218 + $0x48] sm:$0xff]
      %v8448 = vld [vmem:[%s5218 + $0x50] sm:$0xff]
      %v8449 = vld [vmem:[%s5218 + $0x58] sm:$0xff]
      %v8450 = vld [vmem:[%s5218 + $0x60] sm:$0xff]
      %v8451 = vld [vmem:[%s5218 + $0x68] sm:$0xff]
      %v8452 = vld [vmem:[%s5218 + $0x70] sm:$0xff]
      %v8453 = vld [vmem:[%s5218 + $0x78] sm:$0xff]
      %v8462 = vunpack.c.l.b16 %v8430
      %v8463 = vunpack.c.l.b16 %v8431
      %v8464 = vunpack.c.l.b16 %v8432
      %v8465 = vunpack.c.l.b16 %v8433
      %v8466 = vunpack.c.l.b16 %v8434
      %v8467 = vunpack.c.l.b16 %v8435
      %v8468 = vunpack.c.l.b16 %v8436
      %v8469 = vunpack.c.l.b16 %v8437
      %v8470 = vpack.c.b16 %v8463, %v8462
      %v8471 = vpack.c.b16 %v8465, %v8464
      %v8472 = vpack.c.b16 %v8467, %v8466
      %v8473 = vpack.c.b16 %v8469, %v8468
      %v8494 = vunpack.c.l.b16 %v8438
      %v8495 = vunpack.c.h.b16 %v8438
      %v8496 = vunpack.c.l.b16 %v8439
      %v8497 = vunpack.c.h.b16 %v8439
      %v8498 = vunpack.c.l.b16 %v8440
      %v8499 = vunpack.c.h.b16 %v8440
      %v8500 = vunpack.c.l.b16 %v8441
      %v8501 = vunpack.c.h.b16 %v8441
      %v8502 = vunpack.c.l.b16 %v8442
      %v8503 = vunpack.c.h.b16 %v8442
      %v8504 = vunpack.c.l.b16 %v8443
      %v8505 = vunpack.c.h.b16 %v8443
      %v8506 = vunpack.c.l.b16 %v8444
      %v8507 = vunpack.c.h.b16 %v8444
      %v8508 = vunpack.c.l.b16 %v8445
      %v8509 = vunpack.c.h.b16 %v8445
      %v8510 = vunpack.c.l.b16 %v8446
      %v8511 = vunpack.c.h.b16 %v8446
      %v8512 = vunpack.c.l.b16 %v8447
      %v8513 = vunpack.c.h.b16 %v8447
      %v8514 = vunpack.c.l.b16 %v8448
      %v8515 = vunpack.c.h.b16 %v8448
      %v8516 = vunpack.c.l.b16 %v8449
      %v8517 = vunpack.c.h.b16 %v8449
      %v8518 = vunpack.c.l.b16 %v8450
      %v8519 = vunpack.c.h.b16 %v8450
      %v8520 = vunpack.c.l.b16 %v8451
      %v8521 = vunpack.c.h.b16 %v8451
      %v8522 = vunpack.c.l.b16 %v8452
      %v8523 = vunpack.c.h.b16 %v8452
      %v8524 = vunpack.c.l.b16 %v8453
      %v8525 = vunpack.c.h.b16 %v8453
      %v8526 = vpack.c.b16 %v8496, %v8494
      %v8527 = vpack.c.b16 %v8497, %v8495
      %v8528 = vpack.c.b16 %v8500, %v8498
      %v8529 = vpack.c.b16 %v8501, %v8499
      %v8530 = vpack.c.b16 %v8504, %v8502
      %v8531 = vpack.c.b16 %v8505, %v8503
      %v8532 = vpack.c.b16 %v8508, %v8506
      %v8533 = vpack.c.b16 %v8509, %v8507
      %v8534 = vpack.c.b16 %v8512, %v8510
      %v8535 = vpack.c.b16 %v8513, %v8511
      %v8536 = vpack.c.b16 %v8516, %v8514
      %v8537 = vpack.c.b16 %v8517, %v8515
      %v8538 = vpack.c.b16 %v8520, %v8518
      %v8539 = vpack.c.b16 %v8521, %v8519
      %v8540 = vpack.c.b16 %v8524, %v8522
      %v8541 = vpack.c.b16 %v8525, %v8523
      %8558 = vmatprep.subr.bf16.mxu0 %v8541
      %8559 = vmatpush1.bf16.msra.mxu0 %v8540
      %8560 = vmatprep.subr.bf16.mxu0 %v8539
      %8561 = vmatpush1.bf16.msra.mxu0 %v8538
      %8562 = vmatprep.subr.bf16.mxu0 %v8537
      %8563 = vmatpush1.bf16.msra.mxu0 %v8536
      %8564 = vmatprep.subr.bf16.mxu0 %v8535
      %8565 = vmatpush1.bf16.msra.mxu0 %v8534
      %8566 = vmatprep.subr.bf16.mxu0 %v8533
      %8567 = vmatpush1.bf16.msra.mxu0 %v8532
      %8568 = vmatprep.subr.bf16.mxu0 %v8531
      %8569 = vmatpush1.bf16.msra.mxu0 %v8530
      %8570 = vmatprep.subr.bf16.mxu0 %v8529
      %8571 = vmatpush1.bf16.msra.mxu0 %v8528
      %8572 = vmatprep.subr.bf16.mxu0 %v8527
      %8573 = vmatpush1.bf16.msra.mxu0 %v8526
      %8574 = vmatprep.subr.bf16.mxu0 0
      %8575 = vmatpush2.bf16.msra.mxu0 0
      %8576 = vmatprep.subr.bf16.mxu0 0
      %8577 = vmatpush2.bf16.msra.mxu0 0
      %8578 = vmatprep.subr.bf16.mxu0 0
      %8579 = vmatpush2.bf16.msra.mxu0 0
      %8580 = vmatprep.subr.bf16.mxu0 0
      %8581 = vmatpush2.bf16.msra.mxu0 0
      %8582 = vmatprep.subr.bf16.mxu0 0
      %8583 = vmatpush2.bf16.msra.mxu0 0
      %8584 = vmatprep.subr.bf16.mxu0 0
      %8585 = vmatpush2.bf16.msra.mxu0 0
      %8586 = vmatprep.subr.bf16.mxu0 0
      %8587 = vmatpush2.bf16.msra.mxu0 0
      %8588 = vmatprep.subr.bf16.mxu0 0
      %8589 = vmatpush2.bf16.msra.mxu0 0
      %8590 = vmatprep.mubr.bf16.mxu0 0
      %8591 = vmatmul.mubr.bf16.gmra.mxu0 %v8470
      %v8592 = vpop.f32.mrf.mxu0
      %v8593 = vadd.f32 0.0, %v8592
      %v8594 = vpop.f32.mrf.mxu0
      %v8595 = vadd.f32 0.0, %v8594
      %v8596 = vpop.f32.mrf.mxu0
      %v8597 = vadd.f32 0.0, %v8596
      %v8598 = vpop.f32.mrf.mxu0
      %v8599 = vadd.f32 0.0, %v8598
      %8600 = vmatprep.mubr.bf16.mxu0 0
      %8601 = vmatmul.mubr.bf16.gmra.mxu0 %v8471
      %v8602 = vpop.f32.mrf.mxu0
      %v8603 = vadd.f32 0.0, %v8602
      %v8604 = vpop.f32.mrf.mxu0
      %v8605 = vadd.f32 0.0, %v8604
      %v8606 = vpop.f32.mrf.mxu0
      %v8607 = vadd.f32 0.0, %v8606
      %v8608 = vpop.f32.mrf.mxu0
      %v8609 = vadd.f32 0.0, %v8608
      %8610 = vmatprep.mubr.bf16.mxu0 0
      %8611 = vmatmul.mubr.bf16.gmra.mxu0 %v8472
      %v8612 = vpop.f32.mrf.mxu0
      %v8613 = vadd.f32 0.0, %v8612
      %v8614 = vpop.f32.mrf.mxu0
      %v8615 = vadd.f32 0.0, %v8614
      %v8616 = vpop.f32.mrf.mxu0
      %v8617 = vadd.f32 0.0, %v8616
      %v8618 = vpop.f32.mrf.mxu0
      %v8619 = vadd.f32 0.0, %v8618
      %8620 = vmatprep.mubr.bf16.mxu0 0
      %8621 = vmatmul.mubr.bf16.gmra.mxu0 %v8473
      %v8622 = vpop.f32.mrf.mxu0
      %v8623 = vadd.f32 0.0, %v8622
      %v8624 = vpop.f32.mrf.mxu0
      %v8625 = vadd.f32 0.0, %v8624
      %v8626 = vpop.f32.mrf.mxu0
      %v8627 = vadd.f32 0.0, %v8626
      %v8628 = vpop.f32.mrf.mxu0
      %v8629 = vadd.f32 0.0, %v8628
      %8630 = vdwg.mxu0
      %v8631 = vadd.f32 %v8392, %v8593
      %v8632 = vadd.f32 %v8394, %v8595
      %v8633 = vadd.f32 %v8396, %v8597
      %v8634 = vadd.f32 %v8398, %v8599
      %v8635 = vadd.f32 %v8402, %v8603
      %v8636 = vadd.f32 %v8404, %v8605
      %v8637 = vadd.f32 %v8406, %v8607
      %v8638 = vadd.f32 %v8408, %v8609
      %v8639 = vadd.f32 %v8412, %v8613
      %v8640 = vadd.f32 %v8414, %v8615
      %v8641 = vadd.f32 %v8416, %v8617
      %v8642 = vadd.f32 %v8418, %v8619
      %v8643 = vadd.f32 %v8422, %v8623
      %v8644 = vadd.f32 %v8424, %v8625
      %v8645 = vadd.f32 %v8426, %v8627
      %v8646 = vadd.f32 %v8428, %v8629
      %v8647 = vld [vmem:[%s4] sm:$0x3]
      %v8649 = vlaneseq
      %v8650 = vshrl.u32 %v8649, 7
      %v8651 = vsub.s32 0, %v8650
      %v8652 = vrot.slane %v8647, %v8651
      %v8653 = vlaneseq
      %v8654 = vshrl.u32 %v8653, 7
      %v8655 = vsub.s32 1, %v8654
      %v8656 = vrot.slane %v8647, %v8655
      %v8659 = vadd.f32 %v8631, %v8652
      %v8660 = vadd.f32 %v8632, %v8656
      %v8661 = vadd.f32 %v8633, %v8652
      %v8662 = vadd.f32 %v8634, %v8656
      %v8663 = vadd.f32 %v8635, %v8652
      %v8664 = vadd.f32 %v8636, %v8656
      %v8665 = vadd.f32 %v8637, %v8652
      %v8666 = vadd.f32 %v8638, %v8656
      %v8667 = vadd.f32 %v8639, %v8652
      %v8668 = vadd.f32 %v8640, %v8656
      %v8669 = vadd.f32 %v8641, %v8652
      %v8670 = vadd.f32 %v8642, %v8656
      %v8671 = vadd.f32 %v8643, %v8652
      %v8672 = vadd.f32 %v8644, %v8656
      %v8673 = vadd.f32 %v8645, %v8652
      %v8674 = vadd.f32 %v8646, %v8656
      %v8675 = vtanh.pop %v8659
      %v8676 = vtanh.pop %v8660
      %v8677 = vtanh.pop %v8661
      %v8678 = vtanh.pop %v8662
      %v8679 = vtanh.pop %v8663
      %v8680 = vtanh.pop %v8664
      %v8681 = vtanh.pop %v8665
      %v8682 = vtanh.pop %v8666
      %v8683 = vtanh.pop %v8667
      %v8684 = vtanh.pop %v8668
      %v8685 = vtanh.pop %v8669
      %v8686 = vtanh.pop %v8670
      %v8687 = vtanh.pop %v8671
      %v8688 = vtanh.pop %v8672
      %v8689 = vtanh.pop %v8673
      %v8690 = vtanh.pop %v8674
      %v8691 = vmax.f32 %v8675, %v8676
      %v8692 = vmax.f32 %v8677, %v8678
      %v8693 = vmax.f32 %v8679, %v8680
      %v8694 = vmax.f32 %v8681, %v8682
      %v8695 = vmax.f32 %v8683, %v8684
      %v8696 = vmax.f32 %v8685, %v8686
      %v8697 = vmax.f32 %v8687, %v8688
      %v8698 = vmax.f32 %v8689, %v8690
      %v8699 = vmax.f32 %v8691, %v8695
      %v8700 = vmax.f32 %v8692, %v8696
      %v8701 = vmax.f32 %v8693, %v8697
      %v8702 = vmax.f32 %v8694, %v8698
      %v8703 = vld [vmem:[#allocation3] sm:$0xff]
      %v8704 = vld [vmem:[#allocation3 + $0x8] sm:$0xff]
      %v8705 = vld [vmem:[#allocation3 + $0x10] sm:$0xff]
      %v8706 = vld [vmem:[#allocation3 + $0x18] sm:$0xff]
      %v8707 = vld [vmem:[#allocation3 + $0x20] sm:$0xff]
      %v8708 = vld [vmem:[#allocation3 + $0x28] sm:$0xff]
      %v8709 = vld [vmem:[#allocation3 + $0x30] sm:$0xff]
      %v8710 = vld [vmem:[#allocation3 + $0x38] sm:$0xff]
      %s8711 = scalar_lea.vmem %s5, 1024
      %v8712 = vld [vmem:[%s8711] sm:$0xff]
      %v8713 = vld [vmem:[%s8711 + $0x8] sm:$0xff]
      %v8714 = vld [vmem:[%s8711 + $0x10] sm:$0xff]
      %v8715 = vld [vmem:[%s8711 + $0x18] sm:$0xff]
      %v8716 = vld [vmem:[%s8711 + $0x20] sm:$0xff]
      %v8717 = vld [vmem:[%s8711 + $0x28] sm:$0xff]
      %v8718 = vld [vmem:[%s8711 + $0x30] sm:$0xff]
      %v8719 = vld [vmem:[%s8711 + $0x38] sm:$0xff]
      %v8720 = vld [vmem:[%s8711 + $0x40] sm:$0xff]
      %v8721 = vld [vmem:[%s8711 + $0x48] sm:$0xff]
      %v8722 = vld [vmem:[%s8711 + $0x50] sm:$0xff]
      %v8723 = vld [vmem:[%s8711 + $0x58] sm:$0xff]
      %v8724 = vld [vmem:[%s8711 + $0x60] sm:$0xff]
      %v8725 = vld [vmem:[%s8711 + $0x68] sm:$0xff]
      %v8726 = vld [vmem:[%s8711 + $0x70] sm:$0xff]
      %v8727 = vld [vmem:[%s8711 + $0x78] sm:$0xff]
      %v8728 = vld [vmem:[%s8711 + $0x80] sm:$0xff]
      %v8729 = vld [vmem:[%s8711 + $0x88] sm:$0xff]
      %v8730 = vld [vmem:[%s8711 + $0x90] sm:$0xff]
      %v8731 = vld [vmem:[%s8711 + $0x98] sm:$0xff]
      %v8732 = vld [vmem:[%s8711 + $0xa0] sm:$0xff]
      %v8733 = vld [vmem:[%s8711 + $0xa8] sm:$0xff]
      %v8734 = vld [vmem:[%s8711 + $0xb0] sm:$0xff]
      %v8735 = vld [vmem:[%s8711 + $0xb8] sm:$0xff]
      %v8736 = vld [vmem:[%s8711 + $0xc0] sm:$0xff]
      %v8737 = vld [vmem:[%s8711 + $0xc8] sm:$0xff]
      %v8738 = vld [vmem:[%s8711 + $0xd0] sm:$0xff]
      %v8739 = vld [vmem:[%s8711 + $0xd8] sm:$0xff]
      %v8740 = vld [vmem:[%s8711 + $0xe0] sm:$0xff]
      %v8741 = vld [vmem:[%s8711 + $0xe8] sm:$0xff]
      %v8742 = vld [vmem:[%s8711 + $0xf0] sm:$0xff]
      %v8743 = vld [vmem:[%s8711 + $0xf8] sm:$0xff]
      %8744 = vmatprep.subr.mxu0 %v8743
      %8745 = vmatpush1.msra.mxu0 %v8742
      %8746 = vmatprep.subr.mxu0 %v8741
      %8747 = vmatpush1.msra.mxu0 %v8740
      %8748 = vmatprep.subr.mxu0 %v8739
      %8749 = vmatpush1.msra.mxu0 %v8738
      %8750 = vmatprep.subr.mxu0 %v8737
      %8751 = vmatpush1.msra.mxu0 %v8736
      %8752 = vmatprep.subr.mxu0 %v8735
      %8753 = vmatpush1.msra.mxu0 %v8734
      %8754 = vmatprep.subr.mxu0 %v8733
      %8755 = vmatpush1.msra.mxu0 %v8732
      %8756 = vmatprep.subr.mxu0 %v8731
      %8757 = vmatpush1.msra.mxu0 %v8730
      %8758 = vmatprep.subr.mxu0 %v8729
      %8759 = vmatpush1.msra.mxu0 %v8728
      %8760 = vmatprep.subr.mxu0 %v8727
      %8761 = vmatpush1.msra.mxu0 %v8726
      %8762 = vmatprep.subr.mxu0 %v8725
      %8763 = vmatpush1.msra.mxu0 %v8724
      %8764 = vmatprep.subr.mxu0 %v8723
      %8765 = vmatpush1.msra.mxu0 %v8722
      %8766 = vmatprep.subr.mxu0 %v8721
      %8767 = vmatpush1.msra.mxu0 %v8720
      %8768 = vmatprep.subr.mxu0 %v8719
      %8769 = vmatpush1.msra.mxu0 %v8718
      %8770 = vmatprep.subr.mxu0 %v8717
      %8771 = vmatpush1.msra.mxu0 %v8716
      %8772 = vmatprep.subr.mxu0 %v8715
      %8773 = vmatpush1.msra.mxu0 %v8714
      %8774 = vmatprep.subr.mxu0 %v8713
      %8775 = vmatpush1.msra.mxu0 %v8712
      %8776 = vmatprep.subr.mxu0 0.0
      %8777 = vmatpush2.msra.mxu0 0.0
      %8778 = vmatprep.subr.mxu0 0.0
      %8779 = vmatpush2.msra.mxu0 0.0
      %8780 = vmatprep.subr.mxu0 0.0
      %8781 = vmatpush2.msra.mxu0 0.0
      %8782 = vmatprep.subr.mxu0 0.0
      %8783 = vmatpush2.msra.mxu0 0.0
      %8784 = vmatprep.subr.mxu0 0.0
      %8785 = vmatpush2.msra.mxu0 0.0
      %8786 = vmatprep.subr.mxu0 0.0
      %8787 = vmatpush2.msra.mxu0 0.0
      %8788 = vmatprep.subr.mxu0 0.0
      %8789 = vmatpush2.msra.mxu0 0.0
      %8790 = vmatprep.subr.mxu0 0.0
      %8791 = vmatpush2.msra.mxu0 0.0
      %8792 = vmatprep.subr.mxu0 0.0
      %8793 = vmatpush2.msra.mxu0 0.0
      %8794 = vmatprep.subr.mxu0 0.0
      %8795 = vmatpush2.msra.mxu0 0.0
      %8796 = vmatprep.subr.mxu0 0.0
      %8797 = vmatpush2.msra.mxu0 0.0
      %8798 = vmatprep.subr.mxu0 0.0
      %8799 = vmatpush2.msra.mxu0 0.0
      %8800 = vmatprep.subr.mxu0 0.0
      %8801 = vmatpush2.msra.mxu0 0.0
      %8802 = vmatprep.subr.mxu0 0.0
      %8803 = vmatpush2.msra.mxu0 0.0
      %8804 = vmatprep.subr.mxu0 0.0
      %8805 = vmatpush2.msra.mxu0 0.0
      %8806 = vmatprep.subr.mxu0 0.0
      %8807 = vmatpush2.msra.mxu0 0.0
      %8808 = vmatprep.mubr.f32.mxu0 0.0
      %8809 = vmatmul.mubr.f32.gmra.mxu0 %v8699
      %v8810 = vpop.f32.mrf.mxu0
      %v8811 = vadd.f32 0.0, %v8810
      %v8812 = vpop.f32.mrf.mxu0
      %v8813 = vadd.f32 0.0, %v8812
      %8814 = vmatprep.mubr.f32.mxu0 0.0
      %8815 = vmatmul.mubr.f32.gmra.mxu0 %v8700
      %v8816 = vpop.f32.mrf.mxu0
      %v8817 = vadd.f32 0.0, %v8816
      %v8818 = vpop.f32.mrf.mxu0
      %v8819 = vadd.f32 0.0, %v8818
      %8820 = vmatprep.mubr.f32.mxu0 0.0
      %8821 = vmatmul.mubr.f32.gmra.mxu0 %v8701
      %v8822 = vpop.f32.mrf.mxu0
      %v8823 = vadd.f32 0.0, %v8822
      %v8824 = vpop.f32.mrf.mxu0
      %v8825 = vadd.f32 0.0, %v8824
      %8826 = vmatprep.mubr.f32.mxu0 0.0
      %8827 = vmatmul.mubr.f32.gmra.mxu0 %v8702
      %v8828 = vpop.f32.mrf.mxu0
      %v8829 = vadd.f32 0.0, %v8828
      %v8830 = vpop.f32.mrf.mxu0
      %v8831 = vadd.f32 0.0, %v8830
      %8832 = vdwg.mxu0
      %v8833 = vadd.f32 %v8703, %v8811
      %v8834 = vadd.f32 %v8704, %v8813
      %v8835 = vadd.f32 %v8705, %v8817
      %v8836 = vadd.f32 %v8706, %v8819
      %v8837 = vadd.f32 %v8707, %v8823
      %v8838 = vadd.f32 %v8708, %v8825
      %v8839 = vadd.f32 %v8709, %v8829
      %v8840 = vadd.f32 %v8710, %v8831
      %8841 = vst [vmem:[#allocation3] sm:$0xff] %v8833
      %8842 = vst [vmem:[#allocation3 + $0x8] sm:$0xff] %v8834
      %8843 = vst [vmem:[#allocation3 + $0x10] sm:$0xff] %v8835
      %8844 = vst [vmem:[#allocation3 + $0x18] sm:$0xff] %v8836
      %8845 = vst [vmem:[#allocation3 + $0x20] sm:$0xff] %v8837
      %8846 = vst [vmem:[#allocation3 + $0x28] sm:$0xff] %v8838
      %8847 = vst [vmem:[#allocation3 + $0x30] sm:$0xff] %v8839
      %8848 = vst [vmem:[#allocation3 + $0x38] sm:$0xff] %v8840
      %v8849 = vld [vmem:[#allocation3] sm:$0xff]
      %v8850 = vld [vmem:[#allocation3 + $0x8] sm:$0xff]
      %v8851 = vld [vmem:[#allocation3 + $0x10] sm:$0xff]
      %v8852 = vld [vmem:[#allocation3 + $0x18] sm:$0xff]
      %v8853 = vld [vmem:[#allocation3 + $0x20] sm:$0xff]
      %v8854 = vld [vmem:[#allocation3 + $0x28] sm:$0xff]
      %v8855 = vld [vmem:[#allocation3 + $0x30] sm:$0xff]
      %v8856 = vld [vmem:[#allocation3 + $0x38] sm:$0xff]
      %v8857 = vld [vmem:[%s6] sm:$0x3]
      %v8859 = vlaneseq
      %v8860 = vshrl.u32 %v8859, 7
      %v8861 = vsub.s32 0, %v8860
      %v8862 = vrot.slane %v8857, %v8861
      %v8863 = vlaneseq
      %v8864 = vshrl.u32 %v8863, 7
      %v8865 = vsub.s32 1, %v8864
      %v8866 = vrot.slane %v8857, %v8865
      %v8869 = vadd.f32 %v8849, %v8862
      %v8870 = vadd.f32 %v8850, %v8866
      %v8871 = vadd.f32 %v8851, %v8862
      %v8872 = vadd.f32 %v8852, %v8866
      %v8873 = vadd.f32 %v8853, %v8862
      %v8874 = vadd.f32 %v8854, %v8866
      %v8875 = vadd.f32 %v8855, %v8862
      %v8876 = vadd.f32 %v8856, %v8866
      %v8877 = vtanh.pop %v8869
      %v8878 = vtanh.pop %v8870
      %v8879 = vtanh.pop %v8871
      %v8880 = vtanh.pop %v8872
      %v8881 = vtanh.pop %v8873
      %v8882 = vtanh.pop %v8874
      %v8883 = vtanh.pop %v8875
      %v8884 = vtanh.pop %v8876
      %v8885 = vld [vmem:[%s7] sm:$0xff]
      %v8886 = vld [vmem:[%s7 + $0x8] sm:$0xff]
      %v8887 = vld [vmem:[%s7 + $0x10] sm:$0xff]
      %v8888 = vld [vmem:[%s7 + $0x18] sm:$0xff]
      %v8889 = vld [vmem:[%s7 + $0x20] sm:$0xff]
      %v8890 = vld [vmem:[%s7 + $0x28] sm:$0xff]
      %v8891 = vld [vmem:[%s7 + $0x30] sm:$0xff]
      %v8892 = vld [vmem:[%s7 + $0x38] sm:$0xff]
      %v8893 = vld [vmem:[%s7 + $0x40] sm:$0xff]
      %v8894 = vld [vmem:[%s7 + $0x48] sm:$0xff]
      %v8895 = vld [vmem:[%s7 + $0x50] sm:$0xff]
      %v8896 = vld [vmem:[%s7 + $0x58] sm:$0xff]
      %v8897 = vld [vmem:[%s7 + $0x60] sm:$0xff]
      %v8898 = vld [vmem:[%s7 + $0x68] sm:$0xff]
      %v8899 = vld [vmem:[%s7 + $0x70] sm:$0xff]
      %v8900 = vld [vmem:[%s7 + $0x78] sm:$0xff]
      %v8901 = vld [vmem:[%s7 + $0x80] sm:$0xff]
      %v8902 = vld [vmem:[%s7 + $0x88] sm:$0xff]
      %v8903 = vld [vmem:[%s7 + $0x90] sm:$0xff]
      %v8904 = vld [vmem:[%s7 + $0x98] sm:$0xff]
      %v8905 = vld [vmem:[%s7 + $0xa0] sm:$0xff]
      %v8906 = vld [vmem:[%s7 + $0xa8] sm:$0xff]
      %v8907 = vld [vmem:[%s7 + $0xb0] sm:$0xff]
      %v8908 = vld [vmem:[%s7 + $0xb8] sm:$0xff]
      %v8909 = vld [vmem:[%s7 + $0xc0] sm:$0xff]
      %v8910 = vld [vmem:[%s7 + $0xc8] sm:$0xff]
      %v8911 = vld [vmem:[%s7 + $0xd0] sm:$0xff]
      %v8912 = vld [vmem:[%s7 + $0xd8] sm:$0xff]
      %v8913 = vld [vmem:[%s7 + $0xe0] sm:$0xff]
      %v8914 = vld [vmem:[%s7 + $0xe8] sm:$0xff]
      %v8915 = vld [vmem:[%s7 + $0xf0] sm:$0xff]
      %v8916 = vld [vmem:[%s7 + $0xf8] sm:$0xff]
      %v8917 = vld [vmem:[%s8] sm:$0x1]
      %v8919 = vlaneseq
      %v8920 = vshrl.u32 %v8919, 7
      %v8921 = vsub.s32 0, %v8920
      %v8922 = vrot.slane %v8917, %v8921
      %8924 = vmatprep.subr.mxu0 0.0
      %8925 = vmatpush1.msra.mxu0 %v8900
      %8926 = vmatprep.subr.mxu0 0.0
      %8927 = vmatpush1.msra.mxu0 %v8899
      %8928 = vmatprep.subr.mxu0 0.0
      %8929 = vmatpush1.msra.mxu0 %v8898
      %8930 = vmatprep.subr.mxu0 0.0
      %8931 = vmatpush1.msra.mxu0 %v8897
      %8932 = vmatprep.subr.mxu0 0.0
      %8933 = vmatpush1.msra.mxu0 %v8896
      %8934 = vmatprep.subr.mxu0 0.0
      %8935 = vmatpush1.msra.mxu0 %v8895
      %8936 = vmatprep.subr.mxu0 0.0
      %8937 = vmatpush1.msra.mxu0 %v8894
      %8938 = vmatprep.subr.mxu0 0.0
      %8939 = vmatpush1.msra.mxu0 %v8893
      %8940 = vmatprep.subr.mxu0 0.0
      %8941 = vmatpush1.msra.mxu0 %v8892
      %8942 = vmatprep.subr.mxu0 0.0
      %8943 = vmatpush1.msra.mxu0 %v8891
      %8944 = vmatprep.subr.mxu0 0.0
      %8945 = vmatpush1.msra.mxu0 %v8890
      %8946 = vmatprep.subr.mxu0 0.0
      %8947 = vmatpush1.msra.mxu0 %v8889
      %8948 = vmatprep.subr.mxu0 0.0
      %8949 = vmatpush1.msra.mxu0 %v8888
      %8950 = vmatprep.subr.mxu0 0.0
      %8951 = vmatpush1.msra.mxu0 %v8887
      %8952 = vmatprep.subr.mxu0 0.0
      %8953 = vmatpush1.msra.mxu0 %v8886
      %8954 = vmatprep.subr.mxu0 0.0
      %8955 = vmatpush1.msra.mxu0 %v8885
      %8956 = vmatprep.subr.mxu0 0.0
      %8957 = vmatpush2.msra.mxu0 %v8916
      %8958 = vmatprep.subr.mxu0 0.0
      %8959 = vmatpush2.msra.mxu0 %v8915
      %8960 = vmatprep.subr.mxu0 0.0
      %8961 = vmatpush2.msra.mxu0 %v8914
      %8962 = vmatprep.subr.mxu0 0.0
      %8963 = vmatpush2.msra.mxu0 %v8913
      %8964 = vmatprep.subr.mxu0 0.0
      %8965 = vmatpush2.msra.mxu0 %v8912
      %8966 = vmatprep.subr.mxu0 0.0
      %8967 = vmatpush2.msra.mxu0 %v8911
      %8968 = vmatprep.subr.mxu0 0.0
      %8969 = vmatpush2.msra.mxu0 %v8910
      %8970 = vmatprep.subr.mxu0 0.0
      %8971 = vmatpush2.msra.mxu0 %v8909
      %8972 = vmatprep.subr.mxu0 0.0
      %8973 = vmatpush2.msra.mxu0 %v8908
      %8974 = vmatprep.subr.mxu0 0.0
      %8975 = vmatpush2.msra.mxu0 %v8907
      %8976 = vmatprep.subr.mxu0 0.0
      %8977 = vmatpush2.msra.mxu0 %v8906
      %8978 = vmatprep.subr.mxu0 0.0
      %8979 = vmatpush2.msra.mxu0 %v8905
      %8980 = vmatprep.subr.mxu0 0.0
      %8981 = vmatpush2.msra.mxu0 %v8904
      %8982 = vmatprep.subr.mxu0 0.0
      %8983 = vmatpush2.msra.mxu0 %v8903
      %8984 = vmatprep.subr.mxu0 0.0
      %8985 = vmatpush2.msra.mxu0 %v8902
      %8986 = vmatprep.subr.mxu0 0.0
      %8987 = vmatpush2.msra.mxu0 %v8901
      %8988 = vmatprep.mubr.f32.mxu0 %v8878
      %8989 = vmatmul.mubr.f32.gmra.mxu0 %v8877
      %v8990 = vpop.f32.mrf.mxu0
      %v8991 = vadd.f32 %v8922, %v8990
      %v8992 = vpop.f32.mrf.mxu0
      %8993 = vmatprep.mubr.f32.mxu0 %v8880
      %8994 = vmatmul.mubr.f32.gmra.mxu0 %v8879
      %v8995 = vpop.f32.mrf.mxu0
      %v8996 = vadd.f32 %v8922, %v8995
      %v8997 = vpop.f32.mrf.mxu0
      %8998 = vmatprep.mubr.f32.mxu0 %v8882
      %8999 = vmatmul.mubr.f32.gmra.mxu0 %v8881
      %v9000 = vpop.f32.mrf.mxu0
      %v9001 = vadd.f32 %v8922, %v9000
      %v9002 = vpop.f32.mrf.mxu0
      %9003 = vmatprep.mubr.f32.mxu0 %v8884
      %9004 = vmatmul.mubr.f32.gmra.mxu0 %v8883
      %v9005 = vpop.f32.mrf.mxu0
      %v9006 = vadd.f32 %v8922, %v9005
      %v9007 = vpop.f32.mrf.mxu0
      %9008 = vdwg.mxu0
      %9009 = vst [vmem:[%s332] sm:$0xff] %v8991
      %9010 = vst [vmem:[%s332 + $0x8] sm:$0xff] %v8996
      %9011 = vst [vmem:[%s332 + $0x10] sm:$0xff] %v9001
      %9012 = vst [vmem:[%s332 + $0x18] sm:$0xff] %v9006
      %p9013 = scmp.lt.s32.totalorder %s20, 1
      %s9014 = scalar_select %p9013, %s20, 1
      %s9015 = smul.addr %s9014, 4
      %s9016 = smul.addr %s9015, 8
      %s9017 = scalar_lea.vmem %s9, %s9016
      // Predicated region
      $region57: #{dqn_forward.1} parent=55 // pred_check
        %p9018 = pneg %p232
      $region58: #{dqn_forward.1} parent=55 // pred_check_branch
        %9020 = sbr.rel (%p9018) target = $region60
      $region59: #{dqn_forward.1} parent=55 // pred_region
        _
      $region60: #{dqn_forward.1} parent=55 // pred_fallthru
        _
    $region56: #{dqn_forward.1} parent=5 // pred_fallthru
      _
    %p9021 = scmp.le.s32.totalorder 2, %s15
    // Predicated region
    $region61: #{dqn_forward.1} parent=5 // pred_check
      %p9022 = pneg %p9021
    $region62: #{dqn_forward.1} parent=5 // pred_check_branch
      %9024 = sbr.rel (%p9022) target = $region64
    $region63: #{dqn_forward.1} parent=5 // pred_region
      %s9025 = ssub.s32 %s15, 2
      // Predicated region
      $region65: #{dqn_forward.1} parent=63 // pred_check
        %p9026 = pneg %p238
      $region66: #{dqn_forward.1} parent=63 // pred_check_branch
        %9028 = sbr.rel (%p9026) target = $region68
      $region67: #{dqn_forward.1} parent=63 // pred_region
        %p9029 = scmp.lt.s32.totalorder %s21, 1
        %s9030 = scalar_select %p9029, %s21, 1
        %s9031 = smul.addr %s9030, 4
        %s9032 = smul.addr %s9031, 8
        %s9033 = scalar_lea.vmem %s9, %s9032
      $region68: #{dqn_forward.1} parent=63 // pred_fallthru
        _
    $region64: #{dqn_forward.1} parent=5 // pred_fallthru
      _
  $region6: #{dqn_forward.1} parent=0 // loop_footer
    %s19 = sadd.s32 1, %s15
  $region7: #{dqn_forward.1} parent=0 // loop_footer_branch
    %14 = sbr.rel target = $region3
  $region8: #{dqn_forward.1} parent=0 // loop_exit
    _

</llo_original>
